<compile_context>
chip_gen: v7x
topology: tpu7x:2x2x1
jax: 0.10.0
libtpu: 0.0.40
codegen_flags: <defaults>
</compile_context>

<pallas_src>
import functools

import jax
import jax.numpy as jnp
from jax.experimental import pallas as pl
from jax.experimental.pallas import tpu as pltpu

LANES = 128


def _round_up(x, m):
    return (x + m - 1) // m * m


# ----------------------------- Pallas kernels ------------------------------

def _conv_relu_pool_kernel(cols_ref, w_ref, b_ref, o_ref, *, m_out):
    """One image: (4*m_out, K)bf16 @ (K, Cp)bf16 -> +bias -> ReLU -> 2x2 maxpool.

    Rows are tap-major: rows [t*m_out, (t+1)*m_out) are the conv outputs for
    pooling-window tap t, so the pool is a max over 4 contiguous slabs.
    """
    acc = jnp.dot(cols_ref[...], w_ref[...], preferred_element_type=jnp.float32)
    acc = jnp.maximum(acc + b_ref[...], 0.0)                       # (4*m_out, Cp) f32
    p01 = jnp.maximum(acc[0 * m_out:1 * m_out], acc[1 * m_out:2 * m_out])
    p23 = jnp.maximum(acc[2 * m_out:3 * m_out], acc[3 * m_out:4 * m_out])
    o_ref[...] = jnp.maximum(p01, p23)                             # (m_out, Cp)


def conv_relu_pool_pallas(cols, w_col, b_pad, *, m_out):
    M4, K = cols.shape            # M4 = n_img * 4 * m_out
    Cp = w_col.shape[1]
    n_img = M4 // (4 * m_out)
    kernel = functools.partial(_conv_relu_pool_kernel, m_out=m_out)
    return pl.pallas_call(
        kernel,
        out_shape=jax.ShapeDtypeStruct((n_img * m_out, Cp), jnp.float32),
        grid_spec=pl.GridSpec(
            grid=(n_img,),
            in_specs=[
                pl.BlockSpec((4 * m_out, K), lambda i: (i, 0)),    # per-image cols
                pl.BlockSpec((K, Cp), lambda i: (0, 0)),           # weights (resident)
                pl.BlockSpec((1, Cp), lambda i: (0, 0)),           # bias
            ],
            out_specs=pl.BlockSpec((m_out, Cp), lambda i: (i, 0)),
        ),
        compiler_params=pltpu.CompilerParams(
            dimension_semantics=("parallel",)),                    # v7x: 2 TCs
    )(cols, w_col, b_pad)


def _fc_stack_kernel(x_ref, w1_ref, b1_ref, w2_ref, b2_ref, w3_ref, b3_ref,
                     o_ref):
    """Fused fc1(ReLU) -> fc2(ReLU) -> fc3; all intermediates stay on-chip."""
    x = x_ref[...].astype(jnp.bfloat16)
    h = jnp.dot(x, w1_ref[...], preferred_element_type=jnp.float32)
    h = jnp.maximum(h + b1_ref[...], 0.0)
    h = jnp.dot(h.astype(jnp.bfloat16), w2_ref[...],
                preferred_element_type=jnp.float32)
    h = jnp.maximum(h + b2_ref[...], 0.0)
    h = jnp.dot(h.astype(jnp.bfloat16), w3_ref[...],
                preferred_element_type=jnp.float32)
    o_ref[...] = h + b3_ref[...]


def fc_stack_pallas(x, w1, b1, w2, b2, w3, b3):
    M = x.shape[0]
    Np = w3.shape[1]

    def full(a):
        return pl.BlockSpec(a.shape, lambda i: (0,) * a.ndim)

    return pl.pallas_call(
        _fc_stack_kernel,
        out_shape=jax.ShapeDtypeStruct((M, Np), jnp.float32),
        grid_spec=pl.GridSpec(
            grid=(1,),
            in_specs=[full(x), full(w1), full(b1), full(w2), full(b2),
                      full(w3), full(b3)],
            out_specs=pl.BlockSpec((M, Np), lambda i: (0, 0)),
        ),
        compiler_params=pltpu.CompilerParams(
            dimension_semantics=("arbitrary",),
            vmem_limit_bytes=32 * 1024 * 1024),   # bf16 fc1 weight fits easily
    )(x, w1, b1, w2, b2, w3, b3)


# ------------------------------ glue helpers -------------------------------

def _im2col_pool_tapmajor(x_nhwc, k, pad, k_pad):
    """im2col (stride 1, 'same' pad) with rows ordered (image, tap, ho, wo).

    Returns bf16 (N * 4 * (H//2) * (W//2), k_pad); the contraction dim is
    zero-padded from k*k*C up to k_pad (a multiple of 128).
    """
    x = x_nhwc.astype(jnp.bfloat16)
    N, H, W, C = x.shape
    Ho, Wo = H // 2, W // 2
    K = k * k * C
    xp = jnp.pad(x, ((0, 0), (pad, pad), (pad, pad), (0, 0)))
    patches = [xp[:, di:di + H, dj:dj + W, :]
               for di in range(k) for dj in range(k)]
    p = jnp.stack(patches, axis=3).reshape(N, H, W, K)     # [(di,dj), cin] order
    p = p.reshape(N, Ho, 2, Wo, 2, K).transpose(0, 2, 4, 1, 3, 5)
    cols = p.reshape(N * 4 * Ho * Wo, K)
    return jnp.pad(cols, ((0, 0), (0, k_pad - K)))


def _conv_weight_cols(w_oihw, k_pad, c_pad):
    """Torch (Cout,Cin,kh,kw) -> bf16 (k_pad, c_pad) matching the patch order."""
    Cout, Cin, kh, kw = w_oihw.shape
    K = kh * kw * Cin
    w_col = jnp.transpose(w_oihw, (2, 3, 1, 0)).reshape(K, Cout)
    w_col = jnp.pad(w_col, ((0, k_pad - K), (0, c_pad - Cout)))
    return w_col.astype(jnp.bfloat16)


def conv_relu_pool(x_nhwc, w_oihw, b, *, pad):
    """Conv2d(stride=1,padding=pad) + ReLU + MaxPool2d(2) in one Pallas kernel."""
    N, H, W, Cin = x_nhwc.shape
    Cout, _, k, _ = w_oihw.shape
    K = k * k * Cin
    Kp = _round_up(K, LANES)
    Cp = _round_up(Cout, LANES)
    Ho, Wo = H // 2, W // 2
    cols = _im2col_pool_tapmajor(x_nhwc, k, pad, Kp)               # (N*4*Ho*Wo, Kp)
    w_col = _conv_weight_cols(w_oihw, Kp, Cp)                      # (Kp, Cp) bf16
    b_pad = jnp.pad(b, (0, Cp - Cout)).astype(jnp.float32).reshape(1, Cp)
    out = conv_relu_pool_pallas(cols, w_col, b_pad, m_out=Ho * Wo)  # (N*Ho*Wo, Cp)
    return out.reshape(N, Ho, Wo, Cp)[..., :Cout]


# ------------------------------ model wiring -------------------------------

def init_params(key, num_classes=10):
    """Deterministic, PyTorch-like uniform(-1/sqrt(fan_in), 1/sqrt(fan_in)) init."""
    ks = jax.random.split(key, 10)

    def u(k, shape, fan_in):
        bound = 1.0 / float(fan_in) ** 0.5
        return jax.random.uniform(k, shape, jnp.float32, -bound, bound)

    p = {}
    p["conv1_w"] = u(ks[0], (32, 3, 5, 5), 3 * 25)
    p["conv1_b"] = u(ks[1], (32,), 3 * 25)
    p["conv2_w"] = u(ks[2], (64, 32, 5, 5), 32 * 25)
    p["conv2_b"] = u(ks[3], (64,), 32 * 25)
    p["fc1_w"] = u(ks[4], (64 * 8 * 8, 512), 64 * 8 * 8)   # stored as (in, out)
    p["fc1_b"] = u(ks[5], (512,), 64 * 8 * 8)
    p["fc2_w"] = u(ks[6], (512, 128), 512)
    p["fc2_b"] = u(ks[7], (128,), 512)
    p["fc3_w"] = u(ks[8], (128, num_classes), 128)
    p["fc3_b"] = u(ks[9], (num_classes,), 128)
    return p


def cnn_cifar1_forward(params, x_nchw, num_classes=10):
    # NCHW -> NHWC for kernel compute
    x = jnp.transpose(x_nchw, (0, 2, 3, 1))                                  # (N,32,32,3)
    x = conv_relu_pool(x, params["conv1_w"], params["conv1_b"], pad=2)       # (N,16,16,32)
    x = conv_relu_pool(x, params["conv2_w"], params["conv2_b"], pad=2)       # (N,8,8,64)
    # torch flattens NCHW: x.view(-1, 64*8*8) — reproduce that ordering.
    N = x.shape[0]
    x = jnp.transpose(x, (0, 3, 1, 2)).reshape(N, 64 * 8 * 8)                # (N,4096) f32

    n_pad = _round_up(num_classes, LANES)
    w1 = params["fc1_w"].astype(jnp.bfloat16)
    b1 = params["fc1_b"].reshape(1, -1).astype(jnp.float32)
    w2 = params["fc2_w"].astype(jnp.bfloat16)
    b2 = params["fc2_b"].reshape(1, -1).astype(jnp.float32)
    w3 = jnp.pad(params["fc3_w"],
                 ((0, 0), (0, n_pad - num_classes))).astype(jnp.bfloat16)
    b3 = jnp.pad(params["fc3_b"],
                 (0, n_pad - num_classes)).reshape(1, n_pad).astype(jnp.float32)

    out = fc_stack_pallas(x, w1, b1, w2, b2, w3, b3)                         # (N,128)
    return out[:, :num_classes]


if __name__ == "__main__":
    key = jax.random.PRNGKey(0)
    k_params, k_x = jax.random.split(key)
    params = init_params(k_params, num_classes=10)
    # CIFAR geometry is fixed by fc1 (64*8*8 features): 3x32x32 input, batch=2.
    x = jax.random.normal(k_x, (2, 3, 32, 32), dtype=jnp.float32)
    out = jax.jit(cnn_cifar1_forward)(params, x)
    out = jax.block_until_ready(out)
    assert out.shape == (2, 10) and out.dtype == jnp.float32
    print("KERNEL_OK")
</pallas_src>

<mosaic_0001>
module attributes {stable_mosaic.version = 11 : i64} {
  func.func @_conv_relu_pool_kernel(%arg0: i32, %arg1: memref<1024x128xbf16, #tpu.memory_space<vmem>>, %arg2: memref<128x128xbf16, #tpu.memory_space<vmem>>, %arg3: memref<1x128xf32, #tpu.memory_space<vmem>>, %arg4: memref<256x128xf32, #tpu.memory_space<vmem>>) attributes {dimension_semantics = [#tpu.dimension_semantics<parallel>], iteration_bounds = array<i64: 2>, scalar_prefetch = 0 : i64, scratch_operands = 0 : i64, tpu.core_type = #tpu.core_type<tc>, window_params = [{transform_indices = @transform_0, window_bounds = array<i64: 1024, 128>}, {pipeline_mode = #tpu.pipeline_mode<synchronous>, transform_indices = @transform_1, window_bounds = array<i64: 128, 128>}, {pipeline_mode = #tpu.pipeline_mode<synchronous>, transform_indices = @transform_2, window_bounds = array<i64: 1, 128>}, {transform_indices = @transform_3, window_bounds = array<i64: 256, 128>}]} {
    %c0 = arith.constant 0 : index
    %c0_0 = arith.constant 0 : index
    %0 = vector.load %arg1[%c0, %c0_0] : memref<1024x128xbf16, #tpu.memory_space<vmem>>, vector<1024x128xbf16>
    %c0_1 = arith.constant 0 : index
    %c0_2 = arith.constant 0 : index
    %1 = vector.load %arg2[%c0_1, %c0_2] : memref<128x128xbf16, #tpu.memory_space<vmem>>, vector<128x128xbf16>
    %cst = arith.constant dense<0.000000e+00> : vector<1024x128xf32>
    %2 = tpu.matmul %0, %1, %cst {dimension_numbers = #tpu.dot_dimension_numbers<[1], [0], [0], [1], [0, 0, 1, 1], [], []>} : vector<1024x128xbf16>, vector<128x128xbf16>, vector<1024x128xf32> -> vector<1024x128xf32>
    %c0_3 = arith.constant 0 : index
    %c0_4 = arith.constant 0 : index
    %3 = vector.load %arg3[%c0_3, %c0_4] : memref<1x128xf32, #tpu.memory_space<vmem>>, vector<1x128xf32>
    %4 = vector.broadcast %3 : vector<1x128xf32> to vector<1024x128xf32>
    %5 = arith.addf %2, %4 : vector<1024x128xf32>
    %cst_5 = arith.constant 0.000000e+00 : f32
    %6 = vector.broadcast %cst_5 : f32 to vector<1024x128xf32>
    %7 = arith.maximumf %5, %6 : vector<1024x128xf32>
    %8 = vector.extract_strided_slice %7 {offsets = [0, 0], sizes = [256, 128], strides = [1, 1]} : vector<1024x128xf32> to vector<256x128xf32>
    %9 = vector.extract_strided_slice %7 {offsets = [256, 0], sizes = [256, 128], strides = [1, 1]} : vector<1024x128xf32> to vector<256x128xf32>
    %10 = arith.maximumf %8, %9 : vector<256x128xf32>
    %11 = vector.extract_strided_slice %7 {offsets = [512, 0], sizes = [256, 128], strides = [1, 1]} : vector<1024x128xf32> to vector<256x128xf32>
    %12 = vector.extract_strided_slice %7 {offsets = [768, 0], sizes = [256, 128], strides = [1, 1]} : vector<1024x128xf32> to vector<256x128xf32>
    %13 = arith.maximumf %11, %12 : vector<256x128xf32>
    %14 = arith.maximumf %10, %13 : vector<256x128xf32>
    %c0_6 = arith.constant 0 : index
    %c0_7 = arith.constant 0 : index
    %15 = vector.load %arg4[%c0_6, %c0_7] : memref<256x128xf32, #tpu.memory_space<vmem>>, vector<256x128xf32>
    tpu.vector_store %arg4[%c0_6, %c0_7], %14 {strides = array<i32>} : memref<256x128xf32, #tpu.memory_space<vmem>>, vector<256x128xf32>,
    return
  }
  func.func @transform_0(%arg0: i32) -> (i32, i32) {
    %c0_i32 = arith.constant 0 : i32
    %c0_i32_0 = arith.constant 0 : i32
    return %arg0, %c0_i32 : i32, i32
  }
  func.func @transform_1(%arg0: i32) -> (i32, i32) {
    %c0_i32 = arith.constant 0 : i32
    %c0_i32_0 = arith.constant 0 : i32
    %c0_i32_1 = arith.constant 0 : i32
    return %c0_i32, %c0_i32_0 : i32, i32
  }
  func.func @transform_2(%arg0: i32) -> (i32, i32) {
    %c0_i32 = arith.constant 0 : i32
    %c0_i32_0 = arith.constant 0 : i32
    %c0_i32_1 = arith.constant 0 : i32
    return %c0_i32, %c0_i32_0 : i32, i32
  }
  func.func @transform_3(%arg0: i32) -> (i32, i32) {
    %c0_i32 = arith.constant 0 : i32
    %c0_i32_0 = arith.constant 0 : i32
    return %arg0, %c0_i32 : i32, i32
  }
}

module attributes {stable_mosaic.version = 11 : i64} {
  func.func @_conv_relu_pool_kernel(%arg0: i32, %arg1: memref<256x896xbf16, #tpu.memory_space<vmem>>, %arg2: memref<896x128xbf16, #tpu.memory_space<vmem>>, %arg3: memref<1x128xf32, #tpu.memory_space<vmem>>, %arg4: memref<64x128xf32, #tpu.memory_space<vmem>>) attributes {dimension_semantics = [#tpu.dimension_semantics<parallel>], iteration_bounds = array<i64: 2>, scalar_prefetch = 0 : i64, scratch_operands = 0 : i64, tpu.core_type = #tpu.core_type<tc>, window_params = [{transform_indices = @transform_0, window_bounds = array<i64: 256, 896>}, {pipeline_mode = #tpu.pipeline_mode<synchronous>, transform_indices = @transform_1, window_bounds = array<i64: 896, 128>}, {pipeline_mode = #tpu.pipeline_mode<synchronous>, transform_indices = @transform_2, window_bounds = array<i64: 1, 128>}, {transform_indices = @transform_3, window_bounds = array<i64: 64, 128>}]} {
    %c0 = arith.constant 0 : index
    %c0_0 = arith.constant 0 : index
    %0 = vector.load %arg1[%c0, %c0_0] : memref<256x896xbf16, #tpu.memory_space<vmem>>, vector<256x896xbf16>
    %c0_1 = arith.constant 0 : index
    %c0_2 = arith.constant 0 : index
    %1 = vector.load %arg2[%c0_1, %c0_2] : memref<896x128xbf16, #tpu.memory_space<vmem>>, vector<896x128xbf16>
    %cst = arith.constant dense<0.000000e+00> : vector<256x128xf32>
    %2 = tpu.matmul %0, %1, %cst {dimension_numbers = #tpu.dot_dimension_numbers<[1], [0], [0], [1], [0, 0, 1, 1], [], []>} : vector<256x896xbf16>, vector<896x128xbf16>, vector<256x128xf32> -> vector<256x128xf32>
    %c0_3 = arith.constant 0 : index
    %c0_4 = arith.constant 0 : index
    %3 = vector.load %arg3[%c0_3, %c0_4] : memref<1x128xf32, #tpu.memory_space<vmem>>, vector<1x128xf32>
    %4 = vector.broadcast %3 : vector<1x128xf32> to vector<256x128xf32>
    %5 = arith.addf %2, %4 : vector<256x128xf32>
    %cst_5 = arith.constant 0.000000e+00 : f32
    %6 = vector.broadcast %cst_5 : f32 to vector<256x128xf32>
    %7 = arith.maximumf %5, %6 : vector<256x128xf32>
    %8 = vector.extract_strided_slice %7 {offsets = [0, 0], sizes = [64, 128], strides = [1, 1]} : vector<256x128xf32> to vector<64x128xf32>
    %9 = vector.extract_strided_slice %7 {offsets = [64, 0], sizes = [64, 128], strides = [1, 1]} : vector<256x128xf32> to vector<64x128xf32>
    %10 = arith.maximumf %8, %9 : vector<64x128xf32>
    %11 = vector.extract_strided_slice %7 {offsets = [128, 0], sizes = [64, 128], strides = [1, 1]} : vector<256x128xf32> to vector<64x128xf32>
    %12 = vector.extract_strided_slice %7 {offsets = [192, 0], sizes = [64, 128], strides = [1, 1]} : vector<256x128xf32> to vector<64x128xf32>
    %13 = arith.maximumf %11, %12 : vector<64x128xf32>
    %14 = arith.maximumf %10, %13 : vector<64x128xf32>
    %c0_6 = arith.constant 0 : index
    %c0_7 = arith.constant 0 : index
    %15 = vector.load %arg4[%c0_6, %c0_7] : memref<64x128xf32, #tpu.memory_space<vmem>>, vector<64x128xf32>
    tpu.vector_store %arg4[%c0_6, %c0_7], %14 {strides = array<i32>} : memref<64x128xf32, #tpu.memory_space<vmem>>, vector<64x128xf32>,
    return
  }
  func.func @transform_0(%arg0: i32) -> (i32, i32) {
    %c0_i32 = arith.constant 0 : i32
    %c0_i32_0 = arith.constant 0 : i32
    return %arg0, %c0_i32 : i32, i32
  }
  func.func @transform_1(%arg0: i32) -> (i32, i32) {
    %c0_i32 = arith.constant 0 : i32
    %c0_i32_0 = arith.constant 0 : i32
    %c0_i32_1 = arith.constant 0 : i32
    return %c0_i32, %c0_i32_0 : i32, i32
  }
  func.func @transform_2(%arg0: i32) -> (i32, i32) {
    %c0_i32 = arith.constant 0 : i32
    %c0_i32_0 = arith.constant 0 : i32
    %c0_i32_1 = arith.constant 0 : i32
    return %c0_i32, %c0_i32_0 : i32, i32
  }
  func.func @transform_3(%arg0: i32) -> (i32, i32) {
    %c0_i32 = arith.constant 0 : i32
    %c0_i32_0 = arith.constant 0 : i32
    return %arg0, %c0_i32 : i32, i32
  }
}

module attributes {stable_mosaic.version = 11 : i64} {
  func.func @_fc_stack_kernel(%arg0: i32, %arg1: memref<2x4096xf32, #tpu.memory_space<vmem>>, %arg2: memref<4096x512xbf16, #tpu.memory_space<vmem>>, %arg3: memref<1x512xf32, #tpu.memory_space<vmem>>, %arg4: memref<512x128xbf16, #tpu.memory_space<vmem>>, %arg5: memref<1x128xf32, #tpu.memory_space<vmem>>, %arg6: memref<128x128xbf16, #tpu.memory_space<vmem>>, %arg7: memref<1x128xf32, #tpu.memory_space<vmem>>, %arg8: memref<2x128xf32, #tpu.memory_space<vmem>>) attributes {dimension_semantics = [#tpu.dimension_semantics<arbitrary>], iteration_bounds = array<i64: 1>, scalar_prefetch = 0 : i64, scratch_operands = 0 : i64, tpu.core_type = #tpu.core_type<tc>, window_params = [{pipeline_mode = #tpu.pipeline_mode<synchronous>, transform_indices = @transform_0, window_bounds = array<i64: 2, 4096>}, {pipeline_mode = #tpu.pipeline_mode<synchronous>, transform_indices = @transform_1, window_bounds = array<i64: 4096, 512>}, {pipeline_mode = #tpu.pipeline_mode<synchronous>, transform_indices = @transform_2, window_bounds = array<i64: 1, 512>}, {pipeline_mode = #tpu.pipeline_mode<synchronous>, transform_indices = @transform_3, window_bounds = array<i64: 512, 128>}, {pipeline_mode = #tpu.pipeline_mode<synchronous>, transform_indices = @transform_4, window_bounds = array<i64: 1, 128>}, {pipeline_mode = #tpu.pipeline_mode<synchronous>, transform_indices = @transform_5, window_bounds = array<i64: 128, 128>}, {pipeline_mode = #tpu.pipeline_mode<synchronous>, transform_indices = @transform_6, window_bounds = array<i64: 1, 128>}, {pipeline_mode = #tpu.pipeline_mode<synchronous>, transform_indices = @transform_7, window_bounds = array<i64: 2, 128>}]} {
    %c0 = arith.constant 0 : index
    %c0_0 = arith.constant 0 : index
    %0 = vector.load %arg1[%c0, %c0_0] : memref<2x4096xf32, #tpu.memory_space<vmem>>, vector<2x4096xf32>
    %1 = arith.truncf %0 : vector<2x4096xf32> to vector<2x4096xbf16>
    %c0_1 = arith.constant 0 : index
    %c0_2 = arith.constant 0 : index
    %2 = vector.load %arg2[%c0_1, %c0_2] : memref<4096x512xbf16, #tpu.memory_space<vmem>>, vector<4096x512xbf16>
    %cst = arith.constant dense<0.000000e+00> : vector<2x512xf32>
    %3 = tpu.matmul %1, %2, %cst {dimension_numbers = #tpu.dot_dimension_numbers<[1], [0], [0], [1], [0, 0, 1, 1], [], []>} : vector<2x4096xbf16>, vector<4096x512xbf16>, vector<2x512xf32> -> vector<2x512xf32>
    %c0_3 = arith.constant 0 : index
    %c0_4 = arith.constant 0 : index
    %4 = vector.load %arg3[%c0_3, %c0_4] : memref<1x512xf32, #tpu.memory_space<vmem>>, vector<1x512xf32>
    %5 = vector.broadcast %4 : vector<1x512xf32> to vector<2x512xf32>
    %6 = arith.addf %3, %5 : vector<2x512xf32>
    %cst_5 = arith.constant 0.000000e+00 : f32
    %7 = vector.broadcast %cst_5 : f32 to vector<2x512xf32>
    %8 = arith.maximumf %6, %7 : vector<2x512xf32>
    %9 = arith.truncf %8 : vector<2x512xf32> to vector<2x512xbf16>
    %c0_6 = arith.constant 0 : index
    %c0_7 = arith.constant 0 : index
    %10 = vector.load %arg4[%c0_6, %c0_7] : memref<512x128xbf16, #tpu.memory_space<vmem>>, vector<512x128xbf16>
    %cst_8 = arith.constant dense<0.000000e+00> : vector<2x128xf32>
    %11 = tpu.matmul %9, %10, %cst_8 {dimension_numbers = #tpu.dot_dimension_numbers<[1], [0], [0], [1], [0, 0, 1, 1], [], []>} : vector<2x512xbf16>, vector<512x128xbf16>, vector<2x128xf32> -> vector<2x128xf32>
    %c0_9 = arith.constant 0 : index
    %c0_10 = arith.constant 0 : index
    %12 = vector.load %arg5[%c0_9, %c0_10] : memref<1x128xf32, #tpu.memory_space<vmem>>, vector<1x128xf32>
    %13 = vector.broadcast %12 : vector<1x128xf32> to vector<2x128xf32>
    %14 = arith.addf %11, %13 : vector<2x128xf32>
    %cst_11 = arith.constant 0.000000e+00 : f32
    %15 = vector.broadcast %cst_11 : f32 to vector<2x128xf32>
    %16 = arith.maximumf %14, %15 : vector<2x128xf32>
    %17 = arith.truncf %16 : vector<2x128xf32> to vector<2x128xbf16>
    %c0_12 = arith.constant 0 : index
    %c0_13 = arith.constant 0 : index
    %18 = vector.load %arg6[%c0_12, %c0_13] : memref<128x128xbf16, #tpu.memory_space<vmem>>, vector<128x128xbf16>
    %cst_14 = arith.constant dense<0.000000e+00> : vector<2x128xf32>
    %19 = tpu.matmul %17, %18, %cst_14 {dimension_numbers = #tpu.dot_dimension_numbers<[1], [0], [0], [1], [0, 0, 1, 1], [], []>} : vector<2x128xbf16>, vector<128x128xbf16>, vector<2x128xf32> -> vector<2x128xf32>
    %c0_15 = arith.constant 0 : index
    %c0_16 = arith.constant 0 : index
    %20 = vector.load %arg7[%c0_15, %c0_16] : memref<1x128xf32, #tpu.memory_space<vmem>>, vector<1x128xf32>
    %21 = vector.broadcast %20 : vector<1x128xf32> to vector<2x128xf32>
    %22 = arith.addf %19, %21 : vector<2x128xf32>
    %c0_17 = arith.constant 0 : index
    %c0_18 = arith.constant 0 : index
    %23 = vector.load %arg8[%c0_17, %c0_18] : memref<2x128xf32, #tpu.memory_space<vmem>>, vector<2x128xf32>
    tpu.vector_store %arg8[%c0_17, %c0_18], %22 {strides = array<i32>} : memref<2x128xf32, #tpu.memory_space<vmem>>, vector<2x128xf32>,
    return
  }
  func.func @transform_0(%arg0: i32) -> (i32, i32) {
    %c0_i32 = arith.constant 0 : i32
    %c0_i32_0 = arith.constant 0 : i32
    %c0_i32_1 = arith.constant 0 : i32
    return %c0_i32, %c0_i32_0 : i32, i32
  }
  func.func @transform_1(%arg0: i32) -> (i32, i32) {
    %c0_i32 = arith.constant 0 : i32
    %c0_i32_0 = arith.constant 0 : i32
    %c0_i32_1 = arith.constant 0 : i32
    return %c0_i32, %c0_i32_0 : i32, i32
  }
  func.func @transform_2(%arg0: i32) -> (i32, i32) {
    %c0_i32 = arith.constant 0 : i32
    %c0_i32_0 = arith.constant 0 : i32
    %c0_i32_1 = arith.constant 0 : i32
    return %c0_i32, %c0_i32_0 : i32, i32
  }
  func.func @transform_3(%arg0: i32) -> (i32, i32) {
    %c0_i32 = arith.constant 0 : i32
    %c0_i32_0 = arith.constant 0 : i32
    %c0_i32_1 = arith.constant 0 : i32
    return %c0_i32, %c0_i32_0 : i32, i32
  }
  func.func @transform_4(%arg0: i32) -> (i32, i32) {
    %c0_i32 = arith.constant 0 : i32
    %c0_i32_0 = arith.constant 0 : i32
    %c0_i32_1 = arith.constant 0 : i32
    return %c0_i32, %c0_i32_0 : i32, i32
  }
  func.func @transform_5(%arg0: i32) -> (i32, i32) {
    %c0_i32 = arith.constant 0 : i32
    %c0_i32_0 = arith.constant 0 : i32
    %c0_i32_1 = arith.constant 0 : i32
    return %c0_i32, %c0_i32_0 : i32, i32
  }
  func.func @transform_6(%arg0: i32) -> (i32, i32) {
    %c0_i32 = arith.constant 0 : i32
    %c0_i32_0 = arith.constant 0 : i32
    %c0_i32_1 = arith.constant 0 : i32
    return %c0_i32, %c0_i32_0 : i32, i32
  }
  func.func @transform_7(%arg0: i32) -> (i32, i32) {
    %c0_i32 = arith.constant 0 : i32
    %c0_i32_0 = arith.constant 0 : i32
    %c0_i32_1 = arith.constant 0 : i32
    return %c0_i32, %c0_i32_0 : i32, i32
  }
}

</mosaic_0001>

<llo_original>
// kernel: cnn_cifar1_forward.3
$region0: #{cnn_cifar1_forward.3}
  #allocation0 [shape = 'u32[]', space=smem, size = 0x4, offset = 0x4, fixed_abs, tag = 'smem constant byte address 0x4 - core index']
  #allocation1 [shape = 'u32[144,128]{1,0:T(1,128)}', space=vmem, size = 0x12000, scoped, tag = 'internal scratch']
  %s0 = inlined_call_operand.vmem [shape: bf16[2048,128], index: 0, kind: input, shape index: {}]
  %s1 = inlined_call_operand.vmem [shape: bf16[128,128], index: 1, kind: input, shape index: {}]
  %s2 = inlined_call_operand.vmem [shape: f32[1,128], index: 2, kind: input, shape index: {}]
  %s3 = inlined_call_operand.vmem [shape: f32[512,128], index: 3, kind: output, shape index: {}]
  %s4 = sld [smem:[#allocation0]]
  $region45: #{cnn_cifar1_forward.3} parent=0
    _
  %s6 = ssub.s32 1, %s4
  %s7 = scalar_select 0, %s6, %s4
  loop: start=0, step=1, limit=4
  $region2: #{cnn_cifar1_forward.3} parent=0 // loop_pre_header
    _
  $region3: #{cnn_cifar1_forward.3} parent=0 // loop_header
    %s9 = sphi 0, %s13
    %p10 = scmp.ge.s32.totalorder %s9, 4
    %s19 = sphi 0, %s21
    %s22 = sphi 0, %s19
    %s23 = sphi 0, %s22
    %s39 = sphi 0, %s23
    %s43 = sphi 0, %s43
    %s45 = sphi 0, %s43
    %s46 = sphi 0, %s45
    %s60 = sphi 0, %s46
    %s64 = sphi 0, %s64
    %s66 = sphi 0, %s64
    %s67 = sphi 0, %s66
    %s81 = sphi 0, %s67
    %s87 = sphi 0, %s89
    %s90 = sphi 0, %s87
    %s91 = sphi 0, %s90
    %s107 = sphi 0, %s91
  $region4: #{cnn_cifar1_forward.3} parent=0 // loop_header_branch
    %12 = sbr.rel (%p10) target = $region8
  $region5: #{cnn_cifar1_forward.3} parent=0 // loop_body
    %s14 = ssub.s32 %s9, 1
    %s15 = ssub.s32 %s9, 2
    %s16 = sadd.s32 %s9, 1
    %s17 = ssub.s32 %s9, %s16
    %p18 = scmp.eq.s32.totalorder %s17, 0
    %s20 = sadd.s32 %s19, 1
    %s21 = scalar_select %p18, %s19, %s20
    %p24 = pneg %p18
    %p25 = scmp.eq.s32.totalorder %s9, 1
    %p26 = por %p24, %p25
    %p27 = scmp.ne.s32.totalorder %s19, %s22
    %p28 = scmp.eq.s32.totalorder %s9, 0
    %p29 = por %p27, %p28
    %p30 = scmp.ne.s32.totalorder %s19, %s22
    %p31 = scmp.eq.s32.totalorder %s14, 1
    %p32 = por %p30, %p31
    %p33 = scmp.ne.s32.totalorder %s22, %s23
    %p34 = scmp.eq.s32.totalorder %s14, 0
    %p35 = por %p33, %p34
    %p36 = scmp.ne.s32.totalorder %s22, %s23
    %p37 = scmp.eq.s32.totalorder %s15, 1
    %p38 = por %p36, %p37
    %p40 = scmp.ne.s32.totalorder %s23, %s39
    %p41 = scmp.eq.s32.totalorder %s15, 0
    %p42 = por %p40, %p41
    %s44 = sadd.s32 %s43, 1
    %p47 = scmp.eq.s32.totalorder %s9, 1
    %p48 = scmp.ne.s32.totalorder %s43, %s45
    %p49 = scmp.eq.s32.totalorder %s9, 0
    %p50 = por %p48, %p49
    %p51 = scmp.ne.s32.totalorder %s43, %s45
    %p52 = scmp.eq.s32.totalorder %s14, 1
    %p53 = por %p51, %p52
    %p54 = scmp.ne.s32.totalorder %s45, %s46
    %p55 = scmp.eq.s32.totalorder %s14, 0
    %p56 = por %p54, %p55
    %p57 = scmp.ne.s32.totalorder %s45, %s46
    %p58 = scmp.eq.s32.totalorder %s15, 1
    %p59 = por %p57, %p58
    %p61 = scmp.ne.s32.totalorder %s46, %s60
    %p62 = scmp.eq.s32.totalorder %s15, 0
    %p63 = por %p61, %p62
    %s65 = sadd.s32 %s64, 1
    %p68 = scmp.eq.s32.totalorder %s9, 1
    %p69 = scmp.ne.s32.totalorder %s64, %s66
    %p70 = scmp.eq.s32.totalorder %s9, 0
    %p71 = por %p69, %p70
    %p72 = scmp.ne.s32.totalorder %s64, %s66
    %p73 = scmp.eq.s32.totalorder %s14, 1
    %p74 = por %p72, %p73
    %p75 = scmp.ne.s32.totalorder %s66, %s67
    %p76 = scmp.eq.s32.totalorder %s14, 0
    %p77 = por %p75, %p76
    %p78 = scmp.ne.s32.totalorder %s66, %s67
    %p79 = scmp.eq.s32.totalorder %s15, 1
    %p80 = por %p78, %p79
    %p82 = scmp.ne.s32.totalorder %s67, %s81
    %p83 = scmp.eq.s32.totalorder %s15, 0
    %p84 = por %p82, %p83
    %s85 = ssub.s32 %s9, %s16
    %p86 = scmp.eq.s32.totalorder %s85, 0
    %s88 = sadd.s32 %s87, 1
    %s89 = scalar_select %p86, %s87, %s88
    %p92 = pneg %p86
    %p93 = scmp.eq.s32.totalorder %s9, 1
    %p94 = por %p92, %p93
    %p95 = scmp.ne.s32.totalorder %s87, %s90
    %p96 = scmp.eq.s32.totalorder %s9, 0
    %p97 = por %p95, %p96
    %p98 = scmp.ne.s32.totalorder %s87, %s90
    %p99 = scmp.eq.s32.totalorder %s14, 1
    %p100 = por %p98, %p99
    %p101 = scmp.ne.s32.totalorder %s90, %s91
    %p102 = scmp.eq.s32.totalorder %s14, 0
    %p103 = por %p101, %p102
    %p104 = scmp.ne.s32.totalorder %s90, %s91
    %p105 = scmp.eq.s32.totalorder %s15, 1
    %p106 = por %p104, %p105
    %p108 = scmp.ne.s32.totalorder %s91, %s107
    %p109 = scmp.eq.s32.totalorder %s15, 0
    %p110 = por %p108, %p109
    %p111 = scmp.le.s32.totalorder 1, %s9
    %p112 = scmp.lt.s32.totalorder %s9, 3
    %p113 = pnand %p111, %p112
    %p114 = pneg %p113
    // Predicated region
    $region9: #{cnn_cifar1_forward.3} parent=5 // pred_check
      _
    $region10: #{cnn_cifar1_forward.3} parent=5 // pred_check_branch
      %116 = sbr.rel (%p113) target = $region12
    $region11: #{cnn_cifar1_forward.3} parent=5 // pred_region
      %s117 = ssub.s32 %s9, 1
      // Predicated region
      $region13: #{cnn_cifar1_forward.3} parent=11 // pred_check
        %p118 = pneg %p56
      $region14: #{cnn_cifar1_forward.3} parent=11 // pred_check_branch
        %120 = sbr.rel (%p118) target = $region16
      $region15: #{cnn_cifar1_forward.3} parent=11 // pred_region
        _
      $region16: #{cnn_cifar1_forward.3} parent=11 // pred_fallthru
        _
      // Predicated region
      $region17: #{cnn_cifar1_forward.3} parent=11 // pred_check
        %p121 = pneg %p77
      $region18: #{cnn_cifar1_forward.3} parent=11 // pred_check_branch
        %123 = sbr.rel (%p121) target = $region20
      $region19: #{cnn_cifar1_forward.3} parent=11 // pred_region
        _
      $region20: #{cnn_cifar1_forward.3} parent=11 // pred_fallthru
        _
    $region12: #{cnn_cifar1_forward.3} parent=5 // pred_fallthru
      _
    %p124 = scmp.lt.s32.totalorder %s9, 2
    // Predicated region
    $region21: #{cnn_cifar1_forward.3} parent=5 // pred_check
      %p125 = pneg %p124
    $region22: #{cnn_cifar1_forward.3} parent=5 // pred_check_branch
      %127 = sbr.rel (%p125) target = $region24
    $region23: #{cnn_cifar1_forward.3} parent=5 // pred_region
      // Predicated region
      $region25: #{cnn_cifar1_forward.3} parent=23 // pred_check
        %p128 = pneg %p29
      $region26: #{cnn_cifar1_forward.3} parent=23 // pred_check_branch
        %130 = sbr.rel (%p128) target = $region28
      $region27: #{cnn_cifar1_forward.3} parent=23 // pred_region
        %s131 = smul.u32 128, %s9
        %p132 = scmp.lt.s32.totalorder %s131, 255
        %s133 = scalar_select %p132, %s131, 255
        %s134 = smul.addr %s133, 4
        %s135 = scalar_lea.vmem %s0, %s134
        %s136 = smul.u32 128, %s9
      $region28: #{cnn_cifar1_forward.3} parent=23 // pred_fallthru
        _
    $region24: #{cnn_cifar1_forward.3} parent=5 // pred_fallthru
      _
    %p137 = scmp.le.s32.totalorder 1, %s9
    %p138 = scmp.lt.s32.totalorder %s9, 3
    %p139 = pnand %p137, %p138
    %p140 = pneg %p139
    // Predicated region
    $region29: #{cnn_cifar1_forward.3} parent=5 // pred_check
      _
    $region30: #{cnn_cifar1_forward.3} parent=5 // pred_check_branch
      %142 = sbr.rel (%p139) target = $region32
    $region31: #{cnn_cifar1_forward.3} parent=5 // pred_region
      %s143 = ssub.s32 %s9, 1
      %s144 = smul.u32 128, %s14
      %p145 = scmp.lt.s32.totalorder %s144, 255
      %s146 = scalar_select %p145, %s144, 255
      %s147 = smul.addr %s146, 4
      %s148 = scalar_lea.vmem %s0, %s147
      %p149 = pneg %p35
      %p150 = pneg %p32
      %p151 = pneg %p56
      %p152 = pneg %p53
      %p153 = pneg %p77
      %p154 = pneg %p74
      %p155 = pneg %p103
      %p156 = pneg %p100
      %s157 = smul.u32 32, %s14
      %p158 = scmp.lt.s32.totalorder %s157, 63
      %s159 = scalar_select %p158, %s157, 63
      %s160 = smul.addr %s159, 8
      %s161 = scalar_lea.vmem %s3, %s160
      %s162 = smul.u32 128, %s14
      %p163 = scmp.lt.s32.totalorder %s162, 255
      %s164 = scalar_select %p163, %s162, 255
      %s165 = smul.addr %s164, 4
      %s166 = scalar_lea.vmem %s0, %s165
      %s167 = smul.u32 128, %s14
      %s168 = smul.u32 32, %s14
      %p169 = scmp.lt.s32.totalorder %s168, 63
      %s170 = scalar_select %p169, %s168, 63
      %s171 = smul.addr %s170, 8
      %s172 = scalar_lea.vmem %s3, %s171
      %s173 = smul.u32 32, %s14
      %v175 = vld [vmem:[%s166] sm:$0xf]
      %v176 = vld [vmem:[%s166 + $0x4] sm:$0xf]
      %v177 = vld [vmem:[%s166 + $0x8] sm:$0xf]
      %v178 = vld [vmem:[%s166 + $0xc] sm:$0xf]
      %v179 = vld [vmem:[%s166 + $0x10] sm:$0xf]
      %v180 = vld [vmem:[%s166 + $0x14] sm:$0xf]
      %v181 = vld [vmem:[%s166 + $0x18] sm:$0xf]
      %v182 = vld [vmem:[%s166 + $0x1c] sm:$0xf]
      %v183 = vld [vmem:[%s166 + $0x20] sm:$0xf]
      %v184 = vld [vmem:[%s166 + $0x24] sm:$0xf]
      %v185 = vld [vmem:[%s166 + $0x28] sm:$0xf]
      %v186 = vld [vmem:[%s166 + $0x2c] sm:$0xf]
      %v187 = vld [vmem:[%s166 + $0x30] sm:$0xf]
      %v188 = vld [vmem:[%s166 + $0x34] sm:$0xf]
      %v189 = vld [vmem:[%s166 + $0x38] sm:$0xf]
      %v190 = vld [vmem:[%s166 + $0x3c] sm:$0xf]
      %v191 = vld [vmem:[%s166 + $0x40] sm:$0xf]
      %v192 = vld [vmem:[%s166 + $0x44] sm:$0xf]
      %v193 = vld [vmem:[%s166 + $0x48] sm:$0xf]
      %v194 = vld [vmem:[%s166 + $0x4c] sm:$0xf]
      %v195 = vld [vmem:[%s166 + $0x50] sm:$0xf]
      %v196 = vld [vmem:[%s166 + $0x54] sm:$0xf]
      %v197 = vld [vmem:[%s166 + $0x58] sm:$0xf]
      %v198 = vld [vmem:[%s166 + $0x5c] sm:$0xf]
      %v199 = vld [vmem:[%s166 + $0x60] sm:$0xf]
      %v200 = vld [vmem:[%s166 + $0x64] sm:$0xf]
      %v201 = vld [vmem:[%s166 + $0x68] sm:$0xf]
      %v202 = vld [vmem:[%s166 + $0x6c] sm:$0xf]
      %v203 = vld [vmem:[%s166 + $0x70] sm:$0xf]
      %v204 = vld [vmem:[%s166 + $0x74] sm:$0xf]
      %v205 = vld [vmem:[%s166 + $0x78] sm:$0xf]
      %v206 = vld [vmem:[%s166 + $0x7c] sm:$0xf]
      %v207 = vld [vmem:[%s166 + $0x80] sm:$0xf]
      %v208 = vld [vmem:[%s166 + $0x84] sm:$0xf]
      %v209 = vld [vmem:[%s166 + $0x88] sm:$0xf]
      %v210 = vld [vmem:[%s166 + $0x8c] sm:$0xf]
      %v211 = vld [vmem:[%s166 + $0x90] sm:$0xf]
      %v212 = vld [vmem:[%s166 + $0x94] sm:$0xf]
      %v213 = vld [vmem:[%s166 + $0x98] sm:$0xf]
      %v214 = vld [vmem:[%s166 + $0x9c] sm:$0xf]
      %v215 = vld [vmem:[%s166 + $0xa0] sm:$0xf]
      %v216 = vld [vmem:[%s166 + $0xa4] sm:$0xf]
      %v217 = vld [vmem:[%s166 + $0xa8] sm:$0xf]
      %v218 = vld [vmem:[%s166 + $0xac] sm:$0xf]
      %v219 = vld [vmem:[%s166 + $0xb0] sm:$0xf]
      %v220 = vld [vmem:[%s166 + $0xb4] sm:$0xf]
      %v221 = vld [vmem:[%s166 + $0xb8] sm:$0xf]
      %v222 = vld [vmem:[%s166 + $0xbc] sm:$0xf]
      %v223 = vld [vmem:[%s166 + $0xc0] sm:$0xf]
      %v224 = vld [vmem:[%s166 + $0xc4] sm:$0xf]
      %v225 = vld [vmem:[%s166 + $0xc8] sm:$0xf]
      %v226 = vld [vmem:[%s166 + $0xcc] sm:$0xf]
      %v227 = vld [vmem:[%s166 + $0xd0] sm:$0xf]
      %v228 = vld [vmem:[%s166 + $0xd4] sm:$0xf]
      %v229 = vld [vmem:[%s166 + $0xd8] sm:$0xf]
      %v230 = vld [vmem:[%s166 + $0xdc] sm:$0xf]
      %v231 = vld [vmem:[%s166 + $0xe0] sm:$0xf]
      %v232 = vld [vmem:[%s166 + $0xe4] sm:$0xf]
      %v233 = vld [vmem:[%s166 + $0xe8] sm:$0xf]
      %v234 = vld [vmem:[%s166 + $0xec] sm:$0xf]
      %v235 = vld [vmem:[%s166 + $0xf0] sm:$0xf]
      %v236 = vld [vmem:[%s166 + $0xf4] sm:$0xf]
      %v237 = vld [vmem:[%s166 + $0xf8] sm:$0xf]
      %v238 = vld [vmem:[%s166 + $0xfc] sm:$0xf]
      %v239 = vld [vmem:[%s166 + $0x100] sm:$0xf]
      %v240 = vld [vmem:[%s166 + $0x104] sm:$0xf]
      %v241 = vld [vmem:[%s166 + $0x108] sm:$0xf]
      %v242 = vld [vmem:[%s166 + $0x10c] sm:$0xf]
      %v243 = vld [vmem:[%s166 + $0x110] sm:$0xf]
      %v244 = vld [vmem:[%s166 + $0x114] sm:$0xf]
      %v245 = vld [vmem:[%s166 + $0x118] sm:$0xf]
      %v246 = vld [vmem:[%s166 + $0x11c] sm:$0xf]
      %v247 = vld [vmem:[%s166 + $0x120] sm:$0xf]
      %v248 = vld [vmem:[%s166 + $0x124] sm:$0xf]
      %v249 = vld [vmem:[%s166 + $0x128] sm:$0xf]
      %v250 = vld [vmem:[%s166 + $0x12c] sm:$0xf]
      %v251 = vld [vmem:[%s166 + $0x130] sm:$0xf]
      %v252 = vld [vmem:[%s166 + $0x134] sm:$0xf]
      %v253 = vld [vmem:[%s166 + $0x138] sm:$0xf]
      %v254 = vld [vmem:[%s166 + $0x13c] sm:$0xf]
      %v255 = vld [vmem:[%s166 + $0x140] sm:$0xf]
      %v256 = vld [vmem:[%s166 + $0x144] sm:$0xf]
      %v257 = vld [vmem:[%s166 + $0x148] sm:$0xf]
      %v258 = vld [vmem:[%s166 + $0x14c] sm:$0xf]
      %v259 = vld [vmem:[%s166 + $0x150] sm:$0xf]
      %v260 = vld [vmem:[%s166 + $0x154] sm:$0xf]
      %v261 = vld [vmem:[%s166 + $0x158] sm:$0xf]
      %v262 = vld [vmem:[%s166 + $0x15c] sm:$0xf]
      %v263 = vld [vmem:[%s166 + $0x160] sm:$0xf]
      %v264 = vld [vmem:[%s166 + $0x164] sm:$0xf]
      %v265 = vld [vmem:[%s166 + $0x168] sm:$0xf]
      %v266 = vld [vmem:[%s166 + $0x16c] sm:$0xf]
      %v267 = vld [vmem:[%s166 + $0x170] sm:$0xf]
      %v268 = vld [vmem:[%s166 + $0x174] sm:$0xf]
      %v269 = vld [vmem:[%s166 + $0x178] sm:$0xf]
      %v270 = vld [vmem:[%s166 + $0x17c] sm:$0xf]
      %v271 = vld [vmem:[%s166 + $0x180] sm:$0xf]
      %v272 = vld [vmem:[%s166 + $0x184] sm:$0xf]
      %v273 = vld [vmem:[%s166 + $0x188] sm:$0xf]
      %v274 = vld [vmem:[%s166 + $0x18c] sm:$0xf]
      %v275 = vld [vmem:[%s166 + $0x190] sm:$0xf]
      %v276 = vld [vmem:[%s166 + $0x194] sm:$0xf]
      %v277 = vld [vmem:[%s166 + $0x198] sm:$0xf]
      %v278 = vld [vmem:[%s166 + $0x19c] sm:$0xf]
      %v279 = vld [vmem:[%s166 + $0x1a0] sm:$0xf]
      %v280 = vld [vmem:[%s166 + $0x1a4] sm:$0xf]
      %v281 = vld [vmem:[%s166 + $0x1a8] sm:$0xf]
      %v282 = vld [vmem:[%s166 + $0x1ac] sm:$0xf]
      %v283 = vld [vmem:[%s166 + $0x1b0] sm:$0xf]
      %v284 = vld [vmem:[%s166 + $0x1b4] sm:$0xf]
      %v285 = vld [vmem:[%s166 + $0x1b8] sm:$0xf]
      %v286 = vld [vmem:[%s166 + $0x1bc] sm:$0xf]
      %v287 = vld [vmem:[%s166 + $0x1c0] sm:$0xf]
      %v288 = vld [vmem:[%s166 + $0x1c4] sm:$0xf]
      %v289 = vld [vmem:[%s166 + $0x1c8] sm:$0xf]
      %v290 = vld [vmem:[%s166 + $0x1cc] sm:$0xf]
      %v291 = vld [vmem:[%s166 + $0x1d0] sm:$0xf]
      %v292 = vld [vmem:[%s166 + $0x1d4] sm:$0xf]
      %v293 = vld [vmem:[%s166 + $0x1d8] sm:$0xf]
      %v294 = vld [vmem:[%s166 + $0x1dc] sm:$0xf]
      %v295 = vld [vmem:[%s166 + $0x1e0] sm:$0xf]
      %v296 = vld [vmem:[%s166 + $0x1e4] sm:$0xf]
      %v297 = vld [vmem:[%s166 + $0x1e8] sm:$0xf]
      %v298 = vld [vmem:[%s166 + $0x1ec] sm:$0xf]
      %v299 = vld [vmem:[%s166 + $0x1f0] sm:$0xf]
      %v300 = vld [vmem:[%s166 + $0x1f4] sm:$0xf]
      %v301 = vld [vmem:[%s166 + $0x1f8] sm:$0xf]
      %v302 = vld [vmem:[%s166 + $0x1fc] sm:$0xf]
      %v303 = vld [vmem:[%s1] sm:$0xf]
      %v304 = vld [vmem:[%s1 + $0x4] sm:$0xf]
      %v305 = vld [vmem:[%s1 + $0x8] sm:$0xf]
      %v306 = vld [vmem:[%s1 + $0xc] sm:$0xf]
      %v307 = vld [vmem:[%s1 + $0x10] sm:$0xf]
      %v308 = vld [vmem:[%s1 + $0x14] sm:$0xf]
      %v309 = vld [vmem:[%s1 + $0x18] sm:$0xf]
      %v310 = vld [vmem:[%s1 + $0x1c] sm:$0xf]
      %v311 = vld [vmem:[%s1 + $0x20] sm:$0xf]
      %v312 = vld [vmem:[%s1 + $0x24] sm:$0xf]
      %v313 = vld [vmem:[%s1 + $0x28] sm:$0xf]
      %v314 = vld [vmem:[%s1 + $0x2c] sm:$0xf]
      %v315 = vld [vmem:[%s1 + $0x30] sm:$0xf]
      %v316 = vld [vmem:[%s1 + $0x34] sm:$0xf]
      %v317 = vld [vmem:[%s1 + $0x38] sm:$0xf]
      %v318 = vld [vmem:[%s1 + $0x3c] sm:$0xf]
      %v319 = vld [vmem:[%s2] sm:$0x1]
      %v321 = vlaneseq
      %v322 = vshrl.u32 %v321, 7
      %v323 = vsub.s32 0, %v322
      %v324 = vrot.slane %v319, %v323
      %v454 = vunpack.c.l.b16 %v175
      %v455 = vunpack.c.l.b16 %v176
      %v456 = vunpack.c.l.b16 %v177
      %v457 = vunpack.c.l.b16 %v178
      %v458 = vunpack.c.l.b16 %v179
      %v459 = vunpack.c.l.b16 %v180
      %v460 = vunpack.c.l.b16 %v181
      %v461 = vunpack.c.l.b16 %v182
      %v462 = vunpack.c.l.b16 %v183
      %v463 = vunpack.c.l.b16 %v184
      %v464 = vunpack.c.l.b16 %v185
      %v465 = vunpack.c.l.b16 %v186
      %v466 = vunpack.c.l.b16 %v187
      %v467 = vunpack.c.l.b16 %v188
      %v468 = vunpack.c.l.b16 %v189
      %v469 = vunpack.c.l.b16 %v190
      %v470 = vunpack.c.l.b16 %v191
      %v471 = vunpack.c.l.b16 %v192
      %v472 = vunpack.c.l.b16 %v193
      %v473 = vunpack.c.l.b16 %v194
      %v474 = vunpack.c.l.b16 %v195
      %v475 = vunpack.c.l.b16 %v196
      %v476 = vunpack.c.l.b16 %v197
      %v477 = vunpack.c.l.b16 %v198
      %v478 = vunpack.c.l.b16 %v199
      %v479 = vunpack.c.l.b16 %v200
      %v480 = vunpack.c.l.b16 %v201
      %v481 = vunpack.c.l.b16 %v202
      %v482 = vunpack.c.l.b16 %v203
      %v483 = vunpack.c.l.b16 %v204
      %v484 = vunpack.c.l.b16 %v205
      %v485 = vunpack.c.l.b16 %v206
      %v486 = vunpack.c.l.b16 %v207
      %v487 = vunpack.c.l.b16 %v208
      %v488 = vunpack.c.l.b16 %v209
      %v489 = vunpack.c.l.b16 %v210
      %v490 = vunpack.c.l.b16 %v211
      %v491 = vunpack.c.l.b16 %v212
      %v492 = vunpack.c.l.b16 %v213
      %v493 = vunpack.c.l.b16 %v214
      %v494 = vunpack.c.l.b16 %v215
      %v495 = vunpack.c.l.b16 %v216
      %v496 = vunpack.c.l.b16 %v217
      %v497 = vunpack.c.l.b16 %v218
      %v498 = vunpack.c.l.b16 %v219
      %v499 = vunpack.c.l.b16 %v220
      %v500 = vunpack.c.l.b16 %v221
      %v501 = vunpack.c.l.b16 %v222
      %v502 = vunpack.c.l.b16 %v223
      %v503 = vunpack.c.l.b16 %v224
      %v504 = vunpack.c.l.b16 %v225
      %v505 = vunpack.c.l.b16 %v226
      %v506 = vunpack.c.l.b16 %v227
      %v507 = vunpack.c.l.b16 %v228
      %v508 = vunpack.c.l.b16 %v229
      %v509 = vunpack.c.l.b16 %v230
      %v510 = vunpack.c.l.b16 %v231
      %v511 = vunpack.c.l.b16 %v232
      %v512 = vunpack.c.l.b16 %v233
      %v513 = vunpack.c.l.b16 %v234
      %v514 = vunpack.c.l.b16 %v235
      %v515 = vunpack.c.l.b16 %v236
      %v516 = vunpack.c.l.b16 %v237
      %v517 = vunpack.c.l.b16 %v238
      %v518 = vunpack.c.l.b16 %v239
      %v519 = vunpack.c.l.b16 %v240
      %v520 = vunpack.c.l.b16 %v241
      %v521 = vunpack.c.l.b16 %v242
      %v522 = vunpack.c.l.b16 %v243
      %v523 = vunpack.c.l.b16 %v244
      %v524 = vunpack.c.l.b16 %v245
      %v525 = vunpack.c.l.b16 %v246
      %v526 = vunpack.c.l.b16 %v247
      %v527 = vunpack.c.l.b16 %v248
      %v528 = vunpack.c.l.b16 %v249
      %v529 = vunpack.c.l.b16 %v250
      %v530 = vunpack.c.l.b16 %v251
      %v531 = vunpack.c.l.b16 %v252
      %v532 = vunpack.c.l.b16 %v253
      %v533 = vunpack.c.l.b16 %v254
      %v534 = vunpack.c.l.b16 %v255
      %v535 = vunpack.c.l.b16 %v256
      %v536 = vunpack.c.l.b16 %v257
      %v537 = vunpack.c.l.b16 %v258
      %v538 = vunpack.c.l.b16 %v259
      %v539 = vunpack.c.l.b16 %v260
      %v540 = vunpack.c.l.b16 %v261
      %v541 = vunpack.c.l.b16 %v262
      %v542 = vunpack.c.l.b16 %v263
      %v543 = vunpack.c.l.b16 %v264
      %v544 = vunpack.c.l.b16 %v265
      %v545 = vunpack.c.l.b16 %v266
      %v546 = vunpack.c.l.b16 %v267
      %v547 = vunpack.c.l.b16 %v268
      %v548 = vunpack.c.l.b16 %v269
      %v549 = vunpack.c.l.b16 %v270
      %v550 = vunpack.c.l.b16 %v271
      %v551 = vunpack.c.l.b16 %v272
      %v552 = vunpack.c.l.b16 %v273
      %v553 = vunpack.c.l.b16 %v274
      %v554 = vunpack.c.l.b16 %v275
      %v555 = vunpack.c.l.b16 %v276
      %v556 = vunpack.c.l.b16 %v277
      %v557 = vunpack.c.l.b16 %v278
      %v558 = vunpack.c.l.b16 %v279
      %v559 = vunpack.c.l.b16 %v280
      %v560 = vunpack.c.l.b16 %v281
      %v561 = vunpack.c.l.b16 %v282
      %v562 = vunpack.c.l.b16 %v283
      %v563 = vunpack.c.l.b16 %v284
      %v564 = vunpack.c.l.b16 %v285
      %v565 = vunpack.c.l.b16 %v286
      %v566 = vunpack.c.l.b16 %v287
      %v567 = vunpack.c.l.b16 %v288
      %v568 = vunpack.c.l.b16 %v289
      %v569 = vunpack.c.l.b16 %v290
      %v570 = vunpack.c.l.b16 %v291
      %v571 = vunpack.c.l.b16 %v292
      %v572 = vunpack.c.l.b16 %v293
      %v573 = vunpack.c.l.b16 %v294
      %v574 = vunpack.c.l.b16 %v295
      %v575 = vunpack.c.l.b16 %v296
      %v576 = vunpack.c.l.b16 %v297
      %v577 = vunpack.c.l.b16 %v298
      %v578 = vunpack.c.l.b16 %v299
      %v579 = vunpack.c.l.b16 %v300
      %v580 = vunpack.c.l.b16 %v301
      %v581 = vunpack.c.l.b16 %v302
      %v582 = vpack.c.b16 %v455, %v454
      %v583 = vpack.c.b16 %v457, %v456
      %v584 = vpack.c.b16 %v459, %v458
      %v585 = vpack.c.b16 %v461, %v460
      %v586 = vpack.c.b16 %v463, %v462
      %v587 = vpack.c.b16 %v465, %v464
      %v588 = vpack.c.b16 %v467, %v466
      %v589 = vpack.c.b16 %v469, %v468
      %v590 = vpack.c.b16 %v471, %v470
      %v591 = vpack.c.b16 %v473, %v472
      %v592 = vpack.c.b16 %v475, %v474
      %v593 = vpack.c.b16 %v477, %v476
      %v594 = vpack.c.b16 %v479, %v478
      %v595 = vpack.c.b16 %v481, %v480
      %v596 = vpack.c.b16 %v483, %v482
      %v597 = vpack.c.b16 %v485, %v484
      %v598 = vpack.c.b16 %v487, %v486
      %v599 = vpack.c.b16 %v489, %v488
      %v600 = vpack.c.b16 %v491, %v490
      %v601 = vpack.c.b16 %v493, %v492
      %v602 = vpack.c.b16 %v495, %v494
      %v603 = vpack.c.b16 %v497, %v496
      %v604 = vpack.c.b16 %v499, %v498
      %v605 = vpack.c.b16 %v501, %v500
      %v606 = vpack.c.b16 %v503, %v502
      %v607 = vpack.c.b16 %v505, %v504
      %v608 = vpack.c.b16 %v507, %v506
      %v609 = vpack.c.b16 %v509, %v508
      %v610 = vpack.c.b16 %v511, %v510
      %v611 = vpack.c.b16 %v513, %v512
      %v612 = vpack.c.b16 %v515, %v514
      %v613 = vpack.c.b16 %v517, %v516
      %v614 = vpack.c.b16 %v519, %v518
      %v615 = vpack.c.b16 %v521, %v520
      %v616 = vpack.c.b16 %v523, %v522
      %v617 = vpack.c.b16 %v525, %v524
      %v618 = vpack.c.b16 %v527, %v526
      %v619 = vpack.c.b16 %v529, %v528
      %v620 = vpack.c.b16 %v531, %v530
      %v621 = vpack.c.b16 %v533, %v532
      %v622 = vpack.c.b16 %v535, %v534
      %v623 = vpack.c.b16 %v537, %v536
      %v624 = vpack.c.b16 %v539, %v538
      %v625 = vpack.c.b16 %v541, %v540
      %v626 = vpack.c.b16 %v543, %v542
      %v627 = vpack.c.b16 %v545, %v544
      %v628 = vpack.c.b16 %v547, %v546
      %v629 = vpack.c.b16 %v549, %v548
      %v630 = vpack.c.b16 %v551, %v550
      %v631 = vpack.c.b16 %v553, %v552
      %v632 = vpack.c.b16 %v555, %v554
      %v633 = vpack.c.b16 %v557, %v556
      %v634 = vpack.c.b16 %v559, %v558
      %v635 = vpack.c.b16 %v561, %v560
      %v636 = vpack.c.b16 %v563, %v562
      %v637 = vpack.c.b16 %v565, %v564
      %v638 = vpack.c.b16 %v567, %v566
      %v639 = vpack.c.b16 %v569, %v568
      %v640 = vpack.c.b16 %v571, %v570
      %v641 = vpack.c.b16 %v573, %v572
      %v642 = vpack.c.b16 %v575, %v574
      %v643 = vpack.c.b16 %v577, %v576
      %v644 = vpack.c.b16 %v579, %v578
      %v645 = vpack.c.b16 %v581, %v580
      %v726 = vunpack.c.l.b16 %v303
      %v727 = vunpack.c.l.b16 %v304
      %v728 = vunpack.c.l.b16 %v305
      %v729 = vunpack.c.l.b16 %v306
      %v730 = vunpack.c.l.b16 %v307
      %v731 = vunpack.c.l.b16 %v308
      %v732 = vunpack.c.l.b16 %v309
      %v733 = vunpack.c.l.b16 %v310
      %v734 = vunpack.c.l.b16 %v311
      %v735 = vunpack.c.l.b16 %v312
      %v736 = vunpack.c.l.b16 %v313
      %v737 = vunpack.c.l.b16 %v314
      %v738 = vunpack.c.l.b16 %v315
      %v739 = vunpack.c.l.b16 %v316
      %v740 = vunpack.c.l.b16 %v317
      %v741 = vunpack.c.l.b16 %v318
      %v742 = vpack.c.b16 %v727, %v726
      %v743 = vpack.c.b16 %v729, %v728
      %v744 = vpack.c.b16 %v731, %v730
      %v745 = vpack.c.b16 %v733, %v732
      %v746 = vpack.c.b16 %v735, %v734
      %v747 = vpack.c.b16 %v737, %v736
      %v748 = vpack.c.b16 %v739, %v738
      %v749 = vpack.c.b16 %v741, %v740
      %758 = vmatprep.subr.bf16.mxu0 0
      %759 = vmatpush1.bf16.msra.mxu0 %v742
      %760 = vmatprep.subr.bf16.mxu0 0
      %761 = vmatpush1.bf16.msra.mxu0 %v743
      %762 = vmatprep.subr.bf16.mxu0 0
      %763 = vmatpush1.bf16.msra.mxu0 %v744
      %764 = vmatprep.subr.bf16.mxu0 0
      %765 = vmatpush1.bf16.msra.mxu0 %v745
      %766 = vmatprep.subr.bf16.mxu0 0
      %767 = vmatpush1.bf16.msra.mxu0 %v746
      %768 = vmatprep.subr.bf16.mxu0 0
      %769 = vmatpush1.bf16.msra.mxu0 %v747
      %770 = vmatprep.subr.bf16.mxu0 0
      %771 = vmatpush1.bf16.msra.mxu0 %v748
      %772 = vmatprep.subr.bf16.mxu0 0
      %773 = vmatpush1.bf16.msra.mxu0 %v749
      %774 = vmatprep.subr.bf16.mxu0 0
      %775 = vmatpush1.bf16.msra.mxu0 0
      %776 = vmatprep.subr.bf16.mxu0 0
      %777 = vmatpush1.bf16.msra.mxu0 0
      %778 = vmatprep.subr.bf16.mxu0 0
      %779 = vmatpush1.bf16.msra.mxu0 0
      %780 = vmatprep.subr.bf16.mxu0 0
      %781 = vmatpush1.bf16.msra.mxu0 0
      %782 = vmatprep.subr.bf16.mxu0 0
      %783 = vmatpush1.bf16.msra.mxu0 0
      %784 = vmatprep.subr.bf16.mxu0 0
      %785 = vmatpush1.bf16.msra.mxu0 0
      %786 = vmatprep.subr.bf16.mxu0 0
      %787 = vmatpush1.bf16.msra.mxu0 0
      %788 = vmatprep.subr.bf16.mxu0 0
      %789 = vmatpush1.bf16.msra.mxu0 0
      %790 = vmatprep.mubr.bf16.mxu0 0
      %791 = vmatmul.mubr.bf16.gmra.mrb[0].mxu0 %v582
      %v792 = vpop.f32.mrb[0].mxu0
      %v793 = vadd.f32 %v324, %v792
      %v794 = vpop.f32.mrb[0].mxu0
      %v795 = vpop.f32.mrb[0].mxu0
      %v796 = vadd.f32 %v324, %v795
      %v797 = vpop.f32.mrb[0].mxu0
      %798 = vmatprep.mubr.bf16.mxu0 0
      %799 = vmatmul.mubr.bf16.gmra.mrb[0].mxu0 %v583
      %v800 = vpop.f32.mrb[0].mxu0
      %v801 = vadd.f32 %v324, %v800
      %v802 = vpop.f32.mrb[0].mxu0
      %v803 = vpop.f32.mrb[0].mxu0
      %v804 = vadd.f32 %v324, %v803
      %v805 = vpop.f32.mrb[0].mxu0
      %806 = vmatprep.mubr.bf16.mxu0 0
      %807 = vmatmul.mubr.bf16.gmra.mrb[0].mxu0 %v584
      %v808 = vpop.f32.mrb[0].mxu0
      %v809 = vadd.f32 %v324, %v808
      %v810 = vpop.f32.mrb[0].mxu0
      %v811 = vpop.f32.mrb[0].mxu0
      %v812 = vadd.f32 %v324, %v811
      %v813 = vpop.f32.mrb[0].mxu0
      %814 = vmatprep.mubr.bf16.mxu0 0
      %815 = vmatmul.mubr.bf16.gmra.mrb[0].mxu0 %v585
      %v816 = vpop.f32.mrb[0].mxu0
      %v817 = vadd.f32 %v324, %v816
      %v818 = vpop.f32.mrb[0].mxu0
      %v819 = vpop.f32.mrb[0].mxu0
      %v820 = vadd.f32 %v324, %v819
      %v821 = vpop.f32.mrb[0].mxu0
      %822 = vmatprep.mubr.bf16.mxu0 0
      %823 = vmatmul.mubr.bf16.gmra.mrb[0].mxu0 %v586
      %v824 = vpop.f32.mrb[0].mxu0
      %v825 = vadd.f32 %v324, %v824
      %v826 = vpop.f32.mrb[0].mxu0
      %v827 = vpop.f32.mrb[0].mxu0
      %v828 = vadd.f32 %v324, %v827
      %v829 = vpop.f32.mrb[0].mxu0
      %830 = vmatprep.mubr.bf16.mxu0 0
      %831 = vmatmul.mubr.bf16.gmra.mrb[0].mxu0 %v587
      %v832 = vpop.f32.mrb[0].mxu0
      %v833 = vadd.f32 %v324, %v832
      %v834 = vpop.f32.mrb[0].mxu0
      %v835 = vpop.f32.mrb[0].mxu0
      %v836 = vadd.f32 %v324, %v835
      %v837 = vpop.f32.mrb[0].mxu0
      %838 = vmatprep.mubr.bf16.mxu0 0
      %839 = vmatmul.mubr.bf16.gmra.mrb[0].mxu0 %v588
      %v840 = vpop.f32.mrb[0].mxu0
      %v841 = vadd.f32 %v324, %v840
      %v842 = vpop.f32.mrb[0].mxu0
      %v843 = vpop.f32.mrb[0].mxu0
      %v844 = vadd.f32 %v324, %v843
      %v845 = vpop.f32.mrb[0].mxu0
      %846 = vmatprep.mubr.bf16.mxu0 0
      %847 = vmatmul.mubr.bf16.gmra.mrb[0].mxu0 %v589
      %v848 = vpop.f32.mrb[0].mxu0
      %v849 = vadd.f32 %v324, %v848
      %v850 = vpop.f32.mrb[0].mxu0
      %v851 = vpop.f32.mrb[0].mxu0
      %v852 = vadd.f32 %v324, %v851
      %v853 = vpop.f32.mrb[0].mxu0
      %854 = vmatprep.mubr.bf16.mxu0 0
      %855 = vmatmul.mubr.bf16.gmra.mrb[0].mxu0 %v590
      %v856 = vpop.f32.mrb[0].mxu0
      %v857 = vadd.f32 %v324, %v856
      %v858 = vpop.f32.mrb[0].mxu0
      %v859 = vpop.f32.mrb[0].mxu0
      %v860 = vadd.f32 %v324, %v859
      %v861 = vpop.f32.mrb[0].mxu0
      %862 = vmatprep.mubr.bf16.mxu0 0
      %863 = vmatmul.mubr.bf16.gmra.mrb[0].mxu0 %v591
      %v864 = vpop.f32.mrb[0].mxu0
      %v865 = vadd.f32 %v324, %v864
      %v866 = vpop.f32.mrb[0].mxu0
      %v867 = vpop.f32.mrb[0].mxu0
      %v868 = vadd.f32 %v324, %v867
      %v869 = vpop.f32.mrb[0].mxu0
      %870 = vmatprep.mubr.bf16.mxu0 0
      %871 = vmatmul.mubr.bf16.gmra.mrb[0].mxu0 %v592
      %v872 = vpop.f32.mrb[0].mxu0
      %v873 = vadd.f32 %v324, %v872
      %v874 = vpop.f32.mrb[0].mxu0
      %v875 = vpop.f32.mrb[0].mxu0
      %v876 = vadd.f32 %v324, %v875
      %v877 = vpop.f32.mrb[0].mxu0
      %878 = vmatprep.mubr.bf16.mxu0 0
      %879 = vmatmul.mubr.bf16.gmra.mrb[0].mxu0 %v593
      %v880 = vpop.f32.mrb[0].mxu0
      %v881 = vadd.f32 %v324, %v880
      %v882 = vpop.f32.mrb[0].mxu0
      %v883 = vpop.f32.mrb[0].mxu0
      %v884 = vadd.f32 %v324, %v883
      %v885 = vpop.f32.mrb[0].mxu0
      %886 = vmatprep.mubr.bf16.mxu0 0
      %887 = vmatmul.mubr.bf16.gmra.mrb[0].mxu0 %v594
      %v888 = vpop.f32.mrb[0].mxu0
      %v889 = vadd.f32 %v324, %v888
      %v890 = vpop.f32.mrb[0].mxu0
      %v891 = vpop.f32.mrb[0].mxu0
      %v892 = vadd.f32 %v324, %v891
      %v893 = vpop.f32.mrb[0].mxu0
      %894 = vmatprep.mubr.bf16.mxu0 0
      %895 = vmatmul.mubr.bf16.gmra.mrb[0].mxu0 %v595
      %v896 = vpop.f32.mrb[0].mxu0
      %v897 = vadd.f32 %v324, %v896
      %v898 = vpop.f32.mrb[0].mxu0
      %v899 = vpop.f32.mrb[0].mxu0
      %v900 = vadd.f32 %v324, %v899
      %v901 = vpop.f32.mrb[0].mxu0
      %902 = vmatprep.mubr.bf16.mxu0 0
      %903 = vmatmul.mubr.bf16.gmra.mrb[0].mxu0 %v596
      %v904 = vpop.f32.mrb[0].mxu0
      %v905 = vadd.f32 %v324, %v904
      %v906 = vpop.f32.mrb[0].mxu0
      %v907 = vpop.f32.mrb[0].mxu0
      %v908 = vadd.f32 %v324, %v907
      %v909 = vpop.f32.mrb[0].mxu0
      %910 = vmatprep.mubr.bf16.mxu0 0
      %911 = vmatmul.mubr.bf16.gmra.mrb[0].mxu0 %v597
      %v912 = vpop.f32.mrb[0].mxu0
      %v913 = vadd.f32 %v324, %v912
      %v914 = vpop.f32.mrb[0].mxu0
      %v915 = vpop.f32.mrb[0].mxu0
      %v916 = vadd.f32 %v324, %v915
      %v917 = vpop.f32.mrb[0].mxu0
      %918 = vmatprep.mubr.bf16.mxu0 0
      %919 = vmatmul.mubr.bf16.gmra.mrb[0].mxu0 %v598
      %v920 = vpop.f32.mrb[0].mxu0
      %v921 = vadd.f32 %v324, %v920
      %v922 = vpop.f32.mrb[0].mxu0
      %v923 = vpop.f32.mrb[0].mxu0
      %v924 = vadd.f32 %v324, %v923
      %v925 = vpop.f32.mrb[0].mxu0
      %926 = vmatprep.mubr.bf16.mxu0 0
      %927 = vmatmul.mubr.bf16.gmra.mrb[0].mxu0 %v599
      %v928 = vpop.f32.mrb[0].mxu0
      %v929 = vadd.f32 %v324, %v928
      %v930 = vpop.f32.mrb[0].mxu0
      %v931 = vpop.f32.mrb[0].mxu0
      %v932 = vadd.f32 %v324, %v931
      %v933 = vpop.f32.mrb[0].mxu0
      %934 = vmatprep.mubr.bf16.mxu0 0
      %935 = vmatmul.mubr.bf16.gmra.mrb[0].mxu0 %v600
      %v936 = vpop.f32.mrb[0].mxu0
      %v937 = vadd.f32 %v324, %v936
      %v938 = vpop.f32.mrb[0].mxu0
      %v939 = vpop.f32.mrb[0].mxu0
      %v940 = vadd.f32 %v324, %v939
      %v941 = vpop.f32.mrb[0].mxu0
      %942 = vmatprep.mubr.bf16.mxu0 0
      %943 = vmatmul.mubr.bf16.gmra.mrb[0].mxu0 %v601
      %v944 = vpop.f32.mrb[0].mxu0
      %v945 = vadd.f32 %v324, %v944
      %v946 = vpop.f32.mrb[0].mxu0
      %v947 = vpop.f32.mrb[0].mxu0
      %v948 = vadd.f32 %v324, %v947
      %v949 = vpop.f32.mrb[0].mxu0
      %950 = vmatprep.mubr.bf16.mxu0 0
      %951 = vmatmul.mubr.bf16.gmra.mrb[0].mxu0 %v602
      %v952 = vpop.f32.mrb[0].mxu0
      %v953 = vadd.f32 %v324, %v952
      %v954 = vpop.f32.mrb[0].mxu0
      %v955 = vpop.f32.mrb[0].mxu0
      %v956 = vadd.f32 %v324, %v955
      %v957 = vpop.f32.mrb[0].mxu0
      %958 = vmatprep.mubr.bf16.mxu0 0
      %959 = vmatmul.mubr.bf16.gmra.mrb[0].mxu0 %v603
      %v960 = vpop.f32.mrb[0].mxu0
      %v961 = vadd.f32 %v324, %v960
      %v962 = vpop.f32.mrb[0].mxu0
      %v963 = vpop.f32.mrb[0].mxu0
      %v964 = vadd.f32 %v324, %v963
      %v965 = vpop.f32.mrb[0].mxu0
      %966 = vmatprep.mubr.bf16.mxu0 0
      %967 = vmatmul.mubr.bf16.gmra.mrb[0].mxu0 %v604
      %v968 = vpop.f32.mrb[0].mxu0
      %v969 = vadd.f32 %v324, %v968
      %v970 = vpop.f32.mrb[0].mxu0
      %v971 = vpop.f32.mrb[0].mxu0
      %v972 = vadd.f32 %v324, %v971
      %v973 = vpop.f32.mrb[0].mxu0
      %974 = vmatprep.mubr.bf16.mxu0 0
      %975 = vmatmul.mubr.bf16.gmra.mrb[0].mxu0 %v605
      %v976 = vpop.f32.mrb[0].mxu0
      %v977 = vadd.f32 %v324, %v976
      %v978 = vpop.f32.mrb[0].mxu0
      %v979 = vpop.f32.mrb[0].mxu0
      %v980 = vadd.f32 %v324, %v979
      %v981 = vpop.f32.mrb[0].mxu0
      %982 = vmatprep.mubr.bf16.mxu0 0
      %983 = vmatmul.mubr.bf16.gmra.mrb[0].mxu0 %v606
      %v984 = vpop.f32.mrb[0].mxu0
      %v985 = vadd.f32 %v324, %v984
      %v986 = vpop.f32.mrb[0].mxu0
      %v987 = vpop.f32.mrb[0].mxu0
      %v988 = vadd.f32 %v324, %v987
      %v989 = vpop.f32.mrb[0].mxu0
      %990 = vmatprep.mubr.bf16.mxu0 0
      %991 = vmatmul.mubr.bf16.gmra.mrb[0].mxu0 %v607
      %v992 = vpop.f32.mrb[0].mxu0
      %v993 = vadd.f32 %v324, %v992
      %v994 = vpop.f32.mrb[0].mxu0
      %v995 = vpop.f32.mrb[0].mxu0
      %v996 = vadd.f32 %v324, %v995
      %v997 = vpop.f32.mrb[0].mxu0
      %998 = vmatprep.mubr.bf16.mxu0 0
      %999 = vmatmul.mubr.bf16.gmra.mrb[0].mxu0 %v608
      %v1000 = vpop.f32.mrb[0].mxu0
      %v1001 = vadd.f32 %v324, %v1000
      %v1002 = vpop.f32.mrb[0].mxu0
      %v1003 = vpop.f32.mrb[0].mxu0
      %v1004 = vadd.f32 %v324, %v1003
      %v1005 = vpop.f32.mrb[0].mxu0
      %1006 = vmatprep.mubr.bf16.mxu0 0
      %1007 = vmatmul.mubr.bf16.gmra.mrb[0].mxu0 %v609
      %v1008 = vpop.f32.mrb[0].mxu0
      %v1009 = vadd.f32 %v324, %v1008
      %v1010 = vpop.f32.mrb[0].mxu0
      %v1011 = vpop.f32.mrb[0].mxu0
      %v1012 = vadd.f32 %v324, %v1011
      %v1013 = vpop.f32.mrb[0].mxu0
      %1014 = vmatprep.mubr.bf16.mxu0 0
      %1015 = vmatmul.mubr.bf16.gmra.mrb[0].mxu0 %v610
      %v1016 = vpop.f32.mrb[0].mxu0
      %v1017 = vadd.f32 %v324, %v1016
      %v1018 = vpop.f32.mrb[0].mxu0
      %v1019 = vpop.f32.mrb[0].mxu0
      %v1020 = vadd.f32 %v324, %v1019
      %v1021 = vpop.f32.mrb[0].mxu0
      %1022 = vmatprep.mubr.bf16.mxu0 0
      %1023 = vmatmul.mubr.bf16.gmra.mrb[0].mxu0 %v611
      %v1024 = vpop.f32.mrb[0].mxu0
      %v1025 = vadd.f32 %v324, %v1024
      %v1026 = vpop.f32.mrb[0].mxu0
      %v1027 = vpop.f32.mrb[0].mxu0
      %v1028 = vadd.f32 %v324, %v1027
      %v1029 = vpop.f32.mrb[0].mxu0
      %1030 = vmatprep.mubr.bf16.mxu0 0
      %1031 = vmatmul.mubr.bf16.gmra.mrb[0].mxu0 %v612
      %v1032 = vpop.f32.mrb[0].mxu0
      %v1033 = vadd.f32 %v324, %v1032
      %v1034 = vpop.f32.mrb[0].mxu0
      %v1035 = vpop.f32.mrb[0].mxu0
      %v1036 = vadd.f32 %v324, %v1035
      %v1037 = vpop.f32.mrb[0].mxu0
      %1038 = vmatprep.mubr.bf16.mxu0 0
      %1039 = vmatmul.mubr.bf16.gmra.mrb[0].mxu0 %v613
      %v1040 = vpop.f32.mrb[0].mxu0
      %v1041 = vadd.f32 %v324, %v1040
      %v1042 = vpop.f32.mrb[0].mxu0
      %v1043 = vpop.f32.mrb[0].mxu0
      %v1044 = vadd.f32 %v324, %v1043
      %v1045 = vpop.f32.mrb[0].mxu0
      %1046 = vmatprep.mubr.bf16.mxu0 0
      %1047 = vmatmul.mubr.bf16.gmra.mrb[0].mxu0 %v614
      %v1048 = vpop.f32.mrb[0].mxu0
      %v1049 = vadd.f32 %v324, %v1048
      %v1050 = vpop.f32.mrb[0].mxu0
      %v1051 = vpop.f32.mrb[0].mxu0
      %v1052 = vadd.f32 %v324, %v1051
      %v1053 = vpop.f32.mrb[0].mxu0
      %1054 = vmatprep.mubr.bf16.mxu0 0
      %1055 = vmatmul.mubr.bf16.gmra.mrb[0].mxu0 %v615
      %v1056 = vpop.f32.mrb[0].mxu0
      %v1057 = vadd.f32 %v324, %v1056
      %v1058 = vpop.f32.mrb[0].mxu0
      %v1059 = vpop.f32.mrb[0].mxu0
      %v1060 = vadd.f32 %v324, %v1059
      %v1061 = vpop.f32.mrb[0].mxu0
      %1062 = vmatprep.mubr.bf16.mxu0 0
      %1063 = vmatmul.mubr.bf16.gmra.mrb[0].mxu0 %v616
      %v1064 = vpop.f32.mrb[0].mxu0
      %v1065 = vadd.f32 %v324, %v1064
      %v1066 = vpop.f32.mrb[0].mxu0
      %v1067 = vpop.f32.mrb[0].mxu0
      %v1068 = vadd.f32 %v324, %v1067
      %v1069 = vpop.f32.mrb[0].mxu0
      %1070 = vmatprep.mubr.bf16.mxu0 0
      %1071 = vmatmul.mubr.bf16.gmra.mrb[0].mxu0 %v617
      %v1072 = vpop.f32.mrb[0].mxu0
      %v1073 = vadd.f32 %v324, %v1072
      %v1074 = vpop.f32.mrb[0].mxu0
      %v1075 = vpop.f32.mrb[0].mxu0
      %v1076 = vadd.f32 %v324, %v1075
      %v1077 = vpop.f32.mrb[0].mxu0
      %1078 = vmatprep.mubr.bf16.mxu0 0
      %1079 = vmatmul.mubr.bf16.gmra.mrb[0].mxu0 %v618
      %v1080 = vpop.f32.mrb[0].mxu0
      %v1081 = vadd.f32 %v324, %v1080
      %v1082 = vpop.f32.mrb[0].mxu0
      %v1083 = vpop.f32.mrb[0].mxu0
      %v1084 = vadd.f32 %v324, %v1083
      %v1085 = vpop.f32.mrb[0].mxu0
      %1086 = vmatprep.mubr.bf16.mxu0 0
      %1087 = vmatmul.mubr.bf16.gmra.mrb[0].mxu0 %v619
      %v1088 = vpop.f32.mrb[0].mxu0
      %v1089 = vadd.f32 %v324, %v1088
      %v1090 = vpop.f32.mrb[0].mxu0
      %v1091 = vpop.f32.mrb[0].mxu0
      %v1092 = vadd.f32 %v324, %v1091
      %v1093 = vpop.f32.mrb[0].mxu0
      %1094 = vmatprep.mubr.bf16.mxu0 0
      %1095 = vmatmul.mubr.bf16.gmra.mrb[0].mxu0 %v620
      %v1096 = vpop.f32.mrb[0].mxu0
      %v1097 = vadd.f32 %v324, %v1096
      %v1098 = vpop.f32.mrb[0].mxu0
      %v1099 = vpop.f32.mrb[0].mxu0
      %v1100 = vadd.f32 %v324, %v1099
      %v1101 = vpop.f32.mrb[0].mxu0
      %1102 = vmatprep.mubr.bf16.mxu0 0
      %1103 = vmatmul.mubr.bf16.gmra.mrb[0].mxu0 %v621
      %v1104 = vpop.f32.mrb[0].mxu0
      %v1105 = vadd.f32 %v324, %v1104
      %v1106 = vpop.f32.mrb[0].mxu0
      %v1107 = vpop.f32.mrb[0].mxu0
      %v1108 = vadd.f32 %v324, %v1107
      %v1109 = vpop.f32.mrb[0].mxu0
      %1110 = vmatprep.mubr.bf16.mxu0 0
      %1111 = vmatmul.mubr.bf16.gmra.mrb[0].mxu0 %v622
      %v1112 = vpop.f32.mrb[0].mxu0
      %v1113 = vadd.f32 %v324, %v1112
      %v1114 = vpop.f32.mrb[0].mxu0
      %v1115 = vpop.f32.mrb[0].mxu0
      %v1116 = vadd.f32 %v324, %v1115
      %v1117 = vpop.f32.mrb[0].mxu0
      %1118 = vmatprep.mubr.bf16.mxu0 0
      %1119 = vmatmul.mubr.bf16.gmra.mrb[0].mxu0 %v623
      %v1120 = vpop.f32.mrb[0].mxu0
      %v1121 = vadd.f32 %v324, %v1120
      %v1122 = vpop.f32.mrb[0].mxu0
      %v1123 = vpop.f32.mrb[0].mxu0
      %v1124 = vadd.f32 %v324, %v1123
      %v1125 = vpop.f32.mrb[0].mxu0
      %1126 = vmatprep.mubr.bf16.mxu0 0
      %1127 = vmatmul.mubr.bf16.gmra.mrb[0].mxu0 %v624
      %v1128 = vpop.f32.mrb[0].mxu0
      %v1129 = vadd.f32 %v324, %v1128
      %v1130 = vpop.f32.mrb[0].mxu0
      %v1131 = vpop.f32.mrb[0].mxu0
      %v1132 = vadd.f32 %v324, %v1131
      %v1133 = vpop.f32.mrb[0].mxu0
      %1134 = vmatprep.mubr.bf16.mxu0 0
      %1135 = vmatmul.mubr.bf16.gmra.mrb[0].mxu0 %v625
      %v1136 = vpop.f32.mrb[0].mxu0
      %v1137 = vadd.f32 %v324, %v1136
      %v1138 = vpop.f32.mrb[0].mxu0
      %v1139 = vpop.f32.mrb[0].mxu0
      %v1140 = vadd.f32 %v324, %v1139
      %v1141 = vpop.f32.mrb[0].mxu0
      %1142 = vmatprep.mubr.bf16.mxu0 0
      %1143 = vmatmul.mubr.bf16.gmra.mrb[0].mxu0 %v626
      %v1144 = vpop.f32.mrb[0].mxu0
      %v1145 = vadd.f32 %v324, %v1144
      %v1146 = vpop.f32.mrb[0].mxu0
      %v1147 = vpop.f32.mrb[0].mxu0
      %v1148 = vadd.f32 %v324, %v1147
      %v1149 = vpop.f32.mrb[0].mxu0
      %1150 = vmatprep.mubr.bf16.mxu0 0
      %1151 = vmatmul.mubr.bf16.gmra.mrb[0].mxu0 %v627
      %v1152 = vpop.f32.mrb[0].mxu0
      %v1153 = vadd.f32 %v324, %v1152
      %v1154 = vpop.f32.mrb[0].mxu0
      %v1155 = vpop.f32.mrb[0].mxu0
      %v1156 = vadd.f32 %v324, %v1155
      %v1157 = vpop.f32.mrb[0].mxu0
      %1158 = vmatprep.mubr.bf16.mxu0 0
      %1159 = vmatmul.mubr.bf16.gmra.mrb[0].mxu0 %v628
      %v1160 = vpop.f32.mrb[0].mxu0
      %v1161 = vadd.f32 %v324, %v1160
      %v1162 = vpop.f32.mrb[0].mxu0
      %v1163 = vpop.f32.mrb[0].mxu0
      %v1164 = vadd.f32 %v324, %v1163
      %v1165 = vpop.f32.mrb[0].mxu0
      %1166 = vmatprep.mubr.bf16.mxu0 0
      %1167 = vmatmul.mubr.bf16.gmra.mrb[0].mxu0 %v629
      %v1168 = vpop.f32.mrb[0].mxu0
      %v1169 = vadd.f32 %v324, %v1168
      %v1170 = vpop.f32.mrb[0].mxu0
      %v1171 = vpop.f32.mrb[0].mxu0
      %v1172 = vadd.f32 %v324, %v1171
      %v1173 = vpop.f32.mrb[0].mxu0
      %1174 = vmatprep.mubr.bf16.mxu0 0
      %1175 = vmatmul.mubr.bf16.gmra.mrb[0].mxu0 %v630
      %v1176 = vpop.f32.mrb[0].mxu0
      %v1177 = vadd.f32 %v324, %v1176
      %v1178 = vpop.f32.mrb[0].mxu0
      %v1179 = vpop.f32.mrb[0].mxu0
      %v1180 = vadd.f32 %v324, %v1179
      %v1181 = vpop.f32.mrb[0].mxu0
      %1182 = vmatprep.mubr.bf16.mxu0 0
      %1183 = vmatmul.mubr.bf16.gmra.mrb[0].mxu0 %v631
      %v1184 = vpop.f32.mrb[0].mxu0
      %v1185 = vadd.f32 %v324, %v1184
      %v1186 = vpop.f32.mrb[0].mxu0
      %v1187 = vpop.f32.mrb[0].mxu0
      %v1188 = vadd.f32 %v324, %v1187
      %v1189 = vpop.f32.mrb[0].mxu0
      %1190 = vmatprep.mubr.bf16.mxu0 0
      %1191 = vmatmul.mubr.bf16.gmra.mrb[0].mxu0 %v632
      %v1192 = vpop.f32.mrb[0].mxu0
      %v1193 = vadd.f32 %v324, %v1192
      %v1194 = vpop.f32.mrb[0].mxu0
      %v1195 = vpop.f32.mrb[0].mxu0
      %v1196 = vadd.f32 %v324, %v1195
      %v1197 = vpop.f32.mrb[0].mxu0
      %1198 = vmatprep.mubr.bf16.mxu0 0
      %1199 = vmatmul.mubr.bf16.gmra.mrb[0].mxu0 %v633
      %v1200 = vpop.f32.mrb[0].mxu0
      %v1201 = vadd.f32 %v324, %v1200
      %v1202 = vpop.f32.mrb[0].mxu0
      %v1203 = vpop.f32.mrb[0].mxu0
      %v1204 = vadd.f32 %v324, %v1203
      %v1205 = vpop.f32.mrb[0].mxu0
      %1206 = vmatprep.mubr.bf16.mxu0 0
      %1207 = vmatmul.mubr.bf16.gmra.mrb[0].mxu0 %v634
      %v1208 = vpop.f32.mrb[0].mxu0
      %v1209 = vadd.f32 %v324, %v1208
      %v1210 = vpop.f32.mrb[0].mxu0
      %v1211 = vpop.f32.mrb[0].mxu0
      %v1212 = vadd.f32 %v324, %v1211
      %v1213 = vpop.f32.mrb[0].mxu0
      %1214 = vmatprep.mubr.bf16.mxu0 0
      %1215 = vmatmul.mubr.bf16.gmra.mrb[0].mxu0 %v635
      %v1216 = vpop.f32.mrb[0].mxu0
      %v1217 = vadd.f32 %v324, %v1216
      %v1218 = vpop.f32.mrb[0].mxu0
      %v1219 = vpop.f32.mrb[0].mxu0
      %v1220 = vadd.f32 %v324, %v1219
      %v1221 = vpop.f32.mrb[0].mxu0
      %1222 = vmatprep.mubr.bf16.mxu0 0
      %1223 = vmatmul.mubr.bf16.gmra.mrb[0].mxu0 %v636
      %v1224 = vpop.f32.mrb[0].mxu0
      %v1225 = vadd.f32 %v324, %v1224
      %v1226 = vpop.f32.mrb[0].mxu0
      %v1227 = vpop.f32.mrb[0].mxu0
      %v1228 = vadd.f32 %v324, %v1227
      %v1229 = vpop.f32.mrb[0].mxu0
      %1230 = vmatprep.mubr.bf16.mxu0 0
      %1231 = vmatmul.mubr.bf16.gmra.mrb[0].mxu0 %v637
      %v1232 = vpop.f32.mrb[0].mxu0
      %v1233 = vadd.f32 %v324, %v1232
      %v1234 = vpop.f32.mrb[0].mxu0
      %v1235 = vpop.f32.mrb[0].mxu0
      %v1236 = vadd.f32 %v324, %v1235
      %v1237 = vpop.f32.mrb[0].mxu0
      %1238 = vmatprep.mubr.bf16.mxu0 0
      %1239 = vmatmul.mubr.bf16.gmra.mrb[0].mxu0 %v638
      %v1240 = vpop.f32.mrb[0].mxu0
      %v1241 = vadd.f32 %v324, %v1240
      %v1242 = vpop.f32.mrb[0].mxu0
      %v1243 = vpop.f32.mrb[0].mxu0
      %v1244 = vadd.f32 %v324, %v1243
      %v1245 = vpop.f32.mrb[0].mxu0
      %1246 = vmatprep.mubr.bf16.mxu0 0
      %1247 = vmatmul.mubr.bf16.gmra.mrb[0].mxu0 %v639
      %v1248 = vpop.f32.mrb[0].mxu0
      %v1249 = vadd.f32 %v324, %v1248
      %v1250 = vpop.f32.mrb[0].mxu0
      %v1251 = vpop.f32.mrb[0].mxu0
      %v1252 = vadd.f32 %v324, %v1251
      %v1253 = vpop.f32.mrb[0].mxu0
      %1254 = vmatprep.mubr.bf16.mxu0 0
      %1255 = vmatmul.mubr.bf16.gmra.mrb[0].mxu0 %v640
      %v1256 = vpop.f32.mrb[0].mxu0
      %v1257 = vadd.f32 %v324, %v1256
      %v1258 = vpop.f32.mrb[0].mxu0
      %v1259 = vpop.f32.mrb[0].mxu0
      %v1260 = vadd.f32 %v324, %v1259
      %v1261 = vpop.f32.mrb[0].mxu0
      %1262 = vmatprep.mubr.bf16.mxu0 0
      %1263 = vmatmul.mubr.bf16.gmra.mrb[0].mxu0 %v641
      %v1264 = vpop.f32.mrb[0].mxu0
      %v1265 = vadd.f32 %v324, %v1264
      %v1266 = vpop.f32.mrb[0].mxu0
      %v1267 = vpop.f32.mrb[0].mxu0
      %v1268 = vadd.f32 %v324, %v1267
      %v1269 = vpop.f32.mrb[0].mxu0
      %1270 = vmatprep.mubr.bf16.mxu0 0
      %1271 = vmatmul.mubr.bf16.gmra.mrb[0].mxu0 %v642
      %v1272 = vpop.f32.mrb[0].mxu0
      %v1273 = vadd.f32 %v324, %v1272
      %v1274 = vpop.f32.mrb[0].mxu0
      %v1275 = vpop.f32.mrb[0].mxu0
      %v1276 = vadd.f32 %v324, %v1275
      %v1277 = vpop.f32.mrb[0].mxu0
      %1278 = vmatprep.mubr.bf16.mxu0 0
      %1279 = vmatmul.mubr.bf16.gmra.mrb[0].mxu0 %v643
      %v1280 = vpop.f32.mrb[0].mxu0
      %v1281 = vadd.f32 %v324, %v1280
      %v1282 = vpop.f32.mrb[0].mxu0
      %v1283 = vpop.f32.mrb[0].mxu0
      %v1284 = vadd.f32 %v324, %v1283
      %v1285 = vpop.f32.mrb[0].mxu0
      %1286 = vmatprep.mubr.bf16.mxu0 0
      %1287 = vmatmul.mubr.bf16.gmra.mrb[0].mxu0 %v644
      %v1288 = vpop.f32.mrb[0].mxu0
      %v1289 = vadd.f32 %v324, %v1288
      %v1290 = vpop.f32.mrb[0].mxu0
      %v1291 = vpop.f32.mrb[0].mxu0
      %v1292 = vadd.f32 %v324, %v1291
      %v1293 = vpop.f32.mrb[0].mxu0
      %1294 = vmatprep.mubr.bf16.mxu0 0
      %1295 = vmatmul.mubr.bf16.gmra.mrb[0].mxu0 %v645
      %v1296 = vpop.f32.mrb[0].mxu0
      %v1297 = vadd.f32 %v324, %v1296
      %v1298 = vpop.f32.mrb[0].mxu0
      %v1299 = vpop.f32.mrb[0].mxu0
      %v1300 = vadd.f32 %v324, %v1299
      %v1301 = vpop.f32.mrb[0].mxu0
      %1302 = vdwg.mxu0
      %v1303 = vmax.f32 %v793, 0.0
      %v1304 = vmax.f32 %v796, 0.0
      %v1305 = vmax.f32 %v801, 0.0
      %v1306 = vmax.f32 %v804, 0.0
      %v1307 = vmax.f32 %v809, 0.0
      %v1308 = vmax.f32 %v812, 0.0
      %v1309 = vmax.f32 %v817, 0.0
      %v1310 = vmax.f32 %v820, 0.0
      %v1311 = vmax.f32 %v825, 0.0
      %v1312 = vmax.f32 %v828, 0.0
      %v1313 = vmax.f32 %v833, 0.0
      %v1314 = vmax.f32 %v836, 0.0
      %v1315 = vmax.f32 %v841, 0.0
      %v1316 = vmax.f32 %v844, 0.0
      %v1317 = vmax.f32 %v849, 0.0
      %v1318 = vmax.f32 %v852, 0.0
      %v1319 = vmax.f32 %v857, 0.0
      %v1320 = vmax.f32 %v860, 0.0
      %v1321 = vmax.f32 %v865, 0.0
      %v1322 = vmax.f32 %v868, 0.0
      %v1323 = vmax.f32 %v873, 0.0
      %v1324 = vmax.f32 %v876, 0.0
      %v1325 = vmax.f32 %v881, 0.0
      %v1326 = vmax.f32 %v884, 0.0
      %v1327 = vmax.f32 %v889, 0.0
      %v1328 = vmax.f32 %v892, 0.0
      %v1329 = vmax.f32 %v897, 0.0
      %v1330 = vmax.f32 %v900, 0.0
      %v1331 = vmax.f32 %v905, 0.0
      %v1332 = vmax.f32 %v908, 0.0
      %v1333 = vmax.f32 %v913, 0.0
      %v1334 = vmax.f32 %v916, 0.0
      %v1335 = vmax.f32 %v921, 0.0
      %v1336 = vmax.f32 %v924, 0.0
      %v1337 = vmax.f32 %v929, 0.0
      %v1338 = vmax.f32 %v932, 0.0
      %v1339 = vmax.f32 %v937, 0.0
      %v1340 = vmax.f32 %v940, 0.0
      %v1341 = vmax.f32 %v945, 0.0
      %v1342 = vmax.f32 %v948, 0.0
      %v1343 = vmax.f32 %v953, 0.0
      %v1344 = vmax.f32 %v956, 0.0
      %v1345 = vmax.f32 %v961, 0.0
      %v1346 = vmax.f32 %v964, 0.0
      %v1347 = vmax.f32 %v969, 0.0
      %v1348 = vmax.f32 %v972, 0.0
      %v1349 = vmax.f32 %v977, 0.0
      %v1350 = vmax.f32 %v980, 0.0
      %v1351 = vmax.f32 %v985, 0.0
      %v1352 = vmax.f32 %v988, 0.0
      %v1353 = vmax.f32 %v993, 0.0
      %v1354 = vmax.f32 %v996, 0.0
      %v1355 = vmax.f32 %v1001, 0.0
      %v1356 = vmax.f32 %v1004, 0.0
      %v1357 = vmax.f32 %v1009, 0.0
      %v1358 = vmax.f32 %v1012, 0.0
      %v1359 = vmax.f32 %v1017, 0.0
      %v1360 = vmax.f32 %v1020, 0.0
      %v1361 = vmax.f32 %v1025, 0.0
      %v1362 = vmax.f32 %v1028, 0.0
      %v1363 = vmax.f32 %v1033, 0.0
      %v1364 = vmax.f32 %v1036, 0.0
      %v1365 = vmax.f32 %v1041, 0.0
      %v1366 = vmax.f32 %v1044, 0.0
      %v1367 = vmax.f32 %v1049, 0.0
      %v1368 = vmax.f32 %v1052, 0.0
      %v1369 = vmax.f32 %v1057, 0.0
      %v1370 = vmax.f32 %v1060, 0.0
      %v1371 = vmax.f32 %v1065, 0.0
      %v1372 = vmax.f32 %v1068, 0.0
      %v1373 = vmax.f32 %v1073, 0.0
      %v1374 = vmax.f32 %v1076, 0.0
      %v1375 = vmax.f32 %v1081, 0.0
      %v1376 = vmax.f32 %v1084, 0.0
      %v1377 = vmax.f32 %v1089, 0.0
      %v1378 = vmax.f32 %v1092, 0.0
      %v1379 = vmax.f32 %v1097, 0.0
      %v1380 = vmax.f32 %v1100, 0.0
      %v1381 = vmax.f32 %v1105, 0.0
      %v1382 = vmax.f32 %v1108, 0.0
      %v1383 = vmax.f32 %v1113, 0.0
      %v1384 = vmax.f32 %v1116, 0.0
      %v1385 = vmax.f32 %v1121, 0.0
      %v1386 = vmax.f32 %v1124, 0.0
      %v1387 = vmax.f32 %v1129, 0.0
      %v1388 = vmax.f32 %v1132, 0.0
      %v1389 = vmax.f32 %v1137, 0.0
      %v1390 = vmax.f32 %v1140, 0.0
      %v1391 = vmax.f32 %v1145, 0.0
      %v1392 = vmax.f32 %v1148, 0.0
      %v1393 = vmax.f32 %v1153, 0.0
      %v1394 = vmax.f32 %v1156, 0.0
      %v1395 = vmax.f32 %v1161, 0.0
      %v1396 = vmax.f32 %v1164, 0.0
      %v1397 = vmax.f32 %v1169, 0.0
      %v1398 = vmax.f32 %v1172, 0.0
      %v1399 = vmax.f32 %v1177, 0.0
      %v1400 = vmax.f32 %v1180, 0.0
      %v1401 = vmax.f32 %v1185, 0.0
      %v1402 = vmax.f32 %v1188, 0.0
      %v1403 = vmax.f32 %v1193, 0.0
      %v1404 = vmax.f32 %v1196, 0.0
      %v1405 = vmax.f32 %v1201, 0.0
      %v1406 = vmax.f32 %v1204, 0.0
      %v1407 = vmax.f32 %v1209, 0.0
      %v1408 = vmax.f32 %v1212, 0.0
      %v1409 = vmax.f32 %v1217, 0.0
      %v1410 = vmax.f32 %v1220, 0.0
      %v1411 = vmax.f32 %v1225, 0.0
      %v1412 = vmax.f32 %v1228, 0.0
      %v1413 = vmax.f32 %v1233, 0.0
      %v1414 = vmax.f32 %v1236, 0.0
      %v1415 = vmax.f32 %v1241, 0.0
      %v1416 = vmax.f32 %v1244, 0.0
      %v1417 = vmax.f32 %v1249, 0.0
      %v1418 = vmax.f32 %v1252, 0.0
      %v1419 = vmax.f32 %v1257, 0.0
      %v1420 = vmax.f32 %v1260, 0.0
      %v1421 = vmax.f32 %v1265, 0.0
      %v1422 = vmax.f32 %v1268, 0.0
      %v1423 = vmax.f32 %v1273, 0.0
      %v1424 = vmax.f32 %v1276, 0.0
      %v1425 = vmax.f32 %v1281, 0.0
      %v1426 = vmax.f32 %v1284, 0.0
      %v1427 = vmax.f32 %v1289, 0.0
      %v1428 = vmax.f32 %v1292, 0.0
      %v1429 = vmax.f32 %v1297, 0.0
      %v1430 = vmax.f32 %v1300, 0.0
      %v1431 = vmax.f32 %v1303, %v1335
      %v1432 = vmax.f32 %v1304, %v1336
      %v1433 = vmax.f32 %v1305, %v1337
      %v1434 = vmax.f32 %v1306, %v1338
      %v1435 = vmax.f32 %v1307, %v1339
      %v1436 = vmax.f32 %v1308, %v1340
      %v1437 = vmax.f32 %v1309, %v1341
      %v1438 = vmax.f32 %v1310, %v1342
      %v1439 = vmax.f32 %v1311, %v1343
      %v1440 = vmax.f32 %v1312, %v1344
      %v1441 = vmax.f32 %v1313, %v1345
      %v1442 = vmax.f32 %v1314, %v1346
      %v1443 = vmax.f32 %v1315, %v1347
      %v1444 = vmax.f32 %v1316, %v1348
      %v1445 = vmax.f32 %v1317, %v1349
      %v1446 = vmax.f32 %v1318, %v1350
      %v1447 = vmax.f32 %v1319, %v1351
      %v1448 = vmax.f32 %v1320, %v1352
      %v1449 = vmax.f32 %v1321, %v1353
      %v1450 = vmax.f32 %v1322, %v1354
      %v1451 = vmax.f32 %v1323, %v1355
      %v1452 = vmax.f32 %v1324, %v1356
      %v1453 = vmax.f32 %v1325, %v1357
      %v1454 = vmax.f32 %v1326, %v1358
      %v1455 = vmax.f32 %v1327, %v1359
      %v1456 = vmax.f32 %v1328, %v1360
      %v1457 = vmax.f32 %v1329, %v1361
      %v1458 = vmax.f32 %v1330, %v1362
      %v1459 = vmax.f32 %v1331, %v1363
      %v1460 = vmax.f32 %v1332, %v1364
      %v1461 = vmax.f32 %v1333, %v1365
      %v1462 = vmax.f32 %v1334, %v1366
      %v1463 = vmax.f32 %v1367, %v1399
      %v1464 = vmax.f32 %v1368, %v1400
      %v1465 = vmax.f32 %v1369, %v1401
      %v1466 = vmax.f32 %v1370, %v1402
      %v1467 = vmax.f32 %v1371, %v1403
      %v1468 = vmax.f32 %v1372, %v1404
      %v1469 = vmax.f32 %v1373, %v1405
      %v1470 = vmax.f32 %v1374, %v1406
      %v1471 = vmax.f32 %v1375, %v1407
      %v1472 = vmax.f32 %v1376, %v1408
      %v1473 = vmax.f32 %v1377, %v1409
      %v1474 = vmax.f32 %v1378, %v1410
      %v1475 = vmax.f32 %v1379, %v1411
      %v1476 = vmax.f32 %v1380, %v1412
      %v1477 = vmax.f32 %v1381, %v1413
      %v1478 = vmax.f32 %v1382, %v1414
      %v1479 = vmax.f32 %v1383, %v1415
      %v1480 = vmax.f32 %v1384, %v1416
      %v1481 = vmax.f32 %v1385, %v1417
      %v1482 = vmax.f32 %v1386, %v1418
      %v1483 = vmax.f32 %v1387, %v1419
      %v1484 = vmax.f32 %v1388, %v1420
      %v1485 = vmax.f32 %v1389, %v1421
      %v1486 = vmax.f32 %v1390, %v1422
      %v1487 = vmax.f32 %v1391, %v1423
      %v1488 = vmax.f32 %v1392, %v1424
      %v1489 = vmax.f32 %v1393, %v1425
      %v1490 = vmax.f32 %v1394, %v1426
      %v1491 = vmax.f32 %v1395, %v1427
      %v1492 = vmax.f32 %v1396, %v1428
      %v1493 = vmax.f32 %v1397, %v1429
      %v1494 = vmax.f32 %v1398, %v1430
      %v1495 = vmax.f32 %v1431, %v1463
      %v1496 = vmax.f32 %v1432, %v1464
      %v1497 = vmax.f32 %v1433, %v1465
      %v1498 = vmax.f32 %v1434, %v1466
      %v1499 = vmax.f32 %v1435, %v1467
      %v1500 = vmax.f32 %v1436, %v1468
      %v1501 = vmax.f32 %v1437, %v1469
      %v1502 = vmax.f32 %v1438, %v1470
      %v1503 = vmax.f32 %v1439, %v1471
      %v1504 = vmax.f32 %v1440, %v1472
      %v1505 = vmax.f32 %v1441, %v1473
      %v1506 = vmax.f32 %v1442, %v1474
      %v1507 = vmax.f32 %v1443, %v1475
      %v1508 = vmax.f32 %v1444, %v1476
      %v1509 = vmax.f32 %v1445, %v1477
      %v1510 = vmax.f32 %v1446, %v1478
      %v1511 = vmax.f32 %v1447, %v1479
      %v1512 = vmax.f32 %v1448, %v1480
      %v1513 = vmax.f32 %v1449, %v1481
      %v1514 = vmax.f32 %v1450, %v1482
      %v1515 = vmax.f32 %v1451, %v1483
      %v1516 = vmax.f32 %v1452, %v1484
      %v1517 = vmax.f32 %v1453, %v1485
      %v1518 = vmax.f32 %v1454, %v1486
      %v1519 = vmax.f32 %v1455, %v1487
      %v1520 = vmax.f32 %v1456, %v1488
      %v1521 = vmax.f32 %v1457, %v1489
      %v1522 = vmax.f32 %v1458, %v1490
      %v1523 = vmax.f32 %v1459, %v1491
      %v1524 = vmax.f32 %v1460, %v1492
      %v1525 = vmax.f32 %v1461, %v1493
      %v1526 = vmax.f32 %v1462, %v1494
      %1527 = vst [vmem:[%s172] sm:$0xff] %v1495
      %1528 = vst [vmem:[%s172 + $0x8] sm:$0xff] %v1496
      %1529 = vst [vmem:[%s172 + $0x10] sm:$0xff] %v1497
      %1530 = vst [vmem:[%s172 + $0x18] sm:$0xff] %v1498
      %1531 = vst [vmem:[%s172 + $0x20] sm:$0xff] %v1499
      %1532 = vst [vmem:[%s172 + $0x28] sm:$0xff] %v1500
      %1533 = vst [vmem:[%s172 + $0x30] sm:$0xff] %v1501
      %1534 = vst [vmem:[%s172 + $0x38] sm:$0xff] %v1502
      %1535 = vst [vmem:[%s172 + $0x40] sm:$0xff] %v1503
      %1536 = vst [vmem:[%s172 + $0x48] sm:$0xff] %v1504
      %1537 = vst [vmem:[%s172 + $0x50] sm:$0xff] %v1505
      %1538 = vst [vmem:[%s172 + $0x58] sm:$0xff] %v1506
      %1539 = vst [vmem:[%s172 + $0x60] sm:$0xff] %v1507
      %1540 = vst [vmem:[%s172 + $0x68] sm:$0xff] %v1508
      %1541 = vst [vmem:[%s172 + $0x70] sm:$0xff] %v1509
      %1542 = vst [vmem:[%s172 + $0x78] sm:$0xff] %v1510
      %1543 = vst [vmem:[%s172 + $0x80] sm:$0xff] %v1511
      %1544 = vst [vmem:[%s172 + $0x88] sm:$0xff] %v1512
      %1545 = vst [vmem:[%s172 + $0x90] sm:$0xff] %v1513
      %1546 = vst [vmem:[%s172 + $0x98] sm:$0xff] %v1514
      %1547 = vst [vmem:[%s172 + $0xa0] sm:$0xff] %v1515
      %1548 = vst [vmem:[%s172 + $0xa8] sm:$0xff] %v1516
      %1549 = vst [vmem:[%s172 + $0xb0] sm:$0xff] %v1517
      %1550 = vst [vmem:[%s172 + $0xb8] sm:$0xff] %v1518
      %1551 = vst [vmem:[%s172 + $0xc0] sm:$0xff] %v1519
      %1552 = vst [vmem:[%s172 + $0xc8] sm:$0xff] %v1520
      %1553 = vst [vmem:[%s172 + $0xd0] sm:$0xff] %v1521
      %1554 = vst [vmem:[%s172 + $0xd8] sm:$0xff] %v1522
      %1555 = vst [vmem:[%s172 + $0xe0] sm:$0xff] %v1523
      %1556 = vst [vmem:[%s172 + $0xe8] sm:$0xff] %v1524
      %1557 = vst [vmem:[%s172 + $0xf0] sm:$0xff] %v1525
      %1558 = vst [vmem:[%s172 + $0xf8] sm:$0xff] %v1526
      %s1559 = smul.u32 32, %s14
      %p1560 = scmp.lt.s32.totalorder %s1559, 63
      %s1561 = scalar_select %p1560, %s1559, 63
      %s1562 = smul.addr %s1561, 8
      %s1563 = scalar_lea.vmem %s3, %s1562
      // Predicated region
      $region33: #{cnn_cifar1_forward.3} parent=31 // pred_check
        %p1564 = pneg %p100
      $region34: #{cnn_cifar1_forward.3} parent=31 // pred_check_branch
        %1566 = sbr.rel (%p1564) target = $region36
      $region35: #{cnn_cifar1_forward.3} parent=31 // pred_region
        %s1567 = smul.u32 32, %s14
      $region36: #{cnn_cifar1_forward.3} parent=31 // pred_fallthru
        _
    $region32: #{cnn_cifar1_forward.3} parent=5 // pred_fallthru
      _
    %p1568 = scmp.le.s32.totalorder 2, %s9
    // Predicated region
    $region37: #{cnn_cifar1_forward.3} parent=5 // pred_check
      %p1569 = pneg %p1568
    $region38: #{cnn_cifar1_forward.3} parent=5 // pred_check_branch
      %1571 = sbr.rel (%p1569) target = $region40
    $region39: #{cnn_cifar1_forward.3} parent=5 // pred_region
      %s1572 = ssub.s32 %s9, 2
      // Predicated region
      $region41: #{cnn_cifar1_forward.3} parent=39 // pred_check
        %p1573 = pneg %p106
      $region42: #{cnn_cifar1_forward.3} parent=39 // pred_check_branch
        %1575 = sbr.rel (%p1573) target = $region44
      $region43: #{cnn_cifar1_forward.3} parent=39 // pred_region
        %s1576 = smul.u32 32, %s15
        %p1577 = scmp.lt.s32.totalorder %s1576, 63
        %s1578 = scalar_select %p1577, %s1576, 63
        %s1579 = smul.addr %s1578, 8
        %s1580 = scalar_lea.vmem %s3, %s1579
      $region44: #{cnn_cifar1_forward.3} parent=39 // pred_fallthru
        _
    $region40: #{cnn_cifar1_forward.3} parent=5 // pred_fallthru
      _
  $region6: #{cnn_cifar1_forward.3} parent=0 // loop_footer
    %s13 = sadd.s32 1, %s9
  $region7: #{cnn_cifar1_forward.3} parent=0 // loop_footer_branch
    %8 = sbr.rel target = $region3
  $region8: #{cnn_cifar1_forward.3} parent=0 // loop_exit
    _

// kernel: cnn_cifar1_forward.4
$region0: #{cnn_cifar1_forward.4}
  #allocation0 [shape = 'u32[]', space=smem, size = 0x4, offset = 0x4, fixed_abs, tag = 'smem constant byte address 0x4 - core index']
  #allocation1 [shape = 'u32[144,128]{1,0:T(1,128)}', space=vmem, size = 0x12000, scoped, tag = 'internal scratch']
  %s0 = inlined_call_operand.vmem [shape: bf16[512,896], index: 0, kind: input, shape index: {}]
  %s1 = inlined_call_operand.vmem [shape: bf16[896,128], index: 1, kind: input, shape index: {}]
  %s2 = inlined_call_operand.vmem [shape: f32[1,128], index: 2, kind: input, shape index: {}]
  %s3 = inlined_call_operand.vmem [shape: f32[128,128], index: 3, kind: output, shape index: {}]
  %s4 = sld [smem:[#allocation0]]
  $region45: #{cnn_cifar1_forward.4} parent=0
    _
  %s6 = ssub.s32 1, %s4
  %s7 = scalar_select 0, %s6, %s4
  loop: start=0, step=1, limit=4
  $region2: #{cnn_cifar1_forward.4} parent=0 // loop_pre_header
    _
  $region3: #{cnn_cifar1_forward.4} parent=0 // loop_header
    %s9 = sphi 0, %s13
    %p10 = scmp.ge.s32.totalorder %s9, 4
    %s19 = sphi 0, %s21
    %s22 = sphi 0, %s19
    %s23 = sphi 0, %s22
    %s39 = sphi 0, %s23
    %s43 = sphi 0, %s43
    %s45 = sphi 0, %s43
    %s46 = sphi 0, %s45
    %s60 = sphi 0, %s46
    %s64 = sphi 0, %s64
    %s66 = sphi 0, %s64
    %s67 = sphi 0, %s66
    %s81 = sphi 0, %s67
    %s87 = sphi 0, %s89
    %s90 = sphi 0, %s87
    %s91 = sphi 0, %s90
    %s107 = sphi 0, %s91
  $region4: #{cnn_cifar1_forward.4} parent=0 // loop_header_branch
    %12 = sbr.rel (%p10) target = $region8
  $region5: #{cnn_cifar1_forward.4} parent=0 // loop_body
    %s14 = ssub.s32 %s9, 1
    %s15 = ssub.s32 %s9, 2
    %s16 = sadd.s32 %s9, 1
    %s17 = ssub.s32 %s9, %s16
    %p18 = scmp.eq.s32.totalorder %s17, 0
    %s20 = sadd.s32 %s19, 1
    %s21 = scalar_select %p18, %s19, %s20
    %p24 = pneg %p18
    %p25 = scmp.eq.s32.totalorder %s9, 1
    %p26 = por %p24, %p25
    %p27 = scmp.ne.s32.totalorder %s19, %s22
    %p28 = scmp.eq.s32.totalorder %s9, 0
    %p29 = por %p27, %p28
    %p30 = scmp.ne.s32.totalorder %s19, %s22
    %p31 = scmp.eq.s32.totalorder %s14, 1
    %p32 = por %p30, %p31
    %p33 = scmp.ne.s32.totalorder %s22, %s23
    %p34 = scmp.eq.s32.totalorder %s14, 0
    %p35 = por %p33, %p34
    %p36 = scmp.ne.s32.totalorder %s22, %s23
    %p37 = scmp.eq.s32.totalorder %s15, 1
    %p38 = por %p36, %p37
    %p40 = scmp.ne.s32.totalorder %s23, %s39
    %p41 = scmp.eq.s32.totalorder %s15, 0
    %p42 = por %p40, %p41
    %s44 = sadd.s32 %s43, 1
    %p47 = scmp.eq.s32.totalorder %s9, 1
    %p48 = scmp.ne.s32.totalorder %s43, %s45
    %p49 = scmp.eq.s32.totalorder %s9, 0
    %p50 = por %p48, %p49
    %p51 = scmp.ne.s32.totalorder %s43, %s45
    %p52 = scmp.eq.s32.totalorder %s14, 1
    %p53 = por %p51, %p52
    %p54 = scmp.ne.s32.totalorder %s45, %s46
    %p55 = scmp.eq.s32.totalorder %s14, 0
    %p56 = por %p54, %p55
    %p57 = scmp.ne.s32.totalorder %s45, %s46
    %p58 = scmp.eq.s32.totalorder %s15, 1
    %p59 = por %p57, %p58
    %p61 = scmp.ne.s32.totalorder %s46, %s60
    %p62 = scmp.eq.s32.totalorder %s15, 0
    %p63 = por %p61, %p62
    %s65 = sadd.s32 %s64, 1
    %p68 = scmp.eq.s32.totalorder %s9, 1
    %p69 = scmp.ne.s32.totalorder %s64, %s66
    %p70 = scmp.eq.s32.totalorder %s9, 0
    %p71 = por %p69, %p70
    %p72 = scmp.ne.s32.totalorder %s64, %s66
    %p73 = scmp.eq.s32.totalorder %s14, 1
    %p74 = por %p72, %p73
    %p75 = scmp.ne.s32.totalorder %s66, %s67
    %p76 = scmp.eq.s32.totalorder %s14, 0
    %p77 = por %p75, %p76
    %p78 = scmp.ne.s32.totalorder %s66, %s67
    %p79 = scmp.eq.s32.totalorder %s15, 1
    %p80 = por %p78, %p79
    %p82 = scmp.ne.s32.totalorder %s67, %s81
    %p83 = scmp.eq.s32.totalorder %s15, 0
    %p84 = por %p82, %p83
    %s85 = ssub.s32 %s9, %s16
    %p86 = scmp.eq.s32.totalorder %s85, 0
    %s88 = sadd.s32 %s87, 1
    %s89 = scalar_select %p86, %s87, %s88
    %p92 = pneg %p86
    %p93 = scmp.eq.s32.totalorder %s9, 1
    %p94 = por %p92, %p93
    %p95 = scmp.ne.s32.totalorder %s87, %s90
    %p96 = scmp.eq.s32.totalorder %s9, 0
    %p97 = por %p95, %p96
    %p98 = scmp.ne.s32.totalorder %s87, %s90
    %p99 = scmp.eq.s32.totalorder %s14, 1
    %p100 = por %p98, %p99
    %p101 = scmp.ne.s32.totalorder %s90, %s91
    %p102 = scmp.eq.s32.totalorder %s14, 0
    %p103 = por %p101, %p102
    %p104 = scmp.ne.s32.totalorder %s90, %s91
    %p105 = scmp.eq.s32.totalorder %s15, 1
    %p106 = por %p104, %p105
    %p108 = scmp.ne.s32.totalorder %s91, %s107
    %p109 = scmp.eq.s32.totalorder %s15, 0
    %p110 = por %p108, %p109
    %p111 = scmp.le.s32.totalorder 1, %s9
    %p112 = scmp.lt.s32.totalorder %s9, 3
    %p113 = pnand %p111, %p112
    %p114 = pneg %p113
    // Predicated region
    $region9: #{cnn_cifar1_forward.4} parent=5 // pred_check
      _
    $region10: #{cnn_cifar1_forward.4} parent=5 // pred_check_branch
      %116 = sbr.rel (%p113) target = $region12
    $region11: #{cnn_cifar1_forward.4} parent=5 // pred_region
      %s117 = ssub.s32 %s9, 1
      // Predicated region
      $region13: #{cnn_cifar1_forward.4} parent=11 // pred_check
        %p118 = pneg %p56
      $region14: #{cnn_cifar1_forward.4} parent=11 // pred_check_branch
        %120 = sbr.rel (%p118) target = $region16
      $region15: #{cnn_cifar1_forward.4} parent=11 // pred_region
        _
      $region16: #{cnn_cifar1_forward.4} parent=11 // pred_fallthru
        _
      // Predicated region
      $region17: #{cnn_cifar1_forward.4} parent=11 // pred_check
        %p121 = pneg %p77
      $region18: #{cnn_cifar1_forward.4} parent=11 // pred_check_branch
        %123 = sbr.rel (%p121) target = $region20
      $region19: #{cnn_cifar1_forward.4} parent=11 // pred_region
        _
      $region20: #{cnn_cifar1_forward.4} parent=11 // pred_fallthru
        _
    $region12: #{cnn_cifar1_forward.4} parent=5 // pred_fallthru
      _
    %p124 = scmp.lt.s32.totalorder %s9, 2
    // Predicated region
    $region21: #{cnn_cifar1_forward.4} parent=5 // pred_check
      %p125 = pneg %p124
    $region22: #{cnn_cifar1_forward.4} parent=5 // pred_check_branch
      %127 = sbr.rel (%p125) target = $region24
    $region23: #{cnn_cifar1_forward.4} parent=5 // pred_region
      // Predicated region
      $region25: #{cnn_cifar1_forward.4} parent=23 // pred_check
        %p128 = pneg %p29
      $region26: #{cnn_cifar1_forward.4} parent=23 // pred_check_branch
        %130 = sbr.rel (%p128) target = $region28
      $region27: #{cnn_cifar1_forward.4} parent=23 // pred_region
        %s131 = smul.u32 32, %s9
        %p132 = scmp.lt.s32.totalorder %s131, 63
        %s133 = scalar_select %p132, %s131, 63
        %s134 = smul.addr %s133, 7
        %s135 = smul.addr %s134, 4
        %s136 = scalar_lea.vmem %s0, %s135
        %s137 = smul.u32 32, %s9
      $region28: #{cnn_cifar1_forward.4} parent=23 // pred_fallthru
        _
    $region24: #{cnn_cifar1_forward.4} parent=5 // pred_fallthru
      _
    %p138 = scmp.le.s32.totalorder 1, %s9
    %p139 = scmp.lt.s32.totalorder %s9, 3
    %p140 = pnand %p138, %p139
    %p141 = pneg %p140
    // Predicated region
    $region29: #{cnn_cifar1_forward.4} parent=5 // pred_check
      _
    $region30: #{cnn_cifar1_forward.4} parent=5 // pred_check_branch
      %143 = sbr.rel (%p140) target = $region32
    $region31: #{cnn_cifar1_forward.4} parent=5 // pred_region
      %s144 = ssub.s32 %s9, 1
      %s145 = smul.u32 32, %s14
      %p146 = scmp.lt.s32.totalorder %s145, 63
      %s147 = scalar_select %p146, %s145, 63
      %s148 = smul.addr %s147, 7
      %s149 = smul.addr %s148, 4
      %s150 = scalar_lea.vmem %s0, %s149
      %p151 = pneg %p35
      %p152 = pneg %p32
      %p153 = pneg %p56
      %p154 = pneg %p53
      %p155 = pneg %p77
      %p156 = pneg %p74
      %p157 = pneg %p103
      %p158 = pneg %p100
      %s159 = smul.u32 8, %s14
      %p160 = scmp.lt.s32.totalorder %s159, 15
      %s161 = scalar_select %p160, %s159, 15
      %s162 = smul.addr %s161, 8
      %s163 = scalar_lea.vmem %s3, %s162
      %s164 = smul.u32 32, %s14
      %p165 = scmp.lt.s32.totalorder %s164, 63
      %s166 = scalar_select %p165, %s164, 63
      %s167 = smul.addr %s166, 7
      %s168 = smul.addr %s167, 4
      %s169 = scalar_lea.vmem %s0, %s168
      %s170 = smul.u32 32, %s14
      %s171 = smul.u32 8, %s14
      %p172 = scmp.lt.s32.totalorder %s171, 15
      %s173 = scalar_select %p172, %s171, 15
      %s174 = smul.addr %s173, 8
      %s175 = scalar_lea.vmem %s3, %s174
      %s176 = smul.u32 8, %s14
      %v178 = vld [vmem:[%s169] sm:$0xff]
      %v179 = vld [vmem:[%s169 + $0x8] sm:$0xff]
      %v180 = vld [vmem:[%s169 + $0x10] sm:$0xff]
      %v181 = vld [vmem:[%s169 + $0x18] sm:$0xf]
      %v182 = vld [vmem:[%s169 + $0x1c] sm:$0xff]
      %v183 = vld [vmem:[%s169 + $0x24] sm:$0xff]
      %v184 = vld [vmem:[%s169 + $0x2c] sm:$0xff]
      %v185 = vld [vmem:[%s169 + $0x34] sm:$0xf]
      %v186 = vld [vmem:[%s169 + $0x38] sm:$0xff]
      %v187 = vld [vmem:[%s169 + $0x40] sm:$0xff]
      %v188 = vld [vmem:[%s169 + $0x48] sm:$0xff]
      %v189 = vld [vmem:[%s169 + $0x50] sm:$0xf]
      %v190 = vld [vmem:[%s169 + $0x54] sm:$0xff]
      %v191 = vld [vmem:[%s169 + $0x5c] sm:$0xff]
      %v192 = vld [vmem:[%s169 + $0x64] sm:$0xff]
      %v193 = vld [vmem:[%s169 + $0x6c] sm:$0xf]
      %v194 = vld [vmem:[%s169 + $0x70] sm:$0xff]
      %v195 = vld [vmem:[%s169 + $0x78] sm:$0xff]
      %v196 = vld [vmem:[%s169 + $0x80] sm:$0xff]
      %v197 = vld [vmem:[%s169 + $0x88] sm:$0xf]
      %v198 = vld [vmem:[%s169 + $0x8c] sm:$0xff]
      %v199 = vld [vmem:[%s169 + $0x94] sm:$0xff]
      %v200 = vld [vmem:[%s169 + $0x9c] sm:$0xff]
      %v201 = vld [vmem:[%s169 + $0xa4] sm:$0xf]
      %v202 = vld [vmem:[%s169 + $0xa8] sm:$0xff]
      %v203 = vld [vmem:[%s169 + $0xb0] sm:$0xff]
      %v204 = vld [vmem:[%s169 + $0xb8] sm:$0xff]
      %v205 = vld [vmem:[%s169 + $0xc0] sm:$0xf]
      %v206 = vld [vmem:[%s169 + $0xc4] sm:$0xff]
      %v207 = vld [vmem:[%s169 + $0xcc] sm:$0xff]
      %v208 = vld [vmem:[%s169 + $0xd4] sm:$0xff]
      %v209 = vld [vmem:[%s169 + $0xdc] sm:$0xf]
      %v210 = vld [vmem:[%s169 + $0xe0] sm:$0xff]
      %v211 = vld [vmem:[%s169 + $0xe8] sm:$0xff]
      %v212 = vld [vmem:[%s169 + $0xf0] sm:$0xff]
      %v213 = vld [vmem:[%s169 + $0xf8] sm:$0xf]
      %v214 = vld [vmem:[%s169 + $0xfc] sm:$0xff]
      %v215 = vld [vmem:[%s169 + $0x104] sm:$0xff]
      %v216 = vld [vmem:[%s169 + $0x10c] sm:$0xff]
      %v217 = vld [vmem:[%s169 + $0x114] sm:$0xf]
      %v218 = vld [vmem:[%s169 + $0x118] sm:$0xff]
      %v219 = vld [vmem:[%s169 + $0x120] sm:$0xff]
      %v220 = vld [vmem:[%s169 + $0x128] sm:$0xff]
      %v221 = vld [vmem:[%s169 + $0x130] sm:$0xf]
      %v222 = vld [vmem:[%s169 + $0x134] sm:$0xff]
      %v223 = vld [vmem:[%s169 + $0x13c] sm:$0xff]
      %v224 = vld [vmem:[%s169 + $0x144] sm:$0xff]
      %v225 = vld [vmem:[%s169 + $0x14c] sm:$0xf]
      %v226 = vld [vmem:[%s169 + $0x150] sm:$0xff]
      %v227 = vld [vmem:[%s169 + $0x158] sm:$0xff]
      %v228 = vld [vmem:[%s169 + $0x160] sm:$0xff]
      %v229 = vld [vmem:[%s169 + $0x168] sm:$0xf]
      %v230 = vld [vmem:[%s169 + $0x16c] sm:$0xff]
      %v231 = vld [vmem:[%s169 + $0x174] sm:$0xff]
      %v232 = vld [vmem:[%s169 + $0x17c] sm:$0xff]
      %v233 = vld [vmem:[%s169 + $0x184] sm:$0xf]
      %v234 = vld [vmem:[%s169 + $0x188] sm:$0xff]
      %v235 = vld [vmem:[%s169 + $0x190] sm:$0xff]
      %v236 = vld [vmem:[%s169 + $0x198] sm:$0xff]
      %v237 = vld [vmem:[%s169 + $0x1a0] sm:$0xf]
      %v238 = vld [vmem:[%s169 + $0x1a4] sm:$0xff]
      %v239 = vld [vmem:[%s169 + $0x1ac] sm:$0xff]
      %v240 = vld [vmem:[%s169 + $0x1b4] sm:$0xff]
      %v241 = vld [vmem:[%s169 + $0x1bc] sm:$0xf]
      %v242 = vld [vmem:[%s169 + $0x1c0] sm:$0xff]
      %v243 = vld [vmem:[%s169 + $0x1c8] sm:$0xff]
      %v244 = vld [vmem:[%s169 + $0x1d0] sm:$0xff]
      %v245 = vld [vmem:[%s169 + $0x1d8] sm:$0xf]
      %v246 = vld [vmem:[%s169 + $0x1dc] sm:$0xff]
      %v247 = vld [vmem:[%s169 + $0x1e4] sm:$0xff]
      %v248 = vld [vmem:[%s169 + $0x1ec] sm:$0xff]
      %v249 = vld [vmem:[%s169 + $0x1f4] sm:$0xf]
      %v250 = vld [vmem:[%s169 + $0x1f8] sm:$0xff]
      %v251 = vld [vmem:[%s169 + $0x200] sm:$0xff]
      %v252 = vld [vmem:[%s169 + $0x208] sm:$0xff]
      %v253 = vld [vmem:[%s169 + $0x210] sm:$0xf]
      %v254 = vld [vmem:[%s169 + $0x214] sm:$0xff]
      %v255 = vld [vmem:[%s169 + $0x21c] sm:$0xff]
      %v256 = vld [vmem:[%s169 + $0x224] sm:$0xff]
      %v257 = vld [vmem:[%s169 + $0x22c] sm:$0xf]
      %v258 = vld [vmem:[%s169 + $0x230] sm:$0xff]
      %v259 = vld [vmem:[%s169 + $0x238] sm:$0xff]
      %v260 = vld [vmem:[%s169 + $0x240] sm:$0xff]
      %v261 = vld [vmem:[%s169 + $0x248] sm:$0xf]
      %v262 = vld [vmem:[%s169 + $0x24c] sm:$0xff]
      %v263 = vld [vmem:[%s169 + $0x254] sm:$0xff]
      %v264 = vld [vmem:[%s169 + $0x25c] sm:$0xff]
      %v265 = vld [vmem:[%s169 + $0x264] sm:$0xf]
      %v266 = vld [vmem:[%s169 + $0x268] sm:$0xff]
      %v267 = vld [vmem:[%s169 + $0x270] sm:$0xff]
      %v268 = vld [vmem:[%s169 + $0x278] sm:$0xff]
      %v269 = vld [vmem:[%s169 + $0x280] sm:$0xf]
      %v270 = vld [vmem:[%s169 + $0x284] sm:$0xff]
      %v271 = vld [vmem:[%s169 + $0x28c] sm:$0xff]
      %v272 = vld [vmem:[%s169 + $0x294] sm:$0xff]
      %v273 = vld [vmem:[%s169 + $0x29c] sm:$0xf]
      %v274 = vld [vmem:[%s169 + $0x2a0] sm:$0xff]
      %v275 = vld [vmem:[%s169 + $0x2a8] sm:$0xff]
      %v276 = vld [vmem:[%s169 + $0x2b0] sm:$0xff]
      %v277 = vld [vmem:[%s169 + $0x2b8] sm:$0xf]
      %v278 = vld [vmem:[%s169 + $0x2bc] sm:$0xff]
      %v279 = vld [vmem:[%s169 + $0x2c4] sm:$0xff]
      %v280 = vld [vmem:[%s169 + $0x2cc] sm:$0xff]
      %v281 = vld [vmem:[%s169 + $0x2d4] sm:$0xf]
      %v282 = vld [vmem:[%s169 + $0x2d8] sm:$0xff]
      %v283 = vld [vmem:[%s169 + $0x2e0] sm:$0xff]
      %v284 = vld [vmem:[%s169 + $0x2e8] sm:$0xff]
      %v285 = vld [vmem:[%s169 + $0x2f0] sm:$0xf]
      %v286 = vld [vmem:[%s169 + $0x2f4] sm:$0xff]
      %v287 = vld [vmem:[%s169 + $0x2fc] sm:$0xff]
      %v288 = vld [vmem:[%s169 + $0x304] sm:$0xff]
      %v289 = vld [vmem:[%s169 + $0x30c] sm:$0xf]
      %v290 = vld [vmem:[%s169 + $0x310] sm:$0xff]
      %v291 = vld [vmem:[%s169 + $0x318] sm:$0xff]
      %v292 = vld [vmem:[%s169 + $0x320] sm:$0xff]
      %v293 = vld [vmem:[%s169 + $0x328] sm:$0xf]
      %v294 = vld [vmem:[%s169 + $0x32c] sm:$0xff]
      %v295 = vld [vmem:[%s169 + $0x334] sm:$0xff]
      %v296 = vld [vmem:[%s169 + $0x33c] sm:$0xff]
      %v297 = vld [vmem:[%s169 + $0x344] sm:$0xf]
      %v298 = vld [vmem:[%s169 + $0x348] sm:$0xff]
      %v299 = vld [vmem:[%s169 + $0x350] sm:$0xff]
      %v300 = vld [vmem:[%s169 + $0x358] sm:$0xff]
      %v301 = vld [vmem:[%s169 + $0x360] sm:$0xf]
      %v302 = vld [vmem:[%s169 + $0x364] sm:$0xff]
      %v303 = vld [vmem:[%s169 + $0x36c] sm:$0xff]
      %v304 = vld [vmem:[%s169 + $0x374] sm:$0xff]
      %v305 = vld [vmem:[%s169 + $0x37c] sm:$0xf]
      %v306 = vld [vmem:[%s1] sm:$0xf]
      %v307 = vld [vmem:[%s1 + $0x4] sm:$0xf]
      %v308 = vld [vmem:[%s1 + $0x8] sm:$0xf]
      %v309 = vld [vmem:[%s1 + $0xc] sm:$0xf]
      %v310 = vld [vmem:[%s1 + $0x10] sm:$0xf]
      %v311 = vld [vmem:[%s1 + $0x14] sm:$0xf]
      %v312 = vld [vmem:[%s1 + $0x18] sm:$0xf]
      %v313 = vld [vmem:[%s1 + $0x1c] sm:$0xf]
      %v314 = vld [vmem:[%s1 + $0x20] sm:$0xf]
      %v315 = vld [vmem:[%s1 + $0x24] sm:$0xf]
      %v316 = vld [vmem:[%s1 + $0x28] sm:$0xf]
      %v317 = vld [vmem:[%s1 + $0x2c] sm:$0xf]
      %v318 = vld [vmem:[%s1 + $0x30] sm:$0xf]
      %v319 = vld [vmem:[%s1 + $0x34] sm:$0xf]
      %v320 = vld [vmem:[%s1 + $0x38] sm:$0xf]
      %v321 = vld [vmem:[%s1 + $0x3c] sm:$0xf]
      %v322 = vld [vmem:[%s1 + $0x40] sm:$0xf]
      %v323 = vld [vmem:[%s1 + $0x44] sm:$0xf]
      %v324 = vld [vmem:[%s1 + $0x48] sm:$0xf]
      %v325 = vld [vmem:[%s1 + $0x4c] sm:$0xf]
      %v326 = vld [vmem:[%s1 + $0x50] sm:$0xf]
      %v327 = vld [vmem:[%s1 + $0x54] sm:$0xf]
      %v328 = vld [vmem:[%s1 + $0x58] sm:$0xf]
      %v329 = vld [vmem:[%s1 + $0x5c] sm:$0xf]
      %v330 = vld [vmem:[%s1 + $0x60] sm:$0xf]
      %v331 = vld [vmem:[%s1 + $0x64] sm:$0xf]
      %v332 = vld [vmem:[%s1 + $0x68] sm:$0xf]
      %v333 = vld [vmem:[%s1 + $0x6c] sm:$0xf]
      %v334 = vld [vmem:[%s1 + $0x70] sm:$0xf]
      %v335 = vld [vmem:[%s1 + $0x74] sm:$0xf]
      %v336 = vld [vmem:[%s1 + $0x78] sm:$0xf]
      %v337 = vld [vmem:[%s1 + $0x7c] sm:$0xf]
      %v338 = vld [vmem:[%s1 + $0x80] sm:$0xf]
      %v339 = vld [vmem:[%s1 + $0x84] sm:$0xf]
      %v340 = vld [vmem:[%s1 + $0x88] sm:$0xf]
      %v341 = vld [vmem:[%s1 + $0x8c] sm:$0xf]
      %v342 = vld [vmem:[%s1 + $0x90] sm:$0xf]
      %v343 = vld [vmem:[%s1 + $0x94] sm:$0xf]
      %v344 = vld [vmem:[%s1 + $0x98] sm:$0xf]
      %v345 = vld [vmem:[%s1 + $0x9c] sm:$0xf]
      %v346 = vld [vmem:[%s1 + $0xa0] sm:$0xf]
      %v347 = vld [vmem:[%s1 + $0xa4] sm:$0xf]
      %v348 = vld [vmem:[%s1 + $0xa8] sm:$0xf]
      %v349 = vld [vmem:[%s1 + $0xac] sm:$0xf]
      %v350 = vld [vmem:[%s1 + $0xb0] sm:$0xf]
      %v351 = vld [vmem:[%s1 + $0xb4] sm:$0xf]
      %v352 = vld [vmem:[%s1 + $0xb8] sm:$0xf]
      %v353 = vld [vmem:[%s1 + $0xbc] sm:$0xf]
      %v354 = vld [vmem:[%s1 + $0xc0] sm:$0xf]
      %v355 = vld [vmem:[%s1 + $0xc4] sm:$0xf]
      %v356 = vld [vmem:[%s1 + $0xc8] sm:$0xf]
      %v357 = vld [vmem:[%s1 + $0xcc] sm:$0xf]
      %v358 = vld [vmem:[%s1 + $0xd0] sm:$0xf]
      %v359 = vld [vmem:[%s1 + $0xd4] sm:$0xf]
      %v360 = vld [vmem:[%s1 + $0xd8] sm:$0xf]
      %v361 = vld [vmem:[%s1 + $0xdc] sm:$0xf]
      %v362 = vld [vmem:[%s1 + $0xe0] sm:$0xf]
      %v363 = vld [vmem:[%s1 + $0xe4] sm:$0xf]
      %v364 = vld [vmem:[%s1 + $0xe8] sm:$0xf]
      %v365 = vld [vmem:[%s1 + $0xec] sm:$0xf]
      %v366 = vld [vmem:[%s1 + $0xf0] sm:$0xf]
      %v367 = vld [vmem:[%s1 + $0xf4] sm:$0xf]
      %v368 = vld [vmem:[%s1 + $0xf8] sm:$0xf]
      %v369 = vld [vmem:[%s1 + $0xfc] sm:$0xf]
      %v370 = vld [vmem:[%s1 + $0x100] sm:$0xf]
      %v371 = vld [vmem:[%s1 + $0x104] sm:$0xf]
      %v372 = vld [vmem:[%s1 + $0x108] sm:$0xf]
      %v373 = vld [vmem:[%s1 + $0x10c] sm:$0xf]
      %v374 = vld [vmem:[%s1 + $0x110] sm:$0xf]
      %v375 = vld [vmem:[%s1 + $0x114] sm:$0xf]
      %v376 = vld [vmem:[%s1 + $0x118] sm:$0xf]
      %v377 = vld [vmem:[%s1 + $0x11c] sm:$0xf]
      %v378 = vld [vmem:[%s1 + $0x120] sm:$0xf]
      %v379 = vld [vmem:[%s1 + $0x124] sm:$0xf]
      %v380 = vld [vmem:[%s1 + $0x128] sm:$0xf]
      %v381 = vld [vmem:[%s1 + $0x12c] sm:$0xf]
      %v382 = vld [vmem:[%s1 + $0x130] sm:$0xf]
      %v383 = vld [vmem:[%s1 + $0x134] sm:$0xf]
      %v384 = vld [vmem:[%s1 + $0x138] sm:$0xf]
      %v385 = vld [vmem:[%s1 + $0x13c] sm:$0xf]
      %v386 = vld [vmem:[%s1 + $0x140] sm:$0xf]
      %v387 = vld [vmem:[%s1 + $0x144] sm:$0xf]
      %v388 = vld [vmem:[%s1 + $0x148] sm:$0xf]
      %v389 = vld [vmem:[%s1 + $0x14c] sm:$0xf]
      %v390 = vld [vmem:[%s1 + $0x150] sm:$0xf]
      %v391 = vld [vmem:[%s1 + $0x154] sm:$0xf]
      %v392 = vld [vmem:[%s1 + $0x158] sm:$0xf]
      %v393 = vld [vmem:[%s1 + $0x15c] sm:$0xf]
      %v394 = vld [vmem:[%s1 + $0x160] sm:$0xf]
      %v395 = vld [vmem:[%s1 + $0x164] sm:$0xf]
      %v396 = vld [vmem:[%s1 + $0x168] sm:$0xf]
      %v397 = vld [vmem:[%s1 + $0x16c] sm:$0xf]
      %v398 = vld [vmem:[%s1 + $0x170] sm:$0xf]
      %v399 = vld [vmem:[%s1 + $0x174] sm:$0xf]
      %v400 = vld [vmem:[%s1 + $0x178] sm:$0xf]
      %v401 = vld [vmem:[%s1 + $0x17c] sm:$0xf]
      %v402 = vld [vmem:[%s1 + $0x180] sm:$0xf]
      %v403 = vld [vmem:[%s1 + $0x184] sm:$0xf]
      %v404 = vld [vmem:[%s1 + $0x188] sm:$0xf]
      %v405 = vld [vmem:[%s1 + $0x18c] sm:$0xf]
      %v406 = vld [vmem:[%s1 + $0x190] sm:$0xf]
      %v407 = vld [vmem:[%s1 + $0x194] sm:$0xf]
      %v408 = vld [vmem:[%s1 + $0x198] sm:$0xf]
      %v409 = vld [vmem:[%s1 + $0x19c] sm:$0xf]
      %v410 = vld [vmem:[%s1 + $0x1a0] sm:$0xf]
      %v411 = vld [vmem:[%s1 + $0x1a4] sm:$0xf]
      %v412 = vld [vmem:[%s1 + $0x1a8] sm:$0xf]
      %v413 = vld [vmem:[%s1 + $0x1ac] sm:$0xf]
      %v414 = vld [vmem:[%s1 + $0x1b0] sm:$0xf]
      %v415 = vld [vmem:[%s1 + $0x1b4] sm:$0xf]
      %v416 = vld [vmem:[%s1 + $0x1b8] sm:$0xf]
      %v417 = vld [vmem:[%s1 + $0x1bc] sm:$0xf]
      %v418 = vld [vmem:[%s2] sm:$0x1]
      %v420 = vlaneseq
      %v421 = vshrl.u32 %v420, 7
      %v422 = vsub.s32 0, %v421
      %v423 = vrot.slane %v418, %v422
      %v553 = vunpack.c.l.b16 %v178
      %v554 = vunpack.c.h.b16 %v178
      %v555 = vunpack.c.l.b16 %v179
      %v556 = vunpack.c.h.b16 %v179
      %v557 = vunpack.c.l.b16 %v180
      %v558 = vunpack.c.h.b16 %v180
      %v559 = vunpack.c.l.b16 %v181
      %v560 = vunpack.c.l.b16 %v182
      %v561 = vunpack.c.h.b16 %v182
      %v562 = vunpack.c.l.b16 %v183
      %v563 = vunpack.c.h.b16 %v183
      %v564 = vunpack.c.l.b16 %v184
      %v565 = vunpack.c.h.b16 %v184
      %v566 = vunpack.c.l.b16 %v185
      %v567 = vunpack.c.l.b16 %v186
      %v568 = vunpack.c.h.b16 %v186
      %v569 = vunpack.c.l.b16 %v187
      %v570 = vunpack.c.h.b16 %v187
      %v571 = vunpack.c.l.b16 %v188
      %v572 = vunpack.c.h.b16 %v188
      %v573 = vunpack.c.l.b16 %v189
      %v574 = vunpack.c.l.b16 %v190
      %v575 = vunpack.c.h.b16 %v190
      %v576 = vunpack.c.l.b16 %v191
      %v577 = vunpack.c.h.b16 %v191
      %v578 = vunpack.c.l.b16 %v192
      %v579 = vunpack.c.h.b16 %v192
      %v580 = vunpack.c.l.b16 %v193
      %v581 = vunpack.c.l.b16 %v194
      %v582 = vunpack.c.h.b16 %v194
      %v583 = vunpack.c.l.b16 %v195
      %v584 = vunpack.c.h.b16 %v195
      %v585 = vunpack.c.l.b16 %v196
      %v586 = vunpack.c.h.b16 %v196
      %v587 = vunpack.c.l.b16 %v197
      %v588 = vunpack.c.l.b16 %v198
      %v589 = vunpack.c.h.b16 %v198
      %v590 = vunpack.c.l.b16 %v199
      %v591 = vunpack.c.h.b16 %v199
      %v592 = vunpack.c.l.b16 %v200
      %v593 = vunpack.c.h.b16 %v200
      %v594 = vunpack.c.l.b16 %v201
      %v595 = vunpack.c.l.b16 %v202
      %v596 = vunpack.c.h.b16 %v202
      %v597 = vunpack.c.l.b16 %v203
      %v598 = vunpack.c.h.b16 %v203
      %v599 = vunpack.c.l.b16 %v204
      %v600 = vunpack.c.h.b16 %v204
      %v601 = vunpack.c.l.b16 %v205
      %v602 = vunpack.c.l.b16 %v206
      %v603 = vunpack.c.h.b16 %v206
      %v604 = vunpack.c.l.b16 %v207
      %v605 = vunpack.c.h.b16 %v207
      %v606 = vunpack.c.l.b16 %v208
      %v607 = vunpack.c.h.b16 %v208
      %v608 = vunpack.c.l.b16 %v209
      %v609 = vunpack.c.l.b16 %v210
      %v610 = vunpack.c.h.b16 %v210
      %v611 = vunpack.c.l.b16 %v211
      %v612 = vunpack.c.h.b16 %v211
      %v613 = vunpack.c.l.b16 %v212
      %v614 = vunpack.c.h.b16 %v212
      %v615 = vunpack.c.l.b16 %v213
      %v616 = vunpack.c.l.b16 %v214
      %v617 = vunpack.c.h.b16 %v214
      %v618 = vunpack.c.l.b16 %v215
      %v619 = vunpack.c.h.b16 %v215
      %v620 = vunpack.c.l.b16 %v216
      %v621 = vunpack.c.h.b16 %v216
      %v622 = vunpack.c.l.b16 %v217
      %v623 = vunpack.c.l.b16 %v218
      %v624 = vunpack.c.h.b16 %v218
      %v625 = vunpack.c.l.b16 %v219
      %v626 = vunpack.c.h.b16 %v219
      %v627 = vunpack.c.l.b16 %v220
      %v628 = vunpack.c.h.b16 %v220
      %v629 = vunpack.c.l.b16 %v221
      %v630 = vunpack.c.l.b16 %v222
      %v631 = vunpack.c.h.b16 %v222
      %v632 = vunpack.c.l.b16 %v223
      %v633 = vunpack.c.h.b16 %v223
      %v634 = vunpack.c.l.b16 %v224
      %v635 = vunpack.c.h.b16 %v224
      %v636 = vunpack.c.l.b16 %v225
      %v637 = vunpack.c.l.b16 %v226
      %v638 = vunpack.c.h.b16 %v226
      %v639 = vunpack.c.l.b16 %v227
      %v640 = vunpack.c.h.b16 %v227
      %v641 = vunpack.c.l.b16 %v228
      %v642 = vunpack.c.h.b16 %v228
      %v643 = vunpack.c.l.b16 %v229
      %v644 = vunpack.c.l.b16 %v230
      %v645 = vunpack.c.h.b16 %v230
      %v646 = vunpack.c.l.b16 %v231
      %v647 = vunpack.c.h.b16 %v231
      %v648 = vunpack.c.l.b16 %v232
      %v649 = vunpack.c.h.b16 %v232
      %v650 = vunpack.c.l.b16 %v233
      %v651 = vunpack.c.l.b16 %v234
      %v652 = vunpack.c.h.b16 %v234
      %v653 = vunpack.c.l.b16 %v235
      %v654 = vunpack.c.h.b16 %v235
      %v655 = vunpack.c.l.b16 %v236
      %v656 = vunpack.c.h.b16 %v236
      %v657 = vunpack.c.l.b16 %v237
      %v658 = vunpack.c.l.b16 %v238
      %v659 = vunpack.c.h.b16 %v238
      %v660 = vunpack.c.l.b16 %v239
      %v661 = vunpack.c.h.b16 %v239
      %v662 = vunpack.c.l.b16 %v240
      %v663 = vunpack.c.h.b16 %v240
      %v664 = vunpack.c.l.b16 %v241
      %v665 = vunpack.c.l.b16 %v242
      %v666 = vunpack.c.h.b16 %v242
      %v667 = vunpack.c.l.b16 %v243
      %v668 = vunpack.c.h.b16 %v243
      %v669 = vunpack.c.l.b16 %v244
      %v670 = vunpack.c.h.b16 %v244
      %v671 = vunpack.c.l.b16 %v245
      %v672 = vunpack.c.l.b16 %v246
      %v673 = vunpack.c.h.b16 %v246
      %v674 = vunpack.c.l.b16 %v247
      %v675 = vunpack.c.h.b16 %v247
      %v676 = vunpack.c.l.b16 %v248
      %v677 = vunpack.c.h.b16 %v248
      %v678 = vunpack.c.l.b16 %v249
      %v679 = vunpack.c.l.b16 %v250
      %v680 = vunpack.c.h.b16 %v250
      %v681 = vunpack.c.l.b16 %v251
      %v682 = vunpack.c.h.b16 %v251
      %v683 = vunpack.c.l.b16 %v252
      %v684 = vunpack.c.h.b16 %v252
      %v685 = vunpack.c.l.b16 %v253
      %v686 = vunpack.c.l.b16 %v254
      %v687 = vunpack.c.h.b16 %v254
      %v688 = vunpack.c.l.b16 %v255
      %v689 = vunpack.c.h.b16 %v255
      %v690 = vunpack.c.l.b16 %v256
      %v691 = vunpack.c.h.b16 %v256
      %v692 = vunpack.c.l.b16 %v257
      %v693 = vunpack.c.l.b16 %v258
      %v694 = vunpack.c.h.b16 %v258
      %v695 = vunpack.c.l.b16 %v259
      %v696 = vunpack.c.h.b16 %v259
      %v697 = vunpack.c.l.b16 %v260
      %v698 = vunpack.c.h.b16 %v260
      %v699 = vunpack.c.l.b16 %v261
      %v700 = vunpack.c.l.b16 %v262
      %v701 = vunpack.c.h.b16 %v262
      %v702 = vunpack.c.l.b16 %v263
      %v703 = vunpack.c.h.b16 %v263
      %v704 = vunpack.c.l.b16 %v264
      %v705 = vunpack.c.h.b16 %v264
      %v706 = vunpack.c.l.b16 %v265
      %v707 = vunpack.c.l.b16 %v266
      %v708 = vunpack.c.h.b16 %v266
      %v709 = vunpack.c.l.b16 %v267
      %v710 = vunpack.c.h.b16 %v267
      %v711 = vunpack.c.l.b16 %v268
      %v712 = vunpack.c.h.b16 %v268
      %v713 = vunpack.c.l.b16 %v269
      %v714 = vunpack.c.l.b16 %v270
      %v715 = vunpack.c.h.b16 %v270
      %v716 = vunpack.c.l.b16 %v271
      %v717 = vunpack.c.h.b16 %v271
      %v718 = vunpack.c.l.b16 %v272
      %v719 = vunpack.c.h.b16 %v272
      %v720 = vunpack.c.l.b16 %v273
      %v721 = vunpack.c.l.b16 %v274
      %v722 = vunpack.c.h.b16 %v274
      %v723 = vunpack.c.l.b16 %v275
      %v724 = vunpack.c.h.b16 %v275
      %v725 = vunpack.c.l.b16 %v276
      %v726 = vunpack.c.h.b16 %v276
      %v727 = vunpack.c.l.b16 %v277
      %v728 = vunpack.c.l.b16 %v278
      %v729 = vunpack.c.h.b16 %v278
      %v730 = vunpack.c.l.b16 %v279
      %v731 = vunpack.c.h.b16 %v279
      %v732 = vunpack.c.l.b16 %v280
      %v733 = vunpack.c.h.b16 %v280
      %v734 = vunpack.c.l.b16 %v281
      %v735 = vunpack.c.l.b16 %v282
      %v736 = vunpack.c.h.b16 %v282
      %v737 = vunpack.c.l.b16 %v283
      %v738 = vunpack.c.h.b16 %v283
      %v739 = vunpack.c.l.b16 %v284
      %v740 = vunpack.c.h.b16 %v284
      %v741 = vunpack.c.l.b16 %v285
      %v742 = vunpack.c.l.b16 %v286
      %v743 = vunpack.c.h.b16 %v286
      %v744 = vunpack.c.l.b16 %v287
      %v745 = vunpack.c.h.b16 %v287
      %v746 = vunpack.c.l.b16 %v288
      %v747 = vunpack.c.h.b16 %v288
      %v748 = vunpack.c.l.b16 %v289
      %v749 = vunpack.c.l.b16 %v290
      %v750 = vunpack.c.h.b16 %v290
      %v751 = vunpack.c.l.b16 %v291
      %v752 = vunpack.c.h.b16 %v291
      %v753 = vunpack.c.l.b16 %v292
      %v754 = vunpack.c.h.b16 %v292
      %v755 = vunpack.c.l.b16 %v293
      %v756 = vunpack.c.l.b16 %v294
      %v757 = vunpack.c.h.b16 %v294
      %v758 = vunpack.c.l.b16 %v295
      %v759 = vunpack.c.h.b16 %v295
      %v760 = vunpack.c.l.b16 %v296
      %v761 = vunpack.c.h.b16 %v296
      %v762 = vunpack.c.l.b16 %v297
      %v763 = vunpack.c.l.b16 %v298
      %v764 = vunpack.c.h.b16 %v298
      %v765 = vunpack.c.l.b16 %v299
      %v766 = vunpack.c.h.b16 %v299
      %v767 = vunpack.c.l.b16 %v300
      %v768 = vunpack.c.h.b16 %v300
      %v769 = vunpack.c.l.b16 %v301
      %v770 = vunpack.c.l.b16 %v302
      %v771 = vunpack.c.h.b16 %v302
      %v772 = vunpack.c.l.b16 %v303
      %v773 = vunpack.c.h.b16 %v303
      %v774 = vunpack.c.l.b16 %v304
      %v775 = vunpack.c.h.b16 %v304
      %v776 = vunpack.c.l.b16 %v305
      %v777 = vpack.c.b16 %v560, %v553
      %v778 = vpack.c.b16 %v561, %v554
      %v779 = vpack.c.b16 %v562, %v555
      %v780 = vpack.c.b16 %v563, %v556
      %v781 = vpack.c.b16 %v564, %v557
      %v782 = vpack.c.b16 %v565, %v558
      %v783 = vpack.c.b16 %v566, %v559
      %v784 = vpack.c.b16 %v574, %v567
      %v785 = vpack.c.b16 %v575, %v568
      %v786 = vpack.c.b16 %v576, %v569
      %v787 = vpack.c.b16 %v577, %v570
      %v788 = vpack.c.b16 %v578, %v571
      %v789 = vpack.c.b16 %v579, %v572
      %v790 = vpack.c.b16 %v580, %v573
      %v791 = vpack.c.b16 %v588, %v581
      %v792 = vpack.c.b16 %v589, %v582
      %v793 = vpack.c.b16 %v590, %v583
      %v794 = vpack.c.b16 %v591, %v584
      %v795 = vpack.c.b16 %v592, %v585
      %v796 = vpack.c.b16 %v593, %v586
      %v797 = vpack.c.b16 %v594, %v587
      %v798 = vpack.c.b16 %v602, %v595
      %v799 = vpack.c.b16 %v603, %v596
      %v800 = vpack.c.b16 %v604, %v597
      %v801 = vpack.c.b16 %v605, %v598
      %v802 = vpack.c.b16 %v606, %v599
      %v803 = vpack.c.b16 %v607, %v600
      %v804 = vpack.c.b16 %v608, %v601
      %v805 = vpack.c.b16 %v616, %v609
      %v806 = vpack.c.b16 %v617, %v610
      %v807 = vpack.c.b16 %v618, %v611
      %v808 = vpack.c.b16 %v619, %v612
      %v809 = vpack.c.b16 %v620, %v613
      %v810 = vpack.c.b16 %v621, %v614
      %v811 = vpack.c.b16 %v622, %v615
      %v812 = vpack.c.b16 %v630, %v623
      %v813 = vpack.c.b16 %v631, %v624
      %v814 = vpack.c.b16 %v632, %v625
      %v815 = vpack.c.b16 %v633, %v626
      %v816 = vpack.c.b16 %v634, %v627
      %v817 = vpack.c.b16 %v635, %v628
      %v818 = vpack.c.b16 %v636, %v629
      %v819 = vpack.c.b16 %v644, %v637
      %v820 = vpack.c.b16 %v645, %v638
      %v821 = vpack.c.b16 %v646, %v639
      %v822 = vpack.c.b16 %v647, %v640
      %v823 = vpack.c.b16 %v648, %v641
      %v824 = vpack.c.b16 %v649, %v642
      %v825 = vpack.c.b16 %v650, %v643
      %v826 = vpack.c.b16 %v658, %v651
      %v827 = vpack.c.b16 %v659, %v652
      %v828 = vpack.c.b16 %v660, %v653
      %v829 = vpack.c.b16 %v661, %v654
      %v830 = vpack.c.b16 %v662, %v655
      %v831 = vpack.c.b16 %v663, %v656
      %v832 = vpack.c.b16 %v664, %v657
      %v833 = vpack.c.b16 %v672, %v665
      %v834 = vpack.c.b16 %v673, %v666
      %v835 = vpack.c.b16 %v674, %v667
      %v836 = vpack.c.b16 %v675, %v668
      %v837 = vpack.c.b16 %v676, %v669
      %v838 = vpack.c.b16 %v677, %v670
      %v839 = vpack.c.b16 %v678, %v671
      %v840 = vpack.c.b16 %v686, %v679
      %v841 = vpack.c.b16 %v687, %v680
      %v842 = vpack.c.b16 %v688, %v681
      %v843 = vpack.c.b16 %v689, %v682
      %v844 = vpack.c.b16 %v690, %v683
      %v845 = vpack.c.b16 %v691, %v684
      %v846 = vpack.c.b16 %v692, %v685
      %v847 = vpack.c.b16 %v700, %v693
      %v848 = vpack.c.b16 %v701, %v694
      %v849 = vpack.c.b16 %v702, %v695
      %v850 = vpack.c.b16 %v703, %v696
      %v851 = vpack.c.b16 %v704, %v697
      %v852 = vpack.c.b16 %v705, %v698
      %v853 = vpack.c.b16 %v706, %v699
      %v854 = vpack.c.b16 %v714, %v707
      %v855 = vpack.c.b16 %v715, %v708
      %v856 = vpack.c.b16 %v716, %v709
      %v857 = vpack.c.b16 %v717, %v710
      %v858 = vpack.c.b16 %v718, %v711
      %v859 = vpack.c.b16 %v719, %v712
      %v860 = vpack.c.b16 %v720, %v713
      %v861 = vpack.c.b16 %v728, %v721
      %v862 = vpack.c.b16 %v729, %v722
      %v863 = vpack.c.b16 %v730, %v723
      %v864 = vpack.c.b16 %v731, %v724
      %v865 = vpack.c.b16 %v732, %v725
      %v866 = vpack.c.b16 %v733, %v726
      %v867 = vpack.c.b16 %v734, %v727
      %v868 = vpack.c.b16 %v742, %v735
      %v869 = vpack.c.b16 %v743, %v736
      %v870 = vpack.c.b16 %v744, %v737
      %v871 = vpack.c.b16 %v745, %v738
      %v872 = vpack.c.b16 %v746, %v739
      %v873 = vpack.c.b16 %v747, %v740
      %v874 = vpack.c.b16 %v748, %v741
      %v875 = vpack.c.b16 %v756, %v749
      %v876 = vpack.c.b16 %v757, %v750
      %v877 = vpack.c.b16 %v758, %v751
      %v878 = vpack.c.b16 %v759, %v752
      %v879 = vpack.c.b16 %v760, %v753
      %v880 = vpack.c.b16 %v761, %v754
      %v881 = vpack.c.b16 %v762, %v755
      %v882 = vpack.c.b16 %v770, %v763
      %v883 = vpack.c.b16 %v771, %v764
      %v884 = vpack.c.b16 %v772, %v765
      %v885 = vpack.c.b16 %v773, %v766
      %v886 = vpack.c.b16 %v774, %v767
      %v887 = vpack.c.b16 %v775, %v768
      %v888 = vpack.c.b16 %v776, %v769
      %v1113 = vunpack.c.l.b16 %v306
      %v1114 = vunpack.c.l.b16 %v307
      %v1115 = vunpack.c.l.b16 %v308
      %v1116 = vunpack.c.l.b16 %v309
      %v1117 = vunpack.c.l.b16 %v310
      %v1118 = vunpack.c.l.b16 %v311
      %v1119 = vunpack.c.l.b16 %v312
      %v1120 = vunpack.c.l.b16 %v313
      %v1121 = vunpack.c.l.b16 %v314
      %v1122 = vunpack.c.l.b16 %v315
      %v1123 = vunpack.c.l.b16 %v316
      %v1124 = vunpack.c.l.b16 %v317
      %v1125 = vunpack.c.l.b16 %v318
      %v1126 = vunpack.c.l.b16 %v319
      %v1127 = vunpack.c.l.b16 %v320
      %v1128 = vunpack.c.l.b16 %v321
      %v1129 = vunpack.c.l.b16 %v322
      %v1130 = vunpack.c.l.b16 %v323
      %v1131 = vunpack.c.l.b16 %v324
      %v1132 = vunpack.c.l.b16 %v325
      %v1133 = vunpack.c.l.b16 %v326
      %v1134 = vunpack.c.l.b16 %v327
      %v1135 = vunpack.c.l.b16 %v328
      %v1136 = vunpack.c.l.b16 %v329
      %v1137 = vunpack.c.l.b16 %v330
      %v1138 = vunpack.c.l.b16 %v331
      %v1139 = vunpack.c.l.b16 %v332
      %v1140 = vunpack.c.l.b16 %v333
      %v1141 = vunpack.c.l.b16 %v334
      %v1142 = vunpack.c.l.b16 %v335
      %v1143 = vunpack.c.l.b16 %v336
      %v1144 = vunpack.c.l.b16 %v337
      %v1145 = vunpack.c.l.b16 %v338
      %v1146 = vunpack.c.l.b16 %v339
      %v1147 = vunpack.c.l.b16 %v340
      %v1148 = vunpack.c.l.b16 %v341
      %v1149 = vunpack.c.l.b16 %v342
      %v1150 = vunpack.c.l.b16 %v343
      %v1151 = vunpack.c.l.b16 %v344
      %v1152 = vunpack.c.l.b16 %v345
      %v1153 = vunpack.c.l.b16 %v346
      %v1154 = vunpack.c.l.b16 %v347
      %v1155 = vunpack.c.l.b16 %v348
      %v1156 = vunpack.c.l.b16 %v349
      %v1157 = vunpack.c.l.b16 %v350
      %v1158 = vunpack.c.l.b16 %v351
      %v1159 = vunpack.c.l.b16 %v352
      %v1160 = vunpack.c.l.b16 %v353
      %v1161 = vunpack.c.l.b16 %v354
      %v1162 = vunpack.c.l.b16 %v355
      %v1163 = vunpack.c.l.b16 %v356
      %v1164 = vunpack.c.l.b16 %v357
      %v1165 = vunpack.c.l.b16 %v358
      %v1166 = vunpack.c.l.b16 %v359
      %v1167 = vunpack.c.l.b16 %v360
      %v1168 = vunpack.c.l.b16 %v361
      %v1169 = vunpack.c.l.b16 %v362
      %v1170 = vunpack.c.l.b16 %v363
      %v1171 = vunpack.c.l.b16 %v364
      %v1172 = vunpack.c.l.b16 %v365
      %v1173 = vunpack.c.l.b16 %v366
      %v1174 = vunpack.c.l.b16 %v367
      %v1175 = vunpack.c.l.b16 %v368
      %v1176 = vunpack.c.l.b16 %v369
      %v1177 = vunpack.c.l.b16 %v370
      %v1178 = vunpack.c.l.b16 %v371
      %v1179 = vunpack.c.l.b16 %v372
      %v1180 = vunpack.c.l.b16 %v373
      %v1181 = vunpack.c.l.b16 %v374
      %v1182 = vunpack.c.l.b16 %v375
      %v1183 = vunpack.c.l.b16 %v376
      %v1184 = vunpack.c.l.b16 %v377
      %v1185 = vunpack.c.l.b16 %v378
      %v1186 = vunpack.c.l.b16 %v379
      %v1187 = vunpack.c.l.b16 %v380
      %v1188 = vunpack.c.l.b16 %v381
      %v1189 = vunpack.c.l.b16 %v382
      %v1190 = vunpack.c.l.b16 %v383
      %v1191 = vunpack.c.l.b16 %v384
      %v1192 = vunpack.c.l.b16 %v385
      %v1193 = vunpack.c.l.b16 %v386
      %v1194 = vunpack.c.l.b16 %v387
      %v1195 = vunpack.c.l.b16 %v388
      %v1196 = vunpack.c.l.b16 %v389
      %v1197 = vunpack.c.l.b16 %v390
      %v1198 = vunpack.c.l.b16 %v391
      %v1199 = vunpack.c.l.b16 %v392
      %v1200 = vunpack.c.l.b16 %v393
      %v1201 = vunpack.c.l.b16 %v394
      %v1202 = vunpack.c.l.b16 %v395
      %v1203 = vunpack.c.l.b16 %v396
      %v1204 = vunpack.c.l.b16 %v397
      %v1205 = vunpack.c.l.b16 %v398
      %v1206 = vunpack.c.l.b16 %v399
      %v1207 = vunpack.c.l.b16 %v400
      %v1208 = vunpack.c.l.b16 %v401
      %v1209 = vunpack.c.l.b16 %v402
      %v1210 = vunpack.c.l.b16 %v403
      %v1211 = vunpack.c.l.b16 %v404
      %v1212 = vunpack.c.l.b16 %v405
      %v1213 = vunpack.c.l.b16 %v406
      %v1214 = vunpack.c.l.b16 %v407
      %v1215 = vunpack.c.l.b16 %v408
      %v1216 = vunpack.c.l.b16 %v409
      %v1217 = vunpack.c.l.b16 %v410
      %v1218 = vunpack.c.l.b16 %v411
      %v1219 = vunpack.c.l.b16 %v412
      %v1220 = vunpack.c.l.b16 %v413
      %v1221 = vunpack.c.l.b16 %v414
      %v1222 = vunpack.c.l.b16 %v415
      %v1223 = vunpack.c.l.b16 %v416
      %v1224 = vunpack.c.l.b16 %v417
      %v1225 = vpack.c.b16 %v1114, %v1113
      %v1226 = vpack.c.b16 %v1116, %v1115
      %v1227 = vpack.c.b16 %v1118, %v1117
      %v1228 = vpack.c.b16 %v1120, %v1119
      %v1229 = vpack.c.b16 %v1122, %v1121
      %v1230 = vpack.c.b16 %v1124, %v1123
      %v1231 = vpack.c.b16 %v1126, %v1125
      %v1232 = vpack.c.b16 %v1128, %v1127
      %v1233 = vpack.c.b16 %v1130, %v1129
      %v1234 = vpack.c.b16 %v1132, %v1131
      %v1235 = vpack.c.b16 %v1134, %v1133
      %v1236 = vpack.c.b16 %v1136, %v1135
      %v1237 = vpack.c.b16 %v1138, %v1137
      %v1238 = vpack.c.b16 %v1140, %v1139
      %v1239 = vpack.c.b16 %v1142, %v1141
      %v1240 = vpack.c.b16 %v1144, %v1143
      %v1241 = vpack.c.b16 %v1146, %v1145
      %v1242 = vpack.c.b16 %v1148, %v1147
      %v1243 = vpack.c.b16 %v1150, %v1149
      %v1244 = vpack.c.b16 %v1152, %v1151
      %v1245 = vpack.c.b16 %v1154, %v1153
      %v1246 = vpack.c.b16 %v1156, %v1155
      %v1247 = vpack.c.b16 %v1158, %v1157
      %v1248 = vpack.c.b16 %v1160, %v1159
      %v1249 = vpack.c.b16 %v1162, %v1161
      %v1250 = vpack.c.b16 %v1164, %v1163
      %v1251 = vpack.c.b16 %v1166, %v1165
      %v1252 = vpack.c.b16 %v1168, %v1167
      %v1253 = vpack.c.b16 %v1170, %v1169
      %v1254 = vpack.c.b16 %v1172, %v1171
      %v1255 = vpack.c.b16 %v1174, %v1173
      %v1256 = vpack.c.b16 %v1176, %v1175
      %v1257 = vpack.c.b16 %v1178, %v1177
      %v1258 = vpack.c.b16 %v1180, %v1179
      %v1259 = vpack.c.b16 %v1182, %v1181
      %v1260 = vpack.c.b16 %v1184, %v1183
      %v1261 = vpack.c.b16 %v1186, %v1185
      %v1262 = vpack.c.b16 %v1188, %v1187
      %v1263 = vpack.c.b16 %v1190, %v1189
      %v1264 = vpack.c.b16 %v1192, %v1191
      %v1265 = vpack.c.b16 %v1194, %v1193
      %v1266 = vpack.c.b16 %v1196, %v1195
      %v1267 = vpack.c.b16 %v1198, %v1197
      %v1268 = vpack.c.b16 %v1200, %v1199
      %v1269 = vpack.c.b16 %v1202, %v1201
      %v1270 = vpack.c.b16 %v1204, %v1203
      %v1271 = vpack.c.b16 %v1206, %v1205
      %v1272 = vpack.c.b16 %v1208, %v1207
      %v1273 = vpack.c.b16 %v1210, %v1209
      %v1274 = vpack.c.b16 %v1212, %v1211
      %v1275 = vpack.c.b16 %v1214, %v1213
      %v1276 = vpack.c.b16 %v1216, %v1215
      %v1277 = vpack.c.b16 %v1218, %v1217
      %v1278 = vpack.c.b16 %v1220, %v1219
      %v1279 = vpack.c.b16 %v1222, %v1221
      %v1280 = vpack.c.b16 %v1224, %v1223
      %1337 = vmatprep.subr.bf16.mxu0 0
      %1338 = vmatpush1.bf16.msra.mxu0 %v1225
      %1339 = vmatprep.subr.bf16.mxu0 0
      %1340 = vmatpush1.bf16.msra.mxu0 %v1226
      %1341 = vmatprep.subr.bf16.mxu0 0
      %1342 = vmatpush1.bf16.msra.mxu0 %v1227
      %1343 = vmatprep.subr.bf16.mxu0 0
      %1344 = vmatpush1.bf16.msra.mxu0 %v1228
      %1345 = vmatprep.subr.bf16.mxu0 0
      %1346 = vmatpush1.bf16.msra.mxu0 %v1229
      %1347 = vmatprep.subr.bf16.mxu0 0
      %1348 = vmatpush1.bf16.msra.mxu0 %v1230
      %1349 = vmatprep.subr.bf16.mxu0 0
      %1350 = vmatpush1.bf16.msra.mxu0 %v1231
      %1351 = vmatprep.subr.bf16.mxu0 0
      %1352 = vmatpush1.bf16.msra.mxu0 %v1232
      %1353 = vmatprep.subr.bf16.mxu0 0
      %1354 = vmatpush1.bf16.msra.mxu0 %v1233
      %1355 = vmatprep.subr.bf16.mxu0 0
      %1356 = vmatpush1.bf16.msra.mxu0 %v1234
      %1357 = vmatprep.subr.bf16.mxu0 0
      %1358 = vmatpush1.bf16.msra.mxu0 %v1235
      %1359 = vmatprep.subr.bf16.mxu0 0
      %1360 = vmatpush1.bf16.msra.mxu0 %v1236
      %1361 = vmatprep.subr.bf16.mxu0 0
      %1362 = vmatpush1.bf16.msra.mxu0 %v1237
      %1363 = vmatprep.subr.bf16.mxu0 0
      %1364 = vmatpush1.bf16.msra.mxu0 %v1238
      %1365 = vmatprep.subr.bf16.mxu0 0
      %1366 = vmatpush1.bf16.msra.mxu0 %v1239
      %1367 = vmatprep.subr.bf16.mxu0 0
      %1368 = vmatpush1.bf16.msra.mxu0 %v1240
      %1369 = vmatprep.mubr.bf16.mxu0 %v778
      %1370 = vmatmul.mubr.bf16.gmra.mrb[0].mxu0 %v777
      %v1371 = vpop.f32.mrb[0].mxu0
      %v1372 = vadd.f32 %v423, %v1371
      %v1373 = vpop.f32.mrb[0].mxu0
      %v1374 = vpop.f32.mrb[0].mxu0
      %v1375 = vadd.f32 %v423, %v1374
      %v1376 = vpop.f32.mrb[0].mxu0
      %1377 = vmatprep.mubr.bf16.mxu0 %v785
      %1378 = vmatmul.mubr.bf16.gmra.mrb[0].mxu0 %v784
      %v1379 = vpop.f32.mrb[0].mxu0
      %v1380 = vadd.f32 %v423, %v1379
      %v1381 = vpop.f32.mrb[0].mxu0
      %v1382 = vpop.f32.mrb[0].mxu0
      %v1383 = vadd.f32 %v423, %v1382
      %v1384 = vpop.f32.mrb[0].mxu0
      %1385 = vmatprep.mubr.bf16.mxu0 %v792
      %1386 = vmatmul.mubr.bf16.gmra.mrb[0].mxu0 %v791
      %v1387 = vpop.f32.mrb[0].mxu0
      %v1388 = vadd.f32 %v423, %v1387
      %v1389 = vpop.f32.mrb[0].mxu0
      %v1390 = vpop.f32.mrb[0].mxu0
      %v1391 = vadd.f32 %v423, %v1390
      %v1392 = vpop.f32.mrb[0].mxu0
      %1393 = vmatprep.mubr.bf16.mxu0 %v799
      %1394 = vmatmul.mubr.bf16.gmra.mrb[0].mxu0 %v798
      %v1395 = vpop.f32.mrb[0].mxu0
      %v1396 = vadd.f32 %v423, %v1395
      %v1397 = vpop.f32.mrb[0].mxu0
      %v1398 = vpop.f32.mrb[0].mxu0
      %v1399 = vadd.f32 %v423, %v1398
      %v1400 = vpop.f32.mrb[0].mxu0
      %1401 = vmatprep.mubr.bf16.mxu0 %v806
      %1402 = vmatmul.mubr.bf16.gmra.mrb[0].mxu0 %v805
      %v1403 = vpop.f32.mrb[0].mxu0
      %v1404 = vadd.f32 %v423, %v1403
      %v1405 = vpop.f32.mrb[0].mxu0
      %v1406 = vpop.f32.mrb[0].mxu0
      %v1407 = vadd.f32 %v423, %v1406
      %v1408 = vpop.f32.mrb[0].mxu0
      %1409 = vmatprep.mubr.bf16.mxu0 %v813
      %1410 = vmatmul.mubr.bf16.gmra.mrb[0].mxu0 %v812
      %v1411 = vpop.f32.mrb[0].mxu0
      %v1412 = vadd.f32 %v423, %v1411
      %v1413 = vpop.f32.mrb[0].mxu0
      %v1414 = vpop.f32.mrb[0].mxu0
      %v1415 = vadd.f32 %v423, %v1414
      %v1416 = vpop.f32.mrb[0].mxu0
      %1417 = vmatprep.mubr.bf16.mxu0 %v820
      %1418 = vmatmul.mubr.bf16.gmra.mrb[0].mxu0 %v819
      %v1419 = vpop.f32.mrb[0].mxu0
      %v1420 = vadd.f32 %v423, %v1419
      %v1421 = vpop.f32.mrb[0].mxu0
      %v1422 = vpop.f32.mrb[0].mxu0
      %v1423 = vadd.f32 %v423, %v1422
      %v1424 = vpop.f32.mrb[0].mxu0
      %1425 = vmatprep.mubr.bf16.mxu0 %v827
      %1426 = vmatmul.mubr.bf16.gmra.mrb[0].mxu0 %v826
      %v1427 = vpop.f32.mrb[0].mxu0
      %v1428 = vadd.f32 %v423, %v1427
      %v1429 = vpop.f32.mrb[0].mxu0
      %v1430 = vpop.f32.mrb[0].mxu0
      %v1431 = vadd.f32 %v423, %v1430
      %v1432 = vpop.f32.mrb[0].mxu0
      %1433 = vmatprep.mubr.bf16.mxu0 %v834
      %1434 = vmatmul.mubr.bf16.gmra.mrb[0].mxu0 %v833
      %v1435 = vpop.f32.mrb[0].mxu0
      %v1436 = vadd.f32 %v423, %v1435
      %v1437 = vpop.f32.mrb[0].mxu0
      %v1438 = vpop.f32.mrb[0].mxu0
      %v1439 = vadd.f32 %v423, %v1438
      %v1440 = vpop.f32.mrb[0].mxu0
      %1441 = vmatprep.mubr.bf16.mxu0 %v841
      %1442 = vmatmul.mubr.bf16.gmra.mrb[0].mxu0 %v840
      %v1443 = vpop.f32.mrb[0].mxu0
      %v1444 = vadd.f32 %v423, %v1443
      %v1445 = vpop.f32.mrb[0].mxu0
      %v1446 = vpop.f32.mrb[0].mxu0
      %v1447 = vadd.f32 %v423, %v1446
      %v1448 = vpop.f32.mrb[0].mxu0
      %1449 = vmatprep.mubr.bf16.mxu0 %v848
      %1450 = vmatmul.mubr.bf16.gmra.mrb[0].mxu0 %v847
      %v1451 = vpop.f32.mrb[0].mxu0
      %v1452 = vadd.f32 %v423, %v1451
      %v1453 = vpop.f32.mrb[0].mxu0
      %v1454 = vpop.f32.mrb[0].mxu0
      %v1455 = vadd.f32 %v423, %v1454
      %v1456 = vpop.f32.mrb[0].mxu0
      %1457 = vmatprep.mubr.bf16.mxu0 %v855
      %1458 = vmatmul.mubr.bf16.gmra.mrb[0].mxu0 %v854
      %v1459 = vpop.f32.mrb[0].mxu0
      %v1460 = vadd.f32 %v423, %v1459
      %v1461 = vpop.f32.mrb[0].mxu0
      %v1462 = vpop.f32.mrb[0].mxu0
      %v1463 = vadd.f32 %v423, %v1462
      %v1464 = vpop.f32.mrb[0].mxu0
      %1465 = vmatprep.mubr.bf16.mxu0 %v862
      %1466 = vmatmul.mubr.bf16.gmra.mrb[0].mxu0 %v861
      %v1467 = vpop.f32.mrb[0].mxu0
      %v1468 = vadd.f32 %v423, %v1467
      %v1469 = vpop.f32.mrb[0].mxu0
      %v1470 = vpop.f32.mrb[0].mxu0
      %v1471 = vadd.f32 %v423, %v1470
      %v1472 = vpop.f32.mrb[0].mxu0
      %1473 = vmatprep.mubr.bf16.mxu0 %v869
      %1474 = vmatmul.mubr.bf16.gmra.mrb[0].mxu0 %v868
      %v1475 = vpop.f32.mrb[0].mxu0
      %v1476 = vadd.f32 %v423, %v1475
      %v1477 = vpop.f32.mrb[0].mxu0
      %v1478 = vpop.f32.mrb[0].mxu0
      %v1479 = vadd.f32 %v423, %v1478
      %v1480 = vpop.f32.mrb[0].mxu0
      %1481 = vmatprep.mubr.bf16.mxu0 %v876
      %1482 = vmatmul.mubr.bf16.gmra.mrb[0].mxu0 %v875
      %v1483 = vpop.f32.mrb[0].mxu0
      %v1484 = vadd.f32 %v423, %v1483
      %v1485 = vpop.f32.mrb[0].mxu0
      %v1486 = vpop.f32.mrb[0].mxu0
      %v1487 = vadd.f32 %v423, %v1486
      %v1488 = vpop.f32.mrb[0].mxu0
      %1489 = vmatprep.mubr.bf16.mxu0 %v883
      %1490 = vmatmul.mubr.bf16.gmra.mrb[0].mxu0 %v882
      %v1491 = vpop.f32.mrb[0].mxu0
      %v1492 = vadd.f32 %v423, %v1491
      %v1493 = vpop.f32.mrb[0].mxu0
      %v1494 = vpop.f32.mrb[0].mxu0
      %v1495 = vadd.f32 %v423, %v1494
      %v1496 = vpop.f32.mrb[0].mxu0
      %1497 = vdwg.mxu0
      %1498 = vmatprep.subr.bf16.mxu0 0
      %1499 = vmatpush1.bf16.msra.mxu0 %v1241
      %1500 = vmatprep.subr.bf16.mxu0 0
      %1501 = vmatpush1.bf16.msra.mxu0 %v1242
      %1502 = vmatprep.subr.bf16.mxu0 0
      %1503 = vmatpush1.bf16.msra.mxu0 %v1243
      %1504 = vmatprep.subr.bf16.mxu0 0
      %1505 = vmatpush1.bf16.msra.mxu0 %v1244
      %1506 = vmatprep.subr.bf16.mxu0 0
      %1507 = vmatpush1.bf16.msra.mxu0 %v1245
      %1508 = vmatprep.subr.bf16.mxu0 0
      %1509 = vmatpush1.bf16.msra.mxu0 %v1246
      %1510 = vmatprep.subr.bf16.mxu0 0
      %1511 = vmatpush1.bf16.msra.mxu0 %v1247
      %1512 = vmatprep.subr.bf16.mxu0 0
      %1513 = vmatpush1.bf16.msra.mxu0 %v1248
      %1514 = vmatprep.subr.bf16.mxu0 0
      %1515 = vmatpush1.bf16.msra.mxu0 %v1249
      %1516 = vmatprep.subr.bf16.mxu0 0
      %1517 = vmatpush1.bf16.msra.mxu0 %v1250
      %1518 = vmatprep.subr.bf16.mxu0 0
      %1519 = vmatpush1.bf16.msra.mxu0 %v1251
      %1520 = vmatprep.subr.bf16.mxu0 0
      %1521 = vmatpush1.bf16.msra.mxu0 %v1252
      %1522 = vmatprep.subr.bf16.mxu0 0
      %1523 = vmatpush1.bf16.msra.mxu0 %v1253
      %1524 = vmatprep.subr.bf16.mxu0 0
      %1525 = vmatpush1.bf16.msra.mxu0 %v1254
      %1526 = vmatprep.subr.bf16.mxu0 0
      %1527 = vmatpush1.bf16.msra.mxu0 %v1255
      %1528 = vmatprep.subr.bf16.mxu0 0
      %1529 = vmatpush1.bf16.msra.mxu0 %v1256
      %1530 = vmatprep.mubr.bf16.mxu0 %v780
      %1531 = vmatmul.mubr.bf16.gmra.mrb[0].mxu0 %v779
      %v1532 = vpop.f32.mrb[0].mxu0
      %v1533 = vadd.f32 %v1372, %v1532
      %v1534 = vpop.f32.mrb[0].mxu0
      %v1535 = vpop.f32.mrb[0].mxu0
      %v1536 = vadd.f32 %v1375, %v1535
      %v1537 = vpop.f32.mrb[0].mxu0
      %1538 = vmatprep.mubr.bf16.mxu0 %v787
      %1539 = vmatmul.mubr.bf16.gmra.mrb[0].mxu0 %v786
      %v1540 = vpop.f32.mrb[0].mxu0
      %v1541 = vadd.f32 %v1380, %v1540
      %v1542 = vpop.f32.mrb[0].mxu0
      %v1543 = vpop.f32.mrb[0].mxu0
      %v1544 = vadd.f32 %v1383, %v1543
      %v1545 = vpop.f32.mrb[0].mxu0
      %1546 = vmatprep.mubr.bf16.mxu0 %v794
      %1547 = vmatmul.mubr.bf16.gmra.mrb[0].mxu0 %v793
      %v1548 = vpop.f32.mrb[0].mxu0
      %v1549 = vadd.f32 %v1388, %v1548
      %v1550 = vpop.f32.mrb[0].mxu0
      %v1551 = vpop.f32.mrb[0].mxu0
      %v1552 = vadd.f32 %v1391, %v1551
      %v1553 = vpop.f32.mrb[0].mxu0
      %1554 = vmatprep.mubr.bf16.mxu0 %v801
      %1555 = vmatmul.mubr.bf16.gmra.mrb[0].mxu0 %v800
      %v1556 = vpop.f32.mrb[0].mxu0
      %v1557 = vadd.f32 %v1396, %v1556
      %v1558 = vpop.f32.mrb[0].mxu0
      %v1559 = vpop.f32.mrb[0].mxu0
      %v1560 = vadd.f32 %v1399, %v1559
      %v1561 = vpop.f32.mrb[0].mxu0
      %1562 = vmatprep.mubr.bf16.mxu0 %v808
      %1563 = vmatmul.mubr.bf16.gmra.mrb[0].mxu0 %v807
      %v1564 = vpop.f32.mrb[0].mxu0
      %v1565 = vadd.f32 %v1404, %v1564
      %v1566 = vpop.f32.mrb[0].mxu0
      %v1567 = vpop.f32.mrb[0].mxu0
      %v1568 = vadd.f32 %v1407, %v1567
      %v1569 = vpop.f32.mrb[0].mxu0
      %1570 = vmatprep.mubr.bf16.mxu0 %v815
      %1571 = vmatmul.mubr.bf16.gmra.mrb[0].mxu0 %v814
      %v1572 = vpop.f32.mrb[0].mxu0
      %v1573 = vadd.f32 %v1412, %v1572
      %v1574 = vpop.f32.mrb[0].mxu0
      %v1575 = vpop.f32.mrb[0].mxu0
      %v1576 = vadd.f32 %v1415, %v1575
      %v1577 = vpop.f32.mrb[0].mxu0
      %1578 = vmatprep.mubr.bf16.mxu0 %v822
      %1579 = vmatmul.mubr.bf16.gmra.mrb[0].mxu0 %v821
      %v1580 = vpop.f32.mrb[0].mxu0
      %v1581 = vadd.f32 %v1420, %v1580
      %v1582 = vpop.f32.mrb[0].mxu0
      %v1583 = vpop.f32.mrb[0].mxu0
      %v1584 = vadd.f32 %v1423, %v1583
      %v1585 = vpop.f32.mrb[0].mxu0
      %1586 = vmatprep.mubr.bf16.mxu0 %v829
      %1587 = vmatmul.mubr.bf16.gmra.mrb[0].mxu0 %v828
      %v1588 = vpop.f32.mrb[0].mxu0
      %v1589 = vadd.f32 %v1428, %v1588
      %v1590 = vpop.f32.mrb[0].mxu0
      %v1591 = vpop.f32.mrb[0].mxu0
      %v1592 = vadd.f32 %v1431, %v1591
      %v1593 = vpop.f32.mrb[0].mxu0
      %1594 = vmatprep.mubr.bf16.mxu0 %v836
      %1595 = vmatmul.mubr.bf16.gmra.mrb[0].mxu0 %v835
      %v1596 = vpop.f32.mrb[0].mxu0
      %v1597 = vadd.f32 %v1436, %v1596
      %v1598 = vpop.f32.mrb[0].mxu0
      %v1599 = vpop.f32.mrb[0].mxu0
      %v1600 = vadd.f32 %v1439, %v1599
      %v1601 = vpop.f32.mrb[0].mxu0
      %1602 = vmatprep.mubr.bf16.mxu0 %v843
      %1603 = vmatmul.mubr.bf16.gmra.mrb[0].mxu0 %v842
      %v1604 = vpop.f32.mrb[0].mxu0
      %v1605 = vadd.f32 %v1444, %v1604
      %v1606 = vpop.f32.mrb[0].mxu0
      %v1607 = vpop.f32.mrb[0].mxu0
      %v1608 = vadd.f32 %v1447, %v1607
      %v1609 = vpop.f32.mrb[0].mxu0
      %1610 = vmatprep.mubr.bf16.mxu0 %v850
      %1611 = vmatmul.mubr.bf16.gmra.mrb[0].mxu0 %v849
      %v1612 = vpop.f32.mrb[0].mxu0
      %v1613 = vadd.f32 %v1452, %v1612
      %v1614 = vpop.f32.mrb[0].mxu0
      %v1615 = vpop.f32.mrb[0].mxu0
      %v1616 = vadd.f32 %v1455, %v1615
      %v1617 = vpop.f32.mrb[0].mxu0
      %1618 = vmatprep.mubr.bf16.mxu0 %v857
      %1619 = vmatmul.mubr.bf16.gmra.mrb[0].mxu0 %v856
      %v1620 = vpop.f32.mrb[0].mxu0
      %v1621 = vadd.f32 %v1460, %v1620
      %v1622 = vpop.f32.mrb[0].mxu0
      %v1623 = vpop.f32.mrb[0].mxu0
      %v1624 = vadd.f32 %v1463, %v1623
      %v1625 = vpop.f32.mrb[0].mxu0
      %1626 = vmatprep.mubr.bf16.mxu0 %v864
      %1627 = vmatmul.mubr.bf16.gmra.mrb[0].mxu0 %v863
      %v1628 = vpop.f32.mrb[0].mxu0
      %v1629 = vadd.f32 %v1468, %v1628
      %v1630 = vpop.f32.mrb[0].mxu0
      %v1631 = vpop.f32.mrb[0].mxu0
      %v1632 = vadd.f32 %v1471, %v1631
      %v1633 = vpop.f32.mrb[0].mxu0
      %1634 = vmatprep.mubr.bf16.mxu0 %v871
      %1635 = vmatmul.mubr.bf16.gmra.mrb[0].mxu0 %v870
      %v1636 = vpop.f32.mrb[0].mxu0
      %v1637 = vadd.f32 %v1476, %v1636
      %v1638 = vpop.f32.mrb[0].mxu0
      %v1639 = vpop.f32.mrb[0].mxu0
      %v1640 = vadd.f32 %v1479, %v1639
      %v1641 = vpop.f32.mrb[0].mxu0
      %1642 = vmatprep.mubr.bf16.mxu0 %v878
      %1643 = vmatmul.mubr.bf16.gmra.mrb[0].mxu0 %v877
      %v1644 = vpop.f32.mrb[0].mxu0
      %v1645 = vadd.f32 %v1484, %v1644
      %v1646 = vpop.f32.mrb[0].mxu0
      %v1647 = vpop.f32.mrb[0].mxu0
      %v1648 = vadd.f32 %v1487, %v1647
      %v1649 = vpop.f32.mrb[0].mxu0
      %1650 = vmatprep.mubr.bf16.mxu0 %v885
      %1651 = vmatmul.mubr.bf16.gmra.mrb[0].mxu0 %v884
      %v1652 = vpop.f32.mrb[0].mxu0
      %v1653 = vadd.f32 %v1492, %v1652
      %v1654 = vpop.f32.mrb[0].mxu0
      %v1655 = vpop.f32.mrb[0].mxu0
      %v1656 = vadd.f32 %v1495, %v1655
      %v1657 = vpop.f32.mrb[0].mxu0
      %1658 = vdwg.mxu0
      %1659 = vmatprep.subr.bf16.mxu0 0
      %1660 = vmatpush1.bf16.msra.mxu0 %v1257
      %1661 = vmatprep.subr.bf16.mxu0 0
      %1662 = vmatpush1.bf16.msra.mxu0 %v1258
      %1663 = vmatprep.subr.bf16.mxu0 0
      %1664 = vmatpush1.bf16.msra.mxu0 %v1259
      %1665 = vmatprep.subr.bf16.mxu0 0
      %1666 = vmatpush1.bf16.msra.mxu0 %v1260
      %1667 = vmatprep.subr.bf16.mxu0 0
      %1668 = vmatpush1.bf16.msra.mxu0 %v1261
      %1669 = vmatprep.subr.bf16.mxu0 0
      %1670 = vmatpush1.bf16.msra.mxu0 %v1262
      %1671 = vmatprep.subr.bf16.mxu0 0
      %1672 = vmatpush1.bf16.msra.mxu0 %v1263
      %1673 = vmatprep.subr.bf16.mxu0 0
      %1674 = vmatpush1.bf16.msra.mxu0 %v1264
      %1675 = vmatprep.subr.bf16.mxu0 0
      %1676 = vmatpush1.bf16.msra.mxu0 %v1265
      %1677 = vmatprep.subr.bf16.mxu0 0
      %1678 = vmatpush1.bf16.msra.mxu0 %v1266
      %1679 = vmatprep.subr.bf16.mxu0 0
      %1680 = vmatpush1.bf16.msra.mxu0 %v1267
      %1681 = vmatprep.subr.bf16.mxu0 0
      %1682 = vmatpush1.bf16.msra.mxu0 %v1268
      %1683 = vmatprep.subr.bf16.mxu0 0
      %1684 = vmatpush1.bf16.msra.mxu0 %v1269
      %1685 = vmatprep.subr.bf16.mxu0 0
      %1686 = vmatpush1.bf16.msra.mxu0 %v1270
      %1687 = vmatprep.subr.bf16.mxu0 0
      %1688 = vmatpush1.bf16.msra.mxu0 %v1271
      %1689 = vmatprep.subr.bf16.mxu0 0
      %1690 = vmatpush1.bf16.msra.mxu0 %v1272
      %1691 = vmatprep.mubr.bf16.mxu0 %v782
      %1692 = vmatmul.mubr.bf16.gmra.mrb[0].mxu0 %v781
      %v1693 = vpop.f32.mrb[0].mxu0
      %v1694 = vadd.f32 %v1533, %v1693
      %v1695 = vpop.f32.mrb[0].mxu0
      %v1696 = vpop.f32.mrb[0].mxu0
      %v1697 = vadd.f32 %v1536, %v1696
      %v1698 = vpop.f32.mrb[0].mxu0
      %1699 = vmatprep.mubr.bf16.mxu0 %v789
      %1700 = vmatmul.mubr.bf16.gmra.mrb[0].mxu0 %v788
      %v1701 = vpop.f32.mrb[0].mxu0
      %v1702 = vadd.f32 %v1541, %v1701
      %v1703 = vpop.f32.mrb[0].mxu0
      %v1704 = vpop.f32.mrb[0].mxu0
      %v1705 = vadd.f32 %v1544, %v1704
      %v1706 = vpop.f32.mrb[0].mxu0
      %1707 = vmatprep.mubr.bf16.mxu0 %v796
      %1708 = vmatmul.mubr.bf16.gmra.mrb[0].mxu0 %v795
      %v1709 = vpop.f32.mrb[0].mxu0
      %v1710 = vadd.f32 %v1549, %v1709
      %v1711 = vpop.f32.mrb[0].mxu0
      %v1712 = vpop.f32.mrb[0].mxu0
      %v1713 = vadd.f32 %v1552, %v1712
      %v1714 = vpop.f32.mrb[0].mxu0
      %1715 = vmatprep.mubr.bf16.mxu0 %v803
      %1716 = vmatmul.mubr.bf16.gmra.mrb[0].mxu0 %v802
      %v1717 = vpop.f32.mrb[0].mxu0
      %v1718 = vadd.f32 %v1557, %v1717
      %v1719 = vpop.f32.mrb[0].mxu0
      %v1720 = vpop.f32.mrb[0].mxu0
      %v1721 = vadd.f32 %v1560, %v1720
      %v1722 = vpop.f32.mrb[0].mxu0
      %1723 = vmatprep.mubr.bf16.mxu0 %v810
      %1724 = vmatmul.mubr.bf16.gmra.mrb[0].mxu0 %v809
      %v1725 = vpop.f32.mrb[0].mxu0
      %v1726 = vadd.f32 %v1565, %v1725
      %v1727 = vpop.f32.mrb[0].mxu0
      %v1728 = vpop.f32.mrb[0].mxu0
      %v1729 = vadd.f32 %v1568, %v1728
      %v1730 = vpop.f32.mrb[0].mxu0
      %1731 = vmatprep.mubr.bf16.mxu0 %v817
      %1732 = vmatmul.mubr.bf16.gmra.mrb[0].mxu0 %v816
      %v1733 = vpop.f32.mrb[0].mxu0
      %v1734 = vadd.f32 %v1573, %v1733
      %v1735 = vpop.f32.mrb[0].mxu0
      %v1736 = vpop.f32.mrb[0].mxu0
      %v1737 = vadd.f32 %v1576, %v1736
      %v1738 = vpop.f32.mrb[0].mxu0
      %1739 = vmatprep.mubr.bf16.mxu0 %v824
      %1740 = vmatmul.mubr.bf16.gmra.mrb[0].mxu0 %v823
      %v1741 = vpop.f32.mrb[0].mxu0
      %v1742 = vadd.f32 %v1581, %v1741
      %v1743 = vpop.f32.mrb[0].mxu0
      %v1744 = vpop.f32.mrb[0].mxu0
      %v1745 = vadd.f32 %v1584, %v1744
      %v1746 = vpop.f32.mrb[0].mxu0
      %1747 = vmatprep.mubr.bf16.mxu0 %v831
      %1748 = vmatmul.mubr.bf16.gmra.mrb[0].mxu0 %v830
      %v1749 = vpop.f32.mrb[0].mxu0
      %v1750 = vadd.f32 %v1589, %v1749
      %v1751 = vpop.f32.mrb[0].mxu0
      %v1752 = vpop.f32.mrb[0].mxu0
      %v1753 = vadd.f32 %v1592, %v1752
      %v1754 = vpop.f32.mrb[0].mxu0
      %1755 = vmatprep.mubr.bf16.mxu0 %v838
      %1756 = vmatmul.mubr.bf16.gmra.mrb[0].mxu0 %v837
      %v1757 = vpop.f32.mrb[0].mxu0
      %v1758 = vadd.f32 %v1597, %v1757
      %v1759 = vpop.f32.mrb[0].mxu0
      %v1760 = vpop.f32.mrb[0].mxu0
      %v1761 = vadd.f32 %v1600, %v1760
      %v1762 = vpop.f32.mrb[0].mxu0
      %1763 = vmatprep.mubr.bf16.mxu0 %v845
      %1764 = vmatmul.mubr.bf16.gmra.mrb[0].mxu0 %v844
      %v1765 = vpop.f32.mrb[0].mxu0
      %v1766 = vadd.f32 %v1605, %v1765
      %v1767 = vpop.f32.mrb[0].mxu0
      %v1768 = vpop.f32.mrb[0].mxu0
      %v1769 = vadd.f32 %v1608, %v1768
      %v1770 = vpop.f32.mrb[0].mxu0
      %1771 = vmatprep.mubr.bf16.mxu0 %v852
      %1772 = vmatmul.mubr.bf16.gmra.mrb[0].mxu0 %v851
      %v1773 = vpop.f32.mrb[0].mxu0
      %v1774 = vadd.f32 %v1613, %v1773
      %v1775 = vpop.f32.mrb[0].mxu0
      %v1776 = vpop.f32.mrb[0].mxu0
      %v1777 = vadd.f32 %v1616, %v1776
      %v1778 = vpop.f32.mrb[0].mxu0
      %1779 = vmatprep.mubr.bf16.mxu0 %v859
      %1780 = vmatmul.mubr.bf16.gmra.mrb[0].mxu0 %v858
      %v1781 = vpop.f32.mrb[0].mxu0
      %v1782 = vadd.f32 %v1621, %v1781
      %v1783 = vpop.f32.mrb[0].mxu0
      %v1784 = vpop.f32.mrb[0].mxu0
      %v1785 = vadd.f32 %v1624, %v1784
      %v1786 = vpop.f32.mrb[0].mxu0
      %1787 = vmatprep.mubr.bf16.mxu0 %v866
      %1788 = vmatmul.mubr.bf16.gmra.mrb[0].mxu0 %v865
      %v1789 = vpop.f32.mrb[0].mxu0
      %v1790 = vadd.f32 %v1629, %v1789
      %v1791 = vpop.f32.mrb[0].mxu0
      %v1792 = vpop.f32.mrb[0].mxu0
      %v1793 = vadd.f32 %v1632, %v1792
      %v1794 = vpop.f32.mrb[0].mxu0
      %1795 = vmatprep.mubr.bf16.mxu0 %v873
      %1796 = vmatmul.mubr.bf16.gmra.mrb[0].mxu0 %v872
      %v1797 = vpop.f32.mrb[0].mxu0
      %v1798 = vadd.f32 %v1637, %v1797
      %v1799 = vpop.f32.mrb[0].mxu0
      %v1800 = vpop.f32.mrb[0].mxu0
      %v1801 = vadd.f32 %v1640, %v1800
      %v1802 = vpop.f32.mrb[0].mxu0
      %1803 = vmatprep.mubr.bf16.mxu0 %v880
      %1804 = vmatmul.mubr.bf16.gmra.mrb[0].mxu0 %v879
      %v1805 = vpop.f32.mrb[0].mxu0
      %v1806 = vadd.f32 %v1645, %v1805
      %v1807 = vpop.f32.mrb[0].mxu0
      %v1808 = vpop.f32.mrb[0].mxu0
      %v1809 = vadd.f32 %v1648, %v1808
      %v1810 = vpop.f32.mrb[0].mxu0
      %1811 = vmatprep.mubr.bf16.mxu0 %v887
      %1812 = vmatmul.mubr.bf16.gmra.mrb[0].mxu0 %v886
      %v1813 = vpop.f32.mrb[0].mxu0
      %v1814 = vadd.f32 %v1653, %v1813
      %v1815 = vpop.f32.mrb[0].mxu0
      %v1816 = vpop.f32.mrb[0].mxu0
      %v1817 = vadd.f32 %v1656, %v1816
      %v1818 = vpop.f32.mrb[0].mxu0
      %1819 = vdwg.mxu0
      %1820 = vmatprep.subr.bf16.mxu0 0
      %1821 = vmatpush1.bf16.msra.mxu0 %v1273
      %1822 = vmatprep.subr.bf16.mxu0 0
      %1823 = vmatpush1.bf16.msra.mxu0 %v1274
      %1824 = vmatprep.subr.bf16.mxu0 0
      %1825 = vmatpush1.bf16.msra.mxu0 %v1275
      %1826 = vmatprep.subr.bf16.mxu0 0
      %1827 = vmatpush1.bf16.msra.mxu0 %v1276
      %1828 = vmatprep.subr.bf16.mxu0 0
      %1829 = vmatpush1.bf16.msra.mxu0 %v1277
      %1830 = vmatprep.subr.bf16.mxu0 0
      %1831 = vmatpush1.bf16.msra.mxu0 %v1278
      %1832 = vmatprep.subr.bf16.mxu0 0
      %1833 = vmatpush1.bf16.msra.mxu0 %v1279
      %1834 = vmatprep.subr.bf16.mxu0 0
      %1835 = vmatpush1.bf16.msra.mxu0 %v1280
      %1836 = vmatprep.subr.bf16.mxu0 0
      %1837 = vmatpush1.bf16.msra.mxu0 0
      %1838 = vmatprep.subr.bf16.mxu0 0
      %1839 = vmatpush1.bf16.msra.mxu0 0
      %1840 = vmatprep.subr.bf16.mxu0 0
      %1841 = vmatpush1.bf16.msra.mxu0 0
      %1842 = vmatprep.subr.bf16.mxu0 0
      %1843 = vmatpush1.bf16.msra.mxu0 0
      %1844 = vmatprep.subr.bf16.mxu0 0
      %1845 = vmatpush1.bf16.msra.mxu0 0
      %1846 = vmatprep.subr.bf16.mxu0 0
      %1847 = vmatpush1.bf16.msra.mxu0 0
      %1848 = vmatprep.subr.bf16.mxu0 0
      %1849 = vmatpush1.bf16.msra.mxu0 0
      %1850 = vmatprep.subr.bf16.mxu0 0
      %1851 = vmatpush1.bf16.msra.mxu0 0
      %1852 = vmatprep.mubr.bf16.mxu0 0
      %1853 = vmatmul.mubr.bf16.gmra.mrb[0].mxu0 %v783
      %v1854 = vpop.f32.mrb[0].mxu0
      %v1855 = vadd.f32 %v1694, %v1854
      %v1856 = vpop.f32.mrb[0].mxu0
      %v1857 = vpop.f32.mrb[0].mxu0
      %v1858 = vadd.f32 %v1697, %v1857
      %v1859 = vpop.f32.mrb[0].mxu0
      %1860 = vmatprep.mubr.bf16.mxu0 0
      %1861 = vmatmul.mubr.bf16.gmra.mrb[0].mxu0 %v790
      %v1862 = vpop.f32.mrb[0].mxu0
      %v1863 = vadd.f32 %v1702, %v1862
      %v1864 = vpop.f32.mrb[0].mxu0
      %v1865 = vpop.f32.mrb[0].mxu0
      %v1866 = vadd.f32 %v1705, %v1865
      %v1867 = vpop.f32.mrb[0].mxu0
      %1868 = vmatprep.mubr.bf16.mxu0 0
      %1869 = vmatmul.mubr.bf16.gmra.mrb[0].mxu0 %v797
      %v1870 = vpop.f32.mrb[0].mxu0
      %v1871 = vadd.f32 %v1710, %v1870
      %v1872 = vpop.f32.mrb[0].mxu0
      %v1873 = vpop.f32.mrb[0].mxu0
      %v1874 = vadd.f32 %v1713, %v1873
      %v1875 = vpop.f32.mrb[0].mxu0
      %1876 = vmatprep.mubr.bf16.mxu0 0
      %1877 = vmatmul.mubr.bf16.gmra.mrb[0].mxu0 %v804
      %v1878 = vpop.f32.mrb[0].mxu0
      %v1879 = vadd.f32 %v1718, %v1878
      %v1880 = vpop.f32.mrb[0].mxu0
      %v1881 = vpop.f32.mrb[0].mxu0
      %v1882 = vadd.f32 %v1721, %v1881
      %v1883 = vpop.f32.mrb[0].mxu0
      %1884 = vmatprep.mubr.bf16.mxu0 0
      %1885 = vmatmul.mubr.bf16.gmra.mrb[0].mxu0 %v811
      %v1886 = vpop.f32.mrb[0].mxu0
      %v1887 = vadd.f32 %v1726, %v1886
      %v1888 = vpop.f32.mrb[0].mxu0
      %v1889 = vpop.f32.mrb[0].mxu0
      %v1890 = vadd.f32 %v1729, %v1889
      %v1891 = vpop.f32.mrb[0].mxu0
      %1892 = vmatprep.mubr.bf16.mxu0 0
      %1893 = vmatmul.mubr.bf16.gmra.mrb[0].mxu0 %v818
      %v1894 = vpop.f32.mrb[0].mxu0
      %v1895 = vadd.f32 %v1734, %v1894
      %v1896 = vpop.f32.mrb[0].mxu0
      %v1897 = vpop.f32.mrb[0].mxu0
      %v1898 = vadd.f32 %v1737, %v1897
      %v1899 = vpop.f32.mrb[0].mxu0
      %1900 = vmatprep.mubr.bf16.mxu0 0
      %1901 = vmatmul.mubr.bf16.gmra.mrb[0].mxu0 %v825
      %v1902 = vpop.f32.mrb[0].mxu0
      %v1903 = vadd.f32 %v1742, %v1902
      %v1904 = vpop.f32.mrb[0].mxu0
      %v1905 = vpop.f32.mrb[0].mxu0
      %v1906 = vadd.f32 %v1745, %v1905
      %v1907 = vpop.f32.mrb[0].mxu0
      %1908 = vmatprep.mubr.bf16.mxu0 0
      %1909 = vmatmul.mubr.bf16.gmra.mrb[0].mxu0 %v832
      %v1910 = vpop.f32.mrb[0].mxu0
      %v1911 = vadd.f32 %v1750, %v1910
      %v1912 = vpop.f32.mrb[0].mxu0
      %v1913 = vpop.f32.mrb[0].mxu0
      %v1914 = vadd.f32 %v1753, %v1913
      %v1915 = vpop.f32.mrb[0].mxu0
      %1916 = vmatprep.mubr.bf16.mxu0 0
      %1917 = vmatmul.mubr.bf16.gmra.mrb[0].mxu0 %v839
      %v1918 = vpop.f32.mrb[0].mxu0
      %v1919 = vadd.f32 %v1758, %v1918
      %v1920 = vpop.f32.mrb[0].mxu0
      %v1921 = vpop.f32.mrb[0].mxu0
      %v1922 = vadd.f32 %v1761, %v1921
      %v1923 = vpop.f32.mrb[0].mxu0
      %1924 = vmatprep.mubr.bf16.mxu0 0
      %1925 = vmatmul.mubr.bf16.gmra.mrb[0].mxu0 %v846
      %v1926 = vpop.f32.mrb[0].mxu0
      %v1927 = vadd.f32 %v1766, %v1926
      %v1928 = vpop.f32.mrb[0].mxu0
      %v1929 = vpop.f32.mrb[0].mxu0
      %v1930 = vadd.f32 %v1769, %v1929
      %v1931 = vpop.f32.mrb[0].mxu0
      %1932 = vmatprep.mubr.bf16.mxu0 0
      %1933 = vmatmul.mubr.bf16.gmra.mrb[0].mxu0 %v853
      %v1934 = vpop.f32.mrb[0].mxu0
      %v1935 = vadd.f32 %v1774, %v1934
      %v1936 = vpop.f32.mrb[0].mxu0
      %v1937 = vpop.f32.mrb[0].mxu0
      %v1938 = vadd.f32 %v1777, %v1937
      %v1939 = vpop.f32.mrb[0].mxu0
      %1940 = vmatprep.mubr.bf16.mxu0 0
      %1941 = vmatmul.mubr.bf16.gmra.mrb[0].mxu0 %v860
      %v1942 = vpop.f32.mrb[0].mxu0
      %v1943 = vadd.f32 %v1782, %v1942
      %v1944 = vpop.f32.mrb[0].mxu0
      %v1945 = vpop.f32.mrb[0].mxu0
      %v1946 = vadd.f32 %v1785, %v1945
      %v1947 = vpop.f32.mrb[0].mxu0
      %1948 = vmatprep.mubr.bf16.mxu0 0
      %1949 = vmatmul.mubr.bf16.gmra.mrb[0].mxu0 %v867
      %v1950 = vpop.f32.mrb[0].mxu0
      %v1951 = vadd.f32 %v1790, %v1950
      %v1952 = vpop.f32.mrb[0].mxu0
      %v1953 = vpop.f32.mrb[0].mxu0
      %v1954 = vadd.f32 %v1793, %v1953
      %v1955 = vpop.f32.mrb[0].mxu0
      %1956 = vmatprep.mubr.bf16.mxu0 0
      %1957 = vmatmul.mubr.bf16.gmra.mrb[0].mxu0 %v874
      %v1958 = vpop.f32.mrb[0].mxu0
      %v1959 = vadd.f32 %v1798, %v1958
      %v1960 = vpop.f32.mrb[0].mxu0
      %v1961 = vpop.f32.mrb[0].mxu0
      %v1962 = vadd.f32 %v1801, %v1961
      %v1963 = vpop.f32.mrb[0].mxu0
      %1964 = vmatprep.mubr.bf16.mxu0 0
      %1965 = vmatmul.mubr.bf16.gmra.mrb[0].mxu0 %v881
      %v1966 = vpop.f32.mrb[0].mxu0
      %v1967 = vadd.f32 %v1806, %v1966
      %v1968 = vpop.f32.mrb[0].mxu0
      %v1969 = vpop.f32.mrb[0].mxu0
      %v1970 = vadd.f32 %v1809, %v1969
      %v1971 = vpop.f32.mrb[0].mxu0
      %1972 = vmatprep.mubr.bf16.mxu0 0
      %1973 = vmatmul.mubr.bf16.gmra.mrb[0].mxu0 %v888
      %v1974 = vpop.f32.mrb[0].mxu0
      %v1975 = vadd.f32 %v1814, %v1974
      %v1976 = vpop.f32.mrb[0].mxu0
      %v1977 = vpop.f32.mrb[0].mxu0
      %v1978 = vadd.f32 %v1817, %v1977
      %v1979 = vpop.f32.mrb[0].mxu0
      %1980 = vdwg.mxu0
      %v1981 = vmax.f32 %v1855, 0.0
      %v1982 = vmax.f32 %v1858, 0.0
      %v1983 = vmax.f32 %v1863, 0.0
      %v1984 = vmax.f32 %v1866, 0.0
      %v1985 = vmax.f32 %v1871, 0.0
      %v1986 = vmax.f32 %v1874, 0.0
      %v1987 = vmax.f32 %v1879, 0.0
      %v1988 = vmax.f32 %v1882, 0.0
      %v1989 = vmax.f32 %v1887, 0.0
      %v1990 = vmax.f32 %v1890, 0.0
      %v1991 = vmax.f32 %v1895, 0.0
      %v1992 = vmax.f32 %v1898, 0.0
      %v1993 = vmax.f32 %v1903, 0.0
      %v1994 = vmax.f32 %v1906, 0.0
      %v1995 = vmax.f32 %v1911, 0.0
      %v1996 = vmax.f32 %v1914, 0.0
      %v1997 = vmax.f32 %v1919, 0.0
      %v1998 = vmax.f32 %v1922, 0.0
      %v1999 = vmax.f32 %v1927, 0.0
      %v2000 = vmax.f32 %v1930, 0.0
      %v2001 = vmax.f32 %v1935, 0.0
      %v2002 = vmax.f32 %v1938, 0.0
      %v2003 = vmax.f32 %v1943, 0.0
      %v2004 = vmax.f32 %v1946, 0.0
      %v2005 = vmax.f32 %v1951, 0.0
      %v2006 = vmax.f32 %v1954, 0.0
      %v2007 = vmax.f32 %v1959, 0.0
      %v2008 = vmax.f32 %v1962, 0.0
      %v2009 = vmax.f32 %v1967, 0.0
      %v2010 = vmax.f32 %v1970, 0.0
      %v2011 = vmax.f32 %v1975, 0.0
      %v2012 = vmax.f32 %v1978, 0.0
      %v2013 = vmax.f32 %v1981, %v1989
      %v2014 = vmax.f32 %v1982, %v1990
      %v2015 = vmax.f32 %v1983, %v1991
      %v2016 = vmax.f32 %v1984, %v1992
      %v2017 = vmax.f32 %v1985, %v1993
      %v2018 = vmax.f32 %v1986, %v1994
      %v2019 = vmax.f32 %v1987, %v1995
      %v2020 = vmax.f32 %v1988, %v1996
      %v2021 = vmax.f32 %v1997, %v2005
      %v2022 = vmax.f32 %v1998, %v2006
      %v2023 = vmax.f32 %v1999, %v2007
      %v2024 = vmax.f32 %v2000, %v2008
      %v2025 = vmax.f32 %v2001, %v2009
      %v2026 = vmax.f32 %v2002, %v2010
      %v2027 = vmax.f32 %v2003, %v2011
      %v2028 = vmax.f32 %v2004, %v2012
      %v2029 = vmax.f32 %v2013, %v2021
      %v2030 = vmax.f32 %v2014, %v2022
      %v2031 = vmax.f32 %v2015, %v2023
      %v2032 = vmax.f32 %v2016, %v2024
      %v2033 = vmax.f32 %v2017, %v2025
      %v2034 = vmax.f32 %v2018, %v2026
      %v2035 = vmax.f32 %v2019, %v2027
      %v2036 = vmax.f32 %v2020, %v2028
      %2037 = vst [vmem:[%s175] sm:$0xff] %v2029
      %2038 = vst [vmem:[%s175 + $0x8] sm:$0xff] %v2030
      %2039 = vst [vmem:[%s175 + $0x10] sm:$0xff] %v2031
      %2040 = vst [vmem:[%s175 + $0x18] sm:$0xff] %v2032
      %2041 = vst [vmem:[%s175 + $0x20] sm:$0xff] %v2033
      %2042 = vst [vmem:[%s175 + $0x28] sm:$0xff] %v2034
      %2043 = vst [vmem:[%s175 + $0x30] sm:$0xff] %v2035
      %2044 = vst [vmem:[%s175 + $0x38] sm:$0xff] %v2036
      %s2045 = smul.u32 8, %s14
      %p2046 = scmp.lt.s32.totalorder %s2045, 15
      %s2047 = scalar_select %p2046, %s2045, 15
      %s2048 = smul.addr %s2047, 8
      %s2049 = scalar_lea.vmem %s3, %s2048
      // Predicated region
      $region33: #{cnn_cifar1_forward.4} parent=31 // pred_check
        %p2050 = pneg %p100
      $region34: #{cnn_cifar1_forward.4} parent=31 // pred_check_branch
        %2052 = sbr.rel (%p2050) target = $region36
      $region35: #{cnn_cifar1_forward.4} parent=31 // pred_region
        %s2053 = smul.u32 8, %s14
      $region36: #{cnn_cifar1_forward.4} parent=31 // pred_fallthru
        _
    $region32: #{cnn_cifar1_forward.4} parent=5 // pred_fallthru
      _
    %p2054 = scmp.le.s32.totalorder 2, %s9
    // Predicated region
    $region37: #{cnn_cifar1_forward.4} parent=5 // pred_check
      %p2055 = pneg %p2054
    $region38: #{cnn_cifar1_forward.4} parent=5 // pred_check_branch
      %2057 = sbr.rel (%p2055) target = $region40
    $region39: #{cnn_cifar1_forward.4} parent=5 // pred_region
      %s2058 = ssub.s32 %s9, 2
      // Predicated region
      $region41: #{cnn_cifar1_forward.4} parent=39 // pred_check
        %p2059 = pneg %p106
      $region42: #{cnn_cifar1_forward.4} parent=39 // pred_check_branch
        %2061 = sbr.rel (%p2059) target = $region44
      $region43: #{cnn_cifar1_forward.4} parent=39 // pred_region
        %s2062 = smul.u32 8, %s15
        %p2063 = scmp.lt.s32.totalorder %s2062, 15
        %s2064 = scalar_select %p2063, %s2062, 15
        %s2065 = smul.addr %s2064, 8
        %s2066 = scalar_lea.vmem %s3, %s2065
      $region44: #{cnn_cifar1_forward.4} parent=39 // pred_fallthru
        _
    $region40: #{cnn_cifar1_forward.4} parent=5 // pred_fallthru
      _
  $region6: #{cnn_cifar1_forward.4} parent=0 // loop_footer
    %s13 = sadd.s32 1, %s9
  $region7: #{cnn_cifar1_forward.4} parent=0 // loop_footer_branch
    %8 = sbr.rel target = $region3
  $region8: #{cnn_cifar1_forward.4} parent=0 // loop_exit
    _

// kernel: cnn_cifar1_forward.5
$region0: #{cnn_cifar1_forward.5}
  #allocation0 [shape = 'u32[]', space=smem, size = 0x4, offset = 0x4, fixed_abs, tag = 'smem constant byte address 0x4 - core index']
  #allocation1 [shape = 'u32[144,128]{1,0:T(1,128)}', space=vmem, size = 0x12000, scoped, tag = 'internal scratch']
  %s0 = inlined_call_operand.vmem [shape: f32[2,4096], index: 0, kind: input, shape index: {}]
  %s1 = inlined_call_operand.vmem [shape: bf16[4096,512], index: 1, kind: input, shape index: {}]
  %s2 = inlined_call_operand.vmem [shape: f32[1,512], index: 2, kind: input, shape index: {}]
  %s3 = inlined_call_operand.vmem [shape: bf16[512,128], index: 3, kind: input, shape index: {}]
  %s4 = inlined_call_operand.vmem [shape: f32[1,128], index: 4, kind: input, shape index: {}]
  %s5 = inlined_call_operand.vmem [shape: bf16[128,128], index: 5, kind: input, shape index: {}]
  %s6 = inlined_call_operand.vmem [shape: f32[1,128], index: 6, kind: input, shape index: {}]
  %s7 = inlined_call_operand.hbm [shape: f32[2,128], index: 7, kind: output, shape index: {}]
  %s8 = sld [smem:[#allocation0]]
  $region38: #{cnn_cifar1_forward.5} parent=0
    _
  %s10 = ssub.s32 1, %s8
  %s11 = scalar_select 0, %s10, %s8
  $region1: #{cnn_cifar1_forward.5} parent=0
    #allocation2 [shape = 'u8[1024]{0}', space=vmem, size = 0x400, scoped, tag = 'output window, operand 0, single buffered']
    #allocation3 [shape = 's32[1]{0}', space=sflag, size = 0x4, scoped, tag = 'scoped memory for cnn_cifar1_forward.5']
    %12 = vsyncpa [#allocation3], 0
    // Predicated region
    $region2: #{cnn_cifar1_forward.5} parent=1 // pred_check
      _
    $region3: #{cnn_cifar1_forward.5} parent=1 // pred_check_branch
      %14 = sbr.rel (0) target = $region5
    $region4: #{cnn_cifar1_forward.5} parent=1 // pred_region
      _
    $region5: #{cnn_cifar1_forward.5} parent=1 // pred_fallthru
      _
    // Predicated region
    $region6: #{cnn_cifar1_forward.5} parent=1 // pred_check
      _
    $region7: #{cnn_cifar1_forward.5} parent=1 // pred_check_branch
      %16 = sbr.rel (0) target = $region9
    $region8: #{cnn_cifar1_forward.5} parent=1 // pred_region
      _
    $region9: #{cnn_cifar1_forward.5} parent=1 // pred_fallthru
      _
    // Predicated region
    $region10: #{cnn_cifar1_forward.5} parent=1 // pred_check
      _
    $region11: #{cnn_cifar1_forward.5} parent=1 // pred_check_branch
      %18 = sbr.rel (0) target = $region13
    $region12: #{cnn_cifar1_forward.5} parent=1 // pred_region
      _
    $region13: #{cnn_cifar1_forward.5} parent=1 // pred_fallthru
      _
    // Predicated region
    $region14: #{cnn_cifar1_forward.5} parent=1 // pred_check
      _
    $region15: #{cnn_cifar1_forward.5} parent=1 // pred_check_branch
      %20 = sbr.rel (0) target = $region17
    $region16: #{cnn_cifar1_forward.5} parent=1 // pred_region
      _
    $region17: #{cnn_cifar1_forward.5} parent=1 // pred_fallthru
      _
    // Predicated region
    $region18: #{cnn_cifar1_forward.5} parent=1 // pred_check
      _
    $region19: #{cnn_cifar1_forward.5} parent=1 // pred_check_branch
      %22 = sbr.rel (0) target = $region21
    $region20: #{cnn_cifar1_forward.5} parent=1 // pred_region
      _
    $region21: #{cnn_cifar1_forward.5} parent=1 // pred_fallthru
      _
    // Predicated region
    $region22: #{cnn_cifar1_forward.5} parent=1 // pred_check
      _
    $region23: #{cnn_cifar1_forward.5} parent=1 // pred_check_branch
      %24 = sbr.rel (0) target = $region25
    $region24: #{cnn_cifar1_forward.5} parent=1 // pred_region
      _
    $region25: #{cnn_cifar1_forward.5} parent=1 // pred_fallthru
      _
    // Predicated region
    $region26: #{cnn_cifar1_forward.5} parent=1 // pred_check
      _
    $region27: #{cnn_cifar1_forward.5} parent=1 // pred_check_branch
      %26 = sbr.rel (0) target = $region29
    $region28: #{cnn_cifar1_forward.5} parent=1 // pred_region
      _
    $region29: #{cnn_cifar1_forward.5} parent=1 // pred_fallthru
      _
    %v28 = vld [vmem:[%s0] sm:$0xff]
    %v29 = vld [vmem:[%s0 + $0x8] sm:$0xff]
    %v30 = vld [vmem:[%s0 + $0x10] sm:$0xff]
    %v31 = vld [vmem:[%s0 + $0x18] sm:$0xff]
    %v32 = vld [vmem:[%s0 + $0x20] sm:$0xff]
    %v33 = vld [vmem:[%s0 + $0x28] sm:$0xff]
    %v34 = vld [vmem:[%s0 + $0x30] sm:$0xff]
    %v35 = vld [vmem:[%s0 + $0x38] sm:$0xff]
    %v44 = vcombine.high %v28, %v28
    %v46 = vunpack.c.l.s4 1983009808
    %v47 = vunpack.c.0.s8 %v46
    %v48 = vlaneseq
    %v49 = vshrl.u32 %v48, 7
    %v50 = vsub.s32 %v47, %v49
    %v51 = vrot.slane %v28, %v50
    %v53 = vunpack.c.l.s4 1983009808
    %v54 = vunpack.c.0.s8 %v53
    %v55 = vlaneseq
    %v56 = vshrl.u32 %v55, 7
    %v57 = vsub.s32 %v54, %v56
    %v58 = vrot.slane %v44, %v57
    %v59 = vcombine.high %v51, %v51
    %v60 = vcombine.high %v58, %v58
    %v61 = vcombine.high %v29, %v29
    %v63 = vunpack.c.l.s4 1983009808
    %v64 = vunpack.c.0.s8 %v63
    %v65 = vlaneseq
    %v66 = vshrl.u32 %v65, 7
    %v67 = vsub.s32 %v64, %v66
    %v68 = vrot.slane %v29, %v67
    %v70 = vunpack.c.l.s4 1983009808
    %v71 = vunpack.c.0.s8 %v70
    %v72 = vlaneseq
    %v73 = vshrl.u32 %v72, 7
    %v74 = vsub.s32 %v71, %v73
    %v75 = vrot.slane %v61, %v74
    %v76 = vcombine.high %v68, %v68
    %v77 = vcombine.high %v75, %v75
    %v78 = vcombine.high %v30, %v30
    %v80 = vunpack.c.l.s4 1983009808
    %v81 = vunpack.c.0.s8 %v80
    %v82 = vlaneseq
    %v83 = vshrl.u32 %v82, 7
    %v84 = vsub.s32 %v81, %v83
    %v85 = vrot.slane %v30, %v84
    %v87 = vunpack.c.l.s4 1983009808
    %v88 = vunpack.c.0.s8 %v87
    %v89 = vlaneseq
    %v90 = vshrl.u32 %v89, 7
    %v91 = vsub.s32 %v88, %v90
    %v92 = vrot.slane %v78, %v91
    %v93 = vcombine.high %v85, %v85
    %v94 = vcombine.high %v92, %v92
    %v95 = vcombine.high %v31, %v31
    %v97 = vunpack.c.l.s4 1983009808
    %v98 = vunpack.c.0.s8 %v97
    %v99 = vlaneseq
    %v100 = vshrl.u32 %v99, 7
    %v101 = vsub.s32 %v98, %v100
    %v102 = vrot.slane %v31, %v101
    %v104 = vunpack.c.l.s4 1983009808
    %v105 = vunpack.c.0.s8 %v104
    %v106 = vlaneseq
    %v107 = vshrl.u32 %v106, 7
    %v108 = vsub.s32 %v105, %v107
    %v109 = vrot.slane %v95, %v108
    %v110 = vcombine.high %v102, %v102
    %v111 = vcombine.high %v109, %v109
    %v112 = vcombine.high %v32, %v32
    %v114 = vunpack.c.l.s4 1983009808
    %v115 = vunpack.c.0.s8 %v114
    %v116 = vlaneseq
    %v117 = vshrl.u32 %v116, 7
    %v118 = vsub.s32 %v115, %v117
    %v119 = vrot.slane %v32, %v118
    %v121 = vunpack.c.l.s4 1983009808
    %v122 = vunpack.c.0.s8 %v121
    %v123 = vlaneseq
    %v124 = vshrl.u32 %v123, 7
    %v125 = vsub.s32 %v122, %v124
    %v126 = vrot.slane %v112, %v125
    %v127 = vcombine.high %v119, %v119
    %v128 = vcombine.high %v126, %v126
    %v129 = vcombine.high %v33, %v33
    %v131 = vunpack.c.l.s4 1983009808
    %v132 = vunpack.c.0.s8 %v131
    %v133 = vlaneseq
    %v134 = vshrl.u32 %v133, 7
    %v135 = vsub.s32 %v132, %v134
    %v136 = vrot.slane %v33, %v135
    %v138 = vunpack.c.l.s4 1983009808
    %v139 = vunpack.c.0.s8 %v138
    %v140 = vlaneseq
    %v141 = vshrl.u32 %v140, 7
    %v142 = vsub.s32 %v139, %v141
    %v143 = vrot.slane %v129, %v142
    %v144 = vcombine.high %v136, %v136
    %v145 = vcombine.high %v143, %v143
    %v146 = vcombine.high %v34, %v34
    %v148 = vunpack.c.l.s4 1983009808
    %v149 = vunpack.c.0.s8 %v148
    %v150 = vlaneseq
    %v151 = vshrl.u32 %v150, 7
    %v152 = vsub.s32 %v149, %v151
    %v153 = vrot.slane %v34, %v152
    %v155 = vunpack.c.l.s4 1983009808
    %v156 = vunpack.c.0.s8 %v155
    %v157 = vlaneseq
    %v158 = vshrl.u32 %v157, 7
    %v159 = vsub.s32 %v156, %v158
    %v160 = vrot.slane %v146, %v159
    %v161 = vcombine.high %v153, %v153
    %v162 = vcombine.high %v160, %v160
    %v163 = vcombine.high %v35, %v35
    %v165 = vunpack.c.l.s4 1983009808
    %v166 = vunpack.c.0.s8 %v165
    %v167 = vlaneseq
    %v168 = vshrl.u32 %v167, 7
    %v169 = vsub.s32 %v166, %v168
    %v170 = vrot.slane %v35, %v169
    %v172 = vunpack.c.l.s4 1983009808
    %v173 = vunpack.c.0.s8 %v172
    %v174 = vlaneseq
    %v175 = vshrl.u32 %v174, 7
    %v176 = vsub.s32 %v173, %v175
    %v177 = vrot.slane %v163, %v176
    %v178 = vcombine.high %v170, %v170
    %v179 = vcombine.high %v177, %v177
    %v212 = vpack.c.bf16 %v51, %v51
    %v213 = vpack.c.bf16 %v59, %v59
    %v214 = vpack.c.bf16 %v58, %v58
    %v215 = vpack.c.bf16 %v60, %v60
    %v216 = vpack.c.bf16 %v68, %v68
    %v217 = vpack.c.bf16 %v76, %v76
    %v218 = vpack.c.bf16 %v75, %v75
    %v219 = vpack.c.bf16 %v77, %v77
    %v220 = vpack.c.bf16 %v85, %v85
    %v221 = vpack.c.bf16 %v93, %v93
    %v222 = vpack.c.bf16 %v92, %v92
    %v223 = vpack.c.bf16 %v94, %v94
    %v224 = vpack.c.bf16 %v102, %v102
    %v225 = vpack.c.bf16 %v110, %v110
    %v226 = vpack.c.bf16 %v109, %v109
    %v227 = vpack.c.bf16 %v111, %v111
    %v228 = vpack.c.bf16 %v119, %v119
    %v229 = vpack.c.bf16 %v127, %v127
    %v230 = vpack.c.bf16 %v126, %v126
    %v231 = vpack.c.bf16 %v128, %v128
    %v232 = vpack.c.bf16 %v136, %v136
    %v233 = vpack.c.bf16 %v144, %v144
    %v234 = vpack.c.bf16 %v143, %v143
    %v235 = vpack.c.bf16 %v145, %v145
    %v236 = vpack.c.bf16 %v153, %v153
    %v237 = vpack.c.bf16 %v161, %v161
    %v238 = vpack.c.bf16 %v160, %v160
    %v239 = vpack.c.bf16 %v162, %v162
    %v240 = vpack.c.bf16 %v170, %v170
    %v241 = vpack.c.bf16 %v178, %v178
    %v242 = vpack.c.bf16 %v177, %v177
    %v243 = vpack.c.bf16 %v179, %v179
    %v244 = vld [vmem:[%s1] sm:$0xff]
    %v245 = vld [vmem:[%s1 + $0x8] sm:$0xff]
    %v246 = vld [vmem:[%s1 + $0x10] sm:$0xff]
    %v247 = vld [vmem:[%s1 + $0x18] sm:$0xff]
    %v248 = vld [vmem:[%s1 + $0x20] sm:$0xff]
    %v249 = vld [vmem:[%s1 + $0x28] sm:$0xff]
    %v250 = vld [vmem:[%s1 + $0x30] sm:$0xff]
    %v251 = vld [vmem:[%s1 + $0x38] sm:$0xff]
    %v252 = vld [vmem:[%s1 + $0x40] sm:$0xff]
    %v253 = vld [vmem:[%s1 + $0x48] sm:$0xff]
    %v254 = vld [vmem:[%s1 + $0x50] sm:$0xff]
    %v255 = vld [vmem:[%s1 + $0x58] sm:$0xff]
    %v256 = vld [vmem:[%s1 + $0x60] sm:$0xff]
    %v257 = vld [vmem:[%s1 + $0x68] sm:$0xff]
    %v258 = vld [vmem:[%s1 + $0x70] sm:$0xff]
    %v259 = vld [vmem:[%s1 + $0x78] sm:$0xff]
    %v260 = vld [vmem:[%s1 + $0x80] sm:$0xff]
    %v261 = vld [vmem:[%s1 + $0x88] sm:$0xff]
    %v262 = vld [vmem:[%s1 + $0x90] sm:$0xff]
    %v263 = vld [vmem:[%s1 + $0x98] sm:$0xff]
    %v264 = vld [vmem:[%s1 + $0xa0] sm:$0xff]
    %v265 = vld [vmem:[%s1 + $0xa8] sm:$0xff]
    %v266 = vld [vmem:[%s1 + $0xb0] sm:$0xff]
    %v267 = vld [vmem:[%s1 + $0xb8] sm:$0xff]
    %v268 = vld [vmem:[%s1 + $0xc0] sm:$0xff]
    %v269 = vld [vmem:[%s1 + $0xc8] sm:$0xff]
    %v270 = vld [vmem:[%s1 + $0xd0] sm:$0xff]
    %v271 = vld [vmem:[%s1 + $0xd8] sm:$0xff]
    %v272 = vld [vmem:[%s1 + $0xe0] sm:$0xff]
    %v273 = vld [vmem:[%s1 + $0xe8] sm:$0xff]
    %v274 = vld [vmem:[%s1 + $0xf0] sm:$0xff]
    %v275 = vld [vmem:[%s1 + $0xf8] sm:$0xff]
    %v276 = vld [vmem:[%s1 + $0x100] sm:$0xff]
    %v277 = vld [vmem:[%s1 + $0x108] sm:$0xff]
    %v278 = vld [vmem:[%s1 + $0x110] sm:$0xff]
    %v279 = vld [vmem:[%s1 + $0x118] sm:$0xff]
    %v280 = vld [vmem:[%s1 + $0x120] sm:$0xff]
    %v281 = vld [vmem:[%s1 + $0x128] sm:$0xff]
    %v282 = vld [vmem:[%s1 + $0x130] sm:$0xff]
    %v283 = vld [vmem:[%s1 + $0x138] sm:$0xff]
    %v284 = vld [vmem:[%s1 + $0x140] sm:$0xff]
    %v285 = vld [vmem:[%s1 + $0x148] sm:$0xff]
    %v286 = vld [vmem:[%s1 + $0x150] sm:$0xff]
    %v287 = vld [vmem:[%s1 + $0x158] sm:$0xff]
    %v288 = vld [vmem:[%s1 + $0x160] sm:$0xff]
    %v289 = vld [vmem:[%s1 + $0x168] sm:$0xff]
    %v290 = vld [vmem:[%s1 + $0x170] sm:$0xff]
    %v291 = vld [vmem:[%s1 + $0x178] sm:$0xff]
    %v292 = vld [vmem:[%s1 + $0x180] sm:$0xff]
    %v293 = vld [vmem:[%s1 + $0x188] sm:$0xff]
    %v294 = vld [vmem:[%s1 + $0x190] sm:$0xff]
    %v295 = vld [vmem:[%s1 + $0x198] sm:$0xff]
    %v296 = vld [vmem:[%s1 + $0x1a0] sm:$0xff]
    %v297 = vld [vmem:[%s1 + $0x1a8] sm:$0xff]
    %v298 = vld [vmem:[%s1 + $0x1b0] sm:$0xff]
    %v299 = vld [vmem:[%s1 + $0x1b8] sm:$0xff]
    %v300 = vld [vmem:[%s1 + $0x1c0] sm:$0xff]
    %v301 = vld [vmem:[%s1 + $0x1c8] sm:$0xff]
    %v302 = vld [vmem:[%s1 + $0x1d0] sm:$0xff]
    %v303 = vld [vmem:[%s1 + $0x1d8] sm:$0xff]
    %v304 = vld [vmem:[%s1 + $0x1e0] sm:$0xff]
    %v305 = vld [vmem:[%s1 + $0x1e8] sm:$0xff]
    %v306 = vld [vmem:[%s1 + $0x1f0] sm:$0xff]
    %v307 = vld [vmem:[%s1 + $0x1f8] sm:$0xff]
    %v308 = vld [vmem:[%s1 + $0x200] sm:$0xff]
    %v309 = vld [vmem:[%s1 + $0x208] sm:$0xff]
    %v310 = vld [vmem:[%s1 + $0x210] sm:$0xff]
    %v311 = vld [vmem:[%s1 + $0x218] sm:$0xff]
    %v312 = vld [vmem:[%s1 + $0x220] sm:$0xff]
    %v313 = vld [vmem:[%s1 + $0x228] sm:$0xff]
    %v314 = vld [vmem:[%s1 + $0x230] sm:$0xff]
    %v315 = vld [vmem:[%s1 + $0x238] sm:$0xff]
    %v316 = vld [vmem:[%s1 + $0x240] sm:$0xff]
    %v317 = vld [vmem:[%s1 + $0x248] sm:$0xff]
    %v318 = vld [vmem:[%s1 + $0x250] sm:$0xff]
    %v319 = vld [vmem:[%s1 + $0x258] sm:$0xff]
    %v320 = vld [vmem:[%s1 + $0x260] sm:$0xff]
    %v321 = vld [vmem:[%s1 + $0x268] sm:$0xff]
    %v322 = vld [vmem:[%s1 + $0x270] sm:$0xff]
    %v323 = vld [vmem:[%s1 + $0x278] sm:$0xff]
    %v324 = vld [vmem:[%s1 + $0x280] sm:$0xff]
    %v325 = vld [vmem:[%s1 + $0x288] sm:$0xff]
    %v326 = vld [vmem:[%s1 + $0x290] sm:$0xff]
    %v327 = vld [vmem:[%s1 + $0x298] sm:$0xff]
    %v328 = vld [vmem:[%s1 + $0x2a0] sm:$0xff]
    %v329 = vld [vmem:[%s1 + $0x2a8] sm:$0xff]
    %v330 = vld [vmem:[%s1 + $0x2b0] sm:$0xff]
    %v331 = vld [vmem:[%s1 + $0x2b8] sm:$0xff]
    %v332 = vld [vmem:[%s1 + $0x2c0] sm:$0xff]
    %v333 = vld [vmem:[%s1 + $0x2c8] sm:$0xff]
    %v334 = vld [vmem:[%s1 + $0x2d0] sm:$0xff]
    %v335 = vld [vmem:[%s1 + $0x2d8] sm:$0xff]
    %v336 = vld [vmem:[%s1 + $0x2e0] sm:$0xff]
    %v337 = vld [vmem:[%s1 + $0x2e8] sm:$0xff]
    %v338 = vld [vmem:[%s1 + $0x2f0] sm:$0xff]
    %v339 = vld [vmem:[%s1 + $0x2f8] sm:$0xff]
    %v340 = vld [vmem:[%s1 + $0x300] sm:$0xff]
    %v341 = vld [vmem:[%s1 + $0x308] sm:$0xff]
    %v342 = vld [vmem:[%s1 + $0x310] sm:$0xff]
    %v343 = vld [vmem:[%s1 + $0x318] sm:$0xff]
    %v344 = vld [vmem:[%s1 + $0x320] sm:$0xff]
    %v345 = vld [vmem:[%s1 + $0x328] sm:$0xff]
    %v346 = vld [vmem:[%s1 + $0x330] sm:$0xff]
    %v347 = vld [vmem:[%s1 + $0x338] sm:$0xff]
    %v348 = vld [vmem:[%s1 + $0x340] sm:$0xff]
    %v349 = vld [vmem:[%s1 + $0x348] sm:$0xff]
    %v350 = vld [vmem:[%s1 + $0x350] sm:$0xff]
    %v351 = vld [vmem:[%s1 + $0x358] sm:$0xff]
    %v352 = vld [vmem:[%s1 + $0x360] sm:$0xff]
    %v353 = vld [vmem:[%s1 + $0x368] sm:$0xff]
    %v354 = vld [vmem:[%s1 + $0x370] sm:$0xff]
    %v355 = vld [vmem:[%s1 + $0x378] sm:$0xff]
    %v356 = vld [vmem:[%s1 + $0x380] sm:$0xff]
    %v357 = vld [vmem:[%s1 + $0x388] sm:$0xff]
    %v358 = vld [vmem:[%s1 + $0x390] sm:$0xff]
    %v359 = vld [vmem:[%s1 + $0x398] sm:$0xff]
    %v360 = vld [vmem:[%s1 + $0x3a0] sm:$0xff]
    %v361 = vld [vmem:[%s1 + $0x3a8] sm:$0xff]
    %v362 = vld [vmem:[%s1 + $0x3b0] sm:$0xff]
    %v363 = vld [vmem:[%s1 + $0x3b8] sm:$0xff]
    %v364 = vld [vmem:[%s1 + $0x3c0] sm:$0xff]
    %v365 = vld [vmem:[%s1 + $0x3c8] sm:$0xff]
    %v366 = vld [vmem:[%s1 + $0x3d0] sm:$0xff]
    %v367 = vld [vmem:[%s1 + $0x3d8] sm:$0xff]
    %v368 = vld [vmem:[%s1 + $0x3e0] sm:$0xff]
    %v369 = vld [vmem:[%s1 + $0x3e8] sm:$0xff]
    %v370 = vld [vmem:[%s1 + $0x3f0] sm:$0xff]
    %v371 = vld [vmem:[%s1 + $0x3f8] sm:$0xff]
    %v372 = vld [vmem:[%s1 + $0x400] sm:$0xff]
    %v373 = vld [vmem:[%s1 + $0x408] sm:$0xff]
    %v374 = vld [vmem:[%s1 + $0x410] sm:$0xff]
    %v375 = vld [vmem:[%s1 + $0x418] sm:$0xff]
    %v376 = vld [vmem:[%s1 + $0x420] sm:$0xff]
    %v377 = vld [vmem:[%s1 + $0x428] sm:$0xff]
    %v378 = vld [vmem:[%s1 + $0x430] sm:$0xff]
    %v379 = vld [vmem:[%s1 + $0x438] sm:$0xff]
    %v380 = vld [vmem:[%s1 + $0x440] sm:$0xff]
    %v381 = vld [vmem:[%s1 + $0x448] sm:$0xff]
    %v382 = vld [vmem:[%s1 + $0x450] sm:$0xff]
    %v383 = vld [vmem:[%s1 + $0x458] sm:$0xff]
    %v384 = vld [vmem:[%s1 + $0x460] sm:$0xff]
    %v385 = vld [vmem:[%s1 + $0x468] sm:$0xff]
    %v386 = vld [vmem:[%s1 + $0x470] sm:$0xff]
    %v387 = vld [vmem:[%s1 + $0x478] sm:$0xff]
    %v388 = vld [vmem:[%s1 + $0x480] sm:$0xff]
    %v389 = vld [vmem:[%s1 + $0x488] sm:$0xff]
    %v390 = vld [vmem:[%s1 + $0x490] sm:$0xff]
    %v391 = vld [vmem:[%s1 + $0x498] sm:$0xff]
    %v392 = vld [vmem:[%s1 + $0x4a0] sm:$0xff]
    %v393 = vld [vmem:[%s1 + $0x4a8] sm:$0xff]
    %v394 = vld [vmem:[%s1 + $0x4b0] sm:$0xff]
    %v395 = vld [vmem:[%s1 + $0x4b8] sm:$0xff]
    %v396 = vld [vmem:[%s1 + $0x4c0] sm:$0xff]
    %v397 = vld [vmem:[%s1 + $0x4c8] sm:$0xff]
    %v398 = vld [vmem:[%s1 + $0x4d0] sm:$0xff]
    %v399 = vld [vmem:[%s1 + $0x4d8] sm:$0xff]
    %v400 = vld [vmem:[%s1 + $0x4e0] sm:$0xff]
    %v401 = vld [vmem:[%s1 + $0x4e8] sm:$0xff]
    %v402 = vld [vmem:[%s1 + $0x4f0] sm:$0xff]
    %v403 = vld [vmem:[%s1 + $0x4f8] sm:$0xff]
    %v404 = vld [vmem:[%s1 + $0x500] sm:$0xff]
    %v405 = vld [vmem:[%s1 + $0x508] sm:$0xff]
    %v406 = vld [vmem:[%s1 + $0x510] sm:$0xff]
    %v407 = vld [vmem:[%s1 + $0x518] sm:$0xff]
    %v408 = vld [vmem:[%s1 + $0x520] sm:$0xff]
    %v409 = vld [vmem:[%s1 + $0x528] sm:$0xff]
    %v410 = vld [vmem:[%s1 + $0x530] sm:$0xff]
    %v411 = vld [vmem:[%s1 + $0x538] sm:$0xff]
    %v412 = vld [vmem:[%s1 + $0x540] sm:$0xff]
    %v413 = vld [vmem:[%s1 + $0x548] sm:$0xff]
    %v414 = vld [vmem:[%s1 + $0x550] sm:$0xff]
    %v415 = vld [vmem:[%s1 + $0x558] sm:$0xff]
    %v416 = vld [vmem:[%s1 + $0x560] sm:$0xff]
    %v417 = vld [vmem:[%s1 + $0x568] sm:$0xff]
    %v418 = vld [vmem:[%s1 + $0x570] sm:$0xff]
    %v419 = vld [vmem:[%s1 + $0x578] sm:$0xff]
    %v420 = vld [vmem:[%s1 + $0x580] sm:$0xff]
    %v421 = vld [vmem:[%s1 + $0x588] sm:$0xff]
    %v422 = vld [vmem:[%s1 + $0x590] sm:$0xff]
    %v423 = vld [vmem:[%s1 + $0x598] sm:$0xff]
    %v424 = vld [vmem:[%s1 + $0x5a0] sm:$0xff]
    %v425 = vld [vmem:[%s1 + $0x5a8] sm:$0xff]
    %v426 = vld [vmem:[%s1 + $0x5b0] sm:$0xff]
    %v427 = vld [vmem:[%s1 + $0x5b8] sm:$0xff]
    %v428 = vld [vmem:[%s1 + $0x5c0] sm:$0xff]
    %v429 = vld [vmem:[%s1 + $0x5c8] sm:$0xff]
    %v430 = vld [vmem:[%s1 + $0x5d0] sm:$0xff]
    %v431 = vld [vmem:[%s1 + $0x5d8] sm:$0xff]
    %v432 = vld [vmem:[%s1 + $0x5e0] sm:$0xff]
    %v433 = vld [vmem:[%s1 + $0x5e8] sm:$0xff]
    %v434 = vld [vmem:[%s1 + $0x5f0] sm:$0xff]
    %v435 = vld [vmem:[%s1 + $0x5f8] sm:$0xff]
    %v436 = vld [vmem:[%s1 + $0x600] sm:$0xff]
    %v437 = vld [vmem:[%s1 + $0x608] sm:$0xff]
    %v438 = vld [vmem:[%s1 + $0x610] sm:$0xff]
    %v439 = vld [vmem:[%s1 + $0x618] sm:$0xff]
    %v440 = vld [vmem:[%s1 + $0x620] sm:$0xff]
    %v441 = vld [vmem:[%s1 + $0x628] sm:$0xff]
    %v442 = vld [vmem:[%s1 + $0x630] sm:$0xff]
    %v443 = vld [vmem:[%s1 + $0x638] sm:$0xff]
    %v444 = vld [vmem:[%s1 + $0x640] sm:$0xff]
    %v445 = vld [vmem:[%s1 + $0x648] sm:$0xff]
    %v446 = vld [vmem:[%s1 + $0x650] sm:$0xff]
    %v447 = vld [vmem:[%s1 + $0x658] sm:$0xff]
    %v448 = vld [vmem:[%s1 + $0x660] sm:$0xff]
    %v449 = vld [vmem:[%s1 + $0x668] sm:$0xff]
    %v450 = vld [vmem:[%s1 + $0x670] sm:$0xff]
    %v451 = vld [vmem:[%s1 + $0x678] sm:$0xff]
    %v452 = vld [vmem:[%s1 + $0x680] sm:$0xff]
    %v453 = vld [vmem:[%s1 + $0x688] sm:$0xff]
    %v454 = vld [vmem:[%s1 + $0x690] sm:$0xff]
    %v455 = vld [vmem:[%s1 + $0x698] sm:$0xff]
    %v456 = vld [vmem:[%s1 + $0x6a0] sm:$0xff]
    %v457 = vld [vmem:[%s1 + $0x6a8] sm:$0xff]
    %v458 = vld [vmem:[%s1 + $0x6b0] sm:$0xff]
    %v459 = vld [vmem:[%s1 + $0x6b8] sm:$0xff]
    %v460 = vld [vmem:[%s1 + $0x6c0] sm:$0xff]
    %v461 = vld [vmem:[%s1 + $0x6c8] sm:$0xff]
    %v462 = vld [vmem:[%s1 + $0x6d0] sm:$0xff]
    %v463 = vld [vmem:[%s1 + $0x6d8] sm:$0xff]
    %v464 = vld [vmem:[%s1 + $0x6e0] sm:$0xff]
    %v465 = vld [vmem:[%s1 + $0x6e8] sm:$0xff]
    %v466 = vld [vmem:[%s1 + $0x6f0] sm:$0xff]
    %v467 = vld [vmem:[%s1 + $0x6f8] sm:$0xff]
    %v468 = vld [vmem:[%s1 + $0x700] sm:$0xff]
    %v469 = vld [vmem:[%s1 + $0x708] sm:$0xff]
    %v470 = vld [vmem:[%s1 + $0x710] sm:$0xff]
    %v471 = vld [vmem:[%s1 + $0x718] sm:$0xff]
    %v472 = vld [vmem:[%s1 + $0x720] sm:$0xff]
    %v473 = vld [vmem:[%s1 + $0x728] sm:$0xff]
    %v474 = vld [vmem:[%s1 + $0x730] sm:$0xff]
    %v475 = vld [vmem:[%s1 + $0x738] sm:$0xff]
    %v476 = vld [vmem:[%s1 + $0x740] sm:$0xff]
    %v477 = vld [vmem:[%s1 + $0x748] sm:$0xff]
    %v478 = vld [vmem:[%s1 + $0x750] sm:$0xff]
    %v479 = vld [vmem:[%s1 + $0x758] sm:$0xff]
    %v480 = vld [vmem:[%s1 + $0x760] sm:$0xff]
    %v481 = vld [vmem:[%s1 + $0x768] sm:$0xff]
    %v482 = vld [vmem:[%s1 + $0x770] sm:$0xff]
    %v483 = vld [vmem:[%s1 + $0x778] sm:$0xff]
    %v484 = vld [vmem:[%s1 + $0x780] sm:$0xff]
    %v485 = vld [vmem:[%s1 + $0x788] sm:$0xff]
    %v486 = vld [vmem:[%s1 + $0x790] sm:$0xff]
    %v487 = vld [vmem:[%s1 + $0x798] sm:$0xff]
    %v488 = vld [vmem:[%s1 + $0x7a0] sm:$0xff]
    %v489 = vld [vmem:[%s1 + $0x7a8] sm:$0xff]
    %v490 = vld [vmem:[%s1 + $0x7b0] sm:$0xff]
    %v491 = vld [vmem:[%s1 + $0x7b8] sm:$0xff]
    %v492 = vld [vmem:[%s1 + $0x7c0] sm:$0xff]
    %v493 = vld [vmem:[%s1 + $0x7c8] sm:$0xff]
    %v494 = vld [vmem:[%s1 + $0x7d0] sm:$0xff]
    %v495 = vld [vmem:[%s1 + $0x7d8] sm:$0xff]
    %v496 = vld [vmem:[%s1 + $0x7e0] sm:$0xff]
    %v497 = vld [vmem:[%s1 + $0x7e8] sm:$0xff]
    %v498 = vld [vmem:[%s1 + $0x7f0] sm:$0xff]
    %v499 = vld [vmem:[%s1 + $0x7f8] sm:$0xff]
    %v500 = vld [vmem:[%s1 + $0x800] sm:$0xff]
    %v501 = vld [vmem:[%s1 + $0x808] sm:$0xff]
    %v502 = vld [vmem:[%s1 + $0x810] sm:$0xff]
    %v503 = vld [vmem:[%s1 + $0x818] sm:$0xff]
    %v504 = vld [vmem:[%s1 + $0x820] sm:$0xff]
    %v505 = vld [vmem:[%s1 + $0x828] sm:$0xff]
    %v506 = vld [vmem:[%s1 + $0x830] sm:$0xff]
    %v507 = vld [vmem:[%s1 + $0x838] sm:$0xff]
    %v508 = vld [vmem:[%s1 + $0x840] sm:$0xff]
    %v509 = vld [vmem:[%s1 + $0x848] sm:$0xff]
    %v510 = vld [vmem:[%s1 + $0x850] sm:$0xff]
    %v511 = vld [vmem:[%s1 + $0x858] sm:$0xff]
    %v512 = vld [vmem:[%s1 + $0x860] sm:$0xff]
    %v513 = vld [vmem:[%s1 + $0x868] sm:$0xff]
    %v514 = vld [vmem:[%s1 + $0x870] sm:$0xff]
    %v515 = vld [vmem:[%s1 + $0x878] sm:$0xff]
    %v516 = vld [vmem:[%s1 + $0x880] sm:$0xff]
    %v517 = vld [vmem:[%s1 + $0x888] sm:$0xff]
    %v518 = vld [vmem:[%s1 + $0x890] sm:$0xff]
    %v519 = vld [vmem:[%s1 + $0x898] sm:$0xff]
    %v520 = vld [vmem:[%s1 + $0x8a0] sm:$0xff]
    %v521 = vld [vmem:[%s1 + $0x8a8] sm:$0xff]
    %v522 = vld [vmem:[%s1 + $0x8b0] sm:$0xff]
    %v523 = vld [vmem:[%s1 + $0x8b8] sm:$0xff]
    %v524 = vld [vmem:[%s1 + $0x8c0] sm:$0xff]
    %v525 = vld [vmem:[%s1 + $0x8c8] sm:$0xff]
    %v526 = vld [vmem:[%s1 + $0x8d0] sm:$0xff]
    %v527 = vld [vmem:[%s1 + $0x8d8] sm:$0xff]
    %v528 = vld [vmem:[%s1 + $0x8e0] sm:$0xff]
    %v529 = vld [vmem:[%s1 + $0x8e8] sm:$0xff]
    %v530 = vld [vmem:[%s1 + $0x8f0] sm:$0xff]
    %v531 = vld [vmem:[%s1 + $0x8f8] sm:$0xff]
    %v532 = vld [vmem:[%s1 + $0x900] sm:$0xff]
    %v533 = vld [vmem:[%s1 + $0x908] sm:$0xff]
    %v534 = vld [vmem:[%s1 + $0x910] sm:$0xff]
    %v535 = vld [vmem:[%s1 + $0x918] sm:$0xff]
    %v536 = vld [vmem:[%s1 + $0x920] sm:$0xff]
    %v537 = vld [vmem:[%s1 + $0x928] sm:$0xff]
    %v538 = vld [vmem:[%s1 + $0x930] sm:$0xff]
    %v539 = vld [vmem:[%s1 + $0x938] sm:$0xff]
    %v540 = vld [vmem:[%s1 + $0x940] sm:$0xff]
    %v541 = vld [vmem:[%s1 + $0x948] sm:$0xff]
    %v542 = vld [vmem:[%s1 + $0x950] sm:$0xff]
    %v543 = vld [vmem:[%s1 + $0x958] sm:$0xff]
    %v544 = vld [vmem:[%s1 + $0x960] sm:$0xff]
    %v545 = vld [vmem:[%s1 + $0x968] sm:$0xff]
    %v546 = vld [vmem:[%s1 + $0x970] sm:$0xff]
    %v547 = vld [vmem:[%s1 + $0x978] sm:$0xff]
    %v548 = vld [vmem:[%s1 + $0x980] sm:$0xff]
    %v549 = vld [vmem:[%s1 + $0x988] sm:$0xff]
    %v550 = vld [vmem:[%s1 + $0x990] sm:$0xff]
    %v551 = vld [vmem:[%s1 + $0x998] sm:$0xff]
    %v552 = vld [vmem:[%s1 + $0x9a0] sm:$0xff]
    %v553 = vld [vmem:[%s1 + $0x9a8] sm:$0xff]
    %v554 = vld [vmem:[%s1 + $0x9b0] sm:$0xff]
    %v555 = vld [vmem:[%s1 + $0x9b8] sm:$0xff]
    %v556 = vld [vmem:[%s1 + $0x9c0] sm:$0xff]
    %v557 = vld [vmem:[%s1 + $0x9c8] sm:$0xff]
    %v558 = vld [vmem:[%s1 + $0x9d0] sm:$0xff]
    %v559 = vld [vmem:[%s1 + $0x9d8] sm:$0xff]
    %v560 = vld [vmem:[%s1 + $0x9e0] sm:$0xff]
    %v561 = vld [vmem:[%s1 + $0x9e8] sm:$0xff]
    %v562 = vld [vmem:[%s1 + $0x9f0] sm:$0xff]
    %v563 = vld [vmem:[%s1 + $0x9f8] sm:$0xff]
    %v564 = vld [vmem:[%s1 + $0xa00] sm:$0xff]
    %v565 = vld [vmem:[%s1 + $0xa08] sm:$0xff]
    %v566 = vld [vmem:[%s1 + $0xa10] sm:$0xff]
    %v567 = vld [vmem:[%s1 + $0xa18] sm:$0xff]
    %v568 = vld [vmem:[%s1 + $0xa20] sm:$0xff]
    %v569 = vld [vmem:[%s1 + $0xa28] sm:$0xff]
    %v570 = vld [vmem:[%s1 + $0xa30] sm:$0xff]
    %v571 = vld [vmem:[%s1 + $0xa38] sm:$0xff]
    %v572 = vld [vmem:[%s1 + $0xa40] sm:$0xff]
    %v573 = vld [vmem:[%s1 + $0xa48] sm:$0xff]
    %v574 = vld [vmem:[%s1 + $0xa50] sm:$0xff]
    %v575 = vld [vmem:[%s1 + $0xa58] sm:$0xff]
    %v576 = vld [vmem:[%s1 + $0xa60] sm:$0xff]
    %v577 = vld [vmem:[%s1 + $0xa68] sm:$0xff]
    %v578 = vld [vmem:[%s1 + $0xa70] sm:$0xff]
    %v579 = vld [vmem:[%s1 + $0xa78] sm:$0xff]
    %v580 = vld [vmem:[%s1 + $0xa80] sm:$0xff]
    %v581 = vld [vmem:[%s1 + $0xa88] sm:$0xff]
    %v582 = vld [vmem:[%s1 + $0xa90] sm:$0xff]
    %v583 = vld [vmem:[%s1 + $0xa98] sm:$0xff]
    %v584 = vld [vmem:[%s1 + $0xaa0] sm:$0xff]
    %v585 = vld [vmem:[%s1 + $0xaa8] sm:$0xff]
    %v586 = vld [vmem:[%s1 + $0xab0] sm:$0xff]
    %v587 = vld [vmem:[%s1 + $0xab8] sm:$0xff]
    %v588 = vld [vmem:[%s1 + $0xac0] sm:$0xff]
    %v589 = vld [vmem:[%s1 + $0xac8] sm:$0xff]
    %v590 = vld [vmem:[%s1 + $0xad0] sm:$0xff]
    %v591 = vld [vmem:[%s1 + $0xad8] sm:$0xff]
    %v592 = vld [vmem:[%s1 + $0xae0] sm:$0xff]
    %v593 = vld [vmem:[%s1 + $0xae8] sm:$0xff]
    %v594 = vld [vmem:[%s1 + $0xaf0] sm:$0xff]
    %v595 = vld [vmem:[%s1 + $0xaf8] sm:$0xff]
    %v596 = vld [vmem:[%s1 + $0xb00] sm:$0xff]
    %v597 = vld [vmem:[%s1 + $0xb08] sm:$0xff]
    %v598 = vld [vmem:[%s1 + $0xb10] sm:$0xff]
    %v599 = vld [vmem:[%s1 + $0xb18] sm:$0xff]
    %v600 = vld [vmem:[%s1 + $0xb20] sm:$0xff]
    %v601 = vld [vmem:[%s1 + $0xb28] sm:$0xff]
    %v602 = vld [vmem:[%s1 + $0xb30] sm:$0xff]
    %v603 = vld [vmem:[%s1 + $0xb38] sm:$0xff]
    %v604 = vld [vmem:[%s1 + $0xb40] sm:$0xff]
    %v605 = vld [vmem:[%s1 + $0xb48] sm:$0xff]
    %v606 = vld [vmem:[%s1 + $0xb50] sm:$0xff]
    %v607 = vld [vmem:[%s1 + $0xb58] sm:$0xff]
    %v608 = vld [vmem:[%s1 + $0xb60] sm:$0xff]
    %v609 = vld [vmem:[%s1 + $0xb68] sm:$0xff]
    %v610 = vld [vmem:[%s1 + $0xb70] sm:$0xff]
    %v611 = vld [vmem:[%s1 + $0xb78] sm:$0xff]
    %v612 = vld [vmem:[%s1 + $0xb80] sm:$0xff]
    %v613 = vld [vmem:[%s1 + $0xb88] sm:$0xff]
    %v614 = vld [vmem:[%s1 + $0xb90] sm:$0xff]
    %v615 = vld [vmem:[%s1 + $0xb98] sm:$0xff]
    %v616 = vld [vmem:[%s1 + $0xba0] sm:$0xff]
    %v617 = vld [vmem:[%s1 + $0xba8] sm:$0xff]
    %v618 = vld [vmem:[%s1 + $0xbb0] sm:$0xff]
    %v619 = vld [vmem:[%s1 + $0xbb8] sm:$0xff]
    %v620 = vld [vmem:[%s1 + $0xbc0] sm:$0xff]
    %v621 = vld [vmem:[%s1 + $0xbc8] sm:$0xff]
    %v622 = vld [vmem:[%s1 + $0xbd0] sm:$0xff]
    %v623 = vld [vmem:[%s1 + $0xbd8] sm:$0xff]
    %v624 = vld [vmem:[%s1 + $0xbe0] sm:$0xff]
    %v625 = vld [vmem:[%s1 + $0xbe8] sm:$0xff]
    %v626 = vld [vmem:[%s1 + $0xbf0] sm:$0xff]
    %v627 = vld [vmem:[%s1 + $0xbf8] sm:$0xff]
    %v628 = vld [vmem:[%s1 + $0xc00] sm:$0xff]
    %v629 = vld [vmem:[%s1 + $0xc08] sm:$0xff]
    %v630 = vld [vmem:[%s1 + $0xc10] sm:$0xff]
    %v631 = vld [vmem:[%s1 + $0xc18] sm:$0xff]
    %v632 = vld [vmem:[%s1 + $0xc20] sm:$0xff]
    %v633 = vld [vmem:[%s1 + $0xc28] sm:$0xff]
    %v634 = vld [vmem:[%s1 + $0xc30] sm:$0xff]
    %v635 = vld [vmem:[%s1 + $0xc38] sm:$0xff]
    %v636 = vld [vmem:[%s1 + $0xc40] sm:$0xff]
    %v637 = vld [vmem:[%s1 + $0xc48] sm:$0xff]
    %v638 = vld [vmem:[%s1 + $0xc50] sm:$0xff]
    %v639 = vld [vmem:[%s1 + $0xc58] sm:$0xff]
    %v640 = vld [vmem:[%s1 + $0xc60] sm:$0xff]
    %v641 = vld [vmem:[%s1 + $0xc68] sm:$0xff]
    %v642 = vld [vmem:[%s1 + $0xc70] sm:$0xff]
    %v643 = vld [vmem:[%s1 + $0xc78] sm:$0xff]
    %v644 = vld [vmem:[%s1 + $0xc80] sm:$0xff]
    %v645 = vld [vmem:[%s1 + $0xc88] sm:$0xff]
    %v646 = vld [vmem:[%s1 + $0xc90] sm:$0xff]
    %v647 = vld [vmem:[%s1 + $0xc98] sm:$0xff]
    %v648 = vld [vmem:[%s1 + $0xca0] sm:$0xff]
    %v649 = vld [vmem:[%s1 + $0xca8] sm:$0xff]
    %v650 = vld [vmem:[%s1 + $0xcb0] sm:$0xff]
    %v651 = vld [vmem:[%s1 + $0xcb8] sm:$0xff]
    %v652 = vld [vmem:[%s1 + $0xcc0] sm:$0xff]
    %v653 = vld [vmem:[%s1 + $0xcc8] sm:$0xff]
    %v654 = vld [vmem:[%s1 + $0xcd0] sm:$0xff]
    %v655 = vld [vmem:[%s1 + $0xcd8] sm:$0xff]
    %v656 = vld [vmem:[%s1 + $0xce0] sm:$0xff]
    %v657 = vld [vmem:[%s1 + $0xce8] sm:$0xff]
    %v658 = vld [vmem:[%s1 + $0xcf0] sm:$0xff]
    %v659 = vld [vmem:[%s1 + $0xcf8] sm:$0xff]
    %v660 = vld [vmem:[%s1 + $0xd00] sm:$0xff]
    %v661 = vld [vmem:[%s1 + $0xd08] sm:$0xff]
    %v662 = vld [vmem:[%s1 + $0xd10] sm:$0xff]
    %v663 = vld [vmem:[%s1 + $0xd18] sm:$0xff]
    %v664 = vld [vmem:[%s1 + $0xd20] sm:$0xff]
    %v665 = vld [vmem:[%s1 + $0xd28] sm:$0xff]
    %v666 = vld [vmem:[%s1 + $0xd30] sm:$0xff]
    %v667 = vld [vmem:[%s1 + $0xd38] sm:$0xff]
    %v668 = vld [vmem:[%s1 + $0xd40] sm:$0xff]
    %v669 = vld [vmem:[%s1 + $0xd48] sm:$0xff]
    %v670 = vld [vmem:[%s1 + $0xd50] sm:$0xff]
    %v671 = vld [vmem:[%s1 + $0xd58] sm:$0xff]
    %v672 = vld [vmem:[%s1 + $0xd60] sm:$0xff]
    %v673 = vld [vmem:[%s1 + $0xd68] sm:$0xff]
    %v674 = vld [vmem:[%s1 + $0xd70] sm:$0xff]
    %v675 = vld [vmem:[%s1 + $0xd78] sm:$0xff]
    %v676 = vld [vmem:[%s1 + $0xd80] sm:$0xff]
    %v677 = vld [vmem:[%s1 + $0xd88] sm:$0xff]
    %v678 = vld [vmem:[%s1 + $0xd90] sm:$0xff]
    %v679 = vld [vmem:[%s1 + $0xd98] sm:$0xff]
    %v680 = vld [vmem:[%s1 + $0xda0] sm:$0xff]
    %v681 = vld [vmem:[%s1 + $0xda8] sm:$0xff]
    %v682 = vld [vmem:[%s1 + $0xdb0] sm:$0xff]
    %v683 = vld [vmem:[%s1 + $0xdb8] sm:$0xff]
    %v684 = vld [vmem:[%s1 + $0xdc0] sm:$0xff]
    %v685 = vld [vmem:[%s1 + $0xdc8] sm:$0xff]
    %v686 = vld [vmem:[%s1 + $0xdd0] sm:$0xff]
    %v687 = vld [vmem:[%s1 + $0xdd8] sm:$0xff]
    %v688 = vld [vmem:[%s1 + $0xde0] sm:$0xff]
    %v689 = vld [vmem:[%s1 + $0xde8] sm:$0xff]
    %v690 = vld [vmem:[%s1 + $0xdf0] sm:$0xff]
    %v691 = vld [vmem:[%s1 + $0xdf8] sm:$0xff]
    %v692 = vld [vmem:[%s1 + $0xe00] sm:$0xff]
    %v693 = vld [vmem:[%s1 + $0xe08] sm:$0xff]
    %v694 = vld [vmem:[%s1 + $0xe10] sm:$0xff]
    %v695 = vld [vmem:[%s1 + $0xe18] sm:$0xff]
    %v696 = vld [vmem:[%s1 + $0xe20] sm:$0xff]
    %v697 = vld [vmem:[%s1 + $0xe28] sm:$0xff]
    %v698 = vld [vmem:[%s1 + $0xe30] sm:$0xff]
    %v699 = vld [vmem:[%s1 + $0xe38] sm:$0xff]
    %v700 = vld [vmem:[%s1 + $0xe40] sm:$0xff]
    %v701 = vld [vmem:[%s1 + $0xe48] sm:$0xff]
    %v702 = vld [vmem:[%s1 + $0xe50] sm:$0xff]
    %v703 = vld [vmem:[%s1 + $0xe58] sm:$0xff]
    %v704 = vld [vmem:[%s1 + $0xe60] sm:$0xff]
    %v705 = vld [vmem:[%s1 + $0xe68] sm:$0xff]
    %v706 = vld [vmem:[%s1 + $0xe70] sm:$0xff]
    %v707 = vld [vmem:[%s1 + $0xe78] sm:$0xff]
    %v708 = vld [vmem:[%s1 + $0xe80] sm:$0xff]
    %v709 = vld [vmem:[%s1 + $0xe88] sm:$0xff]
    %v710 = vld [vmem:[%s1 + $0xe90] sm:$0xff]
    %v711 = vld [vmem:[%s1 + $0xe98] sm:$0xff]
    %v712 = vld [vmem:[%s1 + $0xea0] sm:$0xff]
    %v713 = vld [vmem:[%s1 + $0xea8] sm:$0xff]
    %v714 = vld [vmem:[%s1 + $0xeb0] sm:$0xff]
    %v715 = vld [vmem:[%s1 + $0xeb8] sm:$0xff]
    %v716 = vld [vmem:[%s1 + $0xec0] sm:$0xff]
    %v717 = vld [vmem:[%s1 + $0xec8] sm:$0xff]
    %v718 = vld [vmem:[%s1 + $0xed0] sm:$0xff]
    %v719 = vld [vmem:[%s1 + $0xed8] sm:$0xff]
    %v720 = vld [vmem:[%s1 + $0xee0] sm:$0xff]
    %v721 = vld [vmem:[%s1 + $0xee8] sm:$0xff]
    %v722 = vld [vmem:[%s1 + $0xef0] sm:$0xff]
    %v723 = vld [vmem:[%s1 + $0xef8] sm:$0xff]
    %v724 = vld [vmem:[%s1 + $0xf00] sm:$0xff]
    %v725 = vld [vmem:[%s1 + $0xf08] sm:$0xff]
    %v726 = vld [vmem:[%s1 + $0xf10] sm:$0xff]
    %v727 = vld [vmem:[%s1 + $0xf18] sm:$0xff]
    %v728 = vld [vmem:[%s1 + $0xf20] sm:$0xff]
    %v729 = vld [vmem:[%s1 + $0xf28] sm:$0xff]
    %v730 = vld [vmem:[%s1 + $0xf30] sm:$0xff]
    %v731 = vld [vmem:[%s1 + $0xf38] sm:$0xff]
    %v732 = vld [vmem:[%s1 + $0xf40] sm:$0xff]
    %v733 = vld [vmem:[%s1 + $0xf48] sm:$0xff]
    %v734 = vld [vmem:[%s1 + $0xf50] sm:$0xff]
    %v735 = vld [vmem:[%s1 + $0xf58] sm:$0xff]
    %v736 = vld [vmem:[%s1 + $0xf60] sm:$0xff]
    %v737 = vld [vmem:[%s1 + $0xf68] sm:$0xff]
    %v738 = vld [vmem:[%s1 + $0xf70] sm:$0xff]
    %v739 = vld [vmem:[%s1 + $0xf78] sm:$0xff]
    %v740 = vld [vmem:[%s1 + $0xf80] sm:$0xff]
    %v741 = vld [vmem:[%s1 + $0xf88] sm:$0xff]
    %v742 = vld [vmem:[%s1 + $0xf90] sm:$0xff]
    %v743 = vld [vmem:[%s1 + $0xf98] sm:$0xff]
    %v744 = vld [vmem:[%s1 + $0xfa0] sm:$0xff]
    %v745 = vld [vmem:[%s1 + $0xfa8] sm:$0xff]
    %v746 = vld [vmem:[%s1 + $0xfb0] sm:$0xff]
    %v747 = vld [vmem:[%s1 + $0xfb8] sm:$0xff]
    %v748 = vld [vmem:[%s1 + $0xfc0] sm:$0xff]
    %v749 = vld [vmem:[%s1 + $0xfc8] sm:$0xff]
    %v750 = vld [vmem:[%s1 + $0xfd0] sm:$0xff]
    %v751 = vld [vmem:[%s1 + $0xfd8] sm:$0xff]
    %v752 = vld [vmem:[%s1 + $0xfe0] sm:$0xff]
    %v753 = vld [vmem:[%s1 + $0xfe8] sm:$0xff]
    %v754 = vld [vmem:[%s1 + $0xff0] sm:$0xff]
    %v755 = vld [vmem:[%s1 + $0xff8] sm:$0xff]
    %v756 = vld [vmem:[%s1 + $0x1000] sm:$0xff]
    %v757 = vld [vmem:[%s1 + $0x1008] sm:$0xff]
    %v758 = vld [vmem:[%s1 + $0x1010] sm:$0xff]
    %v759 = vld [vmem:[%s1 + $0x1018] sm:$0xff]
    %v760 = vld [vmem:[%s1 + $0x1020] sm:$0xff]
    %v761 = vld [vmem:[%s1 + $0x1028] sm:$0xff]
    %v762 = vld [vmem:[%s1 + $0x1030] sm:$0xff]
    %v763 = vld [vmem:[%s1 + $0x1038] sm:$0xff]
    %v764 = vld [vmem:[%s1 + $0x1040] sm:$0xff]
    %v765 = vld [vmem:[%s1 + $0x1048] sm:$0xff]
    %v766 = vld [vmem:[%s1 + $0x1050] sm:$0xff]
    %v767 = vld [vmem:[%s1 + $0x1058] sm:$0xff]
    %v768 = vld [vmem:[%s1 + $0x1060] sm:$0xff]
    %v769 = vld [vmem:[%s1 + $0x1068] sm:$0xff]
    %v770 = vld [vmem:[%s1 + $0x1070] sm:$0xff]
    %v771 = vld [vmem:[%s1 + $0x1078] sm:$0xff]
    %v772 = vld [vmem:[%s1 + $0x1080] sm:$0xff]
    %v773 = vld [vmem:[%s1 + $0x1088] sm:$0xff]
    %v774 = vld [vmem:[%s1 + $0x1090] sm:$0xff]
    %v775 = vld [vmem:[%s1 + $0x1098] sm:$0xff]
    %v776 = vld [vmem:[%s1 + $0x10a0] sm:$0xff]
    %v777 = vld [vmem:[%s1 + $0x10a8] sm:$0xff]
    %v778 = vld [vmem:[%s1 + $0x10b0] sm:$0xff]
    %v779 = vld [vmem:[%s1 + $0x10b8] sm:$0xff]
    %v780 = vld [vmem:[%s1 + $0x10c0] sm:$0xff]
    %v781 = vld [vmem:[%s1 + $0x10c8] sm:$0xff]
    %v782 = vld [vmem:[%s1 + $0x10d0] sm:$0xff]
    %v783 = vld [vmem:[%s1 + $0x10d8] sm:$0xff]
    %v784 = vld [vmem:[%s1 + $0x10e0] sm:$0xff]
    %v785 = vld [vmem:[%s1 + $0x10e8] sm:$0xff]
    %v786 = vld [vmem:[%s1 + $0x10f0] sm:$0xff]
    %v787 = vld [vmem:[%s1 + $0x10f8] sm:$0xff]
    %v788 = vld [vmem:[%s1 + $0x1100] sm:$0xff]
    %v789 = vld [vmem:[%s1 + $0x1108] sm:$0xff]
    %v790 = vld [vmem:[%s1 + $0x1110] sm:$0xff]
    %v791 = vld [vmem:[%s1 + $0x1118] sm:$0xff]
    %v792 = vld [vmem:[%s1 + $0x1120] sm:$0xff]
    %v793 = vld [vmem:[%s1 + $0x1128] sm:$0xff]
    %v794 = vld [vmem:[%s1 + $0x1130] sm:$0xff]
    %v795 = vld [vmem:[%s1 + $0x1138] sm:$0xff]
    %v796 = vld [vmem:[%s1 + $0x1140] sm:$0xff]
    %v797 = vld [vmem:[%s1 + $0x1148] sm:$0xff]
    %v798 = vld [vmem:[%s1 + $0x1150] sm:$0xff]
    %v799 = vld [vmem:[%s1 + $0x1158] sm:$0xff]
    %v800 = vld [vmem:[%s1 + $0x1160] sm:$0xff]
    %v801 = vld [vmem:[%s1 + $0x1168] sm:$0xff]
    %v802 = vld [vmem:[%s1 + $0x1170] sm:$0xff]
    %v803 = vld [vmem:[%s1 + $0x1178] sm:$0xff]
    %v804 = vld [vmem:[%s1 + $0x1180] sm:$0xff]
    %v805 = vld [vmem:[%s1 + $0x1188] sm:$0xff]
    %v806 = vld [vmem:[%s1 + $0x1190] sm:$0xff]
    %v807 = vld [vmem:[%s1 + $0x1198] sm:$0xff]
    %v808 = vld [vmem:[%s1 + $0x11a0] sm:$0xff]
    %v809 = vld [vmem:[%s1 + $0x11a8] sm:$0xff]
    %v810 = vld [vmem:[%s1 + $0x11b0] sm:$0xff]
    %v811 = vld [vmem:[%s1 + $0x11b8] sm:$0xff]
    %v812 = vld [vmem:[%s1 + $0x11c0] sm:$0xff]
    %v813 = vld [vmem:[%s1 + $0x11c8] sm:$0xff]
    %v814 = vld [vmem:[%s1 + $0x11d0] sm:$0xff]
    %v815 = vld [vmem:[%s1 + $0x11d8] sm:$0xff]
    %v816 = vld [vmem:[%s1 + $0x11e0] sm:$0xff]
    %v817 = vld [vmem:[%s1 + $0x11e8] sm:$0xff]
    %v818 = vld [vmem:[%s1 + $0x11f0] sm:$0xff]
    %v819 = vld [vmem:[%s1 + $0x11f8] sm:$0xff]
    %v820 = vld [vmem:[%s1 + $0x1200] sm:$0xff]
    %v821 = vld [vmem:[%s1 + $0x1208] sm:$0xff]
    %v822 = vld [vmem:[%s1 + $0x1210] sm:$0xff]
    %v823 = vld [vmem:[%s1 + $0x1218] sm:$0xff]
    %v824 = vld [vmem:[%s1 + $0x1220] sm:$0xff]
    %v825 = vld [vmem:[%s1 + $0x1228] sm:$0xff]
    %v826 = vld [vmem:[%s1 + $0x1230] sm:$0xff]
    %v827 = vld [vmem:[%s1 + $0x1238] sm:$0xff]
    %v828 = vld [vmem:[%s1 + $0x1240] sm:$0xff]
    %v829 = vld [vmem:[%s1 + $0x1248] sm:$0xff]
    %v830 = vld [vmem:[%s1 + $0x1250] sm:$0xff]
    %v831 = vld [vmem:[%s1 + $0x1258] sm:$0xff]
    %v832 = vld [vmem:[%s1 + $0x1260] sm:$0xff]
    %v833 = vld [vmem:[%s1 + $0x1268] sm:$0xff]
    %v834 = vld [vmem:[%s1 + $0x1270] sm:$0xff]
    %v835 = vld [vmem:[%s1 + $0x1278] sm:$0xff]
    %v836 = vld [vmem:[%s1 + $0x1280] sm:$0xff]
    %v837 = vld [vmem:[%s1 + $0x1288] sm:$0xff]
    %v838 = vld [vmem:[%s1 + $0x1290] sm:$0xff]
    %v839 = vld [vmem:[%s1 + $0x1298] sm:$0xff]
    %v840 = vld [vmem:[%s1 + $0x12a0] sm:$0xff]
    %v841 = vld [vmem:[%s1 + $0x12a8] sm:$0xff]
    %v842 = vld [vmem:[%s1 + $0x12b0] sm:$0xff]
    %v843 = vld [vmem:[%s1 + $0x12b8] sm:$0xff]
    %v844 = vld [vmem:[%s1 + $0x12c0] sm:$0xff]
    %v845 = vld [vmem:[%s1 + $0x12c8] sm:$0xff]
    %v846 = vld [vmem:[%s1 + $0x12d0] sm:$0xff]
    %v847 = vld [vmem:[%s1 + $0x12d8] sm:$0xff]
    %v848 = vld [vmem:[%s1 + $0x12e0] sm:$0xff]
    %v849 = vld [vmem:[%s1 + $0x12e8] sm:$0xff]
    %v850 = vld [vmem:[%s1 + $0x12f0] sm:$0xff]
    %v851 = vld [vmem:[%s1 + $0x12f8] sm:$0xff]
    %v852 = vld [vmem:[%s1 + $0x1300] sm:$0xff]
    %v853 = vld [vmem:[%s1 + $0x1308] sm:$0xff]
    %v854 = vld [vmem:[%s1 + $0x1310] sm:$0xff]
    %v855 = vld [vmem:[%s1 + $0x1318] sm:$0xff]
    %v856 = vld [vmem:[%s1 + $0x1320] sm:$0xff]
    %v857 = vld [vmem:[%s1 + $0x1328] sm:$0xff]
    %v858 = vld [vmem:[%s1 + $0x1330] sm:$0xff]
    %v859 = vld [vmem:[%s1 + $0x1338] sm:$0xff]
    %v860 = vld [vmem:[%s1 + $0x1340] sm:$0xff]
    %v861 = vld [vmem:[%s1 + $0x1348] sm:$0xff]
    %v862 = vld [vmem:[%s1 + $0x1350] sm:$0xff]
    %v863 = vld [vmem:[%s1 + $0x1358] sm:$0xff]
    %v864 = vld [vmem:[%s1 + $0x1360] sm:$0xff]
    %v865 = vld [vmem:[%s1 + $0x1368] sm:$0xff]
    %v866 = vld [vmem:[%s1 + $0x1370] sm:$0xff]
    %v867 = vld [vmem:[%s1 + $0x1378] sm:$0xff]
    %v868 = vld [vmem:[%s1 + $0x1380] sm:$0xff]
    %v869 = vld [vmem:[%s1 + $0x1388] sm:$0xff]
    %v870 = vld [vmem:[%s1 + $0x1390] sm:$0xff]
    %v871 = vld [vmem:[%s1 + $0x1398] sm:$0xff]
    %v872 = vld [vmem:[%s1 + $0x13a0] sm:$0xff]
    %v873 = vld [vmem:[%s1 + $0x13a8] sm:$0xff]
    %v874 = vld [vmem:[%s1 + $0x13b0] sm:$0xff]
    %v875 = vld [vmem:[%s1 + $0x13b8] sm:$0xff]
    %v876 = vld [vmem:[%s1 + $0x13c0] sm:$0xff]
    %v877 = vld [vmem:[%s1 + $0x13c8] sm:$0xff]
    %v878 = vld [vmem:[%s1 + $0x13d0] sm:$0xff]
    %v879 = vld [vmem:[%s1 + $0x13d8] sm:$0xff]
    %v880 = vld [vmem:[%s1 + $0x13e0] sm:$0xff]
    %v881 = vld [vmem:[%s1 + $0x13e8] sm:$0xff]
    %v882 = vld [vmem:[%s1 + $0x13f0] sm:$0xff]
    %v883 = vld [vmem:[%s1 + $0x13f8] sm:$0xff]
    %v884 = vld [vmem:[%s1 + $0x1400] sm:$0xff]
    %v885 = vld [vmem:[%s1 + $0x1408] sm:$0xff]
    %v886 = vld [vmem:[%s1 + $0x1410] sm:$0xff]
    %v887 = vld [vmem:[%s1 + $0x1418] sm:$0xff]
    %v888 = vld [vmem:[%s1 + $0x1420] sm:$0xff]
    %v889 = vld [vmem:[%s1 + $0x1428] sm:$0xff]
    %v890 = vld [vmem:[%s1 + $0x1430] sm:$0xff]
    %v891 = vld [vmem:[%s1 + $0x1438] sm:$0xff]
    %v892 = vld [vmem:[%s1 + $0x1440] sm:$0xff]
    %v893 = vld [vmem:[%s1 + $0x1448] sm:$0xff]
    %v894 = vld [vmem:[%s1 + $0x1450] sm:$0xff]
    %v895 = vld [vmem:[%s1 + $0x1458] sm:$0xff]
    %v896 = vld [vmem:[%s1 + $0x1460] sm:$0xff]
    %v897 = vld [vmem:[%s1 + $0x1468] sm:$0xff]
    %v898 = vld [vmem:[%s1 + $0x1470] sm:$0xff]
    %v899 = vld [vmem:[%s1 + $0x1478] sm:$0xff]
    %v900 = vld [vmem:[%s1 + $0x1480] sm:$0xff]
    %v901 = vld [vmem:[%s1 + $0x1488] sm:$0xff]
    %v902 = vld [vmem:[%s1 + $0x1490] sm:$0xff]
    %v903 = vld [vmem:[%s1 + $0x1498] sm:$0xff]
    %v904 = vld [vmem:[%s1 + $0x14a0] sm:$0xff]
    %v905 = vld [vmem:[%s1 + $0x14a8] sm:$0xff]
    %v906 = vld [vmem:[%s1 + $0x14b0] sm:$0xff]
    %v907 = vld [vmem:[%s1 + $0x14b8] sm:$0xff]
    %v908 = vld [vmem:[%s1 + $0x14c0] sm:$0xff]
    %v909 = vld [vmem:[%s1 + $0x14c8] sm:$0xff]
    %v910 = vld [vmem:[%s1 + $0x14d0] sm:$0xff]
    %v911 = vld [vmem:[%s1 + $0x14d8] sm:$0xff]
    %v912 = vld [vmem:[%s1 + $0x14e0] sm:$0xff]
    %v913 = vld [vmem:[%s1 + $0x14e8] sm:$0xff]
    %v914 = vld [vmem:[%s1 + $0x14f0] sm:$0xff]
    %v915 = vld [vmem:[%s1 + $0x14f8] sm:$0xff]
    %v916 = vld [vmem:[%s1 + $0x1500] sm:$0xff]
    %v917 = vld [vmem:[%s1 + $0x1508] sm:$0xff]
    %v918 = vld [vmem:[%s1 + $0x1510] sm:$0xff]
    %v919 = vld [vmem:[%s1 + $0x1518] sm:$0xff]
    %v920 = vld [vmem:[%s1 + $0x1520] sm:$0xff]
    %v921 = vld [vmem:[%s1 + $0x1528] sm:$0xff]
    %v922 = vld [vmem:[%s1 + $0x1530] sm:$0xff]
    %v923 = vld [vmem:[%s1 + $0x1538] sm:$0xff]
    %v924 = vld [vmem:[%s1 + $0x1540] sm:$0xff]
    %v925 = vld [vmem:[%s1 + $0x1548] sm:$0xff]
    %v926 = vld [vmem:[%s1 + $0x1550] sm:$0xff]
    %v927 = vld [vmem:[%s1 + $0x1558] sm:$0xff]
    %v928 = vld [vmem:[%s1 + $0x1560] sm:$0xff]
    %v929 = vld [vmem:[%s1 + $0x1568] sm:$0xff]
    %v930 = vld [vmem:[%s1 + $0x1570] sm:$0xff]
    %v931 = vld [vmem:[%s1 + $0x1578] sm:$0xff]
    %v932 = vld [vmem:[%s1 + $0x1580] sm:$0xff]
    %v933 = vld [vmem:[%s1 + $0x1588] sm:$0xff]
    %v934 = vld [vmem:[%s1 + $0x1590] sm:$0xff]
    %v935 = vld [vmem:[%s1 + $0x1598] sm:$0xff]
    %v936 = vld [vmem:[%s1 + $0x15a0] sm:$0xff]
    %v937 = vld [vmem:[%s1 + $0x15a8] sm:$0xff]
    %v938 = vld [vmem:[%s1 + $0x15b0] sm:$0xff]
    %v939 = vld [vmem:[%s1 + $0x15b8] sm:$0xff]
    %v940 = vld [vmem:[%s1 + $0x15c0] sm:$0xff]
    %v941 = vld [vmem:[%s1 + $0x15c8] sm:$0xff]
    %v942 = vld [vmem:[%s1 + $0x15d0] sm:$0xff]
    %v943 = vld [vmem:[%s1 + $0x15d8] sm:$0xff]
    %v944 = vld [vmem:[%s1 + $0x15e0] sm:$0xff]
    %v945 = vld [vmem:[%s1 + $0x15e8] sm:$0xff]
    %v946 = vld [vmem:[%s1 + $0x15f0] sm:$0xff]
    %v947 = vld [vmem:[%s1 + $0x15f8] sm:$0xff]
    %v948 = vld [vmem:[%s1 + $0x1600] sm:$0xff]
    %v949 = vld [vmem:[%s1 + $0x1608] sm:$0xff]
    %v950 = vld [vmem:[%s1 + $0x1610] sm:$0xff]
    %v951 = vld [vmem:[%s1 + $0x1618] sm:$0xff]
    %v952 = vld [vmem:[%s1 + $0x1620] sm:$0xff]
    %v953 = vld [vmem:[%s1 + $0x1628] sm:$0xff]
    %v954 = vld [vmem:[%s1 + $0x1630] sm:$0xff]
    %v955 = vld [vmem:[%s1 + $0x1638] sm:$0xff]
    %v956 = vld [vmem:[%s1 + $0x1640] sm:$0xff]
    %v957 = vld [vmem:[%s1 + $0x1648] sm:$0xff]
    %v958 = vld [vmem:[%s1 + $0x1650] sm:$0xff]
    %v959 = vld [vmem:[%s1 + $0x1658] sm:$0xff]
    %v960 = vld [vmem:[%s1 + $0x1660] sm:$0xff]
    %v961 = vld [vmem:[%s1 + $0x1668] sm:$0xff]
    %v962 = vld [vmem:[%s1 + $0x1670] sm:$0xff]
    %v963 = vld [vmem:[%s1 + $0x1678] sm:$0xff]
    %v964 = vld [vmem:[%s1 + $0x1680] sm:$0xff]
    %v965 = vld [vmem:[%s1 + $0x1688] sm:$0xff]
    %v966 = vld [vmem:[%s1 + $0x1690] sm:$0xff]
    %v967 = vld [vmem:[%s1 + $0x1698] sm:$0xff]
    %v968 = vld [vmem:[%s1 + $0x16a0] sm:$0xff]
    %v969 = vld [vmem:[%s1 + $0x16a8] sm:$0xff]
    %v970 = vld [vmem:[%s1 + $0x16b0] sm:$0xff]
    %v971 = vld [vmem:[%s1 + $0x16b8] sm:$0xff]
    %v972 = vld [vmem:[%s1 + $0x16c0] sm:$0xff]
    %v973 = vld [vmem:[%s1 + $0x16c8] sm:$0xff]
    %v974 = vld [vmem:[%s1 + $0x16d0] sm:$0xff]
    %v975 = vld [vmem:[%s1 + $0x16d8] sm:$0xff]
    %v976 = vld [vmem:[%s1 + $0x16e0] sm:$0xff]
    %v977 = vld [vmem:[%s1 + $0x16e8] sm:$0xff]
    %v978 = vld [vmem:[%s1 + $0x16f0] sm:$0xff]
    %v979 = vld [vmem:[%s1 + $0x16f8] sm:$0xff]
    %v980 = vld [vmem:[%s1 + $0x1700] sm:$0xff]
    %v981 = vld [vmem:[%s1 + $0x1708] sm:$0xff]
    %v982 = vld [vmem:[%s1 + $0x1710] sm:$0xff]
    %v983 = vld [vmem:[%s1 + $0x1718] sm:$0xff]
    %v984 = vld [vmem:[%s1 + $0x1720] sm:$0xff]
    %v985 = vld [vmem:[%s1 + $0x1728] sm:$0xff]
    %v986 = vld [vmem:[%s1 + $0x1730] sm:$0xff]
    %v987 = vld [vmem:[%s1 + $0x1738] sm:$0xff]
    %v988 = vld [vmem:[%s1 + $0x1740] sm:$0xff]
    %v989 = vld [vmem:[%s1 + $0x1748] sm:$0xff]
    %v990 = vld [vmem:[%s1 + $0x1750] sm:$0xff]
    %v991 = vld [vmem:[%s1 + $0x1758] sm:$0xff]
    %v992 = vld [vmem:[%s1 + $0x1760] sm:$0xff]
    %v993 = vld [vmem:[%s1 + $0x1768] sm:$0xff]
    %v994 = vld [vmem:[%s1 + $0x1770] sm:$0xff]
    %v995 = vld [vmem:[%s1 + $0x1778] sm:$0xff]
    %v996 = vld [vmem:[%s1 + $0x1780] sm:$0xff]
    %v997 = vld [vmem:[%s1 + $0x1788] sm:$0xff]
    %v998 = vld [vmem:[%s1 + $0x1790] sm:$0xff]
    %v999 = vld [vmem:[%s1 + $0x1798] sm:$0xff]
    %v1000 = vld [vmem:[%s1 + $0x17a0] sm:$0xff]
    %v1001 = vld [vmem:[%s1 + $0x17a8] sm:$0xff]
    %v1002 = vld [vmem:[%s1 + $0x17b0] sm:$0xff]
    %v1003 = vld [vmem:[%s1 + $0x17b8] sm:$0xff]
    %v1004 = vld [vmem:[%s1 + $0x17c0] sm:$0xff]
    %v1005 = vld [vmem:[%s1 + $0x17c8] sm:$0xff]
    %v1006 = vld [vmem:[%s1 + $0x17d0] sm:$0xff]
    %v1007 = vld [vmem:[%s1 + $0x17d8] sm:$0xff]
    %v1008 = vld [vmem:[%s1 + $0x17e0] sm:$0xff]
    %v1009 = vld [vmem:[%s1 + $0x17e8] sm:$0xff]
    %v1010 = vld [vmem:[%s1 + $0x17f0] sm:$0xff]
    %v1011 = vld [vmem:[%s1 + $0x17f8] sm:$0xff]
    %v1012 = vld [vmem:[%s1 + $0x1800] sm:$0xff]
    %v1013 = vld [vmem:[%s1 + $0x1808] sm:$0xff]
    %v1014 = vld [vmem:[%s1 + $0x1810] sm:$0xff]
    %v1015 = vld [vmem:[%s1 + $0x1818] sm:$0xff]
    %v1016 = vld [vmem:[%s1 + $0x1820] sm:$0xff]
    %v1017 = vld [vmem:[%s1 + $0x1828] sm:$0xff]
    %v1018 = vld [vmem:[%s1 + $0x1830] sm:$0xff]
    %v1019 = vld [vmem:[%s1 + $0x1838] sm:$0xff]
    %v1020 = vld [vmem:[%s1 + $0x1840] sm:$0xff]
    %v1021 = vld [vmem:[%s1 + $0x1848] sm:$0xff]
    %v1022 = vld [vmem:[%s1 + $0x1850] sm:$0xff]
    %v1023 = vld [vmem:[%s1 + $0x1858] sm:$0xff]
    %v1024 = vld [vmem:[%s1 + $0x1860] sm:$0xff]
    %v1025 = vld [vmem:[%s1 + $0x1868] sm:$0xff]
    %v1026 = vld [vmem:[%s1 + $0x1870] sm:$0xff]
    %v1027 = vld [vmem:[%s1 + $0x1878] sm:$0xff]
    %v1028 = vld [vmem:[%s1 + $0x1880] sm:$0xff]
    %v1029 = vld [vmem:[%s1 + $0x1888] sm:$0xff]
    %v1030 = vld [vmem:[%s1 + $0x1890] sm:$0xff]
    %v1031 = vld [vmem:[%s1 + $0x1898] sm:$0xff]
    %v1032 = vld [vmem:[%s1 + $0x18a0] sm:$0xff]
    %v1033 = vld [vmem:[%s1 + $0x18a8] sm:$0xff]
    %v1034 = vld [vmem:[%s1 + $0x18b0] sm:$0xff]
    %v1035 = vld [vmem:[%s1 + $0x18b8] sm:$0xff]
    %v1036 = vld [vmem:[%s1 + $0x18c0] sm:$0xff]
    %v1037 = vld [vmem:[%s1 + $0x18c8] sm:$0xff]
    %v1038 = vld [vmem:[%s1 + $0x18d0] sm:$0xff]
    %v1039 = vld [vmem:[%s1 + $0x18d8] sm:$0xff]
    %v1040 = vld [vmem:[%s1 + $0x18e0] sm:$0xff]
    %v1041 = vld [vmem:[%s1 + $0x18e8] sm:$0xff]
    %v1042 = vld [vmem:[%s1 + $0x18f0] sm:$0xff]
    %v1043 = vld [vmem:[%s1 + $0x18f8] sm:$0xff]
    %v1044 = vld [vmem:[%s1 + $0x1900] sm:$0xff]
    %v1045 = vld [vmem:[%s1 + $0x1908] sm:$0xff]
    %v1046 = vld [vmem:[%s1 + $0x1910] sm:$0xff]
    %v1047 = vld [vmem:[%s1 + $0x1918] sm:$0xff]
    %v1048 = vld [vmem:[%s1 + $0x1920] sm:$0xff]
    %v1049 = vld [vmem:[%s1 + $0x1928] sm:$0xff]
    %v1050 = vld [vmem:[%s1 + $0x1930] sm:$0xff]
    %v1051 = vld [vmem:[%s1 + $0x1938] sm:$0xff]
    %v1052 = vld [vmem:[%s1 + $0x1940] sm:$0xff]
    %v1053 = vld [vmem:[%s1 + $0x1948] sm:$0xff]
    %v1054 = vld [vmem:[%s1 + $0x1950] sm:$0xff]
    %v1055 = vld [vmem:[%s1 + $0x1958] sm:$0xff]
    %v1056 = vld [vmem:[%s1 + $0x1960] sm:$0xff]
    %v1057 = vld [vmem:[%s1 + $0x1968] sm:$0xff]
    %v1058 = vld [vmem:[%s1 + $0x1970] sm:$0xff]
    %v1059 = vld [vmem:[%s1 + $0x1978] sm:$0xff]
    %v1060 = vld [vmem:[%s1 + $0x1980] sm:$0xff]
    %v1061 = vld [vmem:[%s1 + $0x1988] sm:$0xff]
    %v1062 = vld [vmem:[%s1 + $0x1990] sm:$0xff]
    %v1063 = vld [vmem:[%s1 + $0x1998] sm:$0xff]
    %v1064 = vld [vmem:[%s1 + $0x19a0] sm:$0xff]
    %v1065 = vld [vmem:[%s1 + $0x19a8] sm:$0xff]
    %v1066 = vld [vmem:[%s1 + $0x19b0] sm:$0xff]
    %v1067 = vld [vmem:[%s1 + $0x19b8] sm:$0xff]
    %v1068 = vld [vmem:[%s1 + $0x19c0] sm:$0xff]
    %v1069 = vld [vmem:[%s1 + $0x19c8] sm:$0xff]
    %v1070 = vld [vmem:[%s1 + $0x19d0] sm:$0xff]
    %v1071 = vld [vmem:[%s1 + $0x19d8] sm:$0xff]
    %v1072 = vld [vmem:[%s1 + $0x19e0] sm:$0xff]
    %v1073 = vld [vmem:[%s1 + $0x19e8] sm:$0xff]
    %v1074 = vld [vmem:[%s1 + $0x19f0] sm:$0xff]
    %v1075 = vld [vmem:[%s1 + $0x19f8] sm:$0xff]
    %v1076 = vld [vmem:[%s1 + $0x1a00] sm:$0xff]
    %v1077 = vld [vmem:[%s1 + $0x1a08] sm:$0xff]
    %v1078 = vld [vmem:[%s1 + $0x1a10] sm:$0xff]
    %v1079 = vld [vmem:[%s1 + $0x1a18] sm:$0xff]
    %v1080 = vld [vmem:[%s1 + $0x1a20] sm:$0xff]
    %v1081 = vld [vmem:[%s1 + $0x1a28] sm:$0xff]
    %v1082 = vld [vmem:[%s1 + $0x1a30] sm:$0xff]
    %v1083 = vld [vmem:[%s1 + $0x1a38] sm:$0xff]
    %v1084 = vld [vmem:[%s1 + $0x1a40] sm:$0xff]
    %v1085 = vld [vmem:[%s1 + $0x1a48] sm:$0xff]
    %v1086 = vld [vmem:[%s1 + $0x1a50] sm:$0xff]
    %v1087 = vld [vmem:[%s1 + $0x1a58] sm:$0xff]
    %v1088 = vld [vmem:[%s1 + $0x1a60] sm:$0xff]
    %v1089 = vld [vmem:[%s1 + $0x1a68] sm:$0xff]
    %v1090 = vld [vmem:[%s1 + $0x1a70] sm:$0xff]
    %v1091 = vld [vmem:[%s1 + $0x1a78] sm:$0xff]
    %v1092 = vld [vmem:[%s1 + $0x1a80] sm:$0xff]
    %v1093 = vld [vmem:[%s1 + $0x1a88] sm:$0xff]
    %v1094 = vld [vmem:[%s1 + $0x1a90] sm:$0xff]
    %v1095 = vld [vmem:[%s1 + $0x1a98] sm:$0xff]
    %v1096 = vld [vmem:[%s1 + $0x1aa0] sm:$0xff]
    %v1097 = vld [vmem:[%s1 + $0x1aa8] sm:$0xff]
    %v1098 = vld [vmem:[%s1 + $0x1ab0] sm:$0xff]
    %v1099 = vld [vmem:[%s1 + $0x1ab8] sm:$0xff]
    %v1100 = vld [vmem:[%s1 + $0x1ac0] sm:$0xff]
    %v1101 = vld [vmem:[%s1 + $0x1ac8] sm:$0xff]
    %v1102 = vld [vmem:[%s1 + $0x1ad0] sm:$0xff]
    %v1103 = vld [vmem:[%s1 + $0x1ad8] sm:$0xff]
    %v1104 = vld [vmem:[%s1 + $0x1ae0] sm:$0xff]
    %v1105 = vld [vmem:[%s1 + $0x1ae8] sm:$0xff]
    %v1106 = vld [vmem:[%s1 + $0x1af0] sm:$0xff]
    %v1107 = vld [vmem:[%s1 + $0x1af8] sm:$0xff]
    %v1108 = vld [vmem:[%s1 + $0x1b00] sm:$0xff]
    %v1109 = vld [vmem:[%s1 + $0x1b08] sm:$0xff]
    %v1110 = vld [vmem:[%s1 + $0x1b10] sm:$0xff]
    %v1111 = vld [vmem:[%s1 + $0x1b18] sm:$0xff]
    %v1112 = vld [vmem:[%s1 + $0x1b20] sm:$0xff]
    %v1113 = vld [vmem:[%s1 + $0x1b28] sm:$0xff]
    %v1114 = vld [vmem:[%s1 + $0x1b30] sm:$0xff]
    %v1115 = vld [vmem:[%s1 + $0x1b38] sm:$0xff]
    %v1116 = vld [vmem:[%s1 + $0x1b40] sm:$0xff]
    %v1117 = vld [vmem:[%s1 + $0x1b48] sm:$0xff]
    %v1118 = vld [vmem:[%s1 + $0x1b50] sm:$0xff]
    %v1119 = vld [vmem:[%s1 + $0x1b58] sm:$0xff]
    %v1120 = vld [vmem:[%s1 + $0x1b60] sm:$0xff]
    %v1121 = vld [vmem:[%s1 + $0x1b68] sm:$0xff]
    %v1122 = vld [vmem:[%s1 + $0x1b70] sm:$0xff]
    %v1123 = vld [vmem:[%s1 + $0x1b78] sm:$0xff]
    %v1124 = vld [vmem:[%s1 + $0x1b80] sm:$0xff]
    %v1125 = vld [vmem:[%s1 + $0x1b88] sm:$0xff]
    %v1126 = vld [vmem:[%s1 + $0x1b90] sm:$0xff]
    %v1127 = vld [vmem:[%s1 + $0x1b98] sm:$0xff]
    %v1128 = vld [vmem:[%s1 + $0x1ba0] sm:$0xff]
    %v1129 = vld [vmem:[%s1 + $0x1ba8] sm:$0xff]
    %v1130 = vld [vmem:[%s1 + $0x1bb0] sm:$0xff]
    %v1131 = vld [vmem:[%s1 + $0x1bb8] sm:$0xff]
    %v1132 = vld [vmem:[%s1 + $0x1bc0] sm:$0xff]
    %v1133 = vld [vmem:[%s1 + $0x1bc8] sm:$0xff]
    %v1134 = vld [vmem:[%s1 + $0x1bd0] sm:$0xff]
    %v1135 = vld [vmem:[%s1 + $0x1bd8] sm:$0xff]
    %v1136 = vld [vmem:[%s1 + $0x1be0] sm:$0xff]
    %v1137 = vld [vmem:[%s1 + $0x1be8] sm:$0xff]
    %v1138 = vld [vmem:[%s1 + $0x1bf0] sm:$0xff]
    %v1139 = vld [vmem:[%s1 + $0x1bf8] sm:$0xff]
    %v1140 = vld [vmem:[%s1 + $0x1c00] sm:$0xff]
    %v1141 = vld [vmem:[%s1 + $0x1c08] sm:$0xff]
    %v1142 = vld [vmem:[%s1 + $0x1c10] sm:$0xff]
    %v1143 = vld [vmem:[%s1 + $0x1c18] sm:$0xff]
    %v1144 = vld [vmem:[%s1 + $0x1c20] sm:$0xff]
    %v1145 = vld [vmem:[%s1 + $0x1c28] sm:$0xff]
    %v1146 = vld [vmem:[%s1 + $0x1c30] sm:$0xff]
    %v1147 = vld [vmem:[%s1 + $0x1c38] sm:$0xff]
    %v1148 = vld [vmem:[%s1 + $0x1c40] sm:$0xff]
    %v1149 = vld [vmem:[%s1 + $0x1c48] sm:$0xff]
    %v1150 = vld [vmem:[%s1 + $0x1c50] sm:$0xff]
    %v1151 = vld [vmem:[%s1 + $0x1c58] sm:$0xff]
    %v1152 = vld [vmem:[%s1 + $0x1c60] sm:$0xff]
    %v1153 = vld [vmem:[%s1 + $0x1c68] sm:$0xff]
    %v1154 = vld [vmem:[%s1 + $0x1c70] sm:$0xff]
    %v1155 = vld [vmem:[%s1 + $0x1c78] sm:$0xff]
    %v1156 = vld [vmem:[%s1 + $0x1c80] sm:$0xff]
    %v1157 = vld [vmem:[%s1 + $0x1c88] sm:$0xff]
    %v1158 = vld [vmem:[%s1 + $0x1c90] sm:$0xff]
    %v1159 = vld [vmem:[%s1 + $0x1c98] sm:$0xff]
    %v1160 = vld [vmem:[%s1 + $0x1ca0] sm:$0xff]
    %v1161 = vld [vmem:[%s1 + $0x1ca8] sm:$0xff]
    %v1162 = vld [vmem:[%s1 + $0x1cb0] sm:$0xff]
    %v1163 = vld [vmem:[%s1 + $0x1cb8] sm:$0xff]
    %v1164 = vld [vmem:[%s1 + $0x1cc0] sm:$0xff]
    %v1165 = vld [vmem:[%s1 + $0x1cc8] sm:$0xff]
    %v1166 = vld [vmem:[%s1 + $0x1cd0] sm:$0xff]
    %v1167 = vld [vmem:[%s1 + $0x1cd8] sm:$0xff]
    %v1168 = vld [vmem:[%s1 + $0x1ce0] sm:$0xff]
    %v1169 = vld [vmem:[%s1 + $0x1ce8] sm:$0xff]
    %v1170 = vld [vmem:[%s1 + $0x1cf0] sm:$0xff]
    %v1171 = vld [vmem:[%s1 + $0x1cf8] sm:$0xff]
    %v1172 = vld [vmem:[%s1 + $0x1d00] sm:$0xff]
    %v1173 = vld [vmem:[%s1 + $0x1d08] sm:$0xff]
    %v1174 = vld [vmem:[%s1 + $0x1d10] sm:$0xff]
    %v1175 = vld [vmem:[%s1 + $0x1d18] sm:$0xff]
    %v1176 = vld [vmem:[%s1 + $0x1d20] sm:$0xff]
    %v1177 = vld [vmem:[%s1 + $0x1d28] sm:$0xff]
    %v1178 = vld [vmem:[%s1 + $0x1d30] sm:$0xff]
    %v1179 = vld [vmem:[%s1 + $0x1d38] sm:$0xff]
    %v1180 = vld [vmem:[%s1 + $0x1d40] sm:$0xff]
    %v1181 = vld [vmem:[%s1 + $0x1d48] sm:$0xff]
    %v1182 = vld [vmem:[%s1 + $0x1d50] sm:$0xff]
    %v1183 = vld [vmem:[%s1 + $0x1d58] sm:$0xff]
    %v1184 = vld [vmem:[%s1 + $0x1d60] sm:$0xff]
    %v1185 = vld [vmem:[%s1 + $0x1d68] sm:$0xff]
    %v1186 = vld [vmem:[%s1 + $0x1d70] sm:$0xff]
    %v1187 = vld [vmem:[%s1 + $0x1d78] sm:$0xff]
    %v1188 = vld [vmem:[%s1 + $0x1d80] sm:$0xff]
    %v1189 = vld [vmem:[%s1 + $0x1d88] sm:$0xff]
    %v1190 = vld [vmem:[%s1 + $0x1d90] sm:$0xff]
    %v1191 = vld [vmem:[%s1 + $0x1d98] sm:$0xff]
    %v1192 = vld [vmem:[%s1 + $0x1da0] sm:$0xff]
    %v1193 = vld [vmem:[%s1 + $0x1da8] sm:$0xff]
    %v1194 = vld [vmem:[%s1 + $0x1db0] sm:$0xff]
    %v1195 = vld [vmem:[%s1 + $0x1db8] sm:$0xff]
    %v1196 = vld [vmem:[%s1 + $0x1dc0] sm:$0xff]
    %v1197 = vld [vmem:[%s1 + $0x1dc8] sm:$0xff]
    %v1198 = vld [vmem:[%s1 + $0x1dd0] sm:$0xff]
    %v1199 = vld [vmem:[%s1 + $0x1dd8] sm:$0xff]
    %v1200 = vld [vmem:[%s1 + $0x1de0] sm:$0xff]
    %v1201 = vld [vmem:[%s1 + $0x1de8] sm:$0xff]
    %v1202 = vld [vmem:[%s1 + $0x1df0] sm:$0xff]
    %v1203 = vld [vmem:[%s1 + $0x1df8] sm:$0xff]
    %v1204 = vld [vmem:[%s1 + $0x1e00] sm:$0xff]
    %v1205 = vld [vmem:[%s1 + $0x1e08] sm:$0xff]
    %v1206 = vld [vmem:[%s1 + $0x1e10] sm:$0xff]
    %v1207 = vld [vmem:[%s1 + $0x1e18] sm:$0xff]
    %v1208 = vld [vmem:[%s1 + $0x1e20] sm:$0xff]
    %v1209 = vld [vmem:[%s1 + $0x1e28] sm:$0xff]
    %v1210 = vld [vmem:[%s1 + $0x1e30] sm:$0xff]
    %v1211 = vld [vmem:[%s1 + $0x1e38] sm:$0xff]
    %v1212 = vld [vmem:[%s1 + $0x1e40] sm:$0xff]
    %v1213 = vld [vmem:[%s1 + $0x1e48] sm:$0xff]
    %v1214 = vld [vmem:[%s1 + $0x1e50] sm:$0xff]
    %v1215 = vld [vmem:[%s1 + $0x1e58] sm:$0xff]
    %v1216 = vld [vmem:[%s1 + $0x1e60] sm:$0xff]
    %v1217 = vld [vmem:[%s1 + $0x1e68] sm:$0xff]
    %v1218 = vld [vmem:[%s1 + $0x1e70] sm:$0xff]
    %v1219 = vld [vmem:[%s1 + $0x1e78] sm:$0xff]
    %v1220 = vld [vmem:[%s1 + $0x1e80] sm:$0xff]
    %v1221 = vld [vmem:[%s1 + $0x1e88] sm:$0xff]
    %v1222 = vld [vmem:[%s1 + $0x1e90] sm:$0xff]
    %v1223 = vld [vmem:[%s1 + $0x1e98] sm:$0xff]
    %v1224 = vld [vmem:[%s1 + $0x1ea0] sm:$0xff]
    %v1225 = vld [vmem:[%s1 + $0x1ea8] sm:$0xff]
    %v1226 = vld [vmem:[%s1 + $0x1eb0] sm:$0xff]
    %v1227 = vld [vmem:[%s1 + $0x1eb8] sm:$0xff]
    %v1228 = vld [vmem:[%s1 + $0x1ec0] sm:$0xff]
    %v1229 = vld [vmem:[%s1 + $0x1ec8] sm:$0xff]
    %v1230 = vld [vmem:[%s1 + $0x1ed0] sm:$0xff]
    %v1231 = vld [vmem:[%s1 + $0x1ed8] sm:$0xff]
    %v1232 = vld [vmem:[%s1 + $0x1ee0] sm:$0xff]
    %v1233 = vld [vmem:[%s1 + $0x1ee8] sm:$0xff]
    %v1234 = vld [vmem:[%s1 + $0x1ef0] sm:$0xff]
    %v1235 = vld [vmem:[%s1 + $0x1ef8] sm:$0xff]
    %v1236 = vld [vmem:[%s1 + $0x1f00] sm:$0xff]
    %v1237 = vld [vmem:[%s1 + $0x1f08] sm:$0xff]
    %v1238 = vld [vmem:[%s1 + $0x1f10] sm:$0xff]
    %v1239 = vld [vmem:[%s1 + $0x1f18] sm:$0xff]
    %v1240 = vld [vmem:[%s1 + $0x1f20] sm:$0xff]
    %v1241 = vld [vmem:[%s1 + $0x1f28] sm:$0xff]
    %v1242 = vld [vmem:[%s1 + $0x1f30] sm:$0xff]
    %v1243 = vld [vmem:[%s1 + $0x1f38] sm:$0xff]
    %v1244 = vld [vmem:[%s1 + $0x1f40] sm:$0xff]
    %v1245 = vld [vmem:[%s1 + $0x1f48] sm:$0xff]
    %v1246 = vld [vmem:[%s1 + $0x1f50] sm:$0xff]
    %v1247 = vld [vmem:[%s1 + $0x1f58] sm:$0xff]
    %v1248 = vld [vmem:[%s1 + $0x1f60] sm:$0xff]
    %v1249 = vld [vmem:[%s1 + $0x1f68] sm:$0xff]
    %v1250 = vld [vmem:[%s1 + $0x1f70] sm:$0xff]
    %v1251 = vld [vmem:[%s1 + $0x1f78] sm:$0xff]
    %v1252 = vld [vmem:[%s1 + $0x1f80] sm:$0xff]
    %v1253 = vld [vmem:[%s1 + $0x1f88] sm:$0xff]
    %v1254 = vld [vmem:[%s1 + $0x1f90] sm:$0xff]
    %v1255 = vld [vmem:[%s1 + $0x1f98] sm:$0xff]
    %v1256 = vld [vmem:[%s1 + $0x1fa0] sm:$0xff]
    %v1257 = vld [vmem:[%s1 + $0x1fa8] sm:$0xff]
    %v1258 = vld [vmem:[%s1 + $0x1fb0] sm:$0xff]
    %v1259 = vld [vmem:[%s1 + $0x1fb8] sm:$0xff]
    %v1260 = vld [vmem:[%s1 + $0x1fc0] sm:$0xff]
    %v1261 = vld [vmem:[%s1 + $0x1fc8] sm:$0xff]
    %v1262 = vld [vmem:[%s1 + $0x1fd0] sm:$0xff]
    %v1263 = vld [vmem:[%s1 + $0x1fd8] sm:$0xff]
    %v1264 = vld [vmem:[%s1 + $0x1fe0] sm:$0xff]
    %v1265 = vld [vmem:[%s1 + $0x1fe8] sm:$0xff]
    %v1266 = vld [vmem:[%s1 + $0x1ff0] sm:$0xff]
    %v1267 = vld [vmem:[%s1 + $0x1ff8] sm:$0xff]
    %v1268 = vld [vmem:[%s2] sm:$0xf]
    %v1270 = vlaneseq
    %v1271 = vshrl.u32 %v1270, 7
    %v1272 = vsub.s32 0, %v1271
    %v1273 = vrot.slane %v1268, %v1272
    %v1274 = vlaneseq
    %v1275 = vshrl.u32 %v1274, 7
    %v1276 = vsub.s32 1, %v1275
    %v1277 = vrot.slane %v1268, %v1276
    %v1278 = vlaneseq
    %v1279 = vshrl.u32 %v1278, 7
    %v1280 = vsub.s32 2, %v1279
    %v1281 = vrot.slane %v1268, %v1280
    %v1282 = vlaneseq
    %v1283 = vshrl.u32 %v1282, 7
    %v1284 = vsub.s32 3, %v1283
    %v1285 = vrot.slane %v1268, %v1284
    %v2314 = vunpack.c.l.b16 %v244
    %v2315 = vunpack.c.h.b16 %v244
    %v2316 = vunpack.c.l.b16 %v245
    %v2317 = vunpack.c.h.b16 %v245
    %v2318 = vunpack.c.l.b16 %v246
    %v2319 = vunpack.c.h.b16 %v246
    %v2320 = vunpack.c.l.b16 %v247
    %v2321 = vunpack.c.h.b16 %v247
    %v2322 = vunpack.c.l.b16 %v248
    %v2323 = vunpack.c.h.b16 %v248
    %v2324 = vunpack.c.l.b16 %v249
    %v2325 = vunpack.c.h.b16 %v249
    %v2326 = vunpack.c.l.b16 %v250
    %v2327 = vunpack.c.h.b16 %v250
    %v2328 = vunpack.c.l.b16 %v251
    %v2329 = vunpack.c.h.b16 %v251
    %v2330 = vunpack.c.l.b16 %v252
    %v2331 = vunpack.c.h.b16 %v252
    %v2332 = vunpack.c.l.b16 %v253
    %v2333 = vunpack.c.h.b16 %v253
    %v2334 = vunpack.c.l.b16 %v254
    %v2335 = vunpack.c.h.b16 %v254
    %v2336 = vunpack.c.l.b16 %v255
    %v2337 = vunpack.c.h.b16 %v255
    %v2338 = vunpack.c.l.b16 %v256
    %v2339 = vunpack.c.h.b16 %v256
    %v2340 = vunpack.c.l.b16 %v257
    %v2341 = vunpack.c.h.b16 %v257
    %v2342 = vunpack.c.l.b16 %v258
    %v2343 = vunpack.c.h.b16 %v258
    %v2344 = vunpack.c.l.b16 %v259
    %v2345 = vunpack.c.h.b16 %v259
    %v2346 = vunpack.c.l.b16 %v260
    %v2347 = vunpack.c.h.b16 %v260
    %v2348 = vunpack.c.l.b16 %v261
    %v2349 = vunpack.c.h.b16 %v261
    %v2350 = vunpack.c.l.b16 %v262
    %v2351 = vunpack.c.h.b16 %v262
    %v2352 = vunpack.c.l.b16 %v263
    %v2353 = vunpack.c.h.b16 %v263
    %v2354 = vunpack.c.l.b16 %v264
    %v2355 = vunpack.c.h.b16 %v264
    %v2356 = vunpack.c.l.b16 %v265
    %v2357 = vunpack.c.h.b16 %v265
    %v2358 = vunpack.c.l.b16 %v266
    %v2359 = vunpack.c.h.b16 %v266
    %v2360 = vunpack.c.l.b16 %v267
    %v2361 = vunpack.c.h.b16 %v267
    %v2362 = vunpack.c.l.b16 %v268
    %v2363 = vunpack.c.h.b16 %v268
    %v2364 = vunpack.c.l.b16 %v269
    %v2365 = vunpack.c.h.b16 %v269
    %v2366 = vunpack.c.l.b16 %v270
    %v2367 = vunpack.c.h.b16 %v270
    %v2368 = vunpack.c.l.b16 %v271
    %v2369 = vunpack.c.h.b16 %v271
    %v2370 = vunpack.c.l.b16 %v272
    %v2371 = vunpack.c.h.b16 %v272
    %v2372 = vunpack.c.l.b16 %v273
    %v2373 = vunpack.c.h.b16 %v273
    %v2374 = vunpack.c.l.b16 %v274
    %v2375 = vunpack.c.h.b16 %v274
    %v2376 = vunpack.c.l.b16 %v275
    %v2377 = vunpack.c.h.b16 %v275
    %v2378 = vunpack.c.l.b16 %v276
    %v2379 = vunpack.c.h.b16 %v276
    %v2380 = vunpack.c.l.b16 %v277
    %v2381 = vunpack.c.h.b16 %v277
    %v2382 = vunpack.c.l.b16 %v278
    %v2383 = vunpack.c.h.b16 %v278
    %v2384 = vunpack.c.l.b16 %v279
    %v2385 = vunpack.c.h.b16 %v279
    %v2386 = vunpack.c.l.b16 %v280
    %v2387 = vunpack.c.h.b16 %v280
    %v2388 = vunpack.c.l.b16 %v281
    %v2389 = vunpack.c.h.b16 %v281
    %v2390 = vunpack.c.l.b16 %v282
    %v2391 = vunpack.c.h.b16 %v282
    %v2392 = vunpack.c.l.b16 %v283
    %v2393 = vunpack.c.h.b16 %v283
    %v2394 = vunpack.c.l.b16 %v284
    %v2395 = vunpack.c.h.b16 %v284
    %v2396 = vunpack.c.l.b16 %v285
    %v2397 = vunpack.c.h.b16 %v285
    %v2398 = vunpack.c.l.b16 %v286
    %v2399 = vunpack.c.h.b16 %v286
    %v2400 = vunpack.c.l.b16 %v287
    %v2401 = vunpack.c.h.b16 %v287
    %v2402 = vunpack.c.l.b16 %v288
    %v2403 = vunpack.c.h.b16 %v288
    %v2404 = vunpack.c.l.b16 %v289
    %v2405 = vunpack.c.h.b16 %v289
    %v2406 = vunpack.c.l.b16 %v290
    %v2407 = vunpack.c.h.b16 %v290
    %v2408 = vunpack.c.l.b16 %v291
    %v2409 = vunpack.c.h.b16 %v291
    %v2410 = vunpack.c.l.b16 %v292
    %v2411 = vunpack.c.h.b16 %v292
    %v2412 = vunpack.c.l.b16 %v293
    %v2413 = vunpack.c.h.b16 %v293
    %v2414 = vunpack.c.l.b16 %v294
    %v2415 = vunpack.c.h.b16 %v294
    %v2416 = vunpack.c.l.b16 %v295
    %v2417 = vunpack.c.h.b16 %v295
    %v2418 = vunpack.c.l.b16 %v296
    %v2419 = vunpack.c.h.b16 %v296
    %v2420 = vunpack.c.l.b16 %v297
    %v2421 = vunpack.c.h.b16 %v297
    %v2422 = vunpack.c.l.b16 %v298
    %v2423 = vunpack.c.h.b16 %v298
    %v2424 = vunpack.c.l.b16 %v299
    %v2425 = vunpack.c.h.b16 %v299
    %v2426 = vunpack.c.l.b16 %v300
    %v2427 = vunpack.c.h.b16 %v300
    %v2428 = vunpack.c.l.b16 %v301
    %v2429 = vunpack.c.h.b16 %v301
    %v2430 = vunpack.c.l.b16 %v302
    %v2431 = vunpack.c.h.b16 %v302
    %v2432 = vunpack.c.l.b16 %v303
    %v2433 = vunpack.c.h.b16 %v303
    %v2434 = vunpack.c.l.b16 %v304
    %v2435 = vunpack.c.h.b16 %v304
    %v2436 = vunpack.c.l.b16 %v305
    %v2437 = vunpack.c.h.b16 %v305
    %v2438 = vunpack.c.l.b16 %v306
    %v2439 = vunpack.c.h.b16 %v306
    %v2440 = vunpack.c.l.b16 %v307
    %v2441 = vunpack.c.h.b16 %v307
    %v2442 = vunpack.c.l.b16 %v308
    %v2443 = vunpack.c.h.b16 %v308
    %v2444 = vunpack.c.l.b16 %v309
    %v2445 = vunpack.c.h.b16 %v309
    %v2446 = vunpack.c.l.b16 %v310
    %v2447 = vunpack.c.h.b16 %v310
    %v2448 = vunpack.c.l.b16 %v311
    %v2449 = vunpack.c.h.b16 %v311
    %v2450 = vunpack.c.l.b16 %v312
    %v2451 = vunpack.c.h.b16 %v312
    %v2452 = vunpack.c.l.b16 %v313
    %v2453 = vunpack.c.h.b16 %v313
    %v2454 = vunpack.c.l.b16 %v314
    %v2455 = vunpack.c.h.b16 %v314
    %v2456 = vunpack.c.l.b16 %v315
    %v2457 = vunpack.c.h.b16 %v315
    %v2458 = vunpack.c.l.b16 %v316
    %v2459 = vunpack.c.h.b16 %v316
    %v2460 = vunpack.c.l.b16 %v317
    %v2461 = vunpack.c.h.b16 %v317
    %v2462 = vunpack.c.l.b16 %v318
    %v2463 = vunpack.c.h.b16 %v318
    %v2464 = vunpack.c.l.b16 %v319
    %v2465 = vunpack.c.h.b16 %v319
    %v2466 = vunpack.c.l.b16 %v320
    %v2467 = vunpack.c.h.b16 %v320
    %v2468 = vunpack.c.l.b16 %v321
    %v2469 = vunpack.c.h.b16 %v321
    %v2470 = vunpack.c.l.b16 %v322
    %v2471 = vunpack.c.h.b16 %v322
    %v2472 = vunpack.c.l.b16 %v323
    %v2473 = vunpack.c.h.b16 %v323
    %v2474 = vunpack.c.l.b16 %v324
    %v2475 = vunpack.c.h.b16 %v324
    %v2476 = vunpack.c.l.b16 %v325
    %v2477 = vunpack.c.h.b16 %v325
    %v2478 = vunpack.c.l.b16 %v326
    %v2479 = vunpack.c.h.b16 %v326
    %v2480 = vunpack.c.l.b16 %v327
    %v2481 = vunpack.c.h.b16 %v327
    %v2482 = vunpack.c.l.b16 %v328
    %v2483 = vunpack.c.h.b16 %v328
    %v2484 = vunpack.c.l.b16 %v329
    %v2485 = vunpack.c.h.b16 %v329
    %v2486 = vunpack.c.l.b16 %v330
    %v2487 = vunpack.c.h.b16 %v330
    %v2488 = vunpack.c.l.b16 %v331
    %v2489 = vunpack.c.h.b16 %v331
    %v2490 = vunpack.c.l.b16 %v332
    %v2491 = vunpack.c.h.b16 %v332
    %v2492 = vunpack.c.l.b16 %v333
    %v2493 = vunpack.c.h.b16 %v333
    %v2494 = vunpack.c.l.b16 %v334
    %v2495 = vunpack.c.h.b16 %v334
    %v2496 = vunpack.c.l.b16 %v335
    %v2497 = vunpack.c.h.b16 %v335
    %v2498 = vunpack.c.l.b16 %v336
    %v2499 = vunpack.c.h.b16 %v336
    %v2500 = vunpack.c.l.b16 %v337
    %v2501 = vunpack.c.h.b16 %v337
    %v2502 = vunpack.c.l.b16 %v338
    %v2503 = vunpack.c.h.b16 %v338
    %v2504 = vunpack.c.l.b16 %v339
    %v2505 = vunpack.c.h.b16 %v339
    %v2506 = vunpack.c.l.b16 %v340
    %v2507 = vunpack.c.h.b16 %v340
    %v2508 = vunpack.c.l.b16 %v341
    %v2509 = vunpack.c.h.b16 %v341
    %v2510 = vunpack.c.l.b16 %v342
    %v2511 = vunpack.c.h.b16 %v342
    %v2512 = vunpack.c.l.b16 %v343
    %v2513 = vunpack.c.h.b16 %v343
    %v2514 = vunpack.c.l.b16 %v344
    %v2515 = vunpack.c.h.b16 %v344
    %v2516 = vunpack.c.l.b16 %v345
    %v2517 = vunpack.c.h.b16 %v345
    %v2518 = vunpack.c.l.b16 %v346
    %v2519 = vunpack.c.h.b16 %v346
    %v2520 = vunpack.c.l.b16 %v347
    %v2521 = vunpack.c.h.b16 %v347
    %v2522 = vunpack.c.l.b16 %v348
    %v2523 = vunpack.c.h.b16 %v348
    %v2524 = vunpack.c.l.b16 %v349
    %v2525 = vunpack.c.h.b16 %v349
    %v2526 = vunpack.c.l.b16 %v350
    %v2527 = vunpack.c.h.b16 %v350
    %v2528 = vunpack.c.l.b16 %v351
    %v2529 = vunpack.c.h.b16 %v351
    %v2530 = vunpack.c.l.b16 %v352
    %v2531 = vunpack.c.h.b16 %v352
    %v2532 = vunpack.c.l.b16 %v353
    %v2533 = vunpack.c.h.b16 %v353
    %v2534 = vunpack.c.l.b16 %v354
    %v2535 = vunpack.c.h.b16 %v354
    %v2536 = vunpack.c.l.b16 %v355
    %v2537 = vunpack.c.h.b16 %v355
    %v2538 = vunpack.c.l.b16 %v356
    %v2539 = vunpack.c.h.b16 %v356
    %v2540 = vunpack.c.l.b16 %v357
    %v2541 = vunpack.c.h.b16 %v357
    %v2542 = vunpack.c.l.b16 %v358
    %v2543 = vunpack.c.h.b16 %v358
    %v2544 = vunpack.c.l.b16 %v359
    %v2545 = vunpack.c.h.b16 %v359
    %v2546 = vunpack.c.l.b16 %v360
    %v2547 = vunpack.c.h.b16 %v360
    %v2548 = vunpack.c.l.b16 %v361
    %v2549 = vunpack.c.h.b16 %v361
    %v2550 = vunpack.c.l.b16 %v362
    %v2551 = vunpack.c.h.b16 %v362
    %v2552 = vunpack.c.l.b16 %v363
    %v2553 = vunpack.c.h.b16 %v363
    %v2554 = vunpack.c.l.b16 %v364
    %v2555 = vunpack.c.h.b16 %v364
    %v2556 = vunpack.c.l.b16 %v365
    %v2557 = vunpack.c.h.b16 %v365
    %v2558 = vunpack.c.l.b16 %v366
    %v2559 = vunpack.c.h.b16 %v366
    %v2560 = vunpack.c.l.b16 %v367
    %v2561 = vunpack.c.h.b16 %v367
    %v2562 = vunpack.c.l.b16 %v368
    %v2563 = vunpack.c.h.b16 %v368
    %v2564 = vunpack.c.l.b16 %v369
    %v2565 = vunpack.c.h.b16 %v369
    %v2566 = vunpack.c.l.b16 %v370
    %v2567 = vunpack.c.h.b16 %v370
    %v2568 = vunpack.c.l.b16 %v371
    %v2569 = vunpack.c.h.b16 %v371
    %v2570 = vunpack.c.l.b16 %v372
    %v2571 = vunpack.c.h.b16 %v372
    %v2572 = vunpack.c.l.b16 %v373
    %v2573 = vunpack.c.h.b16 %v373
    %v2574 = vunpack.c.l.b16 %v374
    %v2575 = vunpack.c.h.b16 %v374
    %v2576 = vunpack.c.l.b16 %v375
    %v2577 = vunpack.c.h.b16 %v375
    %v2578 = vunpack.c.l.b16 %v376
    %v2579 = vunpack.c.h.b16 %v376
    %v2580 = vunpack.c.l.b16 %v377
    %v2581 = vunpack.c.h.b16 %v377
    %v2582 = vunpack.c.l.b16 %v378
    %v2583 = vunpack.c.h.b16 %v378
    %v2584 = vunpack.c.l.b16 %v379
    %v2585 = vunpack.c.h.b16 %v379
    %v2586 = vunpack.c.l.b16 %v380
    %v2587 = vunpack.c.h.b16 %v380
    %v2588 = vunpack.c.l.b16 %v381
    %v2589 = vunpack.c.h.b16 %v381
    %v2590 = vunpack.c.l.b16 %v382
    %v2591 = vunpack.c.h.b16 %v382
    %v2592 = vunpack.c.l.b16 %v383
    %v2593 = vunpack.c.h.b16 %v383
    %v2594 = vunpack.c.l.b16 %v384
    %v2595 = vunpack.c.h.b16 %v384
    %v2596 = vunpack.c.l.b16 %v385
    %v2597 = vunpack.c.h.b16 %v385
    %v2598 = vunpack.c.l.b16 %v386
    %v2599 = vunpack.c.h.b16 %v386
    %v2600 = vunpack.c.l.b16 %v387
    %v2601 = vunpack.c.h.b16 %v387
    %v2602 = vunpack.c.l.b16 %v388
    %v2603 = vunpack.c.h.b16 %v388
    %v2604 = vunpack.c.l.b16 %v389
    %v2605 = vunpack.c.h.b16 %v389
    %v2606 = vunpack.c.l.b16 %v390
    %v2607 = vunpack.c.h.b16 %v390
    %v2608 = vunpack.c.l.b16 %v391
    %v2609 = vunpack.c.h.b16 %v391
    %v2610 = vunpack.c.l.b16 %v392
    %v2611 = vunpack.c.h.b16 %v392
    %v2612 = vunpack.c.l.b16 %v393
    %v2613 = vunpack.c.h.b16 %v393
    %v2614 = vunpack.c.l.b16 %v394
    %v2615 = vunpack.c.h.b16 %v394
    %v2616 = vunpack.c.l.b16 %v395
    %v2617 = vunpack.c.h.b16 %v395
    %v2618 = vunpack.c.l.b16 %v396
    %v2619 = vunpack.c.h.b16 %v396
    %v2620 = vunpack.c.l.b16 %v397
    %v2621 = vunpack.c.h.b16 %v397
    %v2622 = vunpack.c.l.b16 %v398
    %v2623 = vunpack.c.h.b16 %v398
    %v2624 = vunpack.c.l.b16 %v399
    %v2625 = vunpack.c.h.b16 %v399
    %v2626 = vunpack.c.l.b16 %v400
    %v2627 = vunpack.c.h.b16 %v400
    %v2628 = vunpack.c.l.b16 %v401
    %v2629 = vunpack.c.h.b16 %v401
    %v2630 = vunpack.c.l.b16 %v402
    %v2631 = vunpack.c.h.b16 %v402
    %v2632 = vunpack.c.l.b16 %v403
    %v2633 = vunpack.c.h.b16 %v403
    %v2634 = vunpack.c.l.b16 %v404
    %v2635 = vunpack.c.h.b16 %v404
    %v2636 = vunpack.c.l.b16 %v405
    %v2637 = vunpack.c.h.b16 %v405
    %v2638 = vunpack.c.l.b16 %v406
    %v2639 = vunpack.c.h.b16 %v406
    %v2640 = vunpack.c.l.b16 %v407
    %v2641 = vunpack.c.h.b16 %v407
    %v2642 = vunpack.c.l.b16 %v408
    %v2643 = vunpack.c.h.b16 %v408
    %v2644 = vunpack.c.l.b16 %v409
    %v2645 = vunpack.c.h.b16 %v409
    %v2646 = vunpack.c.l.b16 %v410
    %v2647 = vunpack.c.h.b16 %v410
    %v2648 = vunpack.c.l.b16 %v411
    %v2649 = vunpack.c.h.b16 %v411
    %v2650 = vunpack.c.l.b16 %v412
    %v2651 = vunpack.c.h.b16 %v412
    %v2652 = vunpack.c.l.b16 %v413
    %v2653 = vunpack.c.h.b16 %v413
    %v2654 = vunpack.c.l.b16 %v414
    %v2655 = vunpack.c.h.b16 %v414
    %v2656 = vunpack.c.l.b16 %v415
    %v2657 = vunpack.c.h.b16 %v415
    %v2658 = vunpack.c.l.b16 %v416
    %v2659 = vunpack.c.h.b16 %v416
    %v2660 = vunpack.c.l.b16 %v417
    %v2661 = vunpack.c.h.b16 %v417
    %v2662 = vunpack.c.l.b16 %v418
    %v2663 = vunpack.c.h.b16 %v418
    %v2664 = vunpack.c.l.b16 %v419
    %v2665 = vunpack.c.h.b16 %v419
    %v2666 = vunpack.c.l.b16 %v420
    %v2667 = vunpack.c.h.b16 %v420
    %v2668 = vunpack.c.l.b16 %v421
    %v2669 = vunpack.c.h.b16 %v421
    %v2670 = vunpack.c.l.b16 %v422
    %v2671 = vunpack.c.h.b16 %v422
    %v2672 = vunpack.c.l.b16 %v423
    %v2673 = vunpack.c.h.b16 %v423
    %v2674 = vunpack.c.l.b16 %v424
    %v2675 = vunpack.c.h.b16 %v424
    %v2676 = vunpack.c.l.b16 %v425
    %v2677 = vunpack.c.h.b16 %v425
    %v2678 = vunpack.c.l.b16 %v426
    %v2679 = vunpack.c.h.b16 %v426
    %v2680 = vunpack.c.l.b16 %v427
    %v2681 = vunpack.c.h.b16 %v427
    %v2682 = vunpack.c.l.b16 %v428
    %v2683 = vunpack.c.h.b16 %v428
    %v2684 = vunpack.c.l.b16 %v429
    %v2685 = vunpack.c.h.b16 %v429
    %v2686 = vunpack.c.l.b16 %v430
    %v2687 = vunpack.c.h.b16 %v430
    %v2688 = vunpack.c.l.b16 %v431
    %v2689 = vunpack.c.h.b16 %v431
    %v2690 = vunpack.c.l.b16 %v432
    %v2691 = vunpack.c.h.b16 %v432
    %v2692 = vunpack.c.l.b16 %v433
    %v2693 = vunpack.c.h.b16 %v433
    %v2694 = vunpack.c.l.b16 %v434
    %v2695 = vunpack.c.h.b16 %v434
    %v2696 = vunpack.c.l.b16 %v435
    %v2697 = vunpack.c.h.b16 %v435
    %v2698 = vunpack.c.l.b16 %v436
    %v2699 = vunpack.c.h.b16 %v436
    %v2700 = vunpack.c.l.b16 %v437
    %v2701 = vunpack.c.h.b16 %v437
    %v2702 = vunpack.c.l.b16 %v438
    %v2703 = vunpack.c.h.b16 %v438
    %v2704 = vunpack.c.l.b16 %v439
    %v2705 = vunpack.c.h.b16 %v439
    %v2706 = vunpack.c.l.b16 %v440
    %v2707 = vunpack.c.h.b16 %v440
    %v2708 = vunpack.c.l.b16 %v441
    %v2709 = vunpack.c.h.b16 %v441
    %v2710 = vunpack.c.l.b16 %v442
    %v2711 = vunpack.c.h.b16 %v442
    %v2712 = vunpack.c.l.b16 %v443
    %v2713 = vunpack.c.h.b16 %v443
    %v2714 = vunpack.c.l.b16 %v444
    %v2715 = vunpack.c.h.b16 %v444
    %v2716 = vunpack.c.l.b16 %v445
    %v2717 = vunpack.c.h.b16 %v445
    %v2718 = vunpack.c.l.b16 %v446
    %v2719 = vunpack.c.h.b16 %v446
    %v2720 = vunpack.c.l.b16 %v447
    %v2721 = vunpack.c.h.b16 %v447
    %v2722 = vunpack.c.l.b16 %v448
    %v2723 = vunpack.c.h.b16 %v448
    %v2724 = vunpack.c.l.b16 %v449
    %v2725 = vunpack.c.h.b16 %v449
    %v2726 = vunpack.c.l.b16 %v450
    %v2727 = vunpack.c.h.b16 %v450
    %v2728 = vunpack.c.l.b16 %v451
    %v2729 = vunpack.c.h.b16 %v451
    %v2730 = vunpack.c.l.b16 %v452
    %v2731 = vunpack.c.h.b16 %v452
    %v2732 = vunpack.c.l.b16 %v453
    %v2733 = vunpack.c.h.b16 %v453
    %v2734 = vunpack.c.l.b16 %v454
    %v2735 = vunpack.c.h.b16 %v454
    %v2736 = vunpack.c.l.b16 %v455
    %v2737 = vunpack.c.h.b16 %v455
    %v2738 = vunpack.c.l.b16 %v456
    %v2739 = vunpack.c.h.b16 %v456
    %v2740 = vunpack.c.l.b16 %v457
    %v2741 = vunpack.c.h.b16 %v457
    %v2742 = vunpack.c.l.b16 %v458
    %v2743 = vunpack.c.h.b16 %v458
    %v2744 = vunpack.c.l.b16 %v459
    %v2745 = vunpack.c.h.b16 %v459
    %v2746 = vunpack.c.l.b16 %v460
    %v2747 = vunpack.c.h.b16 %v460
    %v2748 = vunpack.c.l.b16 %v461
    %v2749 = vunpack.c.h.b16 %v461
    %v2750 = vunpack.c.l.b16 %v462
    %v2751 = vunpack.c.h.b16 %v462
    %v2752 = vunpack.c.l.b16 %v463
    %v2753 = vunpack.c.h.b16 %v463
    %v2754 = vunpack.c.l.b16 %v464
    %v2755 = vunpack.c.h.b16 %v464
    %v2756 = vunpack.c.l.b16 %v465
    %v2757 = vunpack.c.h.b16 %v465
    %v2758 = vunpack.c.l.b16 %v466
    %v2759 = vunpack.c.h.b16 %v466
    %v2760 = vunpack.c.l.b16 %v467
    %v2761 = vunpack.c.h.b16 %v467
    %v2762 = vunpack.c.l.b16 %v468
    %v2763 = vunpack.c.h.b16 %v468
    %v2764 = vunpack.c.l.b16 %v469
    %v2765 = vunpack.c.h.b16 %v469
    %v2766 = vunpack.c.l.b16 %v470
    %v2767 = vunpack.c.h.b16 %v470
    %v2768 = vunpack.c.l.b16 %v471
    %v2769 = vunpack.c.h.b16 %v471
    %v2770 = vunpack.c.l.b16 %v472
    %v2771 = vunpack.c.h.b16 %v472
    %v2772 = vunpack.c.l.b16 %v473
    %v2773 = vunpack.c.h.b16 %v473
    %v2774 = vunpack.c.l.b16 %v474
    %v2775 = vunpack.c.h.b16 %v474
    %v2776 = vunpack.c.l.b16 %v475
    %v2777 = vunpack.c.h.b16 %v475
    %v2778 = vunpack.c.l.b16 %v476
    %v2779 = vunpack.c.h.b16 %v476
    %v2780 = vunpack.c.l.b16 %v477
    %v2781 = vunpack.c.h.b16 %v477
    %v2782 = vunpack.c.l.b16 %v478
    %v2783 = vunpack.c.h.b16 %v478
    %v2784 = vunpack.c.l.b16 %v479
    %v2785 = vunpack.c.h.b16 %v479
    %v2786 = vunpack.c.l.b16 %v480
    %v2787 = vunpack.c.h.b16 %v480
    %v2788 = vunpack.c.l.b16 %v481
    %v2789 = vunpack.c.h.b16 %v481
    %v2790 = vunpack.c.l.b16 %v482
    %v2791 = vunpack.c.h.b16 %v482
    %v2792 = vunpack.c.l.b16 %v483
    %v2793 = vunpack.c.h.b16 %v483
    %v2794 = vunpack.c.l.b16 %v484
    %v2795 = vunpack.c.h.b16 %v484
    %v2796 = vunpack.c.l.b16 %v485
    %v2797 = vunpack.c.h.b16 %v485
    %v2798 = vunpack.c.l.b16 %v486
    %v2799 = vunpack.c.h.b16 %v486
    %v2800 = vunpack.c.l.b16 %v487
    %v2801 = vunpack.c.h.b16 %v487
    %v2802 = vunpack.c.l.b16 %v488
    %v2803 = vunpack.c.h.b16 %v488
    %v2804 = vunpack.c.l.b16 %v489
    %v2805 = vunpack.c.h.b16 %v489
    %v2806 = vunpack.c.l.b16 %v490
    %v2807 = vunpack.c.h.b16 %v490
    %v2808 = vunpack.c.l.b16 %v491
    %v2809 = vunpack.c.h.b16 %v491
    %v2810 = vunpack.c.l.b16 %v492
    %v2811 = vunpack.c.h.b16 %v492
    %v2812 = vunpack.c.l.b16 %v493
    %v2813 = vunpack.c.h.b16 %v493
    %v2814 = vunpack.c.l.b16 %v494
    %v2815 = vunpack.c.h.b16 %v494
    %v2816 = vunpack.c.l.b16 %v495
    %v2817 = vunpack.c.h.b16 %v495
    %v2818 = vunpack.c.l.b16 %v496
    %v2819 = vunpack.c.h.b16 %v496
    %v2820 = vunpack.c.l.b16 %v497
    %v2821 = vunpack.c.h.b16 %v497
    %v2822 = vunpack.c.l.b16 %v498
    %v2823 = vunpack.c.h.b16 %v498
    %v2824 = vunpack.c.l.b16 %v499
    %v2825 = vunpack.c.h.b16 %v499
    %v2826 = vunpack.c.l.b16 %v500
    %v2827 = vunpack.c.h.b16 %v500
    %v2828 = vunpack.c.l.b16 %v501
    %v2829 = vunpack.c.h.b16 %v501
    %v2830 = vunpack.c.l.b16 %v502
    %v2831 = vunpack.c.h.b16 %v502
    %v2832 = vunpack.c.l.b16 %v503
    %v2833 = vunpack.c.h.b16 %v503
    %v2834 = vunpack.c.l.b16 %v504
    %v2835 = vunpack.c.h.b16 %v504
    %v2836 = vunpack.c.l.b16 %v505
    %v2837 = vunpack.c.h.b16 %v505
    %v2838 = vunpack.c.l.b16 %v506
    %v2839 = vunpack.c.h.b16 %v506
    %v2840 = vunpack.c.l.b16 %v507
    %v2841 = vunpack.c.h.b16 %v507
    %v2842 = vunpack.c.l.b16 %v508
    %v2843 = vunpack.c.h.b16 %v508
    %v2844 = vunpack.c.l.b16 %v509
    %v2845 = vunpack.c.h.b16 %v509
    %v2846 = vunpack.c.l.b16 %v510
    %v2847 = vunpack.c.h.b16 %v510
    %v2848 = vunpack.c.l.b16 %v511
    %v2849 = vunpack.c.h.b16 %v511
    %v2850 = vunpack.c.l.b16 %v512
    %v2851 = vunpack.c.h.b16 %v512
    %v2852 = vunpack.c.l.b16 %v513
    %v2853 = vunpack.c.h.b16 %v513
    %v2854 = vunpack.c.l.b16 %v514
    %v2855 = vunpack.c.h.b16 %v514
    %v2856 = vunpack.c.l.b16 %v515
    %v2857 = vunpack.c.h.b16 %v515
    %v2858 = vunpack.c.l.b16 %v516
    %v2859 = vunpack.c.h.b16 %v516
    %v2860 = vunpack.c.l.b16 %v517
    %v2861 = vunpack.c.h.b16 %v517
    %v2862 = vunpack.c.l.b16 %v518
    %v2863 = vunpack.c.h.b16 %v518
    %v2864 = vunpack.c.l.b16 %v519
    %v2865 = vunpack.c.h.b16 %v519
    %v2866 = vunpack.c.l.b16 %v520
    %v2867 = vunpack.c.h.b16 %v520
    %v2868 = vunpack.c.l.b16 %v521
    %v2869 = vunpack.c.h.b16 %v521
    %v2870 = vunpack.c.l.b16 %v522
    %v2871 = vunpack.c.h.b16 %v522
    %v2872 = vunpack.c.l.b16 %v523
    %v2873 = vunpack.c.h.b16 %v523
    %v2874 = vunpack.c.l.b16 %v524
    %v2875 = vunpack.c.h.b16 %v524
    %v2876 = vunpack.c.l.b16 %v525
    %v2877 = vunpack.c.h.b16 %v525
    %v2878 = vunpack.c.l.b16 %v526
    %v2879 = vunpack.c.h.b16 %v526
    %v2880 = vunpack.c.l.b16 %v527
    %v2881 = vunpack.c.h.b16 %v527
    %v2882 = vunpack.c.l.b16 %v528
    %v2883 = vunpack.c.h.b16 %v528
    %v2884 = vunpack.c.l.b16 %v529
    %v2885 = vunpack.c.h.b16 %v529
    %v2886 = vunpack.c.l.b16 %v530
    %v2887 = vunpack.c.h.b16 %v530
    %v2888 = vunpack.c.l.b16 %v531
    %v2889 = vunpack.c.h.b16 %v531
    %v2890 = vunpack.c.l.b16 %v532
    %v2891 = vunpack.c.h.b16 %v532
    %v2892 = vunpack.c.l.b16 %v533
    %v2893 = vunpack.c.h.b16 %v533
    %v2894 = vunpack.c.l.b16 %v534
    %v2895 = vunpack.c.h.b16 %v534
    %v2896 = vunpack.c.l.b16 %v535
    %v2897 = vunpack.c.h.b16 %v535
    %v2898 = vunpack.c.l.b16 %v536
    %v2899 = vunpack.c.h.b16 %v536
    %v2900 = vunpack.c.l.b16 %v537
    %v2901 = vunpack.c.h.b16 %v537
    %v2902 = vunpack.c.l.b16 %v538
    %v2903 = vunpack.c.h.b16 %v538
    %v2904 = vunpack.c.l.b16 %v539
    %v2905 = vunpack.c.h.b16 %v539
    %v2906 = vunpack.c.l.b16 %v540
    %v2907 = vunpack.c.h.b16 %v540
    %v2908 = vunpack.c.l.b16 %v541
    %v2909 = vunpack.c.h.b16 %v541
    %v2910 = vunpack.c.l.b16 %v542
    %v2911 = vunpack.c.h.b16 %v542
    %v2912 = vunpack.c.l.b16 %v543
    %v2913 = vunpack.c.h.b16 %v543
    %v2914 = vunpack.c.l.b16 %v544
    %v2915 = vunpack.c.h.b16 %v544
    %v2916 = vunpack.c.l.b16 %v545
    %v2917 = vunpack.c.h.b16 %v545
    %v2918 = vunpack.c.l.b16 %v546
    %v2919 = vunpack.c.h.b16 %v546
    %v2920 = vunpack.c.l.b16 %v547
    %v2921 = vunpack.c.h.b16 %v547
    %v2922 = vunpack.c.l.b16 %v548
    %v2923 = vunpack.c.h.b16 %v548
    %v2924 = vunpack.c.l.b16 %v549
    %v2925 = vunpack.c.h.b16 %v549
    %v2926 = vunpack.c.l.b16 %v550
    %v2927 = vunpack.c.h.b16 %v550
    %v2928 = vunpack.c.l.b16 %v551
    %v2929 = vunpack.c.h.b16 %v551
    %v2930 = vunpack.c.l.b16 %v552
    %v2931 = vunpack.c.h.b16 %v552
    %v2932 = vunpack.c.l.b16 %v553
    %v2933 = vunpack.c.h.b16 %v553
    %v2934 = vunpack.c.l.b16 %v554
    %v2935 = vunpack.c.h.b16 %v554
    %v2936 = vunpack.c.l.b16 %v555
    %v2937 = vunpack.c.h.b16 %v555
    %v2938 = vunpack.c.l.b16 %v556
    %v2939 = vunpack.c.h.b16 %v556
    %v2940 = vunpack.c.l.b16 %v557
    %v2941 = vunpack.c.h.b16 %v557
    %v2942 = vunpack.c.l.b16 %v558
    %v2943 = vunpack.c.h.b16 %v558
    %v2944 = vunpack.c.l.b16 %v559
    %v2945 = vunpack.c.h.b16 %v559
    %v2946 = vunpack.c.l.b16 %v560
    %v2947 = vunpack.c.h.b16 %v560
    %v2948 = vunpack.c.l.b16 %v561
    %v2949 = vunpack.c.h.b16 %v561
    %v2950 = vunpack.c.l.b16 %v562
    %v2951 = vunpack.c.h.b16 %v562
    %v2952 = vunpack.c.l.b16 %v563
    %v2953 = vunpack.c.h.b16 %v563
    %v2954 = vunpack.c.l.b16 %v564
    %v2955 = vunpack.c.h.b16 %v564
    %v2956 = vunpack.c.l.b16 %v565
    %v2957 = vunpack.c.h.b16 %v565
    %v2958 = vunpack.c.l.b16 %v566
    %v2959 = vunpack.c.h.b16 %v566
    %v2960 = vunpack.c.l.b16 %v567
    %v2961 = vunpack.c.h.b16 %v567
    %v2962 = vunpack.c.l.b16 %v568
    %v2963 = vunpack.c.h.b16 %v568
    %v2964 = vunpack.c.l.b16 %v569
    %v2965 = vunpack.c.h.b16 %v569
    %v2966 = vunpack.c.l.b16 %v570
    %v2967 = vunpack.c.h.b16 %v570
    %v2968 = vunpack.c.l.b16 %v571
    %v2969 = vunpack.c.h.b16 %v571
    %v2970 = vunpack.c.l.b16 %v572
    %v2971 = vunpack.c.h.b16 %v572
    %v2972 = vunpack.c.l.b16 %v573
    %v2973 = vunpack.c.h.b16 %v573
    %v2974 = vunpack.c.l.b16 %v574
    %v2975 = vunpack.c.h.b16 %v574
    %v2976 = vunpack.c.l.b16 %v575
    %v2977 = vunpack.c.h.b16 %v575
    %v2978 = vunpack.c.l.b16 %v576
    %v2979 = vunpack.c.h.b16 %v576
    %v2980 = vunpack.c.l.b16 %v577
    %v2981 = vunpack.c.h.b16 %v577
    %v2982 = vunpack.c.l.b16 %v578
    %v2983 = vunpack.c.h.b16 %v578
    %v2984 = vunpack.c.l.b16 %v579
    %v2985 = vunpack.c.h.b16 %v579
    %v2986 = vunpack.c.l.b16 %v580
    %v2987 = vunpack.c.h.b16 %v580
    %v2988 = vunpack.c.l.b16 %v581
    %v2989 = vunpack.c.h.b16 %v581
    %v2990 = vunpack.c.l.b16 %v582
    %v2991 = vunpack.c.h.b16 %v582
    %v2992 = vunpack.c.l.b16 %v583
    %v2993 = vunpack.c.h.b16 %v583
    %v2994 = vunpack.c.l.b16 %v584
    %v2995 = vunpack.c.h.b16 %v584
    %v2996 = vunpack.c.l.b16 %v585
    %v2997 = vunpack.c.h.b16 %v585
    %v2998 = vunpack.c.l.b16 %v586
    %v2999 = vunpack.c.h.b16 %v586
    %v3000 = vunpack.c.l.b16 %v587
    %v3001 = vunpack.c.h.b16 %v587
    %v3002 = vunpack.c.l.b16 %v588
    %v3003 = vunpack.c.h.b16 %v588
    %v3004 = vunpack.c.l.b16 %v589
    %v3005 = vunpack.c.h.b16 %v589
    %v3006 = vunpack.c.l.b16 %v590
    %v3007 = vunpack.c.h.b16 %v590
    %v3008 = vunpack.c.l.b16 %v591
    %v3009 = vunpack.c.h.b16 %v591
    %v3010 = vunpack.c.l.b16 %v592
    %v3011 = vunpack.c.h.b16 %v592
    %v3012 = vunpack.c.l.b16 %v593
    %v3013 = vunpack.c.h.b16 %v593
    %v3014 = vunpack.c.l.b16 %v594
    %v3015 = vunpack.c.h.b16 %v594
    %v3016 = vunpack.c.l.b16 %v595
    %v3017 = vunpack.c.h.b16 %v595
    %v3018 = vunpack.c.l.b16 %v596
    %v3019 = vunpack.c.h.b16 %v596
    %v3020 = vunpack.c.l.b16 %v597
    %v3021 = vunpack.c.h.b16 %v597
    %v3022 = vunpack.c.l.b16 %v598
    %v3023 = vunpack.c.h.b16 %v598
    %v3024 = vunpack.c.l.b16 %v599
    %v3025 = vunpack.c.h.b16 %v599
    %v3026 = vunpack.c.l.b16 %v600
    %v3027 = vunpack.c.h.b16 %v600
    %v3028 = vunpack.c.l.b16 %v601
    %v3029 = vunpack.c.h.b16 %v601
    %v3030 = vunpack.c.l.b16 %v602
    %v3031 = vunpack.c.h.b16 %v602
    %v3032 = vunpack.c.l.b16 %v603
    %v3033 = vunpack.c.h.b16 %v603
    %v3034 = vunpack.c.l.b16 %v604
    %v3035 = vunpack.c.h.b16 %v604
    %v3036 = vunpack.c.l.b16 %v605
    %v3037 = vunpack.c.h.b16 %v605
    %v3038 = vunpack.c.l.b16 %v606
    %v3039 = vunpack.c.h.b16 %v606
    %v3040 = vunpack.c.l.b16 %v607
    %v3041 = vunpack.c.h.b16 %v607
    %v3042 = vunpack.c.l.b16 %v608
    %v3043 = vunpack.c.h.b16 %v608
    %v3044 = vunpack.c.l.b16 %v609
    %v3045 = vunpack.c.h.b16 %v609
    %v3046 = vunpack.c.l.b16 %v610
    %v3047 = vunpack.c.h.b16 %v610
    %v3048 = vunpack.c.l.b16 %v611
    %v3049 = vunpack.c.h.b16 %v611
    %v3050 = vunpack.c.l.b16 %v612
    %v3051 = vunpack.c.h.b16 %v612
    %v3052 = vunpack.c.l.b16 %v613
    %v3053 = vunpack.c.h.b16 %v613
    %v3054 = vunpack.c.l.b16 %v614
    %v3055 = vunpack.c.h.b16 %v614
    %v3056 = vunpack.c.l.b16 %v615
    %v3057 = vunpack.c.h.b16 %v615
    %v3058 = vunpack.c.l.b16 %v616
    %v3059 = vunpack.c.h.b16 %v616
    %v3060 = vunpack.c.l.b16 %v617
    %v3061 = vunpack.c.h.b16 %v617
    %v3062 = vunpack.c.l.b16 %v618
    %v3063 = vunpack.c.h.b16 %v618
    %v3064 = vunpack.c.l.b16 %v619
    %v3065 = vunpack.c.h.b16 %v619
    %v3066 = vunpack.c.l.b16 %v620
    %v3067 = vunpack.c.h.b16 %v620
    %v3068 = vunpack.c.l.b16 %v621
    %v3069 = vunpack.c.h.b16 %v621
    %v3070 = vunpack.c.l.b16 %v622
    %v3071 = vunpack.c.h.b16 %v622
    %v3072 = vunpack.c.l.b16 %v623
    %v3073 = vunpack.c.h.b16 %v623
    %v3074 = vunpack.c.l.b16 %v624
    %v3075 = vunpack.c.h.b16 %v624
    %v3076 = vunpack.c.l.b16 %v625
    %v3077 = vunpack.c.h.b16 %v625
    %v3078 = vunpack.c.l.b16 %v626
    %v3079 = vunpack.c.h.b16 %v626
    %v3080 = vunpack.c.l.b16 %v627
    %v3081 = vunpack.c.h.b16 %v627
    %v3082 = vunpack.c.l.b16 %v628
    %v3083 = vunpack.c.h.b16 %v628
    %v3084 = vunpack.c.l.b16 %v629
    %v3085 = vunpack.c.h.b16 %v629
    %v3086 = vunpack.c.l.b16 %v630
    %v3087 = vunpack.c.h.b16 %v630
    %v3088 = vunpack.c.l.b16 %v631
    %v3089 = vunpack.c.h.b16 %v631
    %v3090 = vunpack.c.l.b16 %v632
    %v3091 = vunpack.c.h.b16 %v632
    %v3092 = vunpack.c.l.b16 %v633
    %v3093 = vunpack.c.h.b16 %v633
    %v3094 = vunpack.c.l.b16 %v634
    %v3095 = vunpack.c.h.b16 %v634
    %v3096 = vunpack.c.l.b16 %v635
    %v3097 = vunpack.c.h.b16 %v635
    %v3098 = vunpack.c.l.b16 %v636
    %v3099 = vunpack.c.h.b16 %v636
    %v3100 = vunpack.c.l.b16 %v637
    %v3101 = vunpack.c.h.b16 %v637
    %v3102 = vunpack.c.l.b16 %v638
    %v3103 = vunpack.c.h.b16 %v638
    %v3104 = vunpack.c.l.b16 %v639
    %v3105 = vunpack.c.h.b16 %v639
    %v3106 = vunpack.c.l.b16 %v640
    %v3107 = vunpack.c.h.b16 %v640
    %v3108 = vunpack.c.l.b16 %v641
    %v3109 = vunpack.c.h.b16 %v641
    %v3110 = vunpack.c.l.b16 %v642
    %v3111 = vunpack.c.h.b16 %v642
    %v3112 = vunpack.c.l.b16 %v643
    %v3113 = vunpack.c.h.b16 %v643
    %v3114 = vunpack.c.l.b16 %v644
    %v3115 = vunpack.c.h.b16 %v644
    %v3116 = vunpack.c.l.b16 %v645
    %v3117 = vunpack.c.h.b16 %v645
    %v3118 = vunpack.c.l.b16 %v646
    %v3119 = vunpack.c.h.b16 %v646
    %v3120 = vunpack.c.l.b16 %v647
    %v3121 = vunpack.c.h.b16 %v647
    %v3122 = vunpack.c.l.b16 %v648
    %v3123 = vunpack.c.h.b16 %v648
    %v3124 = vunpack.c.l.b16 %v649
    %v3125 = vunpack.c.h.b16 %v649
    %v3126 = vunpack.c.l.b16 %v650
    %v3127 = vunpack.c.h.b16 %v650
    %v3128 = vunpack.c.l.b16 %v651
    %v3129 = vunpack.c.h.b16 %v651
    %v3130 = vunpack.c.l.b16 %v652
    %v3131 = vunpack.c.h.b16 %v652
    %v3132 = vunpack.c.l.b16 %v653
    %v3133 = vunpack.c.h.b16 %v653
    %v3134 = vunpack.c.l.b16 %v654
    %v3135 = vunpack.c.h.b16 %v654
    %v3136 = vunpack.c.l.b16 %v655
    %v3137 = vunpack.c.h.b16 %v655
    %v3138 = vunpack.c.l.b16 %v656
    %v3139 = vunpack.c.h.b16 %v656
    %v3140 = vunpack.c.l.b16 %v657
    %v3141 = vunpack.c.h.b16 %v657
    %v3142 = vunpack.c.l.b16 %v658
    %v3143 = vunpack.c.h.b16 %v658
    %v3144 = vunpack.c.l.b16 %v659
    %v3145 = vunpack.c.h.b16 %v659
    %v3146 = vunpack.c.l.b16 %v660
    %v3147 = vunpack.c.h.b16 %v660
    %v3148 = vunpack.c.l.b16 %v661
    %v3149 = vunpack.c.h.b16 %v661
    %v3150 = vunpack.c.l.b16 %v662
    %v3151 = vunpack.c.h.b16 %v662
    %v3152 = vunpack.c.l.b16 %v663
    %v3153 = vunpack.c.h.b16 %v663
    %v3154 = vunpack.c.l.b16 %v664
    %v3155 = vunpack.c.h.b16 %v664
    %v3156 = vunpack.c.l.b16 %v665
    %v3157 = vunpack.c.h.b16 %v665
    %v3158 = vunpack.c.l.b16 %v666
    %v3159 = vunpack.c.h.b16 %v666
    %v3160 = vunpack.c.l.b16 %v667
    %v3161 = vunpack.c.h.b16 %v667
    %v3162 = vunpack.c.l.b16 %v668
    %v3163 = vunpack.c.h.b16 %v668
    %v3164 = vunpack.c.l.b16 %v669
    %v3165 = vunpack.c.h.b16 %v669
    %v3166 = vunpack.c.l.b16 %v670
    %v3167 = vunpack.c.h.b16 %v670
    %v3168 = vunpack.c.l.b16 %v671
    %v3169 = vunpack.c.h.b16 %v671
    %v3170 = vunpack.c.l.b16 %v672
    %v3171 = vunpack.c.h.b16 %v672
    %v3172 = vunpack.c.l.b16 %v673
    %v3173 = vunpack.c.h.b16 %v673
    %v3174 = vunpack.c.l.b16 %v674
    %v3175 = vunpack.c.h.b16 %v674
    %v3176 = vunpack.c.l.b16 %v675
    %v3177 = vunpack.c.h.b16 %v675
    %v3178 = vunpack.c.l.b16 %v676
    %v3179 = vunpack.c.h.b16 %v676
    %v3180 = vunpack.c.l.b16 %v677
    %v3181 = vunpack.c.h.b16 %v677
    %v3182 = vunpack.c.l.b16 %v678
    %v3183 = vunpack.c.h.b16 %v678
    %v3184 = vunpack.c.l.b16 %v679
    %v3185 = vunpack.c.h.b16 %v679
    %v3186 = vunpack.c.l.b16 %v680
    %v3187 = vunpack.c.h.b16 %v680
    %v3188 = vunpack.c.l.b16 %v681
    %v3189 = vunpack.c.h.b16 %v681
    %v3190 = vunpack.c.l.b16 %v682
    %v3191 = vunpack.c.h.b16 %v682
    %v3192 = vunpack.c.l.b16 %v683
    %v3193 = vunpack.c.h.b16 %v683
    %v3194 = vunpack.c.l.b16 %v684
    %v3195 = vunpack.c.h.b16 %v684
    %v3196 = vunpack.c.l.b16 %v685
    %v3197 = vunpack.c.h.b16 %v685
    %v3198 = vunpack.c.l.b16 %v686
    %v3199 = vunpack.c.h.b16 %v686
    %v3200 = vunpack.c.l.b16 %v687
    %v3201 = vunpack.c.h.b16 %v687
    %v3202 = vunpack.c.l.b16 %v688
    %v3203 = vunpack.c.h.b16 %v688
    %v3204 = vunpack.c.l.b16 %v689
    %v3205 = vunpack.c.h.b16 %v689
    %v3206 = vunpack.c.l.b16 %v690
    %v3207 = vunpack.c.h.b16 %v690
    %v3208 = vunpack.c.l.b16 %v691
    %v3209 = vunpack.c.h.b16 %v691
    %v3210 = vunpack.c.l.b16 %v692
    %v3211 = vunpack.c.h.b16 %v692
    %v3212 = vunpack.c.l.b16 %v693
    %v3213 = vunpack.c.h.b16 %v693
    %v3214 = vunpack.c.l.b16 %v694
    %v3215 = vunpack.c.h.b16 %v694
    %v3216 = vunpack.c.l.b16 %v695
    %v3217 = vunpack.c.h.b16 %v695
    %v3218 = vunpack.c.l.b16 %v696
    %v3219 = vunpack.c.h.b16 %v696
    %v3220 = vunpack.c.l.b16 %v697
    %v3221 = vunpack.c.h.b16 %v697
    %v3222 = vunpack.c.l.b16 %v698
    %v3223 = vunpack.c.h.b16 %v698
    %v3224 = vunpack.c.l.b16 %v699
    %v3225 = vunpack.c.h.b16 %v699
    %v3226 = vunpack.c.l.b16 %v700
    %v3227 = vunpack.c.h.b16 %v700
    %v3228 = vunpack.c.l.b16 %v701
    %v3229 = vunpack.c.h.b16 %v701
    %v3230 = vunpack.c.l.b16 %v702
    %v3231 = vunpack.c.h.b16 %v702
    %v3232 = vunpack.c.l.b16 %v703
    %v3233 = vunpack.c.h.b16 %v703
    %v3234 = vunpack.c.l.b16 %v704
    %v3235 = vunpack.c.h.b16 %v704
    %v3236 = vunpack.c.l.b16 %v705
    %v3237 = vunpack.c.h.b16 %v705
    %v3238 = vunpack.c.l.b16 %v706
    %v3239 = vunpack.c.h.b16 %v706
    %v3240 = vunpack.c.l.b16 %v707
    %v3241 = vunpack.c.h.b16 %v707
    %v3242 = vunpack.c.l.b16 %v708
    %v3243 = vunpack.c.h.b16 %v708
    %v3244 = vunpack.c.l.b16 %v709
    %v3245 = vunpack.c.h.b16 %v709
    %v3246 = vunpack.c.l.b16 %v710
    %v3247 = vunpack.c.h.b16 %v710
    %v3248 = vunpack.c.l.b16 %v711
    %v3249 = vunpack.c.h.b16 %v711
    %v3250 = vunpack.c.l.b16 %v712
    %v3251 = vunpack.c.h.b16 %v712
    %v3252 = vunpack.c.l.b16 %v713
    %v3253 = vunpack.c.h.b16 %v713
    %v3254 = vunpack.c.l.b16 %v714
    %v3255 = vunpack.c.h.b16 %v714
    %v3256 = vunpack.c.l.b16 %v715
    %v3257 = vunpack.c.h.b16 %v715
    %v3258 = vunpack.c.l.b16 %v716
    %v3259 = vunpack.c.h.b16 %v716
    %v3260 = vunpack.c.l.b16 %v717
    %v3261 = vunpack.c.h.b16 %v717
    %v3262 = vunpack.c.l.b16 %v718
    %v3263 = vunpack.c.h.b16 %v718
    %v3264 = vunpack.c.l.b16 %v719
    %v3265 = vunpack.c.h.b16 %v719
    %v3266 = vunpack.c.l.b16 %v720
    %v3267 = vunpack.c.h.b16 %v720
    %v3268 = vunpack.c.l.b16 %v721
    %v3269 = vunpack.c.h.b16 %v721
    %v3270 = vunpack.c.l.b16 %v722
    %v3271 = vunpack.c.h.b16 %v722
    %v3272 = vunpack.c.l.b16 %v723
    %v3273 = vunpack.c.h.b16 %v723
    %v3274 = vunpack.c.l.b16 %v724
    %v3275 = vunpack.c.h.b16 %v724
    %v3276 = vunpack.c.l.b16 %v725
    %v3277 = vunpack.c.h.b16 %v725
    %v3278 = vunpack.c.l.b16 %v726
    %v3279 = vunpack.c.h.b16 %v726
    %v3280 = vunpack.c.l.b16 %v727
    %v3281 = vunpack.c.h.b16 %v727
    %v3282 = vunpack.c.l.b16 %v728
    %v3283 = vunpack.c.h.b16 %v728
    %v3284 = vunpack.c.l.b16 %v729
    %v3285 = vunpack.c.h.b16 %v729
    %v3286 = vunpack.c.l.b16 %v730
    %v3287 = vunpack.c.h.b16 %v730
    %v3288 = vunpack.c.l.b16 %v731
    %v3289 = vunpack.c.h.b16 %v731
    %v3290 = vunpack.c.l.b16 %v732
    %v3291 = vunpack.c.h.b16 %v732
    %v3292 = vunpack.c.l.b16 %v733
    %v3293 = vunpack.c.h.b16 %v733
    %v3294 = vunpack.c.l.b16 %v734
    %v3295 = vunpack.c.h.b16 %v734
    %v3296 = vunpack.c.l.b16 %v735
    %v3297 = vunpack.c.h.b16 %v735
    %v3298 = vunpack.c.l.b16 %v736
    %v3299 = vunpack.c.h.b16 %v736
    %v3300 = vunpack.c.l.b16 %v737
    %v3301 = vunpack.c.h.b16 %v737
    %v3302 = vunpack.c.l.b16 %v738
    %v3303 = vunpack.c.h.b16 %v738
    %v3304 = vunpack.c.l.b16 %v739
    %v3305 = vunpack.c.h.b16 %v739
    %v3306 = vunpack.c.l.b16 %v740
    %v3307 = vunpack.c.h.b16 %v740
    %v3308 = vunpack.c.l.b16 %v741
    %v3309 = vunpack.c.h.b16 %v741
    %v3310 = vunpack.c.l.b16 %v742
    %v3311 = vunpack.c.h.b16 %v742
    %v3312 = vunpack.c.l.b16 %v743
    %v3313 = vunpack.c.h.b16 %v743
    %v3314 = vunpack.c.l.b16 %v744
    %v3315 = vunpack.c.h.b16 %v744
    %v3316 = vunpack.c.l.b16 %v745
    %v3317 = vunpack.c.h.b16 %v745
    %v3318 = vunpack.c.l.b16 %v746
    %v3319 = vunpack.c.h.b16 %v746
    %v3320 = vunpack.c.l.b16 %v747
    %v3321 = vunpack.c.h.b16 %v747
    %v3322 = vunpack.c.l.b16 %v748
    %v3323 = vunpack.c.h.b16 %v748
    %v3324 = vunpack.c.l.b16 %v749
    %v3325 = vunpack.c.h.b16 %v749
    %v3326 = vunpack.c.l.b16 %v750
    %v3327 = vunpack.c.h.b16 %v750
    %v3328 = vunpack.c.l.b16 %v751
    %v3329 = vunpack.c.h.b16 %v751
    %v3330 = vunpack.c.l.b16 %v752
    %v3331 = vunpack.c.h.b16 %v752
    %v3332 = vunpack.c.l.b16 %v753
    %v3333 = vunpack.c.h.b16 %v753
    %v3334 = vunpack.c.l.b16 %v754
    %v3335 = vunpack.c.h.b16 %v754
    %v3336 = vunpack.c.l.b16 %v755
    %v3337 = vunpack.c.h.b16 %v755
    %v3338 = vunpack.c.l.b16 %v756
    %v3339 = vunpack.c.h.b16 %v756
    %v3340 = vunpack.c.l.b16 %v757
    %v3341 = vunpack.c.h.b16 %v757
    %v3342 = vunpack.c.l.b16 %v758
    %v3343 = vunpack.c.h.b16 %v758
    %v3344 = vunpack.c.l.b16 %v759
    %v3345 = vunpack.c.h.b16 %v759
    %v3346 = vunpack.c.l.b16 %v760
    %v3347 = vunpack.c.h.b16 %v760
    %v3348 = vunpack.c.l.b16 %v761
    %v3349 = vunpack.c.h.b16 %v761
    %v3350 = vunpack.c.l.b16 %v762
    %v3351 = vunpack.c.h.b16 %v762
    %v3352 = vunpack.c.l.b16 %v763
    %v3353 = vunpack.c.h.b16 %v763
    %v3354 = vunpack.c.l.b16 %v764
    %v3355 = vunpack.c.h.b16 %v764
    %v3356 = vunpack.c.l.b16 %v765
    %v3357 = vunpack.c.h.b16 %v765
    %v3358 = vunpack.c.l.b16 %v766
    %v3359 = vunpack.c.h.b16 %v766
    %v3360 = vunpack.c.l.b16 %v767
    %v3361 = vunpack.c.h.b16 %v767
    %v3362 = vunpack.c.l.b16 %v768
    %v3363 = vunpack.c.h.b16 %v768
    %v3364 = vunpack.c.l.b16 %v769
    %v3365 = vunpack.c.h.b16 %v769
    %v3366 = vunpack.c.l.b16 %v770
    %v3367 = vunpack.c.h.b16 %v770
    %v3368 = vunpack.c.l.b16 %v771
    %v3369 = vunpack.c.h.b16 %v771
    %v3370 = vunpack.c.l.b16 %v772
    %v3371 = vunpack.c.h.b16 %v772
    %v3372 = vunpack.c.l.b16 %v773
    %v3373 = vunpack.c.h.b16 %v773
    %v3374 = vunpack.c.l.b16 %v774
    %v3375 = vunpack.c.h.b16 %v774
    %v3376 = vunpack.c.l.b16 %v775
    %v3377 = vunpack.c.h.b16 %v775
    %v3378 = vunpack.c.l.b16 %v776
    %v3379 = vunpack.c.h.b16 %v776
    %v3380 = vunpack.c.l.b16 %v777
    %v3381 = vunpack.c.h.b16 %v777
    %v3382 = vunpack.c.l.b16 %v778
    %v3383 = vunpack.c.h.b16 %v778
    %v3384 = vunpack.c.l.b16 %v779
    %v3385 = vunpack.c.h.b16 %v779
    %v3386 = vunpack.c.l.b16 %v780
    %v3387 = vunpack.c.h.b16 %v780
    %v3388 = vunpack.c.l.b16 %v781
    %v3389 = vunpack.c.h.b16 %v781
    %v3390 = vunpack.c.l.b16 %v782
    %v3391 = vunpack.c.h.b16 %v782
    %v3392 = vunpack.c.l.b16 %v783
    %v3393 = vunpack.c.h.b16 %v783
    %v3394 = vunpack.c.l.b16 %v784
    %v3395 = vunpack.c.h.b16 %v784
    %v3396 = vunpack.c.l.b16 %v785
    %v3397 = vunpack.c.h.b16 %v785
    %v3398 = vunpack.c.l.b16 %v786
    %v3399 = vunpack.c.h.b16 %v786
    %v3400 = vunpack.c.l.b16 %v787
    %v3401 = vunpack.c.h.b16 %v787
    %v3402 = vunpack.c.l.b16 %v788
    %v3403 = vunpack.c.h.b16 %v788
    %v3404 = vunpack.c.l.b16 %v789
    %v3405 = vunpack.c.h.b16 %v789
    %v3406 = vunpack.c.l.b16 %v790
    %v3407 = vunpack.c.h.b16 %v790
    %v3408 = vunpack.c.l.b16 %v791
    %v3409 = vunpack.c.h.b16 %v791
    %v3410 = vunpack.c.l.b16 %v792
    %v3411 = vunpack.c.h.b16 %v792
    %v3412 = vunpack.c.l.b16 %v793
    %v3413 = vunpack.c.h.b16 %v793
    %v3414 = vunpack.c.l.b16 %v794
    %v3415 = vunpack.c.h.b16 %v794
    %v3416 = vunpack.c.l.b16 %v795
    %v3417 = vunpack.c.h.b16 %v795
    %v3418 = vunpack.c.l.b16 %v796
    %v3419 = vunpack.c.h.b16 %v796
    %v3420 = vunpack.c.l.b16 %v797
    %v3421 = vunpack.c.h.b16 %v797
    %v3422 = vunpack.c.l.b16 %v798
    %v3423 = vunpack.c.h.b16 %v798
    %v3424 = vunpack.c.l.b16 %v799
    %v3425 = vunpack.c.h.b16 %v799
    %v3426 = vunpack.c.l.b16 %v800
    %v3427 = vunpack.c.h.b16 %v800
    %v3428 = vunpack.c.l.b16 %v801
    %v3429 = vunpack.c.h.b16 %v801
    %v3430 = vunpack.c.l.b16 %v802
    %v3431 = vunpack.c.h.b16 %v802
    %v3432 = vunpack.c.l.b16 %v803
    %v3433 = vunpack.c.h.b16 %v803
    %v3434 = vunpack.c.l.b16 %v804
    %v3435 = vunpack.c.h.b16 %v804
    %v3436 = vunpack.c.l.b16 %v805
    %v3437 = vunpack.c.h.b16 %v805
    %v3438 = vunpack.c.l.b16 %v806
    %v3439 = vunpack.c.h.b16 %v806
    %v3440 = vunpack.c.l.b16 %v807
    %v3441 = vunpack.c.h.b16 %v807
    %v3442 = vunpack.c.l.b16 %v808
    %v3443 = vunpack.c.h.b16 %v808
    %v3444 = vunpack.c.l.b16 %v809
    %v3445 = vunpack.c.h.b16 %v809
    %v3446 = vunpack.c.l.b16 %v810
    %v3447 = vunpack.c.h.b16 %v810
    %v3448 = vunpack.c.l.b16 %v811
    %v3449 = vunpack.c.h.b16 %v811
    %v3450 = vunpack.c.l.b16 %v812
    %v3451 = vunpack.c.h.b16 %v812
    %v3452 = vunpack.c.l.b16 %v813
    %v3453 = vunpack.c.h.b16 %v813
    %v3454 = vunpack.c.l.b16 %v814
    %v3455 = vunpack.c.h.b16 %v814
    %v3456 = vunpack.c.l.b16 %v815
    %v3457 = vunpack.c.h.b16 %v815
    %v3458 = vunpack.c.l.b16 %v816
    %v3459 = vunpack.c.h.b16 %v816
    %v3460 = vunpack.c.l.b16 %v817
    %v3461 = vunpack.c.h.b16 %v817
    %v3462 = vunpack.c.l.b16 %v818
    %v3463 = vunpack.c.h.b16 %v818
    %v3464 = vunpack.c.l.b16 %v819
    %v3465 = vunpack.c.h.b16 %v819
    %v3466 = vunpack.c.l.b16 %v820
    %v3467 = vunpack.c.h.b16 %v820
    %v3468 = vunpack.c.l.b16 %v821
    %v3469 = vunpack.c.h.b16 %v821
    %v3470 = vunpack.c.l.b16 %v822
    %v3471 = vunpack.c.h.b16 %v822
    %v3472 = vunpack.c.l.b16 %v823
    %v3473 = vunpack.c.h.b16 %v823
    %v3474 = vunpack.c.l.b16 %v824
    %v3475 = vunpack.c.h.b16 %v824
    %v3476 = vunpack.c.l.b16 %v825
    %v3477 = vunpack.c.h.b16 %v825
    %v3478 = vunpack.c.l.b16 %v826
    %v3479 = vunpack.c.h.b16 %v826
    %v3480 = vunpack.c.l.b16 %v827
    %v3481 = vunpack.c.h.b16 %v827
    %v3482 = vunpack.c.l.b16 %v828
    %v3483 = vunpack.c.h.b16 %v828
    %v3484 = vunpack.c.l.b16 %v829
    %v3485 = vunpack.c.h.b16 %v829
    %v3486 = vunpack.c.l.b16 %v830
    %v3487 = vunpack.c.h.b16 %v830
    %v3488 = vunpack.c.l.b16 %v831
    %v3489 = vunpack.c.h.b16 %v831
    %v3490 = vunpack.c.l.b16 %v832
    %v3491 = vunpack.c.h.b16 %v832
    %v3492 = vunpack.c.l.b16 %v833
    %v3493 = vunpack.c.h.b16 %v833
    %v3494 = vunpack.c.l.b16 %v834
    %v3495 = vunpack.c.h.b16 %v834
    %v3496 = vunpack.c.l.b16 %v835
    %v3497 = vunpack.c.h.b16 %v835
    %v3498 = vunpack.c.l.b16 %v836
    %v3499 = vunpack.c.h.b16 %v836
    %v3500 = vunpack.c.l.b16 %v837
    %v3501 = vunpack.c.h.b16 %v837
    %v3502 = vunpack.c.l.b16 %v838
    %v3503 = vunpack.c.h.b16 %v838
    %v3504 = vunpack.c.l.b16 %v839
    %v3505 = vunpack.c.h.b16 %v839
    %v3506 = vunpack.c.l.b16 %v840
    %v3507 = vunpack.c.h.b16 %v840
    %v3508 = vunpack.c.l.b16 %v841
    %v3509 = vunpack.c.h.b16 %v841
    %v3510 = vunpack.c.l.b16 %v842
    %v3511 = vunpack.c.h.b16 %v842
    %v3512 = vunpack.c.l.b16 %v843
    %v3513 = vunpack.c.h.b16 %v843
    %v3514 = vunpack.c.l.b16 %v844
    %v3515 = vunpack.c.h.b16 %v844
    %v3516 = vunpack.c.l.b16 %v845
    %v3517 = vunpack.c.h.b16 %v845
    %v3518 = vunpack.c.l.b16 %v846
    %v3519 = vunpack.c.h.b16 %v846
    %v3520 = vunpack.c.l.b16 %v847
    %v3521 = vunpack.c.h.b16 %v847
    %v3522 = vunpack.c.l.b16 %v848
    %v3523 = vunpack.c.h.b16 %v848
    %v3524 = vunpack.c.l.b16 %v849
    %v3525 = vunpack.c.h.b16 %v849
    %v3526 = vunpack.c.l.b16 %v850
    %v3527 = vunpack.c.h.b16 %v850
    %v3528 = vunpack.c.l.b16 %v851
    %v3529 = vunpack.c.h.b16 %v851
    %v3530 = vunpack.c.l.b16 %v852
    %v3531 = vunpack.c.h.b16 %v852
    %v3532 = vunpack.c.l.b16 %v853
    %v3533 = vunpack.c.h.b16 %v853
    %v3534 = vunpack.c.l.b16 %v854
    %v3535 = vunpack.c.h.b16 %v854
    %v3536 = vunpack.c.l.b16 %v855
    %v3537 = vunpack.c.h.b16 %v855
    %v3538 = vunpack.c.l.b16 %v856
    %v3539 = vunpack.c.h.b16 %v856
    %v3540 = vunpack.c.l.b16 %v857
    %v3541 = vunpack.c.h.b16 %v857
    %v3542 = vunpack.c.l.b16 %v858
    %v3543 = vunpack.c.h.b16 %v858
    %v3544 = vunpack.c.l.b16 %v859
    %v3545 = vunpack.c.h.b16 %v859
    %v3546 = vunpack.c.l.b16 %v860
    %v3547 = vunpack.c.h.b16 %v860
    %v3548 = vunpack.c.l.b16 %v861
    %v3549 = vunpack.c.h.b16 %v861
    %v3550 = vunpack.c.l.b16 %v862
    %v3551 = vunpack.c.h.b16 %v862
    %v3552 = vunpack.c.l.b16 %v863
    %v3553 = vunpack.c.h.b16 %v863
    %v3554 = vunpack.c.l.b16 %v864
    %v3555 = vunpack.c.h.b16 %v864
    %v3556 = vunpack.c.l.b16 %v865
    %v3557 = vunpack.c.h.b16 %v865
    %v3558 = vunpack.c.l.b16 %v866
    %v3559 = vunpack.c.h.b16 %v866
    %v3560 = vunpack.c.l.b16 %v867
    %v3561 = vunpack.c.h.b16 %v867
    %v3562 = vunpack.c.l.b16 %v868
    %v3563 = vunpack.c.h.b16 %v868
    %v3564 = vunpack.c.l.b16 %v869
    %v3565 = vunpack.c.h.b16 %v869
    %v3566 = vunpack.c.l.b16 %v870
    %v3567 = vunpack.c.h.b16 %v870
    %v3568 = vunpack.c.l.b16 %v871
    %v3569 = vunpack.c.h.b16 %v871
    %v3570 = vunpack.c.l.b16 %v872
    %v3571 = vunpack.c.h.b16 %v872
    %v3572 = vunpack.c.l.b16 %v873
    %v3573 = vunpack.c.h.b16 %v873
    %v3574 = vunpack.c.l.b16 %v874
    %v3575 = vunpack.c.h.b16 %v874
    %v3576 = vunpack.c.l.b16 %v875
    %v3577 = vunpack.c.h.b16 %v875
    %v3578 = vunpack.c.l.b16 %v876
    %v3579 = vunpack.c.h.b16 %v876
    %v3580 = vunpack.c.l.b16 %v877
    %v3581 = vunpack.c.h.b16 %v877
    %v3582 = vunpack.c.l.b16 %v878
    %v3583 = vunpack.c.h.b16 %v878
    %v3584 = vunpack.c.l.b16 %v879
    %v3585 = vunpack.c.h.b16 %v879
    %v3586 = vunpack.c.l.b16 %v880
    %v3587 = vunpack.c.h.b16 %v880
    %v3588 = vunpack.c.l.b16 %v881
    %v3589 = vunpack.c.h.b16 %v881
    %v3590 = vunpack.c.l.b16 %v882
    %v3591 = vunpack.c.h.b16 %v882
    %v3592 = vunpack.c.l.b16 %v883
    %v3593 = vunpack.c.h.b16 %v883
    %v3594 = vunpack.c.l.b16 %v884
    %v3595 = vunpack.c.h.b16 %v884
    %v3596 = vunpack.c.l.b16 %v885
    %v3597 = vunpack.c.h.b16 %v885
    %v3598 = vunpack.c.l.b16 %v886
    %v3599 = vunpack.c.h.b16 %v886
    %v3600 = vunpack.c.l.b16 %v887
    %v3601 = vunpack.c.h.b16 %v887
    %v3602 = vunpack.c.l.b16 %v888
    %v3603 = vunpack.c.h.b16 %v888
    %v3604 = vunpack.c.l.b16 %v889
    %v3605 = vunpack.c.h.b16 %v889
    %v3606 = vunpack.c.l.b16 %v890
    %v3607 = vunpack.c.h.b16 %v890
    %v3608 = vunpack.c.l.b16 %v891
    %v3609 = vunpack.c.h.b16 %v891
    %v3610 = vunpack.c.l.b16 %v892
    %v3611 = vunpack.c.h.b16 %v892
    %v3612 = vunpack.c.l.b16 %v893
    %v3613 = vunpack.c.h.b16 %v893
    %v3614 = vunpack.c.l.b16 %v894
    %v3615 = vunpack.c.h.b16 %v894
    %v3616 = vunpack.c.l.b16 %v895
    %v3617 = vunpack.c.h.b16 %v895
    %v3618 = vunpack.c.l.b16 %v896
    %v3619 = vunpack.c.h.b16 %v896
    %v3620 = vunpack.c.l.b16 %v897
    %v3621 = vunpack.c.h.b16 %v897
    %v3622 = vunpack.c.l.b16 %v898
    %v3623 = vunpack.c.h.b16 %v898
    %v3624 = vunpack.c.l.b16 %v899
    %v3625 = vunpack.c.h.b16 %v899
    %v3626 = vunpack.c.l.b16 %v900
    %v3627 = vunpack.c.h.b16 %v900
    %v3628 = vunpack.c.l.b16 %v901
    %v3629 = vunpack.c.h.b16 %v901
    %v3630 = vunpack.c.l.b16 %v902
    %v3631 = vunpack.c.h.b16 %v902
    %v3632 = vunpack.c.l.b16 %v903
    %v3633 = vunpack.c.h.b16 %v903
    %v3634 = vunpack.c.l.b16 %v904
    %v3635 = vunpack.c.h.b16 %v904
    %v3636 = vunpack.c.l.b16 %v905
    %v3637 = vunpack.c.h.b16 %v905
    %v3638 = vunpack.c.l.b16 %v906
    %v3639 = vunpack.c.h.b16 %v906
    %v3640 = vunpack.c.l.b16 %v907
    %v3641 = vunpack.c.h.b16 %v907
    %v3642 = vunpack.c.l.b16 %v908
    %v3643 = vunpack.c.h.b16 %v908
    %v3644 = vunpack.c.l.b16 %v909
    %v3645 = vunpack.c.h.b16 %v909
    %v3646 = vunpack.c.l.b16 %v910
    %v3647 = vunpack.c.h.b16 %v910
    %v3648 = vunpack.c.l.b16 %v911
    %v3649 = vunpack.c.h.b16 %v911
    %v3650 = vunpack.c.l.b16 %v912
    %v3651 = vunpack.c.h.b16 %v912
    %v3652 = vunpack.c.l.b16 %v913
    %v3653 = vunpack.c.h.b16 %v913
    %v3654 = vunpack.c.l.b16 %v914
    %v3655 = vunpack.c.h.b16 %v914
    %v3656 = vunpack.c.l.b16 %v915
    %v3657 = vunpack.c.h.b16 %v915
    %v3658 = vunpack.c.l.b16 %v916
    %v3659 = vunpack.c.h.b16 %v916
    %v3660 = vunpack.c.l.b16 %v917
    %v3661 = vunpack.c.h.b16 %v917
    %v3662 = vunpack.c.l.b16 %v918
    %v3663 = vunpack.c.h.b16 %v918
    %v3664 = vunpack.c.l.b16 %v919
    %v3665 = vunpack.c.h.b16 %v919
    %v3666 = vunpack.c.l.b16 %v920
    %v3667 = vunpack.c.h.b16 %v920
    %v3668 = vunpack.c.l.b16 %v921
    %v3669 = vunpack.c.h.b16 %v921
    %v3670 = vunpack.c.l.b16 %v922
    %v3671 = vunpack.c.h.b16 %v922
    %v3672 = vunpack.c.l.b16 %v923
    %v3673 = vunpack.c.h.b16 %v923
    %v3674 = vunpack.c.l.b16 %v924
    %v3675 = vunpack.c.h.b16 %v924
    %v3676 = vunpack.c.l.b16 %v925
    %v3677 = vunpack.c.h.b16 %v925
    %v3678 = vunpack.c.l.b16 %v926
    %v3679 = vunpack.c.h.b16 %v926
    %v3680 = vunpack.c.l.b16 %v927
    %v3681 = vunpack.c.h.b16 %v927
    %v3682 = vunpack.c.l.b16 %v928
    %v3683 = vunpack.c.h.b16 %v928
    %v3684 = vunpack.c.l.b16 %v929
    %v3685 = vunpack.c.h.b16 %v929
    %v3686 = vunpack.c.l.b16 %v930
    %v3687 = vunpack.c.h.b16 %v930
    %v3688 = vunpack.c.l.b16 %v931
    %v3689 = vunpack.c.h.b16 %v931
    %v3690 = vunpack.c.l.b16 %v932
    %v3691 = vunpack.c.h.b16 %v932
    %v3692 = vunpack.c.l.b16 %v933
    %v3693 = vunpack.c.h.b16 %v933
    %v3694 = vunpack.c.l.b16 %v934
    %v3695 = vunpack.c.h.b16 %v934
    %v3696 = vunpack.c.l.b16 %v935
    %v3697 = vunpack.c.h.b16 %v935
    %v3698 = vunpack.c.l.b16 %v936
    %v3699 = vunpack.c.h.b16 %v936
    %v3700 = vunpack.c.l.b16 %v937
    %v3701 = vunpack.c.h.b16 %v937
    %v3702 = vunpack.c.l.b16 %v938
    %v3703 = vunpack.c.h.b16 %v938
    %v3704 = vunpack.c.l.b16 %v939
    %v3705 = vunpack.c.h.b16 %v939
    %v3706 = vunpack.c.l.b16 %v940
    %v3707 = vunpack.c.h.b16 %v940
    %v3708 = vunpack.c.l.b16 %v941
    %v3709 = vunpack.c.h.b16 %v941
    %v3710 = vunpack.c.l.b16 %v942
    %v3711 = vunpack.c.h.b16 %v942
    %v3712 = vunpack.c.l.b16 %v943
    %v3713 = vunpack.c.h.b16 %v943
    %v3714 = vunpack.c.l.b16 %v944
    %v3715 = vunpack.c.h.b16 %v944
    %v3716 = vunpack.c.l.b16 %v945
    %v3717 = vunpack.c.h.b16 %v945
    %v3718 = vunpack.c.l.b16 %v946
    %v3719 = vunpack.c.h.b16 %v946
    %v3720 = vunpack.c.l.b16 %v947
    %v3721 = vunpack.c.h.b16 %v947
    %v3722 = vunpack.c.l.b16 %v948
    %v3723 = vunpack.c.h.b16 %v948
    %v3724 = vunpack.c.l.b16 %v949
    %v3725 = vunpack.c.h.b16 %v949
    %v3726 = vunpack.c.l.b16 %v950
    %v3727 = vunpack.c.h.b16 %v950
    %v3728 = vunpack.c.l.b16 %v951
    %v3729 = vunpack.c.h.b16 %v951
    %v3730 = vunpack.c.l.b16 %v952
    %v3731 = vunpack.c.h.b16 %v952
    %v3732 = vunpack.c.l.b16 %v953
    %v3733 = vunpack.c.h.b16 %v953
    %v3734 = vunpack.c.l.b16 %v954
    %v3735 = vunpack.c.h.b16 %v954
    %v3736 = vunpack.c.l.b16 %v955
    %v3737 = vunpack.c.h.b16 %v955
    %v3738 = vunpack.c.l.b16 %v956
    %v3739 = vunpack.c.h.b16 %v956
    %v3740 = vunpack.c.l.b16 %v957
    %v3741 = vunpack.c.h.b16 %v957
    %v3742 = vunpack.c.l.b16 %v958
    %v3743 = vunpack.c.h.b16 %v958
    %v3744 = vunpack.c.l.b16 %v959
    %v3745 = vunpack.c.h.b16 %v959
    %v3746 = vunpack.c.l.b16 %v960
    %v3747 = vunpack.c.h.b16 %v960
    %v3748 = vunpack.c.l.b16 %v961
    %v3749 = vunpack.c.h.b16 %v961
    %v3750 = vunpack.c.l.b16 %v962
    %v3751 = vunpack.c.h.b16 %v962
    %v3752 = vunpack.c.l.b16 %v963
    %v3753 = vunpack.c.h.b16 %v963
    %v3754 = vunpack.c.l.b16 %v964
    %v3755 = vunpack.c.h.b16 %v964
    %v3756 = vunpack.c.l.b16 %v965
    %v3757 = vunpack.c.h.b16 %v965
    %v3758 = vunpack.c.l.b16 %v966
    %v3759 = vunpack.c.h.b16 %v966
    %v3760 = vunpack.c.l.b16 %v967
    %v3761 = vunpack.c.h.b16 %v967
    %v3762 = vunpack.c.l.b16 %v968
    %v3763 = vunpack.c.h.b16 %v968
    %v3764 = vunpack.c.l.b16 %v969
    %v3765 = vunpack.c.h.b16 %v969
    %v3766 = vunpack.c.l.b16 %v970
    %v3767 = vunpack.c.h.b16 %v970
    %v3768 = vunpack.c.l.b16 %v971
    %v3769 = vunpack.c.h.b16 %v971
    %v3770 = vunpack.c.l.b16 %v972
    %v3771 = vunpack.c.h.b16 %v972
    %v3772 = vunpack.c.l.b16 %v973
    %v3773 = vunpack.c.h.b16 %v973
    %v3774 = vunpack.c.l.b16 %v974
    %v3775 = vunpack.c.h.b16 %v974
    %v3776 = vunpack.c.l.b16 %v975
    %v3777 = vunpack.c.h.b16 %v975
    %v3778 = vunpack.c.l.b16 %v976
    %v3779 = vunpack.c.h.b16 %v976
    %v3780 = vunpack.c.l.b16 %v977
    %v3781 = vunpack.c.h.b16 %v977
    %v3782 = vunpack.c.l.b16 %v978
    %v3783 = vunpack.c.h.b16 %v978
    %v3784 = vunpack.c.l.b16 %v979
    %v3785 = vunpack.c.h.b16 %v979
    %v3786 = vunpack.c.l.b16 %v980
    %v3787 = vunpack.c.h.b16 %v980
    %v3788 = vunpack.c.l.b16 %v981
    %v3789 = vunpack.c.h.b16 %v981
    %v3790 = vunpack.c.l.b16 %v982
    %v3791 = vunpack.c.h.b16 %v982
    %v3792 = vunpack.c.l.b16 %v983
    %v3793 = vunpack.c.h.b16 %v983
    %v3794 = vunpack.c.l.b16 %v984
    %v3795 = vunpack.c.h.b16 %v984
    %v3796 = vunpack.c.l.b16 %v985
    %v3797 = vunpack.c.h.b16 %v985
    %v3798 = vunpack.c.l.b16 %v986
    %v3799 = vunpack.c.h.b16 %v986
    %v3800 = vunpack.c.l.b16 %v987
    %v3801 = vunpack.c.h.b16 %v987
    %v3802 = vunpack.c.l.b16 %v988
    %v3803 = vunpack.c.h.b16 %v988
    %v3804 = vunpack.c.l.b16 %v989
    %v3805 = vunpack.c.h.b16 %v989
    %v3806 = vunpack.c.l.b16 %v990
    %v3807 = vunpack.c.h.b16 %v990
    %v3808 = vunpack.c.l.b16 %v991
    %v3809 = vunpack.c.h.b16 %v991
    %v3810 = vunpack.c.l.b16 %v992
    %v3811 = vunpack.c.h.b16 %v992
    %v3812 = vunpack.c.l.b16 %v993
    %v3813 = vunpack.c.h.b16 %v993
    %v3814 = vunpack.c.l.b16 %v994
    %v3815 = vunpack.c.h.b16 %v994
    %v3816 = vunpack.c.l.b16 %v995
    %v3817 = vunpack.c.h.b16 %v995
    %v3818 = vunpack.c.l.b16 %v996
    %v3819 = vunpack.c.h.b16 %v996
    %v3820 = vunpack.c.l.b16 %v997
    %v3821 = vunpack.c.h.b16 %v997
    %v3822 = vunpack.c.l.b16 %v998
    %v3823 = vunpack.c.h.b16 %v998
    %v3824 = vunpack.c.l.b16 %v999
    %v3825 = vunpack.c.h.b16 %v999
    %v3826 = vunpack.c.l.b16 %v1000
    %v3827 = vunpack.c.h.b16 %v1000
    %v3828 = vunpack.c.l.b16 %v1001
    %v3829 = vunpack.c.h.b16 %v1001
    %v3830 = vunpack.c.l.b16 %v1002
    %v3831 = vunpack.c.h.b16 %v1002
    %v3832 = vunpack.c.l.b16 %v1003
    %v3833 = vunpack.c.h.b16 %v1003
    %v3834 = vunpack.c.l.b16 %v1004
    %v3835 = vunpack.c.h.b16 %v1004
    %v3836 = vunpack.c.l.b16 %v1005
    %v3837 = vunpack.c.h.b16 %v1005
    %v3838 = vunpack.c.l.b16 %v1006
    %v3839 = vunpack.c.h.b16 %v1006
    %v3840 = vunpack.c.l.b16 %v1007
    %v3841 = vunpack.c.h.b16 %v1007
    %v3842 = vunpack.c.l.b16 %v1008
    %v3843 = vunpack.c.h.b16 %v1008
    %v3844 = vunpack.c.l.b16 %v1009
    %v3845 = vunpack.c.h.b16 %v1009
    %v3846 = vunpack.c.l.b16 %v1010
    %v3847 = vunpack.c.h.b16 %v1010
    %v3848 = vunpack.c.l.b16 %v1011
    %v3849 = vunpack.c.h.b16 %v1011
    %v3850 = vunpack.c.l.b16 %v1012
    %v3851 = vunpack.c.h.b16 %v1012
    %v3852 = vunpack.c.l.b16 %v1013
    %v3853 = vunpack.c.h.b16 %v1013
    %v3854 = vunpack.c.l.b16 %v1014
    %v3855 = vunpack.c.h.b16 %v1014
    %v3856 = vunpack.c.l.b16 %v1015
    %v3857 = vunpack.c.h.b16 %v1015
    %v3858 = vunpack.c.l.b16 %v1016
    %v3859 = vunpack.c.h.b16 %v1016
    %v3860 = vunpack.c.l.b16 %v1017
    %v3861 = vunpack.c.h.b16 %v1017
    %v3862 = vunpack.c.l.b16 %v1018
    %v3863 = vunpack.c.h.b16 %v1018
    %v3864 = vunpack.c.l.b16 %v1019
    %v3865 = vunpack.c.h.b16 %v1019
    %v3866 = vunpack.c.l.b16 %v1020
    %v3867 = vunpack.c.h.b16 %v1020
    %v3868 = vunpack.c.l.b16 %v1021
    %v3869 = vunpack.c.h.b16 %v1021
    %v3870 = vunpack.c.l.b16 %v1022
    %v3871 = vunpack.c.h.b16 %v1022
    %v3872 = vunpack.c.l.b16 %v1023
    %v3873 = vunpack.c.h.b16 %v1023
    %v3874 = vunpack.c.l.b16 %v1024
    %v3875 = vunpack.c.h.b16 %v1024
    %v3876 = vunpack.c.l.b16 %v1025
    %v3877 = vunpack.c.h.b16 %v1025
    %v3878 = vunpack.c.l.b16 %v1026
    %v3879 = vunpack.c.h.b16 %v1026
    %v3880 = vunpack.c.l.b16 %v1027
    %v3881 = vunpack.c.h.b16 %v1027
    %v3882 = vunpack.c.l.b16 %v1028
    %v3883 = vunpack.c.h.b16 %v1028
    %v3884 = vunpack.c.l.b16 %v1029
    %v3885 = vunpack.c.h.b16 %v1029
    %v3886 = vunpack.c.l.b16 %v1030
    %v3887 = vunpack.c.h.b16 %v1030
    %v3888 = vunpack.c.l.b16 %v1031
    %v3889 = vunpack.c.h.b16 %v1031
    %v3890 = vunpack.c.l.b16 %v1032
    %v3891 = vunpack.c.h.b16 %v1032
    %v3892 = vunpack.c.l.b16 %v1033
    %v3893 = vunpack.c.h.b16 %v1033
    %v3894 = vunpack.c.l.b16 %v1034
    %v3895 = vunpack.c.h.b16 %v1034
    %v3896 = vunpack.c.l.b16 %v1035
    %v3897 = vunpack.c.h.b16 %v1035
    %v3898 = vunpack.c.l.b16 %v1036
    %v3899 = vunpack.c.h.b16 %v1036
    %v3900 = vunpack.c.l.b16 %v1037
    %v3901 = vunpack.c.h.b16 %v1037
    %v3902 = vunpack.c.l.b16 %v1038
    %v3903 = vunpack.c.h.b16 %v1038
    %v3904 = vunpack.c.l.b16 %v1039
    %v3905 = vunpack.c.h.b16 %v1039
    %v3906 = vunpack.c.l.b16 %v1040
    %v3907 = vunpack.c.h.b16 %v1040
    %v3908 = vunpack.c.l.b16 %v1041
    %v3909 = vunpack.c.h.b16 %v1041
    %v3910 = vunpack.c.l.b16 %v1042
    %v3911 = vunpack.c.h.b16 %v1042
    %v3912 = vunpack.c.l.b16 %v1043
    %v3913 = vunpack.c.h.b16 %v1043
    %v3914 = vunpack.c.l.b16 %v1044
    %v3915 = vunpack.c.h.b16 %v1044
    %v3916 = vunpack.c.l.b16 %v1045
    %v3917 = vunpack.c.h.b16 %v1045
    %v3918 = vunpack.c.l.b16 %v1046
    %v3919 = vunpack.c.h.b16 %v1046
    %v3920 = vunpack.c.l.b16 %v1047
    %v3921 = vunpack.c.h.b16 %v1047
    %v3922 = vunpack.c.l.b16 %v1048
    %v3923 = vunpack.c.h.b16 %v1048
    %v3924 = vunpack.c.l.b16 %v1049
    %v3925 = vunpack.c.h.b16 %v1049
    %v3926 = vunpack.c.l.b16 %v1050
    %v3927 = vunpack.c.h.b16 %v1050
    %v3928 = vunpack.c.l.b16 %v1051
    %v3929 = vunpack.c.h.b16 %v1051
    %v3930 = vunpack.c.l.b16 %v1052
    %v3931 = vunpack.c.h.b16 %v1052
    %v3932 = vunpack.c.l.b16 %v1053
    %v3933 = vunpack.c.h.b16 %v1053
    %v3934 = vunpack.c.l.b16 %v1054
    %v3935 = vunpack.c.h.b16 %v1054
    %v3936 = vunpack.c.l.b16 %v1055
    %v3937 = vunpack.c.h.b16 %v1055
    %v3938 = vunpack.c.l.b16 %v1056
    %v3939 = vunpack.c.h.b16 %v1056
    %v3940 = vunpack.c.l.b16 %v1057
    %v3941 = vunpack.c.h.b16 %v1057
    %v3942 = vunpack.c.l.b16 %v1058
    %v3943 = vunpack.c.h.b16 %v1058
    %v3944 = vunpack.c.l.b16 %v1059
    %v3945 = vunpack.c.h.b16 %v1059
    %v3946 = vunpack.c.l.b16 %v1060
    %v3947 = vunpack.c.h.b16 %v1060
    %v3948 = vunpack.c.l.b16 %v1061
    %v3949 = vunpack.c.h.b16 %v1061
    %v3950 = vunpack.c.l.b16 %v1062
    %v3951 = vunpack.c.h.b16 %v1062
    %v3952 = vunpack.c.l.b16 %v1063
    %v3953 = vunpack.c.h.b16 %v1063
    %v3954 = vunpack.c.l.b16 %v1064
    %v3955 = vunpack.c.h.b16 %v1064
    %v3956 = vunpack.c.l.b16 %v1065
    %v3957 = vunpack.c.h.b16 %v1065
    %v3958 = vunpack.c.l.b16 %v1066
    %v3959 = vunpack.c.h.b16 %v1066
    %v3960 = vunpack.c.l.b16 %v1067
    %v3961 = vunpack.c.h.b16 %v1067
    %v3962 = vunpack.c.l.b16 %v1068
    %v3963 = vunpack.c.h.b16 %v1068
    %v3964 = vunpack.c.l.b16 %v1069
    %v3965 = vunpack.c.h.b16 %v1069
    %v3966 = vunpack.c.l.b16 %v1070
    %v3967 = vunpack.c.h.b16 %v1070
    %v3968 = vunpack.c.l.b16 %v1071
    %v3969 = vunpack.c.h.b16 %v1071
    %v3970 = vunpack.c.l.b16 %v1072
    %v3971 = vunpack.c.h.b16 %v1072
    %v3972 = vunpack.c.l.b16 %v1073
    %v3973 = vunpack.c.h.b16 %v1073
    %v3974 = vunpack.c.l.b16 %v1074
    %v3975 = vunpack.c.h.b16 %v1074
    %v3976 = vunpack.c.l.b16 %v1075
    %v3977 = vunpack.c.h.b16 %v1075
    %v3978 = vunpack.c.l.b16 %v1076
    %v3979 = vunpack.c.h.b16 %v1076
    %v3980 = vunpack.c.l.b16 %v1077
    %v3981 = vunpack.c.h.b16 %v1077
    %v3982 = vunpack.c.l.b16 %v1078
    %v3983 = vunpack.c.h.b16 %v1078
    %v3984 = vunpack.c.l.b16 %v1079
    %v3985 = vunpack.c.h.b16 %v1079
    %v3986 = vunpack.c.l.b16 %v1080
    %v3987 = vunpack.c.h.b16 %v1080
    %v3988 = vunpack.c.l.b16 %v1081
    %v3989 = vunpack.c.h.b16 %v1081
    %v3990 = vunpack.c.l.b16 %v1082
    %v3991 = vunpack.c.h.b16 %v1082
    %v3992 = vunpack.c.l.b16 %v1083
    %v3993 = vunpack.c.h.b16 %v1083
    %v3994 = vunpack.c.l.b16 %v1084
    %v3995 = vunpack.c.h.b16 %v1084
    %v3996 = vunpack.c.l.b16 %v1085
    %v3997 = vunpack.c.h.b16 %v1085
    %v3998 = vunpack.c.l.b16 %v1086
    %v3999 = vunpack.c.h.b16 %v1086
    %v4000 = vunpack.c.l.b16 %v1087
    %v4001 = vunpack.c.h.b16 %v1087
    %v4002 = vunpack.c.l.b16 %v1088
    %v4003 = vunpack.c.h.b16 %v1088
    %v4004 = vunpack.c.l.b16 %v1089
    %v4005 = vunpack.c.h.b16 %v1089
    %v4006 = vunpack.c.l.b16 %v1090
    %v4007 = vunpack.c.h.b16 %v1090
    %v4008 = vunpack.c.l.b16 %v1091
    %v4009 = vunpack.c.h.b16 %v1091
    %v4010 = vunpack.c.l.b16 %v1092
    %v4011 = vunpack.c.h.b16 %v1092
    %v4012 = vunpack.c.l.b16 %v1093
    %v4013 = vunpack.c.h.b16 %v1093
    %v4014 = vunpack.c.l.b16 %v1094
    %v4015 = vunpack.c.h.b16 %v1094
    %v4016 = vunpack.c.l.b16 %v1095
    %v4017 = vunpack.c.h.b16 %v1095
    %v4018 = vunpack.c.l.b16 %v1096
    %v4019 = vunpack.c.h.b16 %v1096
    %v4020 = vunpack.c.l.b16 %v1097
    %v4021 = vunpack.c.h.b16 %v1097
    %v4022 = vunpack.c.l.b16 %v1098
    %v4023 = vunpack.c.h.b16 %v1098
    %v4024 = vunpack.c.l.b16 %v1099
    %v4025 = vunpack.c.h.b16 %v1099
    %v4026 = vunpack.c.l.b16 %v1100
    %v4027 = vunpack.c.h.b16 %v1100
    %v4028 = vunpack.c.l.b16 %v1101
    %v4029 = vunpack.c.h.b16 %v1101
    %v4030 = vunpack.c.l.b16 %v1102
    %v4031 = vunpack.c.h.b16 %v1102
    %v4032 = vunpack.c.l.b16 %v1103
    %v4033 = vunpack.c.h.b16 %v1103
    %v4034 = vunpack.c.l.b16 %v1104
    %v4035 = vunpack.c.h.b16 %v1104
    %v4036 = vunpack.c.l.b16 %v1105
    %v4037 = vunpack.c.h.b16 %v1105
    %v4038 = vunpack.c.l.b16 %v1106
    %v4039 = vunpack.c.h.b16 %v1106
    %v4040 = vunpack.c.l.b16 %v1107
    %v4041 = vunpack.c.h.b16 %v1107
    %v4042 = vunpack.c.l.b16 %v1108
    %v4043 = vunpack.c.h.b16 %v1108
    %v4044 = vunpack.c.l.b16 %v1109
    %v4045 = vunpack.c.h.b16 %v1109
    %v4046 = vunpack.c.l.b16 %v1110
    %v4047 = vunpack.c.h.b16 %v1110
    %v4048 = vunpack.c.l.b16 %v1111
    %v4049 = vunpack.c.h.b16 %v1111
    %v4050 = vunpack.c.l.b16 %v1112
    %v4051 = vunpack.c.h.b16 %v1112
    %v4052 = vunpack.c.l.b16 %v1113
    %v4053 = vunpack.c.h.b16 %v1113
    %v4054 = vunpack.c.l.b16 %v1114
    %v4055 = vunpack.c.h.b16 %v1114
    %v4056 = vunpack.c.l.b16 %v1115
    %v4057 = vunpack.c.h.b16 %v1115
    %v4058 = vunpack.c.l.b16 %v1116
    %v4059 = vunpack.c.h.b16 %v1116
    %v4060 = vunpack.c.l.b16 %v1117
    %v4061 = vunpack.c.h.b16 %v1117
    %v4062 = vunpack.c.l.b16 %v1118
    %v4063 = vunpack.c.h.b16 %v1118
    %v4064 = vunpack.c.l.b16 %v1119
    %v4065 = vunpack.c.h.b16 %v1119
    %v4066 = vunpack.c.l.b16 %v1120
    %v4067 = vunpack.c.h.b16 %v1120
    %v4068 = vunpack.c.l.b16 %v1121
    %v4069 = vunpack.c.h.b16 %v1121
    %v4070 = vunpack.c.l.b16 %v1122
    %v4071 = vunpack.c.h.b16 %v1122
    %v4072 = vunpack.c.l.b16 %v1123
    %v4073 = vunpack.c.h.b16 %v1123
    %v4074 = vunpack.c.l.b16 %v1124
    %v4075 = vunpack.c.h.b16 %v1124
    %v4076 = vunpack.c.l.b16 %v1125
    %v4077 = vunpack.c.h.b16 %v1125
    %v4078 = vunpack.c.l.b16 %v1126
    %v4079 = vunpack.c.h.b16 %v1126
    %v4080 = vunpack.c.l.b16 %v1127
    %v4081 = vunpack.c.h.b16 %v1127
    %v4082 = vunpack.c.l.b16 %v1128
    %v4083 = vunpack.c.h.b16 %v1128
    %v4084 = vunpack.c.l.b16 %v1129
    %v4085 = vunpack.c.h.b16 %v1129
    %v4086 = vunpack.c.l.b16 %v1130
    %v4087 = vunpack.c.h.b16 %v1130
    %v4088 = vunpack.c.l.b16 %v1131
    %v4089 = vunpack.c.h.b16 %v1131
    %v4090 = vunpack.c.l.b16 %v1132
    %v4091 = vunpack.c.h.b16 %v1132
    %v4092 = vunpack.c.l.b16 %v1133
    %v4093 = vunpack.c.h.b16 %v1133
    %v4094 = vunpack.c.l.b16 %v1134
    %v4095 = vunpack.c.h.b16 %v1134
    %v4096 = vunpack.c.l.b16 %v1135
    %v4097 = vunpack.c.h.b16 %v1135
    %v4098 = vunpack.c.l.b16 %v1136
    %v4099 = vunpack.c.h.b16 %v1136
    %v4100 = vunpack.c.l.b16 %v1137
    %v4101 = vunpack.c.h.b16 %v1137
    %v4102 = vunpack.c.l.b16 %v1138
    %v4103 = vunpack.c.h.b16 %v1138
    %v4104 = vunpack.c.l.b16 %v1139
    %v4105 = vunpack.c.h.b16 %v1139
    %v4106 = vunpack.c.l.b16 %v1140
    %v4107 = vunpack.c.h.b16 %v1140
    %v4108 = vunpack.c.l.b16 %v1141
    %v4109 = vunpack.c.h.b16 %v1141
    %v4110 = vunpack.c.l.b16 %v1142
    %v4111 = vunpack.c.h.b16 %v1142
    %v4112 = vunpack.c.l.b16 %v1143
    %v4113 = vunpack.c.h.b16 %v1143
    %v4114 = vunpack.c.l.b16 %v1144
    %v4115 = vunpack.c.h.b16 %v1144
    %v4116 = vunpack.c.l.b16 %v1145
    %v4117 = vunpack.c.h.b16 %v1145
    %v4118 = vunpack.c.l.b16 %v1146
    %v4119 = vunpack.c.h.b16 %v1146
    %v4120 = vunpack.c.l.b16 %v1147
    %v4121 = vunpack.c.h.b16 %v1147
    %v4122 = vunpack.c.l.b16 %v1148
    %v4123 = vunpack.c.h.b16 %v1148
    %v4124 = vunpack.c.l.b16 %v1149
    %v4125 = vunpack.c.h.b16 %v1149
    %v4126 = vunpack.c.l.b16 %v1150
    %v4127 = vunpack.c.h.b16 %v1150
    %v4128 = vunpack.c.l.b16 %v1151
    %v4129 = vunpack.c.h.b16 %v1151
    %v4130 = vunpack.c.l.b16 %v1152
    %v4131 = vunpack.c.h.b16 %v1152
    %v4132 = vunpack.c.l.b16 %v1153
    %v4133 = vunpack.c.h.b16 %v1153
    %v4134 = vunpack.c.l.b16 %v1154
    %v4135 = vunpack.c.h.b16 %v1154
    %v4136 = vunpack.c.l.b16 %v1155
    %v4137 = vunpack.c.h.b16 %v1155
    %v4138 = vunpack.c.l.b16 %v1156
    %v4139 = vunpack.c.h.b16 %v1156
    %v4140 = vunpack.c.l.b16 %v1157
    %v4141 = vunpack.c.h.b16 %v1157
    %v4142 = vunpack.c.l.b16 %v1158
    %v4143 = vunpack.c.h.b16 %v1158
    %v4144 = vunpack.c.l.b16 %v1159
    %v4145 = vunpack.c.h.b16 %v1159
    %v4146 = vunpack.c.l.b16 %v1160
    %v4147 = vunpack.c.h.b16 %v1160
    %v4148 = vunpack.c.l.b16 %v1161
    %v4149 = vunpack.c.h.b16 %v1161
    %v4150 = vunpack.c.l.b16 %v1162
    %v4151 = vunpack.c.h.b16 %v1162
    %v4152 = vunpack.c.l.b16 %v1163
    %v4153 = vunpack.c.h.b16 %v1163
    %v4154 = vunpack.c.l.b16 %v1164
    %v4155 = vunpack.c.h.b16 %v1164
    %v4156 = vunpack.c.l.b16 %v1165
    %v4157 = vunpack.c.h.b16 %v1165
    %v4158 = vunpack.c.l.b16 %v1166
    %v4159 = vunpack.c.h.b16 %v1166
    %v4160 = vunpack.c.l.b16 %v1167
    %v4161 = vunpack.c.h.b16 %v1167
    %v4162 = vunpack.c.l.b16 %v1168
    %v4163 = vunpack.c.h.b16 %v1168
    %v4164 = vunpack.c.l.b16 %v1169
    %v4165 = vunpack.c.h.b16 %v1169
    %v4166 = vunpack.c.l.b16 %v1170
    %v4167 = vunpack.c.h.b16 %v1170
    %v4168 = vunpack.c.l.b16 %v1171
    %v4169 = vunpack.c.h.b16 %v1171
    %v4170 = vunpack.c.l.b16 %v1172
    %v4171 = vunpack.c.h.b16 %v1172
    %v4172 = vunpack.c.l.b16 %v1173
    %v4173 = vunpack.c.h.b16 %v1173
    %v4174 = vunpack.c.l.b16 %v1174
    %v4175 = vunpack.c.h.b16 %v1174
    %v4176 = vunpack.c.l.b16 %v1175
    %v4177 = vunpack.c.h.b16 %v1175
    %v4178 = vunpack.c.l.b16 %v1176
    %v4179 = vunpack.c.h.b16 %v1176
    %v4180 = vunpack.c.l.b16 %v1177
    %v4181 = vunpack.c.h.b16 %v1177
    %v4182 = vunpack.c.l.b16 %v1178
    %v4183 = vunpack.c.h.b16 %v1178
    %v4184 = vunpack.c.l.b16 %v1179
    %v4185 = vunpack.c.h.b16 %v1179
    %v4186 = vunpack.c.l.b16 %v1180
    %v4187 = vunpack.c.h.b16 %v1180
    %v4188 = vunpack.c.l.b16 %v1181
    %v4189 = vunpack.c.h.b16 %v1181
    %v4190 = vunpack.c.l.b16 %v1182
    %v4191 = vunpack.c.h.b16 %v1182
    %v4192 = vunpack.c.l.b16 %v1183
    %v4193 = vunpack.c.h.b16 %v1183
    %v4194 = vunpack.c.l.b16 %v1184
    %v4195 = vunpack.c.h.b16 %v1184
    %v4196 = vunpack.c.l.b16 %v1185
    %v4197 = vunpack.c.h.b16 %v1185
    %v4198 = vunpack.c.l.b16 %v1186
    %v4199 = vunpack.c.h.b16 %v1186
    %v4200 = vunpack.c.l.b16 %v1187
    %v4201 = vunpack.c.h.b16 %v1187
    %v4202 = vunpack.c.l.b16 %v1188
    %v4203 = vunpack.c.h.b16 %v1188
    %v4204 = vunpack.c.l.b16 %v1189
    %v4205 = vunpack.c.h.b16 %v1189
    %v4206 = vunpack.c.l.b16 %v1190
    %v4207 = vunpack.c.h.b16 %v1190
    %v4208 = vunpack.c.l.b16 %v1191
    %v4209 = vunpack.c.h.b16 %v1191
    %v4210 = vunpack.c.l.b16 %v1192
    %v4211 = vunpack.c.h.b16 %v1192
    %v4212 = vunpack.c.l.b16 %v1193
    %v4213 = vunpack.c.h.b16 %v1193
    %v4214 = vunpack.c.l.b16 %v1194
    %v4215 = vunpack.c.h.b16 %v1194
    %v4216 = vunpack.c.l.b16 %v1195
    %v4217 = vunpack.c.h.b16 %v1195
    %v4218 = vunpack.c.l.b16 %v1196
    %v4219 = vunpack.c.h.b16 %v1196
    %v4220 = vunpack.c.l.b16 %v1197
    %v4221 = vunpack.c.h.b16 %v1197
    %v4222 = vunpack.c.l.b16 %v1198
    %v4223 = vunpack.c.h.b16 %v1198
    %v4224 = vunpack.c.l.b16 %v1199
    %v4225 = vunpack.c.h.b16 %v1199
    %v4226 = vunpack.c.l.b16 %v1200
    %v4227 = vunpack.c.h.b16 %v1200
    %v4228 = vunpack.c.l.b16 %v1201
    %v4229 = vunpack.c.h.b16 %v1201
    %v4230 = vunpack.c.l.b16 %v1202
    %v4231 = vunpack.c.h.b16 %v1202
    %v4232 = vunpack.c.l.b16 %v1203
    %v4233 = vunpack.c.h.b16 %v1203
    %v4234 = vunpack.c.l.b16 %v1204
    %v4235 = vunpack.c.h.b16 %v1204
    %v4236 = vunpack.c.l.b16 %v1205
    %v4237 = vunpack.c.h.b16 %v1205
    %v4238 = vunpack.c.l.b16 %v1206
    %v4239 = vunpack.c.h.b16 %v1206
    %v4240 = vunpack.c.l.b16 %v1207
    %v4241 = vunpack.c.h.b16 %v1207
    %v4242 = vunpack.c.l.b16 %v1208
    %v4243 = vunpack.c.h.b16 %v1208
    %v4244 = vunpack.c.l.b16 %v1209
    %v4245 = vunpack.c.h.b16 %v1209
    %v4246 = vunpack.c.l.b16 %v1210
    %v4247 = vunpack.c.h.b16 %v1210
    %v4248 = vunpack.c.l.b16 %v1211
    %v4249 = vunpack.c.h.b16 %v1211
    %v4250 = vunpack.c.l.b16 %v1212
    %v4251 = vunpack.c.h.b16 %v1212
    %v4252 = vunpack.c.l.b16 %v1213
    %v4253 = vunpack.c.h.b16 %v1213
    %v4254 = vunpack.c.l.b16 %v1214
    %v4255 = vunpack.c.h.b16 %v1214
    %v4256 = vunpack.c.l.b16 %v1215
    %v4257 = vunpack.c.h.b16 %v1215
    %v4258 = vunpack.c.l.b16 %v1216
    %v4259 = vunpack.c.h.b16 %v1216
    %v4260 = vunpack.c.l.b16 %v1217
    %v4261 = vunpack.c.h.b16 %v1217
    %v4262 = vunpack.c.l.b16 %v1218
    %v4263 = vunpack.c.h.b16 %v1218
    %v4264 = vunpack.c.l.b16 %v1219
    %v4265 = vunpack.c.h.b16 %v1219
    %v4266 = vunpack.c.l.b16 %v1220
    %v4267 = vunpack.c.h.b16 %v1220
    %v4268 = vunpack.c.l.b16 %v1221
    %v4269 = vunpack.c.h.b16 %v1221
    %v4270 = vunpack.c.l.b16 %v1222
    %v4271 = vunpack.c.h.b16 %v1222
    %v4272 = vunpack.c.l.b16 %v1223
    %v4273 = vunpack.c.h.b16 %v1223
    %v4274 = vunpack.c.l.b16 %v1224
    %v4275 = vunpack.c.h.b16 %v1224
    %v4276 = vunpack.c.l.b16 %v1225
    %v4277 = vunpack.c.h.b16 %v1225
    %v4278 = vunpack.c.l.b16 %v1226
    %v4279 = vunpack.c.h.b16 %v1226
    %v4280 = vunpack.c.l.b16 %v1227
    %v4281 = vunpack.c.h.b16 %v1227
    %v4282 = vunpack.c.l.b16 %v1228
    %v4283 = vunpack.c.h.b16 %v1228
    %v4284 = vunpack.c.l.b16 %v1229
    %v4285 = vunpack.c.h.b16 %v1229
    %v4286 = vunpack.c.l.b16 %v1230
    %v4287 = vunpack.c.h.b16 %v1230
    %v4288 = vunpack.c.l.b16 %v1231
    %v4289 = vunpack.c.h.b16 %v1231
    %v4290 = vunpack.c.l.b16 %v1232
    %v4291 = vunpack.c.h.b16 %v1232
    %v4292 = vunpack.c.l.b16 %v1233
    %v4293 = vunpack.c.h.b16 %v1233
    %v4294 = vunpack.c.l.b16 %v1234
    %v4295 = vunpack.c.h.b16 %v1234
    %v4296 = vunpack.c.l.b16 %v1235
    %v4297 = vunpack.c.h.b16 %v1235
    %v4298 = vunpack.c.l.b16 %v1236
    %v4299 = vunpack.c.h.b16 %v1236
    %v4300 = vunpack.c.l.b16 %v1237
    %v4301 = vunpack.c.h.b16 %v1237
    %v4302 = vunpack.c.l.b16 %v1238
    %v4303 = vunpack.c.h.b16 %v1238
    %v4304 = vunpack.c.l.b16 %v1239
    %v4305 = vunpack.c.h.b16 %v1239
    %v4306 = vunpack.c.l.b16 %v1240
    %v4307 = vunpack.c.h.b16 %v1240
    %v4308 = vunpack.c.l.b16 %v1241
    %v4309 = vunpack.c.h.b16 %v1241
    %v4310 = vunpack.c.l.b16 %v1242
    %v4311 = vunpack.c.h.b16 %v1242
    %v4312 = vunpack.c.l.b16 %v1243
    %v4313 = vunpack.c.h.b16 %v1243
    %v4314 = vunpack.c.l.b16 %v1244
    %v4315 = vunpack.c.h.b16 %v1244
    %v4316 = vunpack.c.l.b16 %v1245
    %v4317 = vunpack.c.h.b16 %v1245
    %v4318 = vunpack.c.l.b16 %v1246
    %v4319 = vunpack.c.h.b16 %v1246
    %v4320 = vunpack.c.l.b16 %v1247
    %v4321 = vunpack.c.h.b16 %v1247
    %v4322 = vunpack.c.l.b16 %v1248
    %v4323 = vunpack.c.h.b16 %v1248
    %v4324 = vunpack.c.l.b16 %v1249
    %v4325 = vunpack.c.h.b16 %v1249
    %v4326 = vunpack.c.l.b16 %v1250
    %v4327 = vunpack.c.h.b16 %v1250
    %v4328 = vunpack.c.l.b16 %v1251
    %v4329 = vunpack.c.h.b16 %v1251
    %v4330 = vunpack.c.l.b16 %v1252
    %v4331 = vunpack.c.h.b16 %v1252
    %v4332 = vunpack.c.l.b16 %v1253
    %v4333 = vunpack.c.h.b16 %v1253
    %v4334 = vunpack.c.l.b16 %v1254
    %v4335 = vunpack.c.h.b16 %v1254
    %v4336 = vunpack.c.l.b16 %v1255
    %v4337 = vunpack.c.h.b16 %v1255
    %v4338 = vunpack.c.l.b16 %v1256
    %v4339 = vunpack.c.h.b16 %v1256
    %v4340 = vunpack.c.l.b16 %v1257
    %v4341 = vunpack.c.h.b16 %v1257
    %v4342 = vunpack.c.l.b16 %v1258
    %v4343 = vunpack.c.h.b16 %v1258
    %v4344 = vunpack.c.l.b16 %v1259
    %v4345 = vunpack.c.h.b16 %v1259
    %v4346 = vunpack.c.l.b16 %v1260
    %v4347 = vunpack.c.h.b16 %v1260
    %v4348 = vunpack.c.l.b16 %v1261
    %v4349 = vunpack.c.h.b16 %v1261
    %v4350 = vunpack.c.l.b16 %v1262
    %v4351 = vunpack.c.h.b16 %v1262
    %v4352 = vunpack.c.l.b16 %v1263
    %v4353 = vunpack.c.h.b16 %v1263
    %v4354 = vunpack.c.l.b16 %v1264
    %v4355 = vunpack.c.h.b16 %v1264
    %v4356 = vunpack.c.l.b16 %v1265
    %v4357 = vunpack.c.h.b16 %v1265
    %v4358 = vunpack.c.l.b16 %v1266
    %v4359 = vunpack.c.h.b16 %v1266
    %v4360 = vunpack.c.l.b16 %v1267
    %v4361 = vunpack.c.h.b16 %v1267
    %v4362 = vpack.c.b16 %v2318, %v2314
    %v4363 = vpack.c.b16 %v2319, %v2315
    %v4364 = vpack.c.b16 %v2320, %v2316
    %v4365 = vpack.c.b16 %v2321, %v2317
    %v4366 = vpack.c.b16 %v2326, %v2322
    %v4367 = vpack.c.b16 %v2327, %v2323
    %v4368 = vpack.c.b16 %v2328, %v2324
    %v4369 = vpack.c.b16 %v2329, %v2325
    %v4370 = vpack.c.b16 %v2334, %v2330
    %v4371 = vpack.c.b16 %v2335, %v2331
    %v4372 = vpack.c.b16 %v2336, %v2332
    %v4373 = vpack.c.b16 %v2337, %v2333
    %v4374 = vpack.c.b16 %v2342, %v2338
    %v4375 = vpack.c.b16 %v2343, %v2339
    %v4376 = vpack.c.b16 %v2344, %v2340
    %v4377 = vpack.c.b16 %v2345, %v2341
    %v4378 = vpack.c.b16 %v2350, %v2346
    %v4379 = vpack.c.b16 %v2351, %v2347
    %v4380 = vpack.c.b16 %v2352, %v2348
    %v4381 = vpack.c.b16 %v2353, %v2349
    %v4382 = vpack.c.b16 %v2358, %v2354
    %v4383 = vpack.c.b16 %v2359, %v2355
    %v4384 = vpack.c.b16 %v2360, %v2356
    %v4385 = vpack.c.b16 %v2361, %v2357
    %v4386 = vpack.c.b16 %v2366, %v2362
    %v4387 = vpack.c.b16 %v2367, %v2363
    %v4388 = vpack.c.b16 %v2368, %v2364
    %v4389 = vpack.c.b16 %v2369, %v2365
    %v4390 = vpack.c.b16 %v2374, %v2370
    %v4391 = vpack.c.b16 %v2375, %v2371
    %v4392 = vpack.c.b16 %v2376, %v2372
    %v4393 = vpack.c.b16 %v2377, %v2373
    %v4394 = vpack.c.b16 %v2382, %v2378
    %v4395 = vpack.c.b16 %v2383, %v2379
    %v4396 = vpack.c.b16 %v2384, %v2380
    %v4397 = vpack.c.b16 %v2385, %v2381
    %v4398 = vpack.c.b16 %v2390, %v2386
    %v4399 = vpack.c.b16 %v2391, %v2387
    %v4400 = vpack.c.b16 %v2392, %v2388
    %v4401 = vpack.c.b16 %v2393, %v2389
    %v4402 = vpack.c.b16 %v2398, %v2394
    %v4403 = vpack.c.b16 %v2399, %v2395
    %v4404 = vpack.c.b16 %v2400, %v2396
    %v4405 = vpack.c.b16 %v2401, %v2397
    %v4406 = vpack.c.b16 %v2406, %v2402
    %v4407 = vpack.c.b16 %v2407, %v2403
    %v4408 = vpack.c.b16 %v2408, %v2404
    %v4409 = vpack.c.b16 %v2409, %v2405
    %v4410 = vpack.c.b16 %v2414, %v2410
    %v4411 = vpack.c.b16 %v2415, %v2411
    %v4412 = vpack.c.b16 %v2416, %v2412
    %v4413 = vpack.c.b16 %v2417, %v2413
    %v4414 = vpack.c.b16 %v2422, %v2418
    %v4415 = vpack.c.b16 %v2423, %v2419
    %v4416 = vpack.c.b16 %v2424, %v2420
    %v4417 = vpack.c.b16 %v2425, %v2421
    %v4418 = vpack.c.b16 %v2430, %v2426
    %v4419 = vpack.c.b16 %v2431, %v2427
    %v4420 = vpack.c.b16 %v2432, %v2428
    %v4421 = vpack.c.b16 %v2433, %v2429
    %v4422 = vpack.c.b16 %v2438, %v2434
    %v4423 = vpack.c.b16 %v2439, %v2435
    %v4424 = vpack.c.b16 %v2440, %v2436
    %v4425 = vpack.c.b16 %v2441, %v2437
    %v4426 = vpack.c.b16 %v2446, %v2442
    %v4427 = vpack.c.b16 %v2447, %v2443
    %v4428 = vpack.c.b16 %v2448, %v2444
    %v4429 = vpack.c.b16 %v2449, %v2445
    %v4430 = vpack.c.b16 %v2454, %v2450
    %v4431 = vpack.c.b16 %v2455, %v2451
    %v4432 = vpack.c.b16 %v2456, %v2452
    %v4433 = vpack.c.b16 %v2457, %v2453
    %v4434 = vpack.c.b16 %v2462, %v2458
    %v4435 = vpack.c.b16 %v2463, %v2459
    %v4436 = vpack.c.b16 %v2464, %v2460
    %v4437 = vpack.c.b16 %v2465, %v2461
    %v4438 = vpack.c.b16 %v2470, %v2466
    %v4439 = vpack.c.b16 %v2471, %v2467
    %v4440 = vpack.c.b16 %v2472, %v2468
    %v4441 = vpack.c.b16 %v2473, %v2469
    %v4442 = vpack.c.b16 %v2478, %v2474
    %v4443 = vpack.c.b16 %v2479, %v2475
    %v4444 = vpack.c.b16 %v2480, %v2476
    %v4445 = vpack.c.b16 %v2481, %v2477
    %v4446 = vpack.c.b16 %v2486, %v2482
    %v4447 = vpack.c.b16 %v2487, %v2483
    %v4448 = vpack.c.b16 %v2488, %v2484
    %v4449 = vpack.c.b16 %v2489, %v2485
    %v4450 = vpack.c.b16 %v2494, %v2490
    %v4451 = vpack.c.b16 %v2495, %v2491
    %v4452 = vpack.c.b16 %v2496, %v2492
    %v4453 = vpack.c.b16 %v2497, %v2493
    %v4454 = vpack.c.b16 %v2502, %v2498
    %v4455 = vpack.c.b16 %v2503, %v2499
    %v4456 = vpack.c.b16 %v2504, %v2500
    %v4457 = vpack.c.b16 %v2505, %v2501
    %v4458 = vpack.c.b16 %v2510, %v2506
    %v4459 = vpack.c.b16 %v2511, %v2507
    %v4460 = vpack.c.b16 %v2512, %v2508
    %v4461 = vpack.c.b16 %v2513, %v2509
    %v4462 = vpack.c.b16 %v2518, %v2514
    %v4463 = vpack.c.b16 %v2519, %v2515
    %v4464 = vpack.c.b16 %v2520, %v2516
    %v4465 = vpack.c.b16 %v2521, %v2517
    %v4466 = vpack.c.b16 %v2526, %v2522
    %v4467 = vpack.c.b16 %v2527, %v2523
    %v4468 = vpack.c.b16 %v2528, %v2524
    %v4469 = vpack.c.b16 %v2529, %v2525
    %v4470 = vpack.c.b16 %v2534, %v2530
    %v4471 = vpack.c.b16 %v2535, %v2531
    %v4472 = vpack.c.b16 %v2536, %v2532
    %v4473 = vpack.c.b16 %v2537, %v2533
    %v4474 = vpack.c.b16 %v2542, %v2538
    %v4475 = vpack.c.b16 %v2543, %v2539
    %v4476 = vpack.c.b16 %v2544, %v2540
    %v4477 = vpack.c.b16 %v2545, %v2541
    %v4478 = vpack.c.b16 %v2550, %v2546
    %v4479 = vpack.c.b16 %v2551, %v2547
    %v4480 = vpack.c.b16 %v2552, %v2548
    %v4481 = vpack.c.b16 %v2553, %v2549
    %v4482 = vpack.c.b16 %v2558, %v2554
    %v4483 = vpack.c.b16 %v2559, %v2555
    %v4484 = vpack.c.b16 %v2560, %v2556
    %v4485 = vpack.c.b16 %v2561, %v2557
    %v4486 = vpack.c.b16 %v2566, %v2562
    %v4487 = vpack.c.b16 %v2567, %v2563
    %v4488 = vpack.c.b16 %v2568, %v2564
    %v4489 = vpack.c.b16 %v2569, %v2565
    %v4490 = vpack.c.b16 %v2574, %v2570
    %v4491 = vpack.c.b16 %v2575, %v2571
    %v4492 = vpack.c.b16 %v2576, %v2572
    %v4493 = vpack.c.b16 %v2577, %v2573
    %v4494 = vpack.c.b16 %v2582, %v2578
    %v4495 = vpack.c.b16 %v2583, %v2579
    %v4496 = vpack.c.b16 %v2584, %v2580
    %v4497 = vpack.c.b16 %v2585, %v2581
    %v4498 = vpack.c.b16 %v2590, %v2586
    %v4499 = vpack.c.b16 %v2591, %v2587
    %v4500 = vpack.c.b16 %v2592, %v2588
    %v4501 = vpack.c.b16 %v2593, %v2589
    %v4502 = vpack.c.b16 %v2598, %v2594
    %v4503 = vpack.c.b16 %v2599, %v2595
    %v4504 = vpack.c.b16 %v2600, %v2596
    %v4505 = vpack.c.b16 %v2601, %v2597
    %v4506 = vpack.c.b16 %v2606, %v2602
    %v4507 = vpack.c.b16 %v2607, %v2603
    %v4508 = vpack.c.b16 %v2608, %v2604
    %v4509 = vpack.c.b16 %v2609, %v2605
    %v4510 = vpack.c.b16 %v2614, %v2610
    %v4511 = vpack.c.b16 %v2615, %v2611
    %v4512 = vpack.c.b16 %v2616, %v2612
    %v4513 = vpack.c.b16 %v2617, %v2613
    %v4514 = vpack.c.b16 %v2622, %v2618
    %v4515 = vpack.c.b16 %v2623, %v2619
    %v4516 = vpack.c.b16 %v2624, %v2620
    %v4517 = vpack.c.b16 %v2625, %v2621
    %v4518 = vpack.c.b16 %v2630, %v2626
    %v4519 = vpack.c.b16 %v2631, %v2627
    %v4520 = vpack.c.b16 %v2632, %v2628
    %v4521 = vpack.c.b16 %v2633, %v2629
    %v4522 = vpack.c.b16 %v2638, %v2634
    %v4523 = vpack.c.b16 %v2639, %v2635
    %v4524 = vpack.c.b16 %v2640, %v2636
    %v4525 = vpack.c.b16 %v2641, %v2637
    %v4526 = vpack.c.b16 %v2646, %v2642
    %v4527 = vpack.c.b16 %v2647, %v2643
    %v4528 = vpack.c.b16 %v2648, %v2644
    %v4529 = vpack.c.b16 %v2649, %v2645
    %v4530 = vpack.c.b16 %v2654, %v2650
    %v4531 = vpack.c.b16 %v2655, %v2651
    %v4532 = vpack.c.b16 %v2656, %v2652
    %v4533 = vpack.c.b16 %v2657, %v2653
    %v4534 = vpack.c.b16 %v2662, %v2658
    %v4535 = vpack.c.b16 %v2663, %v2659
    %v4536 = vpack.c.b16 %v2664, %v2660
    %v4537 = vpack.c.b16 %v2665, %v2661
    %v4538 = vpack.c.b16 %v2670, %v2666
    %v4539 = vpack.c.b16 %v2671, %v2667
    %v4540 = vpack.c.b16 %v2672, %v2668
    %v4541 = vpack.c.b16 %v2673, %v2669
    %v4542 = vpack.c.b16 %v2678, %v2674
    %v4543 = vpack.c.b16 %v2679, %v2675
    %v4544 = vpack.c.b16 %v2680, %v2676
    %v4545 = vpack.c.b16 %v2681, %v2677
    %v4546 = vpack.c.b16 %v2686, %v2682
    %v4547 = vpack.c.b16 %v2687, %v2683
    %v4548 = vpack.c.b16 %v2688, %v2684
    %v4549 = vpack.c.b16 %v2689, %v2685
    %v4550 = vpack.c.b16 %v2694, %v2690
    %v4551 = vpack.c.b16 %v2695, %v2691
    %v4552 = vpack.c.b16 %v2696, %v2692
    %v4553 = vpack.c.b16 %v2697, %v2693
    %v4554 = vpack.c.b16 %v2702, %v2698
    %v4555 = vpack.c.b16 %v2703, %v2699
    %v4556 = vpack.c.b16 %v2704, %v2700
    %v4557 = vpack.c.b16 %v2705, %v2701
    %v4558 = vpack.c.b16 %v2710, %v2706
    %v4559 = vpack.c.b16 %v2711, %v2707
    %v4560 = vpack.c.b16 %v2712, %v2708
    %v4561 = vpack.c.b16 %v2713, %v2709
    %v4562 = vpack.c.b16 %v2718, %v2714
    %v4563 = vpack.c.b16 %v2719, %v2715
    %v4564 = vpack.c.b16 %v2720, %v2716
    %v4565 = vpack.c.b16 %v2721, %v2717
    %v4566 = vpack.c.b16 %v2726, %v2722
    %v4567 = vpack.c.b16 %v2727, %v2723
    %v4568 = vpack.c.b16 %v2728, %v2724
    %v4569 = vpack.c.b16 %v2729, %v2725
    %v4570 = vpack.c.b16 %v2734, %v2730
    %v4571 = vpack.c.b16 %v2735, %v2731
    %v4572 = vpack.c.b16 %v2736, %v2732
    %v4573 = vpack.c.b16 %v2737, %v2733
    %v4574 = vpack.c.b16 %v2742, %v2738
    %v4575 = vpack.c.b16 %v2743, %v2739
    %v4576 = vpack.c.b16 %v2744, %v2740
    %v4577 = vpack.c.b16 %v2745, %v2741
    %v4578 = vpack.c.b16 %v2750, %v2746
    %v4579 = vpack.c.b16 %v2751, %v2747
    %v4580 = vpack.c.b16 %v2752, %v2748
    %v4581 = vpack.c.b16 %v2753, %v2749
    %v4582 = vpack.c.b16 %v2758, %v2754
    %v4583 = vpack.c.b16 %v2759, %v2755
    %v4584 = vpack.c.b16 %v2760, %v2756
    %v4585 = vpack.c.b16 %v2761, %v2757
    %v4586 = vpack.c.b16 %v2766, %v2762
    %v4587 = vpack.c.b16 %v2767, %v2763
    %v4588 = vpack.c.b16 %v2768, %v2764
    %v4589 = vpack.c.b16 %v2769, %v2765
    %v4590 = vpack.c.b16 %v2774, %v2770
    %v4591 = vpack.c.b16 %v2775, %v2771
    %v4592 = vpack.c.b16 %v2776, %v2772
    %v4593 = vpack.c.b16 %v2777, %v2773
    %v4594 = vpack.c.b16 %v2782, %v2778
    %v4595 = vpack.c.b16 %v2783, %v2779
    %v4596 = vpack.c.b16 %v2784, %v2780
    %v4597 = vpack.c.b16 %v2785, %v2781
    %v4598 = vpack.c.b16 %v2790, %v2786
    %v4599 = vpack.c.b16 %v2791, %v2787
    %v4600 = vpack.c.b16 %v2792, %v2788
    %v4601 = vpack.c.b16 %v2793, %v2789
    %v4602 = vpack.c.b16 %v2798, %v2794
    %v4603 = vpack.c.b16 %v2799, %v2795
    %v4604 = vpack.c.b16 %v2800, %v2796
    %v4605 = vpack.c.b16 %v2801, %v2797
    %v4606 = vpack.c.b16 %v2806, %v2802
    %v4607 = vpack.c.b16 %v2807, %v2803
    %v4608 = vpack.c.b16 %v2808, %v2804
    %v4609 = vpack.c.b16 %v2809, %v2805
    %v4610 = vpack.c.b16 %v2814, %v2810
    %v4611 = vpack.c.b16 %v2815, %v2811
    %v4612 = vpack.c.b16 %v2816, %v2812
    %v4613 = vpack.c.b16 %v2817, %v2813
    %v4614 = vpack.c.b16 %v2822, %v2818
    %v4615 = vpack.c.b16 %v2823, %v2819
    %v4616 = vpack.c.b16 %v2824, %v2820
    %v4617 = vpack.c.b16 %v2825, %v2821
    %v4618 = vpack.c.b16 %v2830, %v2826
    %v4619 = vpack.c.b16 %v2831, %v2827
    %v4620 = vpack.c.b16 %v2832, %v2828
    %v4621 = vpack.c.b16 %v2833, %v2829
    %v4622 = vpack.c.b16 %v2838, %v2834
    %v4623 = vpack.c.b16 %v2839, %v2835
    %v4624 = vpack.c.b16 %v2840, %v2836
    %v4625 = vpack.c.b16 %v2841, %v2837
    %v4626 = vpack.c.b16 %v2846, %v2842
    %v4627 = vpack.c.b16 %v2847, %v2843
    %v4628 = vpack.c.b16 %v2848, %v2844
    %v4629 = vpack.c.b16 %v2849, %v2845
    %v4630 = vpack.c.b16 %v2854, %v2850
    %v4631 = vpack.c.b16 %v2855, %v2851
    %v4632 = vpack.c.b16 %v2856, %v2852
    %v4633 = vpack.c.b16 %v2857, %v2853
    %v4634 = vpack.c.b16 %v2862, %v2858
    %v4635 = vpack.c.b16 %v2863, %v2859
    %v4636 = vpack.c.b16 %v2864, %v2860
    %v4637 = vpack.c.b16 %v2865, %v2861
    %v4638 = vpack.c.b16 %v2870, %v2866
    %v4639 = vpack.c.b16 %v2871, %v2867
    %v4640 = vpack.c.b16 %v2872, %v2868
    %v4641 = vpack.c.b16 %v2873, %v2869
    %v4642 = vpack.c.b16 %v2878, %v2874
    %v4643 = vpack.c.b16 %v2879, %v2875
    %v4644 = vpack.c.b16 %v2880, %v2876
    %v4645 = vpack.c.b16 %v2881, %v2877
    %v4646 = vpack.c.b16 %v2886, %v2882
    %v4647 = vpack.c.b16 %v2887, %v2883
    %v4648 = vpack.c.b16 %v2888, %v2884
    %v4649 = vpack.c.b16 %v2889, %v2885
    %v4650 = vpack.c.b16 %v2894, %v2890
    %v4651 = vpack.c.b16 %v2895, %v2891
    %v4652 = vpack.c.b16 %v2896, %v2892
    %v4653 = vpack.c.b16 %v2897, %v2893
    %v4654 = vpack.c.b16 %v2902, %v2898
    %v4655 = vpack.c.b16 %v2903, %v2899
    %v4656 = vpack.c.b16 %v2904, %v2900
    %v4657 = vpack.c.b16 %v2905, %v2901
    %v4658 = vpack.c.b16 %v2910, %v2906
    %v4659 = vpack.c.b16 %v2911, %v2907
    %v4660 = vpack.c.b16 %v2912, %v2908
    %v4661 = vpack.c.b16 %v2913, %v2909
    %v4662 = vpack.c.b16 %v2918, %v2914
    %v4663 = vpack.c.b16 %v2919, %v2915
    %v4664 = vpack.c.b16 %v2920, %v2916
    %v4665 = vpack.c.b16 %v2921, %v2917
    %v4666 = vpack.c.b16 %v2926, %v2922
    %v4667 = vpack.c.b16 %v2927, %v2923
    %v4668 = vpack.c.b16 %v2928, %v2924
    %v4669 = vpack.c.b16 %v2929, %v2925
    %v4670 = vpack.c.b16 %v2934, %v2930
    %v4671 = vpack.c.b16 %v2935, %v2931
    %v4672 = vpack.c.b16 %v2936, %v2932
    %v4673 = vpack.c.b16 %v2937, %v2933
    %v4674 = vpack.c.b16 %v2942, %v2938
    %v4675 = vpack.c.b16 %v2943, %v2939
    %v4676 = vpack.c.b16 %v2944, %v2940
    %v4677 = vpack.c.b16 %v2945, %v2941
    %v4678 = vpack.c.b16 %v2950, %v2946
    %v4679 = vpack.c.b16 %v2951, %v2947
    %v4680 = vpack.c.b16 %v2952, %v2948
    %v4681 = vpack.c.b16 %v2953, %v2949
    %v4682 = vpack.c.b16 %v2958, %v2954
    %v4683 = vpack.c.b16 %v2959, %v2955
    %v4684 = vpack.c.b16 %v2960, %v2956
    %v4685 = vpack.c.b16 %v2961, %v2957
    %v4686 = vpack.c.b16 %v2966, %v2962
    %v4687 = vpack.c.b16 %v2967, %v2963
    %v4688 = vpack.c.b16 %v2968, %v2964
    %v4689 = vpack.c.b16 %v2969, %v2965
    %v4690 = vpack.c.b16 %v2974, %v2970
    %v4691 = vpack.c.b16 %v2975, %v2971
    %v4692 = vpack.c.b16 %v2976, %v2972
    %v4693 = vpack.c.b16 %v2977, %v2973
    %v4694 = vpack.c.b16 %v2982, %v2978
    %v4695 = vpack.c.b16 %v2983, %v2979
    %v4696 = vpack.c.b16 %v2984, %v2980
    %v4697 = vpack.c.b16 %v2985, %v2981
    %v4698 = vpack.c.b16 %v2990, %v2986
    %v4699 = vpack.c.b16 %v2991, %v2987
    %v4700 = vpack.c.b16 %v2992, %v2988
    %v4701 = vpack.c.b16 %v2993, %v2989
    %v4702 = vpack.c.b16 %v2998, %v2994
    %v4703 = vpack.c.b16 %v2999, %v2995
    %v4704 = vpack.c.b16 %v3000, %v2996
    %v4705 = vpack.c.b16 %v3001, %v2997
    %v4706 = vpack.c.b16 %v3006, %v3002
    %v4707 = vpack.c.b16 %v3007, %v3003
    %v4708 = vpack.c.b16 %v3008, %v3004
    %v4709 = vpack.c.b16 %v3009, %v3005
    %v4710 = vpack.c.b16 %v3014, %v3010
    %v4711 = vpack.c.b16 %v3015, %v3011
    %v4712 = vpack.c.b16 %v3016, %v3012
    %v4713 = vpack.c.b16 %v3017, %v3013
    %v4714 = vpack.c.b16 %v3022, %v3018
    %v4715 = vpack.c.b16 %v3023, %v3019
    %v4716 = vpack.c.b16 %v3024, %v3020
    %v4717 = vpack.c.b16 %v3025, %v3021
    %v4718 = vpack.c.b16 %v3030, %v3026
    %v4719 = vpack.c.b16 %v3031, %v3027
    %v4720 = vpack.c.b16 %v3032, %v3028
    %v4721 = vpack.c.b16 %v3033, %v3029
    %v4722 = vpack.c.b16 %v3038, %v3034
    %v4723 = vpack.c.b16 %v3039, %v3035
    %v4724 = vpack.c.b16 %v3040, %v3036
    %v4725 = vpack.c.b16 %v3041, %v3037
    %v4726 = vpack.c.b16 %v3046, %v3042
    %v4727 = vpack.c.b16 %v3047, %v3043
    %v4728 = vpack.c.b16 %v3048, %v3044
    %v4729 = vpack.c.b16 %v3049, %v3045
    %v4730 = vpack.c.b16 %v3054, %v3050
    %v4731 = vpack.c.b16 %v3055, %v3051
    %v4732 = vpack.c.b16 %v3056, %v3052
    %v4733 = vpack.c.b16 %v3057, %v3053
    %v4734 = vpack.c.b16 %v3062, %v3058
    %v4735 = vpack.c.b16 %v3063, %v3059
    %v4736 = vpack.c.b16 %v3064, %v3060
    %v4737 = vpack.c.b16 %v3065, %v3061
    %v4738 = vpack.c.b16 %v3070, %v3066
    %v4739 = vpack.c.b16 %v3071, %v3067
    %v4740 = vpack.c.b16 %v3072, %v3068
    %v4741 = vpack.c.b16 %v3073, %v3069
    %v4742 = vpack.c.b16 %v3078, %v3074
    %v4743 = vpack.c.b16 %v3079, %v3075
    %v4744 = vpack.c.b16 %v3080, %v3076
    %v4745 = vpack.c.b16 %v3081, %v3077
    %v4746 = vpack.c.b16 %v3086, %v3082
    %v4747 = vpack.c.b16 %v3087, %v3083
    %v4748 = vpack.c.b16 %v3088, %v3084
    %v4749 = vpack.c.b16 %v3089, %v3085
    %v4750 = vpack.c.b16 %v3094, %v3090
    %v4751 = vpack.c.b16 %v3095, %v3091
    %v4752 = vpack.c.b16 %v3096, %v3092
    %v4753 = vpack.c.b16 %v3097, %v3093
    %v4754 = vpack.c.b16 %v3102, %v3098
    %v4755 = vpack.c.b16 %v3103, %v3099
    %v4756 = vpack.c.b16 %v3104, %v3100
    %v4757 = vpack.c.b16 %v3105, %v3101
    %v4758 = vpack.c.b16 %v3110, %v3106
    %v4759 = vpack.c.b16 %v3111, %v3107
    %v4760 = vpack.c.b16 %v3112, %v3108
    %v4761 = vpack.c.b16 %v3113, %v3109
    %v4762 = vpack.c.b16 %v3118, %v3114
    %v4763 = vpack.c.b16 %v3119, %v3115
    %v4764 = vpack.c.b16 %v3120, %v3116
    %v4765 = vpack.c.b16 %v3121, %v3117
    %v4766 = vpack.c.b16 %v3126, %v3122
    %v4767 = vpack.c.b16 %v3127, %v3123
    %v4768 = vpack.c.b16 %v3128, %v3124
    %v4769 = vpack.c.b16 %v3129, %v3125
    %v4770 = vpack.c.b16 %v3134, %v3130
    %v4771 = vpack.c.b16 %v3135, %v3131
    %v4772 = vpack.c.b16 %v3136, %v3132
    %v4773 = vpack.c.b16 %v3137, %v3133
    %v4774 = vpack.c.b16 %v3142, %v3138
    %v4775 = vpack.c.b16 %v3143, %v3139
    %v4776 = vpack.c.b16 %v3144, %v3140
    %v4777 = vpack.c.b16 %v3145, %v3141
    %v4778 = vpack.c.b16 %v3150, %v3146
    %v4779 = vpack.c.b16 %v3151, %v3147
    %v4780 = vpack.c.b16 %v3152, %v3148
    %v4781 = vpack.c.b16 %v3153, %v3149
    %v4782 = vpack.c.b16 %v3158, %v3154
    %v4783 = vpack.c.b16 %v3159, %v3155
    %v4784 = vpack.c.b16 %v3160, %v3156
    %v4785 = vpack.c.b16 %v3161, %v3157
    %v4786 = vpack.c.b16 %v3166, %v3162
    %v4787 = vpack.c.b16 %v3167, %v3163
    %v4788 = vpack.c.b16 %v3168, %v3164
    %v4789 = vpack.c.b16 %v3169, %v3165
    %v4790 = vpack.c.b16 %v3174, %v3170
    %v4791 = vpack.c.b16 %v3175, %v3171
    %v4792 = vpack.c.b16 %v3176, %v3172
    %v4793 = vpack.c.b16 %v3177, %v3173
    %v4794 = vpack.c.b16 %v3182, %v3178
    %v4795 = vpack.c.b16 %v3183, %v3179
    %v4796 = vpack.c.b16 %v3184, %v3180
    %v4797 = vpack.c.b16 %v3185, %v3181
    %v4798 = vpack.c.b16 %v3190, %v3186
    %v4799 = vpack.c.b16 %v3191, %v3187
    %v4800 = vpack.c.b16 %v3192, %v3188
    %v4801 = vpack.c.b16 %v3193, %v3189
    %v4802 = vpack.c.b16 %v3198, %v3194
    %v4803 = vpack.c.b16 %v3199, %v3195
    %v4804 = vpack.c.b16 %v3200, %v3196
    %v4805 = vpack.c.b16 %v3201, %v3197
    %v4806 = vpack.c.b16 %v3206, %v3202
    %v4807 = vpack.c.b16 %v3207, %v3203
    %v4808 = vpack.c.b16 %v3208, %v3204
    %v4809 = vpack.c.b16 %v3209, %v3205
    %v4810 = vpack.c.b16 %v3214, %v3210
    %v4811 = vpack.c.b16 %v3215, %v3211
    %v4812 = vpack.c.b16 %v3216, %v3212
    %v4813 = vpack.c.b16 %v3217, %v3213
    %v4814 = vpack.c.b16 %v3222, %v3218
    %v4815 = vpack.c.b16 %v3223, %v3219
    %v4816 = vpack.c.b16 %v3224, %v3220
    %v4817 = vpack.c.b16 %v3225, %v3221
    %v4818 = vpack.c.b16 %v3230, %v3226
    %v4819 = vpack.c.b16 %v3231, %v3227
    %v4820 = vpack.c.b16 %v3232, %v3228
    %v4821 = vpack.c.b16 %v3233, %v3229
    %v4822 = vpack.c.b16 %v3238, %v3234
    %v4823 = vpack.c.b16 %v3239, %v3235
    %v4824 = vpack.c.b16 %v3240, %v3236
    %v4825 = vpack.c.b16 %v3241, %v3237
    %v4826 = vpack.c.b16 %v3246, %v3242
    %v4827 = vpack.c.b16 %v3247, %v3243
    %v4828 = vpack.c.b16 %v3248, %v3244
    %v4829 = vpack.c.b16 %v3249, %v3245
    %v4830 = vpack.c.b16 %v3254, %v3250
    %v4831 = vpack.c.b16 %v3255, %v3251
    %v4832 = vpack.c.b16 %v3256, %v3252
    %v4833 = vpack.c.b16 %v3257, %v3253
    %v4834 = vpack.c.b16 %v3262, %v3258
    %v4835 = vpack.c.b16 %v3263, %v3259
    %v4836 = vpack.c.b16 %v3264, %v3260
    %v4837 = vpack.c.b16 %v3265, %v3261
    %v4838 = vpack.c.b16 %v3270, %v3266
    %v4839 = vpack.c.b16 %v3271, %v3267
    %v4840 = vpack.c.b16 %v3272, %v3268
    %v4841 = vpack.c.b16 %v3273, %v3269
    %v4842 = vpack.c.b16 %v3278, %v3274
    %v4843 = vpack.c.b16 %v3279, %v3275
    %v4844 = vpack.c.b16 %v3280, %v3276
    %v4845 = vpack.c.b16 %v3281, %v3277
    %v4846 = vpack.c.b16 %v3286, %v3282
    %v4847 = vpack.c.b16 %v3287, %v3283
    %v4848 = vpack.c.b16 %v3288, %v3284
    %v4849 = vpack.c.b16 %v3289, %v3285
    %v4850 = vpack.c.b16 %v3294, %v3290
    %v4851 = vpack.c.b16 %v3295, %v3291
    %v4852 = vpack.c.b16 %v3296, %v3292
    %v4853 = vpack.c.b16 %v3297, %v3293
    %v4854 = vpack.c.b16 %v3302, %v3298
    %v4855 = vpack.c.b16 %v3303, %v3299
    %v4856 = vpack.c.b16 %v3304, %v3300
    %v4857 = vpack.c.b16 %v3305, %v3301
    %v4858 = vpack.c.b16 %v3310, %v3306
    %v4859 = vpack.c.b16 %v3311, %v3307
    %v4860 = vpack.c.b16 %v3312, %v3308
    %v4861 = vpack.c.b16 %v3313, %v3309
    %v4862 = vpack.c.b16 %v3318, %v3314
    %v4863 = vpack.c.b16 %v3319, %v3315
    %v4864 = vpack.c.b16 %v3320, %v3316
    %v4865 = vpack.c.b16 %v3321, %v3317
    %v4866 = vpack.c.b16 %v3326, %v3322
    %v4867 = vpack.c.b16 %v3327, %v3323
    %v4868 = vpack.c.b16 %v3328, %v3324
    %v4869 = vpack.c.b16 %v3329, %v3325
    %v4870 = vpack.c.b16 %v3334, %v3330
    %v4871 = vpack.c.b16 %v3335, %v3331
    %v4872 = vpack.c.b16 %v3336, %v3332
    %v4873 = vpack.c.b16 %v3337, %v3333
    %v4874 = vpack.c.b16 %v3342, %v3338
    %v4875 = vpack.c.b16 %v3343, %v3339
    %v4876 = vpack.c.b16 %v3344, %v3340
    %v4877 = vpack.c.b16 %v3345, %v3341
    %v4878 = vpack.c.b16 %v3350, %v3346
    %v4879 = vpack.c.b16 %v3351, %v3347
    %v4880 = vpack.c.b16 %v3352, %v3348
    %v4881 = vpack.c.b16 %v3353, %v3349
    %v4882 = vpack.c.b16 %v3358, %v3354
    %v4883 = vpack.c.b16 %v3359, %v3355
    %v4884 = vpack.c.b16 %v3360, %v3356
    %v4885 = vpack.c.b16 %v3361, %v3357
    %v4886 = vpack.c.b16 %v3366, %v3362
    %v4887 = vpack.c.b16 %v3367, %v3363
    %v4888 = vpack.c.b16 %v3368, %v3364
    %v4889 = vpack.c.b16 %v3369, %v3365
    %v4890 = vpack.c.b16 %v3374, %v3370
    %v4891 = vpack.c.b16 %v3375, %v3371
    %v4892 = vpack.c.b16 %v3376, %v3372
    %v4893 = vpack.c.b16 %v3377, %v3373
    %v4894 = vpack.c.b16 %v3382, %v3378
    %v4895 = vpack.c.b16 %v3383, %v3379
    %v4896 = vpack.c.b16 %v3384, %v3380
    %v4897 = vpack.c.b16 %v3385, %v3381
    %v4898 = vpack.c.b16 %v3390, %v3386
    %v4899 = vpack.c.b16 %v3391, %v3387
    %v4900 = vpack.c.b16 %v3392, %v3388
    %v4901 = vpack.c.b16 %v3393, %v3389
    %v4902 = vpack.c.b16 %v3398, %v3394
    %v4903 = vpack.c.b16 %v3399, %v3395
    %v4904 = vpack.c.b16 %v3400, %v3396
    %v4905 = vpack.c.b16 %v3401, %v3397
    %v4906 = vpack.c.b16 %v3406, %v3402
    %v4907 = vpack.c.b16 %v3407, %v3403
    %v4908 = vpack.c.b16 %v3408, %v3404
    %v4909 = vpack.c.b16 %v3409, %v3405
    %v4910 = vpack.c.b16 %v3414, %v3410
    %v4911 = vpack.c.b16 %v3415, %v3411
    %v4912 = vpack.c.b16 %v3416, %v3412
    %v4913 = vpack.c.b16 %v3417, %v3413
    %v4914 = vpack.c.b16 %v3422, %v3418
    %v4915 = vpack.c.b16 %v3423, %v3419
    %v4916 = vpack.c.b16 %v3424, %v3420
    %v4917 = vpack.c.b16 %v3425, %v3421
    %v4918 = vpack.c.b16 %v3430, %v3426
    %v4919 = vpack.c.b16 %v3431, %v3427
    %v4920 = vpack.c.b16 %v3432, %v3428
    %v4921 = vpack.c.b16 %v3433, %v3429
    %v4922 = vpack.c.b16 %v3438, %v3434
    %v4923 = vpack.c.b16 %v3439, %v3435
    %v4924 = vpack.c.b16 %v3440, %v3436
    %v4925 = vpack.c.b16 %v3441, %v3437
    %v4926 = vpack.c.b16 %v3446, %v3442
    %v4927 = vpack.c.b16 %v3447, %v3443
    %v4928 = vpack.c.b16 %v3448, %v3444
    %v4929 = vpack.c.b16 %v3449, %v3445
    %v4930 = vpack.c.b16 %v3454, %v3450
    %v4931 = vpack.c.b16 %v3455, %v3451
    %v4932 = vpack.c.b16 %v3456, %v3452
    %v4933 = vpack.c.b16 %v3457, %v3453
    %v4934 = vpack.c.b16 %v3462, %v3458
    %v4935 = vpack.c.b16 %v3463, %v3459
    %v4936 = vpack.c.b16 %v3464, %v3460
    %v4937 = vpack.c.b16 %v3465, %v3461
    %v4938 = vpack.c.b16 %v3470, %v3466
    %v4939 = vpack.c.b16 %v3471, %v3467
    %v4940 = vpack.c.b16 %v3472, %v3468
    %v4941 = vpack.c.b16 %v3473, %v3469
    %v4942 = vpack.c.b16 %v3478, %v3474
    %v4943 = vpack.c.b16 %v3479, %v3475
    %v4944 = vpack.c.b16 %v3480, %v3476
    %v4945 = vpack.c.b16 %v3481, %v3477
    %v4946 = vpack.c.b16 %v3486, %v3482
    %v4947 = vpack.c.b16 %v3487, %v3483
    %v4948 = vpack.c.b16 %v3488, %v3484
    %v4949 = vpack.c.b16 %v3489, %v3485
    %v4950 = vpack.c.b16 %v3494, %v3490
    %v4951 = vpack.c.b16 %v3495, %v3491
    %v4952 = vpack.c.b16 %v3496, %v3492
    %v4953 = vpack.c.b16 %v3497, %v3493
    %v4954 = vpack.c.b16 %v3502, %v3498
    %v4955 = vpack.c.b16 %v3503, %v3499
    %v4956 = vpack.c.b16 %v3504, %v3500
    %v4957 = vpack.c.b16 %v3505, %v3501
    %v4958 = vpack.c.b16 %v3510, %v3506
    %v4959 = vpack.c.b16 %v3511, %v3507
    %v4960 = vpack.c.b16 %v3512, %v3508
    %v4961 = vpack.c.b16 %v3513, %v3509
    %v4962 = vpack.c.b16 %v3518, %v3514
    %v4963 = vpack.c.b16 %v3519, %v3515
    %v4964 = vpack.c.b16 %v3520, %v3516
    %v4965 = vpack.c.b16 %v3521, %v3517
    %v4966 = vpack.c.b16 %v3526, %v3522
    %v4967 = vpack.c.b16 %v3527, %v3523
    %v4968 = vpack.c.b16 %v3528, %v3524
    %v4969 = vpack.c.b16 %v3529, %v3525
    %v4970 = vpack.c.b16 %v3534, %v3530
    %v4971 = vpack.c.b16 %v3535, %v3531
    %v4972 = vpack.c.b16 %v3536, %v3532
    %v4973 = vpack.c.b16 %v3537, %v3533
    %v4974 = vpack.c.b16 %v3542, %v3538
    %v4975 = vpack.c.b16 %v3543, %v3539
    %v4976 = vpack.c.b16 %v3544, %v3540
    %v4977 = vpack.c.b16 %v3545, %v3541
    %v4978 = vpack.c.b16 %v3550, %v3546
    %v4979 = vpack.c.b16 %v3551, %v3547
    %v4980 = vpack.c.b16 %v3552, %v3548
    %v4981 = vpack.c.b16 %v3553, %v3549
    %v4982 = vpack.c.b16 %v3558, %v3554
    %v4983 = vpack.c.b16 %v3559, %v3555
    %v4984 = vpack.c.b16 %v3560, %v3556
    %v4985 = vpack.c.b16 %v3561, %v3557
    %v4986 = vpack.c.b16 %v3566, %v3562
    %v4987 = vpack.c.b16 %v3567, %v3563
    %v4988 = vpack.c.b16 %v3568, %v3564
    %v4989 = vpack.c.b16 %v3569, %v3565
    %v4990 = vpack.c.b16 %v3574, %v3570
    %v4991 = vpack.c.b16 %v3575, %v3571
    %v4992 = vpack.c.b16 %v3576, %v3572
    %v4993 = vpack.c.b16 %v3577, %v3573
    %v4994 = vpack.c.b16 %v3582, %v3578
    %v4995 = vpack.c.b16 %v3583, %v3579
    %v4996 = vpack.c.b16 %v3584, %v3580
    %v4997 = vpack.c.b16 %v3585, %v3581
    %v4998 = vpack.c.b16 %v3590, %v3586
    %v4999 = vpack.c.b16 %v3591, %v3587
    %v5000 = vpack.c.b16 %v3592, %v3588
    %v5001 = vpack.c.b16 %v3593, %v3589
    %v5002 = vpack.c.b16 %v3598, %v3594
    %v5003 = vpack.c.b16 %v3599, %v3595
    %v5004 = vpack.c.b16 %v3600, %v3596
    %v5005 = vpack.c.b16 %v3601, %v3597
    %v5006 = vpack.c.b16 %v3606, %v3602
    %v5007 = vpack.c.b16 %v3607, %v3603
    %v5008 = vpack.c.b16 %v3608, %v3604
    %v5009 = vpack.c.b16 %v3609, %v3605
    %v5010 = vpack.c.b16 %v3614, %v3610
    %v5011 = vpack.c.b16 %v3615, %v3611
    %v5012 = vpack.c.b16 %v3616, %v3612
    %v5013 = vpack.c.b16 %v3617, %v3613
    %v5014 = vpack.c.b16 %v3622, %v3618
    %v5015 = vpack.c.b16 %v3623, %v3619
    %v5016 = vpack.c.b16 %v3624, %v3620
    %v5017 = vpack.c.b16 %v3625, %v3621
    %v5018 = vpack.c.b16 %v3630, %v3626
    %v5019 = vpack.c.b16 %v3631, %v3627
    %v5020 = vpack.c.b16 %v3632, %v3628
    %v5021 = vpack.c.b16 %v3633, %v3629
    %v5022 = vpack.c.b16 %v3638, %v3634
    %v5023 = vpack.c.b16 %v3639, %v3635
    %v5024 = vpack.c.b16 %v3640, %v3636
    %v5025 = vpack.c.b16 %v3641, %v3637
    %v5026 = vpack.c.b16 %v3646, %v3642
    %v5027 = vpack.c.b16 %v3647, %v3643
    %v5028 = vpack.c.b16 %v3648, %v3644
    %v5029 = vpack.c.b16 %v3649, %v3645
    %v5030 = vpack.c.b16 %v3654, %v3650
    %v5031 = vpack.c.b16 %v3655, %v3651
    %v5032 = vpack.c.b16 %v3656, %v3652
    %v5033 = vpack.c.b16 %v3657, %v3653
    %v5034 = vpack.c.b16 %v3662, %v3658
    %v5035 = vpack.c.b16 %v3663, %v3659
    %v5036 = vpack.c.b16 %v3664, %v3660
    %v5037 = vpack.c.b16 %v3665, %v3661
    %v5038 = vpack.c.b16 %v3670, %v3666
    %v5039 = vpack.c.b16 %v3671, %v3667
    %v5040 = vpack.c.b16 %v3672, %v3668
    %v5041 = vpack.c.b16 %v3673, %v3669
    %v5042 = vpack.c.b16 %v3678, %v3674
    %v5043 = vpack.c.b16 %v3679, %v3675
    %v5044 = vpack.c.b16 %v3680, %v3676
    %v5045 = vpack.c.b16 %v3681, %v3677
    %v5046 = vpack.c.b16 %v3686, %v3682
    %v5047 = vpack.c.b16 %v3687, %v3683
    %v5048 = vpack.c.b16 %v3688, %v3684
    %v5049 = vpack.c.b16 %v3689, %v3685
    %v5050 = vpack.c.b16 %v3694, %v3690
    %v5051 = vpack.c.b16 %v3695, %v3691
    %v5052 = vpack.c.b16 %v3696, %v3692
    %v5053 = vpack.c.b16 %v3697, %v3693
    %v5054 = vpack.c.b16 %v3702, %v3698
    %v5055 = vpack.c.b16 %v3703, %v3699
    %v5056 = vpack.c.b16 %v3704, %v3700
    %v5057 = vpack.c.b16 %v3705, %v3701
    %v5058 = vpack.c.b16 %v3710, %v3706
    %v5059 = vpack.c.b16 %v3711, %v3707
    %v5060 = vpack.c.b16 %v3712, %v3708
    %v5061 = vpack.c.b16 %v3713, %v3709
    %v5062 = vpack.c.b16 %v3718, %v3714
    %v5063 = vpack.c.b16 %v3719, %v3715
    %v5064 = vpack.c.b16 %v3720, %v3716
    %v5065 = vpack.c.b16 %v3721, %v3717
    %v5066 = vpack.c.b16 %v3726, %v3722
    %v5067 = vpack.c.b16 %v3727, %v3723
    %v5068 = vpack.c.b16 %v3728, %v3724
    %v5069 = vpack.c.b16 %v3729, %v3725
    %v5070 = vpack.c.b16 %v3734, %v3730
    %v5071 = vpack.c.b16 %v3735, %v3731
    %v5072 = vpack.c.b16 %v3736, %v3732
    %v5073 = vpack.c.b16 %v3737, %v3733
    %v5074 = vpack.c.b16 %v3742, %v3738
    %v5075 = vpack.c.b16 %v3743, %v3739
    %v5076 = vpack.c.b16 %v3744, %v3740
    %v5077 = vpack.c.b16 %v3745, %v3741
    %v5078 = vpack.c.b16 %v3750, %v3746
    %v5079 = vpack.c.b16 %v3751, %v3747
    %v5080 = vpack.c.b16 %v3752, %v3748
    %v5081 = vpack.c.b16 %v3753, %v3749
    %v5082 = vpack.c.b16 %v3758, %v3754
    %v5083 = vpack.c.b16 %v3759, %v3755
    %v5084 = vpack.c.b16 %v3760, %v3756
    %v5085 = vpack.c.b16 %v3761, %v3757
    %v5086 = vpack.c.b16 %v3766, %v3762
    %v5087 = vpack.c.b16 %v3767, %v3763
    %v5088 = vpack.c.b16 %v3768, %v3764
    %v5089 = vpack.c.b16 %v3769, %v3765
    %v5090 = vpack.c.b16 %v3774, %v3770
    %v5091 = vpack.c.b16 %v3775, %v3771
    %v5092 = vpack.c.b16 %v3776, %v3772
    %v5093 = vpack.c.b16 %v3777, %v3773
    %v5094 = vpack.c.b16 %v3782, %v3778
    %v5095 = vpack.c.b16 %v3783, %v3779
    %v5096 = vpack.c.b16 %v3784, %v3780
    %v5097 = vpack.c.b16 %v3785, %v3781
    %v5098 = vpack.c.b16 %v3790, %v3786
    %v5099 = vpack.c.b16 %v3791, %v3787
    %v5100 = vpack.c.b16 %v3792, %v3788
    %v5101 = vpack.c.b16 %v3793, %v3789
    %v5102 = vpack.c.b16 %v3798, %v3794
    %v5103 = vpack.c.b16 %v3799, %v3795
    %v5104 = vpack.c.b16 %v3800, %v3796
    %v5105 = vpack.c.b16 %v3801, %v3797
    %v5106 = vpack.c.b16 %v3806, %v3802
    %v5107 = vpack.c.b16 %v3807, %v3803
    %v5108 = vpack.c.b16 %v3808, %v3804
    %v5109 = vpack.c.b16 %v3809, %v3805
    %v5110 = vpack.c.b16 %v3814, %v3810
    %v5111 = vpack.c.b16 %v3815, %v3811
    %v5112 = vpack.c.b16 %v3816, %v3812
    %v5113 = vpack.c.b16 %v3817, %v3813
    %v5114 = vpack.c.b16 %v3822, %v3818
    %v5115 = vpack.c.b16 %v3823, %v3819
    %v5116 = vpack.c.b16 %v3824, %v3820
    %v5117 = vpack.c.b16 %v3825, %v3821
    %v5118 = vpack.c.b16 %v3830, %v3826
    %v5119 = vpack.c.b16 %v3831, %v3827
    %v5120 = vpack.c.b16 %v3832, %v3828
    %v5121 = vpack.c.b16 %v3833, %v3829
    %v5122 = vpack.c.b16 %v3838, %v3834
    %v5123 = vpack.c.b16 %v3839, %v3835
    %v5124 = vpack.c.b16 %v3840, %v3836
    %v5125 = vpack.c.b16 %v3841, %v3837
    %v5126 = vpack.c.b16 %v3846, %v3842
    %v5127 = vpack.c.b16 %v3847, %v3843
    %v5128 = vpack.c.b16 %v3848, %v3844
    %v5129 = vpack.c.b16 %v3849, %v3845
    %v5130 = vpack.c.b16 %v3854, %v3850
    %v5131 = vpack.c.b16 %v3855, %v3851
    %v5132 = vpack.c.b16 %v3856, %v3852
    %v5133 = vpack.c.b16 %v3857, %v3853
    %v5134 = vpack.c.b16 %v3862, %v3858
    %v5135 = vpack.c.b16 %v3863, %v3859
    %v5136 = vpack.c.b16 %v3864, %v3860
    %v5137 = vpack.c.b16 %v3865, %v3861
    %v5138 = vpack.c.b16 %v3870, %v3866
    %v5139 = vpack.c.b16 %v3871, %v3867
    %v5140 = vpack.c.b16 %v3872, %v3868
    %v5141 = vpack.c.b16 %v3873, %v3869
    %v5142 = vpack.c.b16 %v3878, %v3874
    %v5143 = vpack.c.b16 %v3879, %v3875
    %v5144 = vpack.c.b16 %v3880, %v3876
    %v5145 = vpack.c.b16 %v3881, %v3877
    %v5146 = vpack.c.b16 %v3886, %v3882
    %v5147 = vpack.c.b16 %v3887, %v3883
    %v5148 = vpack.c.b16 %v3888, %v3884
    %v5149 = vpack.c.b16 %v3889, %v3885
    %v5150 = vpack.c.b16 %v3894, %v3890
    %v5151 = vpack.c.b16 %v3895, %v3891
    %v5152 = vpack.c.b16 %v3896, %v3892
    %v5153 = vpack.c.b16 %v3897, %v3893
    %v5154 = vpack.c.b16 %v3902, %v3898
    %v5155 = vpack.c.b16 %v3903, %v3899
    %v5156 = vpack.c.b16 %v3904, %v3900
    %v5157 = vpack.c.b16 %v3905, %v3901
    %v5158 = vpack.c.b16 %v3910, %v3906
    %v5159 = vpack.c.b16 %v3911, %v3907
    %v5160 = vpack.c.b16 %v3912, %v3908
    %v5161 = vpack.c.b16 %v3913, %v3909
    %v5162 = vpack.c.b16 %v3918, %v3914
    %v5163 = vpack.c.b16 %v3919, %v3915
    %v5164 = vpack.c.b16 %v3920, %v3916
    %v5165 = vpack.c.b16 %v3921, %v3917
    %v5166 = vpack.c.b16 %v3926, %v3922
    %v5167 = vpack.c.b16 %v3927, %v3923
    %v5168 = vpack.c.b16 %v3928, %v3924
    %v5169 = vpack.c.b16 %v3929, %v3925
    %v5170 = vpack.c.b16 %v3934, %v3930
    %v5171 = vpack.c.b16 %v3935, %v3931
    %v5172 = vpack.c.b16 %v3936, %v3932
    %v5173 = vpack.c.b16 %v3937, %v3933
    %v5174 = vpack.c.b16 %v3942, %v3938
    %v5175 = vpack.c.b16 %v3943, %v3939
    %v5176 = vpack.c.b16 %v3944, %v3940
    %v5177 = vpack.c.b16 %v3945, %v3941
    %v5178 = vpack.c.b16 %v3950, %v3946
    %v5179 = vpack.c.b16 %v3951, %v3947
    %v5180 = vpack.c.b16 %v3952, %v3948
    %v5181 = vpack.c.b16 %v3953, %v3949
    %v5182 = vpack.c.b16 %v3958, %v3954
    %v5183 = vpack.c.b16 %v3959, %v3955
    %v5184 = vpack.c.b16 %v3960, %v3956
    %v5185 = vpack.c.b16 %v3961, %v3957
    %v5186 = vpack.c.b16 %v3966, %v3962
    %v5187 = vpack.c.b16 %v3967, %v3963
    %v5188 = vpack.c.b16 %v3968, %v3964
    %v5189 = vpack.c.b16 %v3969, %v3965
    %v5190 = vpack.c.b16 %v3974, %v3970
    %v5191 = vpack.c.b16 %v3975, %v3971
    %v5192 = vpack.c.b16 %v3976, %v3972
    %v5193 = vpack.c.b16 %v3977, %v3973
    %v5194 = vpack.c.b16 %v3982, %v3978
    %v5195 = vpack.c.b16 %v3983, %v3979
    %v5196 = vpack.c.b16 %v3984, %v3980
    %v5197 = vpack.c.b16 %v3985, %v3981
    %v5198 = vpack.c.b16 %v3990, %v3986
    %v5199 = vpack.c.b16 %v3991, %v3987
    %v5200 = vpack.c.b16 %v3992, %v3988
    %v5201 = vpack.c.b16 %v3993, %v3989
    %v5202 = vpack.c.b16 %v3998, %v3994
    %v5203 = vpack.c.b16 %v3999, %v3995
    %v5204 = vpack.c.b16 %v4000, %v3996
    %v5205 = vpack.c.b16 %v4001, %v3997
    %v5206 = vpack.c.b16 %v4006, %v4002
    %v5207 = vpack.c.b16 %v4007, %v4003
    %v5208 = vpack.c.b16 %v4008, %v4004
    %v5209 = vpack.c.b16 %v4009, %v4005
    %v5210 = vpack.c.b16 %v4014, %v4010
    %v5211 = vpack.c.b16 %v4015, %v4011
    %v5212 = vpack.c.b16 %v4016, %v4012
    %v5213 = vpack.c.b16 %v4017, %v4013
    %v5214 = vpack.c.b16 %v4022, %v4018
    %v5215 = vpack.c.b16 %v4023, %v4019
    %v5216 = vpack.c.b16 %v4024, %v4020
    %v5217 = vpack.c.b16 %v4025, %v4021
    %v5218 = vpack.c.b16 %v4030, %v4026
    %v5219 = vpack.c.b16 %v4031, %v4027
    %v5220 = vpack.c.b16 %v4032, %v4028
    %v5221 = vpack.c.b16 %v4033, %v4029
    %v5222 = vpack.c.b16 %v4038, %v4034
    %v5223 = vpack.c.b16 %v4039, %v4035
    %v5224 = vpack.c.b16 %v4040, %v4036
    %v5225 = vpack.c.b16 %v4041, %v4037
    %v5226 = vpack.c.b16 %v4046, %v4042
    %v5227 = vpack.c.b16 %v4047, %v4043
    %v5228 = vpack.c.b16 %v4048, %v4044
    %v5229 = vpack.c.b16 %v4049, %v4045
    %v5230 = vpack.c.b16 %v4054, %v4050
    %v5231 = vpack.c.b16 %v4055, %v4051
    %v5232 = vpack.c.b16 %v4056, %v4052
    %v5233 = vpack.c.b16 %v4057, %v4053
    %v5234 = vpack.c.b16 %v4062, %v4058
    %v5235 = vpack.c.b16 %v4063, %v4059
    %v5236 = vpack.c.b16 %v4064, %v4060
    %v5237 = vpack.c.b16 %v4065, %v4061
    %v5238 = vpack.c.b16 %v4070, %v4066
    %v5239 = vpack.c.b16 %v4071, %v4067
    %v5240 = vpack.c.b16 %v4072, %v4068
    %v5241 = vpack.c.b16 %v4073, %v4069
    %v5242 = vpack.c.b16 %v4078, %v4074
    %v5243 = vpack.c.b16 %v4079, %v4075
    %v5244 = vpack.c.b16 %v4080, %v4076
    %v5245 = vpack.c.b16 %v4081, %v4077
    %v5246 = vpack.c.b16 %v4086, %v4082
    %v5247 = vpack.c.b16 %v4087, %v4083
    %v5248 = vpack.c.b16 %v4088, %v4084
    %v5249 = vpack.c.b16 %v4089, %v4085
    %v5250 = vpack.c.b16 %v4094, %v4090
    %v5251 = vpack.c.b16 %v4095, %v4091
    %v5252 = vpack.c.b16 %v4096, %v4092
    %v5253 = vpack.c.b16 %v4097, %v4093
    %v5254 = vpack.c.b16 %v4102, %v4098
    %v5255 = vpack.c.b16 %v4103, %v4099
    %v5256 = vpack.c.b16 %v4104, %v4100
    %v5257 = vpack.c.b16 %v4105, %v4101
    %v5258 = vpack.c.b16 %v4110, %v4106
    %v5259 = vpack.c.b16 %v4111, %v4107
    %v5260 = vpack.c.b16 %v4112, %v4108
    %v5261 = vpack.c.b16 %v4113, %v4109
    %v5262 = vpack.c.b16 %v4118, %v4114
    %v5263 = vpack.c.b16 %v4119, %v4115
    %v5264 = vpack.c.b16 %v4120, %v4116
    %v5265 = vpack.c.b16 %v4121, %v4117
    %v5266 = vpack.c.b16 %v4126, %v4122
    %v5267 = vpack.c.b16 %v4127, %v4123
    %v5268 = vpack.c.b16 %v4128, %v4124
    %v5269 = vpack.c.b16 %v4129, %v4125
    %v5270 = vpack.c.b16 %v4134, %v4130
    %v5271 = vpack.c.b16 %v4135, %v4131
    %v5272 = vpack.c.b16 %v4136, %v4132
    %v5273 = vpack.c.b16 %v4137, %v4133
    %v5274 = vpack.c.b16 %v4142, %v4138
    %v5275 = vpack.c.b16 %v4143, %v4139
    %v5276 = vpack.c.b16 %v4144, %v4140
    %v5277 = vpack.c.b16 %v4145, %v4141
    %v5278 = vpack.c.b16 %v4150, %v4146
    %v5279 = vpack.c.b16 %v4151, %v4147
    %v5280 = vpack.c.b16 %v4152, %v4148
    %v5281 = vpack.c.b16 %v4153, %v4149
    %v5282 = vpack.c.b16 %v4158, %v4154
    %v5283 = vpack.c.b16 %v4159, %v4155
    %v5284 = vpack.c.b16 %v4160, %v4156
    %v5285 = vpack.c.b16 %v4161, %v4157
    %v5286 = vpack.c.b16 %v4166, %v4162
    %v5287 = vpack.c.b16 %v4167, %v4163
    %v5288 = vpack.c.b16 %v4168, %v4164
    %v5289 = vpack.c.b16 %v4169, %v4165
    %v5290 = vpack.c.b16 %v4174, %v4170
    %v5291 = vpack.c.b16 %v4175, %v4171
    %v5292 = vpack.c.b16 %v4176, %v4172
    %v5293 = vpack.c.b16 %v4177, %v4173
    %v5294 = vpack.c.b16 %v4182, %v4178
    %v5295 = vpack.c.b16 %v4183, %v4179
    %v5296 = vpack.c.b16 %v4184, %v4180
    %v5297 = vpack.c.b16 %v4185, %v4181
    %v5298 = vpack.c.b16 %v4190, %v4186
    %v5299 = vpack.c.b16 %v4191, %v4187
    %v5300 = vpack.c.b16 %v4192, %v4188
    %v5301 = vpack.c.b16 %v4193, %v4189
    %v5302 = vpack.c.b16 %v4198, %v4194
    %v5303 = vpack.c.b16 %v4199, %v4195
    %v5304 = vpack.c.b16 %v4200, %v4196
    %v5305 = vpack.c.b16 %v4201, %v4197
    %v5306 = vpack.c.b16 %v4206, %v4202
    %v5307 = vpack.c.b16 %v4207, %v4203
    %v5308 = vpack.c.b16 %v4208, %v4204
    %v5309 = vpack.c.b16 %v4209, %v4205
    %v5310 = vpack.c.b16 %v4214, %v4210
    %v5311 = vpack.c.b16 %v4215, %v4211
    %v5312 = vpack.c.b16 %v4216, %v4212
    %v5313 = vpack.c.b16 %v4217, %v4213
    %v5314 = vpack.c.b16 %v4222, %v4218
    %v5315 = vpack.c.b16 %v4223, %v4219
    %v5316 = vpack.c.b16 %v4224, %v4220
    %v5317 = vpack.c.b16 %v4225, %v4221
    %v5318 = vpack.c.b16 %v4230, %v4226
    %v5319 = vpack.c.b16 %v4231, %v4227
    %v5320 = vpack.c.b16 %v4232, %v4228
    %v5321 = vpack.c.b16 %v4233, %v4229
    %v5322 = vpack.c.b16 %v4238, %v4234
    %v5323 = vpack.c.b16 %v4239, %v4235
    %v5324 = vpack.c.b16 %v4240, %v4236
    %v5325 = vpack.c.b16 %v4241, %v4237
    %v5326 = vpack.c.b16 %v4246, %v4242
    %v5327 = vpack.c.b16 %v4247, %v4243
    %v5328 = vpack.c.b16 %v4248, %v4244
    %v5329 = vpack.c.b16 %v4249, %v4245
    %v5330 = vpack.c.b16 %v4254, %v4250
    %v5331 = vpack.c.b16 %v4255, %v4251
    %v5332 = vpack.c.b16 %v4256, %v4252
    %v5333 = vpack.c.b16 %v4257, %v4253
    %v5334 = vpack.c.b16 %v4262, %v4258
    %v5335 = vpack.c.b16 %v4263, %v4259
    %v5336 = vpack.c.b16 %v4264, %v4260
    %v5337 = vpack.c.b16 %v4265, %v4261
    %v5338 = vpack.c.b16 %v4270, %v4266
    %v5339 = vpack.c.b16 %v4271, %v4267
    %v5340 = vpack.c.b16 %v4272, %v4268
    %v5341 = vpack.c.b16 %v4273, %v4269
    %v5342 = vpack.c.b16 %v4278, %v4274
    %v5343 = vpack.c.b16 %v4279, %v4275
    %v5344 = vpack.c.b16 %v4280, %v4276
    %v5345 = vpack.c.b16 %v4281, %v4277
    %v5346 = vpack.c.b16 %v4286, %v4282
    %v5347 = vpack.c.b16 %v4287, %v4283
    %v5348 = vpack.c.b16 %v4288, %v4284
    %v5349 = vpack.c.b16 %v4289, %v4285
    %v5350 = vpack.c.b16 %v4294, %v4290
    %v5351 = vpack.c.b16 %v4295, %v4291
    %v5352 = vpack.c.b16 %v4296, %v4292
    %v5353 = vpack.c.b16 %v4297, %v4293
    %v5354 = vpack.c.b16 %v4302, %v4298
    %v5355 = vpack.c.b16 %v4303, %v4299
    %v5356 = vpack.c.b16 %v4304, %v4300
    %v5357 = vpack.c.b16 %v4305, %v4301
    %v5358 = vpack.c.b16 %v4310, %v4306
    %v5359 = vpack.c.b16 %v4311, %v4307
    %v5360 = vpack.c.b16 %v4312, %v4308
    %v5361 = vpack.c.b16 %v4313, %v4309
    %v5362 = vpack.c.b16 %v4318, %v4314
    %v5363 = vpack.c.b16 %v4319, %v4315
    %v5364 = vpack.c.b16 %v4320, %v4316
    %v5365 = vpack.c.b16 %v4321, %v4317
    %v5366 = vpack.c.b16 %v4326, %v4322
    %v5367 = vpack.c.b16 %v4327, %v4323
    %v5368 = vpack.c.b16 %v4328, %v4324
    %v5369 = vpack.c.b16 %v4329, %v4325
    %v5370 = vpack.c.b16 %v4334, %v4330
    %v5371 = vpack.c.b16 %v4335, %v4331
    %v5372 = vpack.c.b16 %v4336, %v4332
    %v5373 = vpack.c.b16 %v4337, %v4333
    %v5374 = vpack.c.b16 %v4342, %v4338
    %v5375 = vpack.c.b16 %v4343, %v4339
    %v5376 = vpack.c.b16 %v4344, %v4340
    %v5377 = vpack.c.b16 %v4345, %v4341
    %v5378 = vpack.c.b16 %v4350, %v4346
    %v5379 = vpack.c.b16 %v4351, %v4347
    %v5380 = vpack.c.b16 %v4352, %v4348
    %v5381 = vpack.c.b16 %v4353, %v4349
    %v5382 = vpack.c.b16 %v4358, %v4354
    %v5383 = vpack.c.b16 %v4359, %v4355
    %v5384 = vpack.c.b16 %v4360, %v4356
    %v5385 = vpack.c.b16 %v4361, %v4357
    %6410 = vmatprep.subr.bf16.mxu0 %v4363
    %6411 = vmatpush1.bf16.msra.mxu0 %v4362
    %6412 = vmatprep.subr.bf16.mxu0 %v4367
    %6413 = vmatpush1.bf16.msra.mxu0 %v4366
    %6414 = vmatprep.subr.bf16.mxu0 %v4371
    %6415 = vmatpush1.bf16.msra.mxu0 %v4370
    %6416 = vmatprep.subr.bf16.mxu0 %v4375
    %6417 = vmatpush1.bf16.msra.mxu0 %v4374
    %6418 = vmatprep.subr.bf16.mxu0 %v4379
    %6419 = vmatpush1.bf16.msra.mxu0 %v4378
    %6420 = vmatprep.subr.bf16.mxu0 %v4383
    %6421 = vmatpush1.bf16.msra.mxu0 %v4382
    %6422 = vmatprep.subr.bf16.mxu0 %v4387
    %6423 = vmatpush1.bf16.msra.mxu0 %v4386
    %6424 = vmatprep.subr.bf16.mxu0 %v4391
    %6425 = vmatpush1.bf16.msra.mxu0 %v4390
    %6426 = vmatprep.subr.bf16.mxu0 %v4395
    %6427 = vmatpush1.bf16.msra.mxu0 %v4394
    %6428 = vmatprep.subr.bf16.mxu0 %v4399
    %6429 = vmatpush1.bf16.msra.mxu0 %v4398
    %6430 = vmatprep.subr.bf16.mxu0 %v4403
    %6431 = vmatpush1.bf16.msra.mxu0 %v4402
    %6432 = vmatprep.subr.bf16.mxu0 %v4407
    %6433 = vmatpush1.bf16.msra.mxu0 %v4406
    %6434 = vmatprep.subr.bf16.mxu0 %v4411
    %6435 = vmatpush1.bf16.msra.mxu0 %v4410
    %6436 = vmatprep.subr.bf16.mxu0 %v4415
    %6437 = vmatpush1.bf16.msra.mxu0 %v4414
    %6438 = vmatprep.subr.bf16.mxu0 %v4419
    %6439 = vmatpush1.bf16.msra.mxu0 %v4418
    %6440 = vmatprep.subr.bf16.mxu0 %v4423
    %6441 = vmatpush1.bf16.msra.mxu0 %v4422
    %6442 = vmatprep.mubr.bf16.mxu0 %v213
    %6443 = vmatmul.mubr.bf16.gmra.mrb[0].mxu0 %v212
    %v6444 = vpop.f32.mrb[0].mxu0
    %v6445 = vadd.f32 %v1273, %v6444
    %v6446 = vpop.f32.mrb[0].mxu0
    %v6447 = vadd.f32 %v1277, %v6446
    %v6448 = vpop.f32.mrb[0].mxu0
    %v6449 = vpop.f32.mrb[0].mxu0
    %6450 = vdwg.mxu0
    %6451 = vmatprep.subr.bf16.mxu0 %v4427
    %6452 = vmatpush1.bf16.msra.mxu0 %v4426
    %6453 = vmatprep.subr.bf16.mxu0 %v4431
    %6454 = vmatpush1.bf16.msra.mxu0 %v4430
    %6455 = vmatprep.subr.bf16.mxu0 %v4435
    %6456 = vmatpush1.bf16.msra.mxu0 %v4434
    %6457 = vmatprep.subr.bf16.mxu0 %v4439
    %6458 = vmatpush1.bf16.msra.mxu0 %v4438
    %6459 = vmatprep.subr.bf16.mxu0 %v4443
    %6460 = vmatpush1.bf16.msra.mxu0 %v4442
    %6461 = vmatprep.subr.bf16.mxu0 %v4447
    %6462 = vmatpush1.bf16.msra.mxu0 %v4446
    %6463 = vmatprep.subr.bf16.mxu0 %v4451
    %6464 = vmatpush1.bf16.msra.mxu0 %v4450
    %6465 = vmatprep.subr.bf16.mxu0 %v4455
    %6466 = vmatpush1.bf16.msra.mxu0 %v4454
    %6467 = vmatprep.subr.bf16.mxu0 %v4459
    %6468 = vmatpush1.bf16.msra.mxu0 %v4458
    %6469 = vmatprep.subr.bf16.mxu0 %v4463
    %6470 = vmatpush1.bf16.msra.mxu0 %v4462
    %6471 = vmatprep.subr.bf16.mxu0 %v4467
    %6472 = vmatpush1.bf16.msra.mxu0 %v4466
    %6473 = vmatprep.subr.bf16.mxu0 %v4471
    %6474 = vmatpush1.bf16.msra.mxu0 %v4470
    %6475 = vmatprep.subr.bf16.mxu0 %v4475
    %6476 = vmatpush1.bf16.msra.mxu0 %v4474
    %6477 = vmatprep.subr.bf16.mxu0 %v4479
    %6478 = vmatpush1.bf16.msra.mxu0 %v4478
    %6479 = vmatprep.subr.bf16.mxu0 %v4483
    %6480 = vmatpush1.bf16.msra.mxu0 %v4482
    %6481 = vmatprep.subr.bf16.mxu0 %v4487
    %6482 = vmatpush1.bf16.msra.mxu0 %v4486
    %6483 = vmatprep.mubr.bf16.mxu0 %v215
    %6484 = vmatmul.mubr.bf16.gmra.mrb[0].mxu0 %v214
    %v6485 = vpop.f32.mrb[0].mxu0
    %v6486 = vadd.f32 %v6445, %v6485
    %v6487 = vpop.f32.mrb[0].mxu0
    %v6488 = vadd.f32 %v6447, %v6487
    %v6489 = vpop.f32.mrb[0].mxu0
    %v6490 = vpop.f32.mrb[0].mxu0
    %6491 = vdwg.mxu0
    %6492 = vmatprep.subr.bf16.mxu0 %v4491
    %6493 = vmatpush1.bf16.msra.mxu0 %v4490
    %6494 = vmatprep.subr.bf16.mxu0 %v4495
    %6495 = vmatpush1.bf16.msra.mxu0 %v4494
    %6496 = vmatprep.subr.bf16.mxu0 %v4499
    %6497 = vmatpush1.bf16.msra.mxu0 %v4498
    %6498 = vmatprep.subr.bf16.mxu0 %v4503
    %6499 = vmatpush1.bf16.msra.mxu0 %v4502
    %6500 = vmatprep.subr.bf16.mxu0 %v4507
    %6501 = vmatpush1.bf16.msra.mxu0 %v4506
    %6502 = vmatprep.subr.bf16.mxu0 %v4511
    %6503 = vmatpush1.bf16.msra.mxu0 %v4510
    %6504 = vmatprep.subr.bf16.mxu0 %v4515
    %6505 = vmatpush1.bf16.msra.mxu0 %v4514
    %6506 = vmatprep.subr.bf16.mxu0 %v4519
    %6507 = vmatpush1.bf16.msra.mxu0 %v4518
    %6508 = vmatprep.subr.bf16.mxu0 %v4523
    %6509 = vmatpush1.bf16.msra.mxu0 %v4522
    %6510 = vmatprep.subr.bf16.mxu0 %v4527
    %6511 = vmatpush1.bf16.msra.mxu0 %v4526
    %6512 = vmatprep.subr.bf16.mxu0 %v4531
    %6513 = vmatpush1.bf16.msra.mxu0 %v4530
    %6514 = vmatprep.subr.bf16.mxu0 %v4535
    %6515 = vmatpush1.bf16.msra.mxu0 %v4534
    %6516 = vmatprep.subr.bf16.mxu0 %v4539
    %6517 = vmatpush1.bf16.msra.mxu0 %v4538
    %6518 = vmatprep.subr.bf16.mxu0 %v4543
    %6519 = vmatpush1.bf16.msra.mxu0 %v4542
    %6520 = vmatprep.subr.bf16.mxu0 %v4547
    %6521 = vmatpush1.bf16.msra.mxu0 %v4546
    %6522 = vmatprep.subr.bf16.mxu0 %v4551
    %6523 = vmatpush1.bf16.msra.mxu0 %v4550
    %6524 = vmatprep.mubr.bf16.mxu0 %v217
    %6525 = vmatmul.mubr.bf16.gmra.mrb[0].mxu0 %v216
    %v6526 = vpop.f32.mrb[0].mxu0
    %v6527 = vadd.f32 %v6486, %v6526
    %v6528 = vpop.f32.mrb[0].mxu0
    %v6529 = vadd.f32 %v6488, %v6528
    %v6530 = vpop.f32.mrb[0].mxu0
    %v6531 = vpop.f32.mrb[0].mxu0
    %6532 = vdwg.mxu0
    %6533 = vmatprep.subr.bf16.mxu0 %v4555
    %6534 = vmatpush1.bf16.msra.mxu0 %v4554
    %6535 = vmatprep.subr.bf16.mxu0 %v4559
    %6536 = vmatpush1.bf16.msra.mxu0 %v4558
    %6537 = vmatprep.subr.bf16.mxu0 %v4563
    %6538 = vmatpush1.bf16.msra.mxu0 %v4562
    %6539 = vmatprep.subr.bf16.mxu0 %v4567
    %6540 = vmatpush1.bf16.msra.mxu0 %v4566
    %6541 = vmatprep.subr.bf16.mxu0 %v4571
    %6542 = vmatpush1.bf16.msra.mxu0 %v4570
    %6543 = vmatprep.subr.bf16.mxu0 %v4575
    %6544 = vmatpush1.bf16.msra.mxu0 %v4574
    %6545 = vmatprep.subr.bf16.mxu0 %v4579
    %6546 = vmatpush1.bf16.msra.mxu0 %v4578
    %6547 = vmatprep.subr.bf16.mxu0 %v4583
    %6548 = vmatpush1.bf16.msra.mxu0 %v4582
    %6549 = vmatprep.subr.bf16.mxu0 %v4587
    %6550 = vmatpush1.bf16.msra.mxu0 %v4586
    %6551 = vmatprep.subr.bf16.mxu0 %v4591
    %6552 = vmatpush1.bf16.msra.mxu0 %v4590
    %6553 = vmatprep.subr.bf16.mxu0 %v4595
    %6554 = vmatpush1.bf16.msra.mxu0 %v4594
    %6555 = vmatprep.subr.bf16.mxu0 %v4599
    %6556 = vmatpush1.bf16.msra.mxu0 %v4598
    %6557 = vmatprep.subr.bf16.mxu0 %v4603
    %6558 = vmatpush1.bf16.msra.mxu0 %v4602
    %6559 = vmatprep.subr.bf16.mxu0 %v4607
    %6560 = vmatpush1.bf16.msra.mxu0 %v4606
    %6561 = vmatprep.subr.bf16.mxu0 %v4611
    %6562 = vmatpush1.bf16.msra.mxu0 %v4610
    %6563 = vmatprep.subr.bf16.mxu0 %v4615
    %6564 = vmatpush1.bf16.msra.mxu0 %v4614
    %6565 = vmatprep.mubr.bf16.mxu0 %v219
    %6566 = vmatmul.mubr.bf16.gmra.mrb[0].mxu0 %v218
    %v6567 = vpop.f32.mrb[0].mxu0
    %v6568 = vadd.f32 %v6527, %v6567
    %v6569 = vpop.f32.mrb[0].mxu0
    %v6570 = vadd.f32 %v6529, %v6569
    %v6571 = vpop.f32.mrb[0].mxu0
    %v6572 = vpop.f32.mrb[0].mxu0
    %6573 = vdwg.mxu0
    %6574 = vmatprep.subr.bf16.mxu0 %v4619
    %6575 = vmatpush1.bf16.msra.mxu0 %v4618
    %6576 = vmatprep.subr.bf16.mxu0 %v4623
    %6577 = vmatpush1.bf16.msra.mxu0 %v4622
    %6578 = vmatprep.subr.bf16.mxu0 %v4627
    %6579 = vmatpush1.bf16.msra.mxu0 %v4626
    %6580 = vmatprep.subr.bf16.mxu0 %v4631
    %6581 = vmatpush1.bf16.msra.mxu0 %v4630
    %6582 = vmatprep.subr.bf16.mxu0 %v4635
    %6583 = vmatpush1.bf16.msra.mxu0 %v4634
    %6584 = vmatprep.subr.bf16.mxu0 %v4639
    %6585 = vmatpush1.bf16.msra.mxu0 %v4638
    %6586 = vmatprep.subr.bf16.mxu0 %v4643
    %6587 = vmatpush1.bf16.msra.mxu0 %v4642
    %6588 = vmatprep.subr.bf16.mxu0 %v4647
    %6589 = vmatpush1.bf16.msra.mxu0 %v4646
    %6590 = vmatprep.subr.bf16.mxu0 %v4651
    %6591 = vmatpush1.bf16.msra.mxu0 %v4650
    %6592 = vmatprep.subr.bf16.mxu0 %v4655
    %6593 = vmatpush1.bf16.msra.mxu0 %v4654
    %6594 = vmatprep.subr.bf16.mxu0 %v4659
    %6595 = vmatpush1.bf16.msra.mxu0 %v4658
    %6596 = vmatprep.subr.bf16.mxu0 %v4663
    %6597 = vmatpush1.bf16.msra.mxu0 %v4662
    %6598 = vmatprep.subr.bf16.mxu0 %v4667
    %6599 = vmatpush1.bf16.msra.mxu0 %v4666
    %6600 = vmatprep.subr.bf16.mxu0 %v4671
    %6601 = vmatpush1.bf16.msra.mxu0 %v4670
    %6602 = vmatprep.subr.bf16.mxu0 %v4675
    %6603 = vmatpush1.bf16.msra.mxu0 %v4674
    %6604 = vmatprep.subr.bf16.mxu0 %v4679
    %6605 = vmatpush1.bf16.msra.mxu0 %v4678
    %6606 = vmatprep.mubr.bf16.mxu0 %v221
    %6607 = vmatmul.mubr.bf16.gmra.mrb[0].mxu0 %v220
    %v6608 = vpop.f32.mrb[0].mxu0
    %v6609 = vadd.f32 %v6568, %v6608
    %v6610 = vpop.f32.mrb[0].mxu0
    %v6611 = vadd.f32 %v6570, %v6610
    %v6612 = vpop.f32.mrb[0].mxu0
    %v6613 = vpop.f32.mrb[0].mxu0
    %6614 = vdwg.mxu0
    %6615 = vmatprep.subr.bf16.mxu0 %v4683
    %6616 = vmatpush1.bf16.msra.mxu0 %v4682
    %6617 = vmatprep.subr.bf16.mxu0 %v4687
    %6618 = vmatpush1.bf16.msra.mxu0 %v4686
    %6619 = vmatprep.subr.bf16.mxu0 %v4691
    %6620 = vmatpush1.bf16.msra.mxu0 %v4690
    %6621 = vmatprep.subr.bf16.mxu0 %v4695
    %6622 = vmatpush1.bf16.msra.mxu0 %v4694
    %6623 = vmatprep.subr.bf16.mxu0 %v4699
    %6624 = vmatpush1.bf16.msra.mxu0 %v4698
    %6625 = vmatprep.subr.bf16.mxu0 %v4703
    %6626 = vmatpush1.bf16.msra.mxu0 %v4702
    %6627 = vmatprep.subr.bf16.mxu0 %v4707
    %6628 = vmatpush1.bf16.msra.mxu0 %v4706
    %6629 = vmatprep.subr.bf16.mxu0 %v4711
    %6630 = vmatpush1.bf16.msra.mxu0 %v4710
    %6631 = vmatprep.subr.bf16.mxu0 %v4715
    %6632 = vmatpush1.bf16.msra.mxu0 %v4714
    %6633 = vmatprep.subr.bf16.mxu0 %v4719
    %6634 = vmatpush1.bf16.msra.mxu0 %v4718
    %6635 = vmatprep.subr.bf16.mxu0 %v4723
    %6636 = vmatpush1.bf16.msra.mxu0 %v4722
    %6637 = vmatprep.subr.bf16.mxu0 %v4727
    %6638 = vmatpush1.bf16.msra.mxu0 %v4726
    %6639 = vmatprep.subr.bf16.mxu0 %v4731
    %6640 = vmatpush1.bf16.msra.mxu0 %v4730
    %6641 = vmatprep.subr.bf16.mxu0 %v4735
    %6642 = vmatpush1.bf16.msra.mxu0 %v4734
    %6643 = vmatprep.subr.bf16.mxu0 %v4739
    %6644 = vmatpush1.bf16.msra.mxu0 %v4738
    %6645 = vmatprep.subr.bf16.mxu0 %v4743
    %6646 = vmatpush1.bf16.msra.mxu0 %v4742
    %6647 = vmatprep.mubr.bf16.mxu0 %v223
    %6648 = vmatmul.mubr.bf16.gmra.mrb[0].mxu0 %v222
    %v6649 = vpop.f32.mrb[0].mxu0
    %v6650 = vadd.f32 %v6609, %v6649
    %v6651 = vpop.f32.mrb[0].mxu0
    %v6652 = vadd.f32 %v6611, %v6651
    %v6653 = vpop.f32.mrb[0].mxu0
    %v6654 = vpop.f32.mrb[0].mxu0
    %6655 = vdwg.mxu0
    %6656 = vmatprep.subr.bf16.mxu0 %v4747
    %6657 = vmatpush1.bf16.msra.mxu0 %v4746
    %6658 = vmatprep.subr.bf16.mxu0 %v4751
    %6659 = vmatpush1.bf16.msra.mxu0 %v4750
    %6660 = vmatprep.subr.bf16.mxu0 %v4755
    %6661 = vmatpush1.bf16.msra.mxu0 %v4754
    %6662 = vmatprep.subr.bf16.mxu0 %v4759
    %6663 = vmatpush1.bf16.msra.mxu0 %v4758
    %6664 = vmatprep.subr.bf16.mxu0 %v4763
    %6665 = vmatpush1.bf16.msra.mxu0 %v4762
    %6666 = vmatprep.subr.bf16.mxu0 %v4767
    %6667 = vmatpush1.bf16.msra.mxu0 %v4766
    %6668 = vmatprep.subr.bf16.mxu0 %v4771
    %6669 = vmatpush1.bf16.msra.mxu0 %v4770
    %6670 = vmatprep.subr.bf16.mxu0 %v4775
    %6671 = vmatpush1.bf16.msra.mxu0 %v4774
    %6672 = vmatprep.subr.bf16.mxu0 %v4779
    %6673 = vmatpush1.bf16.msra.mxu0 %v4778
    %6674 = vmatprep.subr.bf16.mxu0 %v4783
    %6675 = vmatpush1.bf16.msra.mxu0 %v4782
    %6676 = vmatprep.subr.bf16.mxu0 %v4787
    %6677 = vmatpush1.bf16.msra.mxu0 %v4786
    %6678 = vmatprep.subr.bf16.mxu0 %v4791
    %6679 = vmatpush1.bf16.msra.mxu0 %v4790
    %6680 = vmatprep.subr.bf16.mxu0 %v4795
    %6681 = vmatpush1.bf16.msra.mxu0 %v4794
    %6682 = vmatprep.subr.bf16.mxu0 %v4799
    %6683 = vmatpush1.bf16.msra.mxu0 %v4798
    %6684 = vmatprep.subr.bf16.mxu0 %v4803
    %6685 = vmatpush1.bf16.msra.mxu0 %v4802
    %6686 = vmatprep.subr.bf16.mxu0 %v4807
    %6687 = vmatpush1.bf16.msra.mxu0 %v4806
    %6688 = vmatprep.mubr.bf16.mxu0 %v225
    %6689 = vmatmul.mubr.bf16.gmra.mrb[0].mxu0 %v224
    %v6690 = vpop.f32.mrb[0].mxu0
    %v6691 = vadd.f32 %v6650, %v6690
    %v6692 = vpop.f32.mrb[0].mxu0
    %v6693 = vadd.f32 %v6652, %v6692
    %v6694 = vpop.f32.mrb[0].mxu0
    %v6695 = vpop.f32.mrb[0].mxu0
    %6696 = vdwg.mxu0
    %6697 = vmatprep.subr.bf16.mxu0 %v4811
    %6698 = vmatpush1.bf16.msra.mxu0 %v4810
    %6699 = vmatprep.subr.bf16.mxu0 %v4815
    %6700 = vmatpush1.bf16.msra.mxu0 %v4814
    %6701 = vmatprep.subr.bf16.mxu0 %v4819
    %6702 = vmatpush1.bf16.msra.mxu0 %v4818
    %6703 = vmatprep.subr.bf16.mxu0 %v4823
    %6704 = vmatpush1.bf16.msra.mxu0 %v4822
    %6705 = vmatprep.subr.bf16.mxu0 %v4827
    %6706 = vmatpush1.bf16.msra.mxu0 %v4826
    %6707 = vmatprep.subr.bf16.mxu0 %v4831
    %6708 = vmatpush1.bf16.msra.mxu0 %v4830
    %6709 = vmatprep.subr.bf16.mxu0 %v4835
    %6710 = vmatpush1.bf16.msra.mxu0 %v4834
    %6711 = vmatprep.subr.bf16.mxu0 %v4839
    %6712 = vmatpush1.bf16.msra.mxu0 %v4838
    %6713 = vmatprep.subr.bf16.mxu0 %v4843
    %6714 = vmatpush1.bf16.msra.mxu0 %v4842
    %6715 = vmatprep.subr.bf16.mxu0 %v4847
    %6716 = vmatpush1.bf16.msra.mxu0 %v4846
    %6717 = vmatprep.subr.bf16.mxu0 %v4851
    %6718 = vmatpush1.bf16.msra.mxu0 %v4850
    %6719 = vmatprep.subr.bf16.mxu0 %v4855
    %6720 = vmatpush1.bf16.msra.mxu0 %v4854
    %6721 = vmatprep.subr.bf16.mxu0 %v4859
    %6722 = vmatpush1.bf16.msra.mxu0 %v4858
    %6723 = vmatprep.subr.bf16.mxu0 %v4863
    %6724 = vmatpush1.bf16.msra.mxu0 %v4862
    %6725 = vmatprep.subr.bf16.mxu0 %v4867
    %6726 = vmatpush1.bf16.msra.mxu0 %v4866
    %6727 = vmatprep.subr.bf16.mxu0 %v4871
    %6728 = vmatpush1.bf16.msra.mxu0 %v4870
    %6729 = vmatprep.mubr.bf16.mxu0 %v227
    %6730 = vmatmul.mubr.bf16.gmra.mrb[0].mxu0 %v226
    %v6731 = vpop.f32.mrb[0].mxu0
    %v6732 = vadd.f32 %v6691, %v6731
    %v6733 = vpop.f32.mrb[0].mxu0
    %v6734 = vadd.f32 %v6693, %v6733
    %v6735 = vpop.f32.mrb[0].mxu0
    %v6736 = vpop.f32.mrb[0].mxu0
    %6737 = vdwg.mxu0
    %6738 = vmatprep.subr.bf16.mxu0 %v4875
    %6739 = vmatpush1.bf16.msra.mxu0 %v4874
    %6740 = vmatprep.subr.bf16.mxu0 %v4879
    %6741 = vmatpush1.bf16.msra.mxu0 %v4878
    %6742 = vmatprep.subr.bf16.mxu0 %v4883
    %6743 = vmatpush1.bf16.msra.mxu0 %v4882
    %6744 = vmatprep.subr.bf16.mxu0 %v4887
    %6745 = vmatpush1.bf16.msra.mxu0 %v4886
    %6746 = vmatprep.subr.bf16.mxu0 %v4891
    %6747 = vmatpush1.bf16.msra.mxu0 %v4890
    %6748 = vmatprep.subr.bf16.mxu0 %v4895
    %6749 = vmatpush1.bf16.msra.mxu0 %v4894
    %6750 = vmatprep.subr.bf16.mxu0 %v4899
    %6751 = vmatpush1.bf16.msra.mxu0 %v4898
    %6752 = vmatprep.subr.bf16.mxu0 %v4903
    %6753 = vmatpush1.bf16.msra.mxu0 %v4902
    %6754 = vmatprep.subr.bf16.mxu0 %v4907
    %6755 = vmatpush1.bf16.msra.mxu0 %v4906
    %6756 = vmatprep.subr.bf16.mxu0 %v4911
    %6757 = vmatpush1.bf16.msra.mxu0 %v4910
    %6758 = vmatprep.subr.bf16.mxu0 %v4915
    %6759 = vmatpush1.bf16.msra.mxu0 %v4914
    %6760 = vmatprep.subr.bf16.mxu0 %v4919
    %6761 = vmatpush1.bf16.msra.mxu0 %v4918
    %6762 = vmatprep.subr.bf16.mxu0 %v4923
    %6763 = vmatpush1.bf16.msra.mxu0 %v4922
    %6764 = vmatprep.subr.bf16.mxu0 %v4927
    %6765 = vmatpush1.bf16.msra.mxu0 %v4926
    %6766 = vmatprep.subr.bf16.mxu0 %v4931
    %6767 = vmatpush1.bf16.msra.mxu0 %v4930
    %6768 = vmatprep.subr.bf16.mxu0 %v4935
    %6769 = vmatpush1.bf16.msra.mxu0 %v4934
    %6770 = vmatprep.mubr.bf16.mxu0 %v229
    %6771 = vmatmul.mubr.bf16.gmra.mrb[0].mxu0 %v228
    %v6772 = vpop.f32.mrb[0].mxu0
    %v6773 = vadd.f32 %v6732, %v6772
    %v6774 = vpop.f32.mrb[0].mxu0
    %v6775 = vadd.f32 %v6734, %v6774
    %v6776 = vpop.f32.mrb[0].mxu0
    %v6777 = vpop.f32.mrb[0].mxu0
    %6778 = vdwg.mxu0
    %6779 = vmatprep.subr.bf16.mxu0 %v4939
    %6780 = vmatpush1.bf16.msra.mxu0 %v4938
    %6781 = vmatprep.subr.bf16.mxu0 %v4943
    %6782 = vmatpush1.bf16.msra.mxu0 %v4942
    %6783 = vmatprep.subr.bf16.mxu0 %v4947
    %6784 = vmatpush1.bf16.msra.mxu0 %v4946
    %6785 = vmatprep.subr.bf16.mxu0 %v4951
    %6786 = vmatpush1.bf16.msra.mxu0 %v4950
    %6787 = vmatprep.subr.bf16.mxu0 %v4955
    %6788 = vmatpush1.bf16.msra.mxu0 %v4954
    %6789 = vmatprep.subr.bf16.mxu0 %v4959
    %6790 = vmatpush1.bf16.msra.mxu0 %v4958
    %6791 = vmatprep.subr.bf16.mxu0 %v4963
    %6792 = vmatpush1.bf16.msra.mxu0 %v4962
    %6793 = vmatprep.subr.bf16.mxu0 %v4967
    %6794 = vmatpush1.bf16.msra.mxu0 %v4966
    %6795 = vmatprep.subr.bf16.mxu0 %v4971
    %6796 = vmatpush1.bf16.msra.mxu0 %v4970
    %6797 = vmatprep.subr.bf16.mxu0 %v4975
    %6798 = vmatpush1.bf16.msra.mxu0 %v4974
    %6799 = vmatprep.subr.bf16.mxu0 %v4979
    %6800 = vmatpush1.bf16.msra.mxu0 %v4978
    %6801 = vmatprep.subr.bf16.mxu0 %v4983
    %6802 = vmatpush1.bf16.msra.mxu0 %v4982
    %6803 = vmatprep.subr.bf16.mxu0 %v4987
    %6804 = vmatpush1.bf16.msra.mxu0 %v4986
    %6805 = vmatprep.subr.bf16.mxu0 %v4991
    %6806 = vmatpush1.bf16.msra.mxu0 %v4990
    %6807 = vmatprep.subr.bf16.mxu0 %v4995
    %6808 = vmatpush1.bf16.msra.mxu0 %v4994
    %6809 = vmatprep.subr.bf16.mxu0 %v4999
    %6810 = vmatpush1.bf16.msra.mxu0 %v4998
    %6811 = vmatprep.mubr.bf16.mxu0 %v231
    %6812 = vmatmul.mubr.bf16.gmra.mrb[0].mxu0 %v230
    %v6813 = vpop.f32.mrb[0].mxu0
    %v6814 = vadd.f32 %v6773, %v6813
    %v6815 = vpop.f32.mrb[0].mxu0
    %v6816 = vadd.f32 %v6775, %v6815
    %v6817 = vpop.f32.mrb[0].mxu0
    %v6818 = vpop.f32.mrb[0].mxu0
    %6819 = vdwg.mxu0
    %6820 = vmatprep.subr.bf16.mxu0 %v5003
    %6821 = vmatpush1.bf16.msra.mxu0 %v5002
    %6822 = vmatprep.subr.bf16.mxu0 %v5007
    %6823 = vmatpush1.bf16.msra.mxu0 %v5006
    %6824 = vmatprep.subr.bf16.mxu0 %v5011
    %6825 = vmatpush1.bf16.msra.mxu0 %v5010
    %6826 = vmatprep.subr.bf16.mxu0 %v5015
    %6827 = vmatpush1.bf16.msra.mxu0 %v5014
    %6828 = vmatprep.subr.bf16.mxu0 %v5019
    %6829 = vmatpush1.bf16.msra.mxu0 %v5018
    %6830 = vmatprep.subr.bf16.mxu0 %v5023
    %6831 = vmatpush1.bf16.msra.mxu0 %v5022
    %6832 = vmatprep.subr.bf16.mxu0 %v5027
    %6833 = vmatpush1.bf16.msra.mxu0 %v5026
    %6834 = vmatprep.subr.bf16.mxu0 %v5031
    %6835 = vmatpush1.bf16.msra.mxu0 %v5030
    %6836 = vmatprep.subr.bf16.mxu0 %v5035
    %6837 = vmatpush1.bf16.msra.mxu0 %v5034
    %6838 = vmatprep.subr.bf16.mxu0 %v5039
    %6839 = vmatpush1.bf16.msra.mxu0 %v5038
    %6840 = vmatprep.subr.bf16.mxu0 %v5043
    %6841 = vmatpush1.bf16.msra.mxu0 %v5042
    %6842 = vmatprep.subr.bf16.mxu0 %v5047
    %6843 = vmatpush1.bf16.msra.mxu0 %v5046
    %6844 = vmatprep.subr.bf16.mxu0 %v5051
    %6845 = vmatpush1.bf16.msra.mxu0 %v5050
    %6846 = vmatprep.subr.bf16.mxu0 %v5055
    %6847 = vmatpush1.bf16.msra.mxu0 %v5054
    %6848 = vmatprep.subr.bf16.mxu0 %v5059
    %6849 = vmatpush1.bf16.msra.mxu0 %v5058
    %6850 = vmatprep.subr.bf16.mxu0 %v5063
    %6851 = vmatpush1.bf16.msra.mxu0 %v5062
    %6852 = vmatprep.mubr.bf16.mxu0 %v233
    %6853 = vmatmul.mubr.bf16.gmra.mrb[0].mxu0 %v232
    %v6854 = vpop.f32.mrb[0].mxu0
    %v6855 = vadd.f32 %v6814, %v6854
    %v6856 = vpop.f32.mrb[0].mxu0
    %v6857 = vadd.f32 %v6816, %v6856
    %v6858 = vpop.f32.mrb[0].mxu0
    %v6859 = vpop.f32.mrb[0].mxu0
    %6860 = vdwg.mxu0
    %6861 = vmatprep.subr.bf16.mxu0 %v5067
    %6862 = vmatpush1.bf16.msra.mxu0 %v5066
    %6863 = vmatprep.subr.bf16.mxu0 %v5071
    %6864 = vmatpush1.bf16.msra.mxu0 %v5070
    %6865 = vmatprep.subr.bf16.mxu0 %v5075
    %6866 = vmatpush1.bf16.msra.mxu0 %v5074
    %6867 = vmatprep.subr.bf16.mxu0 %v5079
    %6868 = vmatpush1.bf16.msra.mxu0 %v5078
    %6869 = vmatprep.subr.bf16.mxu0 %v5083
    %6870 = vmatpush1.bf16.msra.mxu0 %v5082
    %6871 = vmatprep.subr.bf16.mxu0 %v5087
    %6872 = vmatpush1.bf16.msra.mxu0 %v5086
    %6873 = vmatprep.subr.bf16.mxu0 %v5091
    %6874 = vmatpush1.bf16.msra.mxu0 %v5090
    %6875 = vmatprep.subr.bf16.mxu0 %v5095
    %6876 = vmatpush1.bf16.msra.mxu0 %v5094
    %6877 = vmatprep.subr.bf16.mxu0 %v5099
    %6878 = vmatpush1.bf16.msra.mxu0 %v5098
    %6879 = vmatprep.subr.bf16.mxu0 %v5103
    %6880 = vmatpush1.bf16.msra.mxu0 %v5102
    %6881 = vmatprep.subr.bf16.mxu0 %v5107
    %6882 = vmatpush1.bf16.msra.mxu0 %v5106
    %6883 = vmatprep.subr.bf16.mxu0 %v5111
    %6884 = vmatpush1.bf16.msra.mxu0 %v5110
    %6885 = vmatprep.subr.bf16.mxu0 %v5115
    %6886 = vmatpush1.bf16.msra.mxu0 %v5114
    %6887 = vmatprep.subr.bf16.mxu0 %v5119
    %6888 = vmatpush1.bf16.msra.mxu0 %v5118
    %6889 = vmatprep.subr.bf16.mxu0 %v5123
    %6890 = vmatpush1.bf16.msra.mxu0 %v5122
    %6891 = vmatprep.subr.bf16.mxu0 %v5127
    %6892 = vmatpush1.bf16.msra.mxu0 %v5126
    %6893 = vmatprep.mubr.bf16.mxu0 %v235
    %6894 = vmatmul.mubr.bf16.gmra.mrb[0].mxu0 %v234
    %v6895 = vpop.f32.mrb[0].mxu0
    %v6896 = vadd.f32 %v6855, %v6895
    %v6897 = vpop.f32.mrb[0].mxu0
    %v6898 = vadd.f32 %v6857, %v6897
    %v6899 = vpop.f32.mrb[0].mxu0
    %v6900 = vpop.f32.mrb[0].mxu0
    %6901 = vdwg.mxu0
    %6902 = vmatprep.subr.bf16.mxu0 %v5131
    %6903 = vmatpush1.bf16.msra.mxu0 %v5130
    %6904 = vmatprep.subr.bf16.mxu0 %v5135
    %6905 = vmatpush1.bf16.msra.mxu0 %v5134
    %6906 = vmatprep.subr.bf16.mxu0 %v5139
    %6907 = vmatpush1.bf16.msra.mxu0 %v5138
    %6908 = vmatprep.subr.bf16.mxu0 %v5143
    %6909 = vmatpush1.bf16.msra.mxu0 %v5142
    %6910 = vmatprep.subr.bf16.mxu0 %v5147
    %6911 = vmatpush1.bf16.msra.mxu0 %v5146
    %6912 = vmatprep.subr.bf16.mxu0 %v5151
    %6913 = vmatpush1.bf16.msra.mxu0 %v5150
    %6914 = vmatprep.subr.bf16.mxu0 %v5155
    %6915 = vmatpush1.bf16.msra.mxu0 %v5154
    %6916 = vmatprep.subr.bf16.mxu0 %v5159
    %6917 = vmatpush1.bf16.msra.mxu0 %v5158
    %6918 = vmatprep.subr.bf16.mxu0 %v5163
    %6919 = vmatpush1.bf16.msra.mxu0 %v5162
    %6920 = vmatprep.subr.bf16.mxu0 %v5167
    %6921 = vmatpush1.bf16.msra.mxu0 %v5166
    %6922 = vmatprep.subr.bf16.mxu0 %v5171
    %6923 = vmatpush1.bf16.msra.mxu0 %v5170
    %6924 = vmatprep.subr.bf16.mxu0 %v5175
    %6925 = vmatpush1.bf16.msra.mxu0 %v5174
    %6926 = vmatprep.subr.bf16.mxu0 %v5179
    %6927 = vmatpush1.bf16.msra.mxu0 %v5178
    %6928 = vmatprep.subr.bf16.mxu0 %v5183
    %6929 = vmatpush1.bf16.msra.mxu0 %v5182
    %6930 = vmatprep.subr.bf16.mxu0 %v5187
    %6931 = vmatpush1.bf16.msra.mxu0 %v5186
    %6932 = vmatprep.subr.bf16.mxu0 %v5191
    %6933 = vmatpush1.bf16.msra.mxu0 %v5190
    %6934 = vmatprep.mubr.bf16.mxu0 %v237
    %6935 = vmatmul.mubr.bf16.gmra.mrb[0].mxu0 %v236
    %v6936 = vpop.f32.mrb[0].mxu0
    %v6937 = vadd.f32 %v6896, %v6936
    %v6938 = vpop.f32.mrb[0].mxu0
    %v6939 = vadd.f32 %v6898, %v6938
    %v6940 = vpop.f32.mrb[0].mxu0
    %v6941 = vpop.f32.mrb[0].mxu0
    %6942 = vdwg.mxu0
    %6943 = vmatprep.subr.bf16.mxu0 %v5195
    %6944 = vmatpush1.bf16.msra.mxu0 %v5194
    %6945 = vmatprep.subr.bf16.mxu0 %v5199
    %6946 = vmatpush1.bf16.msra.mxu0 %v5198
    %6947 = vmatprep.subr.bf16.mxu0 %v5203
    %6948 = vmatpush1.bf16.msra.mxu0 %v5202
    %6949 = vmatprep.subr.bf16.mxu0 %v5207
    %6950 = vmatpush1.bf16.msra.mxu0 %v5206
    %6951 = vmatprep.subr.bf16.mxu0 %v5211
    %6952 = vmatpush1.bf16.msra.mxu0 %v5210
    %6953 = vmatprep.subr.bf16.mxu0 %v5215
    %6954 = vmatpush1.bf16.msra.mxu0 %v5214
    %6955 = vmatprep.subr.bf16.mxu0 %v5219
    %6956 = vmatpush1.bf16.msra.mxu0 %v5218
    %6957 = vmatprep.subr.bf16.mxu0 %v5223
    %6958 = vmatpush1.bf16.msra.mxu0 %v5222
    %6959 = vmatprep.subr.bf16.mxu0 %v5227
    %6960 = vmatpush1.bf16.msra.mxu0 %v5226
    %6961 = vmatprep.subr.bf16.mxu0 %v5231
    %6962 = vmatpush1.bf16.msra.mxu0 %v5230
    %6963 = vmatprep.subr.bf16.mxu0 %v5235
    %6964 = vmatpush1.bf16.msra.mxu0 %v5234
    %6965 = vmatprep.subr.bf16.mxu0 %v5239
    %6966 = vmatpush1.bf16.msra.mxu0 %v5238
    %6967 = vmatprep.subr.bf16.mxu0 %v5243
    %6968 = vmatpush1.bf16.msra.mxu0 %v5242
    %6969 = vmatprep.subr.bf16.mxu0 %v5247
    %6970 = vmatpush1.bf16.msra.mxu0 %v5246
    %6971 = vmatprep.subr.bf16.mxu0 %v5251
    %6972 = vmatpush1.bf16.msra.mxu0 %v5250
    %6973 = vmatprep.subr.bf16.mxu0 %v5255
    %6974 = vmatpush1.bf16.msra.mxu0 %v5254
    %6975 = vmatprep.mubr.bf16.mxu0 %v239
    %6976 = vmatmul.mubr.bf16.gmra.mrb[0].mxu0 %v238
    %v6977 = vpop.f32.mrb[0].mxu0
    %v6978 = vadd.f32 %v6937, %v6977
    %v6979 = vpop.f32.mrb[0].mxu0
    %v6980 = vadd.f32 %v6939, %v6979
    %v6981 = vpop.f32.mrb[0].mxu0
    %v6982 = vpop.f32.mrb[0].mxu0
    %6983 = vdwg.mxu0
    %6984 = vmatprep.subr.bf16.mxu0 %v5259
    %6985 = vmatpush1.bf16.msra.mxu0 %v5258
    %6986 = vmatprep.subr.bf16.mxu0 %v5263
    %6987 = vmatpush1.bf16.msra.mxu0 %v5262
    %6988 = vmatprep.subr.bf16.mxu0 %v5267
    %6989 = vmatpush1.bf16.msra.mxu0 %v5266
    %6990 = vmatprep.subr.bf16.mxu0 %v5271
    %6991 = vmatpush1.bf16.msra.mxu0 %v5270
    %6992 = vmatprep.subr.bf16.mxu0 %v5275
    %6993 = vmatpush1.bf16.msra.mxu0 %v5274
    %6994 = vmatprep.subr.bf16.mxu0 %v5279
    %6995 = vmatpush1.bf16.msra.mxu0 %v5278
    %6996 = vmatprep.subr.bf16.mxu0 %v5283
    %6997 = vmatpush1.bf16.msra.mxu0 %v5282
    %6998 = vmatprep.subr.bf16.mxu0 %v5287
    %6999 = vmatpush1.bf16.msra.mxu0 %v5286
    %7000 = vmatprep.subr.bf16.mxu0 %v5291
    %7001 = vmatpush1.bf16.msra.mxu0 %v5290
    %7002 = vmatprep.subr.bf16.mxu0 %v5295
    %7003 = vmatpush1.bf16.msra.mxu0 %v5294
    %7004 = vmatprep.subr.bf16.mxu0 %v5299
    %7005 = vmatpush1.bf16.msra.mxu0 %v5298
    %7006 = vmatprep.subr.bf16.mxu0 %v5303
    %7007 = vmatpush1.bf16.msra.mxu0 %v5302
    %7008 = vmatprep.subr.bf16.mxu0 %v5307
    %7009 = vmatpush1.bf16.msra.mxu0 %v5306
    %7010 = vmatprep.subr.bf16.mxu0 %v5311
    %7011 = vmatpush1.bf16.msra.mxu0 %v5310
    %7012 = vmatprep.subr.bf16.mxu0 %v5315
    %7013 = vmatpush1.bf16.msra.mxu0 %v5314
    %7014 = vmatprep.subr.bf16.mxu0 %v5319
    %7015 = vmatpush1.bf16.msra.mxu0 %v5318
    %7016 = vmatprep.mubr.bf16.mxu0 %v241
    %7017 = vmatmul.mubr.bf16.gmra.mrb[0].mxu0 %v240
    %v7018 = vpop.f32.mrb[0].mxu0
    %v7019 = vadd.f32 %v6978, %v7018
    %v7020 = vpop.f32.mrb[0].mxu0
    %v7021 = vadd.f32 %v6980, %v7020
    %v7022 = vpop.f32.mrb[0].mxu0
    %v7023 = vpop.f32.mrb[0].mxu0
    %7024 = vdwg.mxu0
    %7025 = vmatprep.subr.bf16.mxu0 %v5323
    %7026 = vmatpush1.bf16.msra.mxu0 %v5322
    %7027 = vmatprep.subr.bf16.mxu0 %v5327
    %7028 = vmatpush1.bf16.msra.mxu0 %v5326
    %7029 = vmatprep.subr.bf16.mxu0 %v5331
    %7030 = vmatpush1.bf16.msra.mxu0 %v5330
    %7031 = vmatprep.subr.bf16.mxu0 %v5335
    %7032 = vmatpush1.bf16.msra.mxu0 %v5334
    %7033 = vmatprep.subr.bf16.mxu0 %v5339
    %7034 = vmatpush1.bf16.msra.mxu0 %v5338
    %7035 = vmatprep.subr.bf16.mxu0 %v5343
    %7036 = vmatpush1.bf16.msra.mxu0 %v5342
    %7037 = vmatprep.subr.bf16.mxu0 %v5347
    %7038 = vmatpush1.bf16.msra.mxu0 %v5346
    %7039 = vmatprep.subr.bf16.mxu0 %v5351
    %7040 = vmatpush1.bf16.msra.mxu0 %v5350
    %7041 = vmatprep.subr.bf16.mxu0 %v5355
    %7042 = vmatpush1.bf16.msra.mxu0 %v5354
    %7043 = vmatprep.subr.bf16.mxu0 %v5359
    %7044 = vmatpush1.bf16.msra.mxu0 %v5358
    %7045 = vmatprep.subr.bf16.mxu0 %v5363
    %7046 = vmatpush1.bf16.msra.mxu0 %v5362
    %7047 = vmatprep.subr.bf16.mxu0 %v5367
    %7048 = vmatpush1.bf16.msra.mxu0 %v5366
    %7049 = vmatprep.subr.bf16.mxu0 %v5371
    %7050 = vmatpush1.bf16.msra.mxu0 %v5370
    %7051 = vmatprep.subr.bf16.mxu0 %v5375
    %7052 = vmatpush1.bf16.msra.mxu0 %v5374
    %7053 = vmatprep.subr.bf16.mxu0 %v5379
    %7054 = vmatpush1.bf16.msra.mxu0 %v5378
    %7055 = vmatprep.subr.bf16.mxu0 %v5383
    %7056 = vmatpush1.bf16.msra.mxu0 %v5382
    %7057 = vmatprep.mubr.bf16.mxu0 %v243
    %7058 = vmatmul.mubr.bf16.gmra.mrb[0].mxu0 %v242
    %v7059 = vpop.f32.mrb[0].mxu0
    %v7060 = vadd.f32 %v7019, %v7059
    %v7061 = vpop.f32.mrb[0].mxu0
    %v7062 = vadd.f32 %v7021, %v7061
    %v7063 = vpop.f32.mrb[0].mxu0
    %v7064 = vpop.f32.mrb[0].mxu0
    %7065 = vdwg.mxu0
    %7066 = vmatprep.subr.bf16.mxu0 %v4365
    %7067 = vmatpush1.bf16.msra.mxu0 %v4364
    %7068 = vmatprep.subr.bf16.mxu0 %v4369
    %7069 = vmatpush1.bf16.msra.mxu0 %v4368
    %7070 = vmatprep.subr.bf16.mxu0 %v4373
    %7071 = vmatpush1.bf16.msra.mxu0 %v4372
    %7072 = vmatprep.subr.bf16.mxu0 %v4377
    %7073 = vmatpush1.bf16.msra.mxu0 %v4376
    %7074 = vmatprep.subr.bf16.mxu0 %v4381
    %7075 = vmatpush1.bf16.msra.mxu0 %v4380
    %7076 = vmatprep.subr.bf16.mxu0 %v4385
    %7077 = vmatpush1.bf16.msra.mxu0 %v4384
    %7078 = vmatprep.subr.bf16.mxu0 %v4389
    %7079 = vmatpush1.bf16.msra.mxu0 %v4388
    %7080 = vmatprep.subr.bf16.mxu0 %v4393
    %7081 = vmatpush1.bf16.msra.mxu0 %v4392
    %7082 = vmatprep.subr.bf16.mxu0 %v4397
    %7083 = vmatpush1.bf16.msra.mxu0 %v4396
    %7084 = vmatprep.subr.bf16.mxu0 %v4401
    %7085 = vmatpush1.bf16.msra.mxu0 %v4400
    %7086 = vmatprep.subr.bf16.mxu0 %v4405
    %7087 = vmatpush1.bf16.msra.mxu0 %v4404
    %7088 = vmatprep.subr.bf16.mxu0 %v4409
    %7089 = vmatpush1.bf16.msra.mxu0 %v4408
    %7090 = vmatprep.subr.bf16.mxu0 %v4413
    %7091 = vmatpush1.bf16.msra.mxu0 %v4412
    %7092 = vmatprep.subr.bf16.mxu0 %v4417
    %7093 = vmatpush1.bf16.msra.mxu0 %v4416
    %7094 = vmatprep.subr.bf16.mxu0 %v4421
    %7095 = vmatpush1.bf16.msra.mxu0 %v4420
    %7096 = vmatprep.subr.bf16.mxu0 %v4425
    %7097 = vmatpush1.bf16.msra.mxu0 %v4424
    %7098 = vmatprep.mubr.bf16.mxu0 %v213
    %7099 = vmatmul.mubr.bf16.gmra.mrb[0].mxu0 %v212
    %v7100 = vpop.f32.mrb[0].mxu0
    %v7101 = vadd.f32 %v1281, %v7100
    %v7102 = vpop.f32.mrb[0].mxu0
    %v7103 = vadd.f32 %v1285, %v7102
    %v7104 = vpop.f32.mrb[0].mxu0
    %v7105 = vpop.f32.mrb[0].mxu0
    %7106 = vdwg.mxu0
    %7107 = vmatprep.subr.bf16.mxu0 %v4429
    %7108 = vmatpush1.bf16.msra.mxu0 %v4428
    %7109 = vmatprep.subr.bf16.mxu0 %v4433
    %7110 = vmatpush1.bf16.msra.mxu0 %v4432
    %7111 = vmatprep.subr.bf16.mxu0 %v4437
    %7112 = vmatpush1.bf16.msra.mxu0 %v4436
    %7113 = vmatprep.subr.bf16.mxu0 %v4441
    %7114 = vmatpush1.bf16.msra.mxu0 %v4440
    %7115 = vmatprep.subr.bf16.mxu0 %v4445
    %7116 = vmatpush1.bf16.msra.mxu0 %v4444
    %7117 = vmatprep.subr.bf16.mxu0 %v4449
    %7118 = vmatpush1.bf16.msra.mxu0 %v4448
    %7119 = vmatprep.subr.bf16.mxu0 %v4453
    %7120 = vmatpush1.bf16.msra.mxu0 %v4452
    %7121 = vmatprep.subr.bf16.mxu0 %v4457
    %7122 = vmatpush1.bf16.msra.mxu0 %v4456
    %7123 = vmatprep.subr.bf16.mxu0 %v4461
    %7124 = vmatpush1.bf16.msra.mxu0 %v4460
    %7125 = vmatprep.subr.bf16.mxu0 %v4465
    %7126 = vmatpush1.bf16.msra.mxu0 %v4464
    %7127 = vmatprep.subr.bf16.mxu0 %v4469
    %7128 = vmatpush1.bf16.msra.mxu0 %v4468
    %7129 = vmatprep.subr.bf16.mxu0 %v4473
    %7130 = vmatpush1.bf16.msra.mxu0 %v4472
    %7131 = vmatprep.subr.bf16.mxu0 %v4477
    %7132 = vmatpush1.bf16.msra.mxu0 %v4476
    %7133 = vmatprep.subr.bf16.mxu0 %v4481
    %7134 = vmatpush1.bf16.msra.mxu0 %v4480
    %7135 = vmatprep.subr.bf16.mxu0 %v4485
    %7136 = vmatpush1.bf16.msra.mxu0 %v4484
    %7137 = vmatprep.subr.bf16.mxu0 %v4489
    %7138 = vmatpush1.bf16.msra.mxu0 %v4488
    %7139 = vmatprep.mubr.bf16.mxu0 %v215
    %7140 = vmatmul.mubr.bf16.gmra.mrb[0].mxu0 %v214
    %v7141 = vpop.f32.mrb[0].mxu0
    %v7142 = vadd.f32 %v7101, %v7141
    %v7143 = vpop.f32.mrb[0].mxu0
    %v7144 = vadd.f32 %v7103, %v7143
    %v7145 = vpop.f32.mrb[0].mxu0
    %v7146 = vpop.f32.mrb[0].mxu0
    %7147 = vdwg.mxu0
    %7148 = vmatprep.subr.bf16.mxu0 %v4493
    %7149 = vmatpush1.bf16.msra.mxu0 %v4492
    %7150 = vmatprep.subr.bf16.mxu0 %v4497
    %7151 = vmatpush1.bf16.msra.mxu0 %v4496
    %7152 = vmatprep.subr.bf16.mxu0 %v4501
    %7153 = vmatpush1.bf16.msra.mxu0 %v4500
    %7154 = vmatprep.subr.bf16.mxu0 %v4505
    %7155 = vmatpush1.bf16.msra.mxu0 %v4504
    %7156 = vmatprep.subr.bf16.mxu0 %v4509
    %7157 = vmatpush1.bf16.msra.mxu0 %v4508
    %7158 = vmatprep.subr.bf16.mxu0 %v4513
    %7159 = vmatpush1.bf16.msra.mxu0 %v4512
    %7160 = vmatprep.subr.bf16.mxu0 %v4517
    %7161 = vmatpush1.bf16.msra.mxu0 %v4516
    %7162 = vmatprep.subr.bf16.mxu0 %v4521
    %7163 = vmatpush1.bf16.msra.mxu0 %v4520
    %7164 = vmatprep.subr.bf16.mxu0 %v4525
    %7165 = vmatpush1.bf16.msra.mxu0 %v4524
    %7166 = vmatprep.subr.bf16.mxu0 %v4529
    %7167 = vmatpush1.bf16.msra.mxu0 %v4528
    %7168 = vmatprep.subr.bf16.mxu0 %v4533
    %7169 = vmatpush1.bf16.msra.mxu0 %v4532
    %7170 = vmatprep.subr.bf16.mxu0 %v4537
    %7171 = vmatpush1.bf16.msra.mxu0 %v4536
    %7172 = vmatprep.subr.bf16.mxu0 %v4541
    %7173 = vmatpush1.bf16.msra.mxu0 %v4540
    %7174 = vmatprep.subr.bf16.mxu0 %v4545
    %7175 = vmatpush1.bf16.msra.mxu0 %v4544
    %7176 = vmatprep.subr.bf16.mxu0 %v4549
    %7177 = vmatpush1.bf16.msra.mxu0 %v4548
    %7178 = vmatprep.subr.bf16.mxu0 %v4553
    %7179 = vmatpush1.bf16.msra.mxu0 %v4552
    %7180 = vmatprep.mubr.bf16.mxu0 %v217
    %7181 = vmatmul.mubr.bf16.gmra.mrb[0].mxu0 %v216
    %v7182 = vpop.f32.mrb[0].mxu0
    %v7183 = vadd.f32 %v7142, %v7182
    %v7184 = vpop.f32.mrb[0].mxu0
    %v7185 = vadd.f32 %v7144, %v7184
    %v7186 = vpop.f32.mrb[0].mxu0
    %v7187 = vpop.f32.mrb[0].mxu0
    %7188 = vdwg.mxu0
    %7189 = vmatprep.subr.bf16.mxu0 %v4557
    %7190 = vmatpush1.bf16.msra.mxu0 %v4556
    %7191 = vmatprep.subr.bf16.mxu0 %v4561
    %7192 = vmatpush1.bf16.msra.mxu0 %v4560
    %7193 = vmatprep.subr.bf16.mxu0 %v4565
    %7194 = vmatpush1.bf16.msra.mxu0 %v4564
    %7195 = vmatprep.subr.bf16.mxu0 %v4569
    %7196 = vmatpush1.bf16.msra.mxu0 %v4568
    %7197 = vmatprep.subr.bf16.mxu0 %v4573
    %7198 = vmatpush1.bf16.msra.mxu0 %v4572
    %7199 = vmatprep.subr.bf16.mxu0 %v4577
    %7200 = vmatpush1.bf16.msra.mxu0 %v4576
    %7201 = vmatprep.subr.bf16.mxu0 %v4581
    %7202 = vmatpush1.bf16.msra.mxu0 %v4580
    %7203 = vmatprep.subr.bf16.mxu0 %v4585
    %7204 = vmatpush1.bf16.msra.mxu0 %v4584
    %7205 = vmatprep.subr.bf16.mxu0 %v4589
    %7206 = vmatpush1.bf16.msra.mxu0 %v4588
    %7207 = vmatprep.subr.bf16.mxu0 %v4593
    %7208 = vmatpush1.bf16.msra.mxu0 %v4592
    %7209 = vmatprep.subr.bf16.mxu0 %v4597
    %7210 = vmatpush1.bf16.msra.mxu0 %v4596
    %7211 = vmatprep.subr.bf16.mxu0 %v4601
    %7212 = vmatpush1.bf16.msra.mxu0 %v4600
    %7213 = vmatprep.subr.bf16.mxu0 %v4605
    %7214 = vmatpush1.bf16.msra.mxu0 %v4604
    %7215 = vmatprep.subr.bf16.mxu0 %v4609
    %7216 = vmatpush1.bf16.msra.mxu0 %v4608
    %7217 = vmatprep.subr.bf16.mxu0 %v4613
    %7218 = vmatpush1.bf16.msra.mxu0 %v4612
    %7219 = vmatprep.subr.bf16.mxu0 %v4617
    %7220 = vmatpush1.bf16.msra.mxu0 %v4616
    %7221 = vmatprep.mubr.bf16.mxu0 %v219
    %7222 = vmatmul.mubr.bf16.gmra.mrb[0].mxu0 %v218
    %v7223 = vpop.f32.mrb[0].mxu0
    %v7224 = vadd.f32 %v7183, %v7223
    %v7225 = vpop.f32.mrb[0].mxu0
    %v7226 = vadd.f32 %v7185, %v7225
    %v7227 = vpop.f32.mrb[0].mxu0
    %v7228 = vpop.f32.mrb[0].mxu0
    %7229 = vdwg.mxu0
    %7230 = vmatprep.subr.bf16.mxu0 %v4621
    %7231 = vmatpush1.bf16.msra.mxu0 %v4620
    %7232 = vmatprep.subr.bf16.mxu0 %v4625
    %7233 = vmatpush1.bf16.msra.mxu0 %v4624
    %7234 = vmatprep.subr.bf16.mxu0 %v4629
    %7235 = vmatpush1.bf16.msra.mxu0 %v4628
    %7236 = vmatprep.subr.bf16.mxu0 %v4633
    %7237 = vmatpush1.bf16.msra.mxu0 %v4632
    %7238 = vmatprep.subr.bf16.mxu0 %v4637
    %7239 = vmatpush1.bf16.msra.mxu0 %v4636
    %7240 = vmatprep.subr.bf16.mxu0 %v4641
    %7241 = vmatpush1.bf16.msra.mxu0 %v4640
    %7242 = vmatprep.subr.bf16.mxu0 %v4645
    %7243 = vmatpush1.bf16.msra.mxu0 %v4644
    %7244 = vmatprep.subr.bf16.mxu0 %v4649
    %7245 = vmatpush1.bf16.msra.mxu0 %v4648
    %7246 = vmatprep.subr.bf16.mxu0 %v4653
    %7247 = vmatpush1.bf16.msra.mxu0 %v4652
    %7248 = vmatprep.subr.bf16.mxu0 %v4657
    %7249 = vmatpush1.bf16.msra.mxu0 %v4656
    %7250 = vmatprep.subr.bf16.mxu0 %v4661
    %7251 = vmatpush1.bf16.msra.mxu0 %v4660
    %7252 = vmatprep.subr.bf16.mxu0 %v4665
    %7253 = vmatpush1.bf16.msra.mxu0 %v4664
    %7254 = vmatprep.subr.bf16.mxu0 %v4669
    %7255 = vmatpush1.bf16.msra.mxu0 %v4668
    %7256 = vmatprep.subr.bf16.mxu0 %v4673
    %7257 = vmatpush1.bf16.msra.mxu0 %v4672
    %7258 = vmatprep.subr.bf16.mxu0 %v4677
    %7259 = vmatpush1.bf16.msra.mxu0 %v4676
    %7260 = vmatprep.subr.bf16.mxu0 %v4681
    %7261 = vmatpush1.bf16.msra.mxu0 %v4680
    %7262 = vmatprep.mubr.bf16.mxu0 %v221
    %7263 = vmatmul.mubr.bf16.gmra.mrb[0].mxu0 %v220
    %v7264 = vpop.f32.mrb[0].mxu0
    %v7265 = vadd.f32 %v7224, %v7264
    %v7266 = vpop.f32.mrb[0].mxu0
    %v7267 = vadd.f32 %v7226, %v7266
    %v7268 = vpop.f32.mrb[0].mxu0
    %v7269 = vpop.f32.mrb[0].mxu0
    %7270 = vdwg.mxu0
    %7271 = vmatprep.subr.bf16.mxu0 %v4685
    %7272 = vmatpush1.bf16.msra.mxu0 %v4684
    %7273 = vmatprep.subr.bf16.mxu0 %v4689
    %7274 = vmatpush1.bf16.msra.mxu0 %v4688
    %7275 = vmatprep.subr.bf16.mxu0 %v4693
    %7276 = vmatpush1.bf16.msra.mxu0 %v4692
    %7277 = vmatprep.subr.bf16.mxu0 %v4697
    %7278 = vmatpush1.bf16.msra.mxu0 %v4696
    %7279 = vmatprep.subr.bf16.mxu0 %v4701
    %7280 = vmatpush1.bf16.msra.mxu0 %v4700
    %7281 = vmatprep.subr.bf16.mxu0 %v4705
    %7282 = vmatpush1.bf16.msra.mxu0 %v4704
    %7283 = vmatprep.subr.bf16.mxu0 %v4709
    %7284 = vmatpush1.bf16.msra.mxu0 %v4708
    %7285 = vmatprep.subr.bf16.mxu0 %v4713
    %7286 = vmatpush1.bf16.msra.mxu0 %v4712
    %7287 = vmatprep.subr.bf16.mxu0 %v4717
    %7288 = vmatpush1.bf16.msra.mxu0 %v4716
    %7289 = vmatprep.subr.bf16.mxu0 %v4721
    %7290 = vmatpush1.bf16.msra.mxu0 %v4720
    %7291 = vmatprep.subr.bf16.mxu0 %v4725
    %7292 = vmatpush1.bf16.msra.mxu0 %v4724
    %7293 = vmatprep.subr.bf16.mxu0 %v4729
    %7294 = vmatpush1.bf16.msra.mxu0 %v4728
    %7295 = vmatprep.subr.bf16.mxu0 %v4733
    %7296 = vmatpush1.bf16.msra.mxu0 %v4732
    %7297 = vmatprep.subr.bf16.mxu0 %v4737
    %7298 = vmatpush1.bf16.msra.mxu0 %v4736
    %7299 = vmatprep.subr.bf16.mxu0 %v4741
    %7300 = vmatpush1.bf16.msra.mxu0 %v4740
    %7301 = vmatprep.subr.bf16.mxu0 %v4745
    %7302 = vmatpush1.bf16.msra.mxu0 %v4744
    %7303 = vmatprep.mubr.bf16.mxu0 %v223
    %7304 = vmatmul.mubr.bf16.gmra.mrb[0].mxu0 %v222
    %v7305 = vpop.f32.mrb[0].mxu0
    %v7306 = vadd.f32 %v7265, %v7305
    %v7307 = vpop.f32.mrb[0].mxu0
    %v7308 = vadd.f32 %v7267, %v7307
    %v7309 = vpop.f32.mrb[0].mxu0
    %v7310 = vpop.f32.mrb[0].mxu0
    %7311 = vdwg.mxu0
    %7312 = vmatprep.subr.bf16.mxu0 %v4749
    %7313 = vmatpush1.bf16.msra.mxu0 %v4748
    %7314 = vmatprep.subr.bf16.mxu0 %v4753
    %7315 = vmatpush1.bf16.msra.mxu0 %v4752
    %7316 = vmatprep.subr.bf16.mxu0 %v4757
    %7317 = vmatpush1.bf16.msra.mxu0 %v4756
    %7318 = vmatprep.subr.bf16.mxu0 %v4761
    %7319 = vmatpush1.bf16.msra.mxu0 %v4760
    %7320 = vmatprep.subr.bf16.mxu0 %v4765
    %7321 = vmatpush1.bf16.msra.mxu0 %v4764
    %7322 = vmatprep.subr.bf16.mxu0 %v4769
    %7323 = vmatpush1.bf16.msra.mxu0 %v4768
    %7324 = vmatprep.subr.bf16.mxu0 %v4773
    %7325 = vmatpush1.bf16.msra.mxu0 %v4772
    %7326 = vmatprep.subr.bf16.mxu0 %v4777
    %7327 = vmatpush1.bf16.msra.mxu0 %v4776
    %7328 = vmatprep.subr.bf16.mxu0 %v4781
    %7329 = vmatpush1.bf16.msra.mxu0 %v4780
    %7330 = vmatprep.subr.bf16.mxu0 %v4785
    %7331 = vmatpush1.bf16.msra.mxu0 %v4784
    %7332 = vmatprep.subr.bf16.mxu0 %v4789
    %7333 = vmatpush1.bf16.msra.mxu0 %v4788
    %7334 = vmatprep.subr.bf16.mxu0 %v4793
    %7335 = vmatpush1.bf16.msra.mxu0 %v4792
    %7336 = vmatprep.subr.bf16.mxu0 %v4797
    %7337 = vmatpush1.bf16.msra.mxu0 %v4796
    %7338 = vmatprep.subr.bf16.mxu0 %v4801
    %7339 = vmatpush1.bf16.msra.mxu0 %v4800
    %7340 = vmatprep.subr.bf16.mxu0 %v4805
    %7341 = vmatpush1.bf16.msra.mxu0 %v4804
    %7342 = vmatprep.subr.bf16.mxu0 %v4809
    %7343 = vmatpush1.bf16.msra.mxu0 %v4808
    %7344 = vmatprep.mubr.bf16.mxu0 %v225
    %7345 = vmatmul.mubr.bf16.gmra.mrb[0].mxu0 %v224
    %v7346 = vpop.f32.mrb[0].mxu0
    %v7347 = vadd.f32 %v7306, %v7346
    %v7348 = vpop.f32.mrb[0].mxu0
    %v7349 = vadd.f32 %v7308, %v7348
    %v7350 = vpop.f32.mrb[0].mxu0
    %v7351 = vpop.f32.mrb[0].mxu0
    %7352 = vdwg.mxu0
    %7353 = vmatprep.subr.bf16.mxu0 %v4813
    %7354 = vmatpush1.bf16.msra.mxu0 %v4812
    %7355 = vmatprep.subr.bf16.mxu0 %v4817
    %7356 = vmatpush1.bf16.msra.mxu0 %v4816
    %7357 = vmatprep.subr.bf16.mxu0 %v4821
    %7358 = vmatpush1.bf16.msra.mxu0 %v4820
    %7359 = vmatprep.subr.bf16.mxu0 %v4825
    %7360 = vmatpush1.bf16.msra.mxu0 %v4824
    %7361 = vmatprep.subr.bf16.mxu0 %v4829
    %7362 = vmatpush1.bf16.msra.mxu0 %v4828
    %7363 = vmatprep.subr.bf16.mxu0 %v4833
    %7364 = vmatpush1.bf16.msra.mxu0 %v4832
    %7365 = vmatprep.subr.bf16.mxu0 %v4837
    %7366 = vmatpush1.bf16.msra.mxu0 %v4836
    %7367 = vmatprep.subr.bf16.mxu0 %v4841
    %7368 = vmatpush1.bf16.msra.mxu0 %v4840
    %7369 = vmatprep.subr.bf16.mxu0 %v4845
    %7370 = vmatpush1.bf16.msra.mxu0 %v4844
    %7371 = vmatprep.subr.bf16.mxu0 %v4849
    %7372 = vmatpush1.bf16.msra.mxu0 %v4848
    %7373 = vmatprep.subr.bf16.mxu0 %v4853
    %7374 = vmatpush1.bf16.msra.mxu0 %v4852
    %7375 = vmatprep.subr.bf16.mxu0 %v4857
    %7376 = vmatpush1.bf16.msra.mxu0 %v4856
    %7377 = vmatprep.subr.bf16.mxu0 %v4861
    %7378 = vmatpush1.bf16.msra.mxu0 %v4860
    %7379 = vmatprep.subr.bf16.mxu0 %v4865
    %7380 = vmatpush1.bf16.msra.mxu0 %v4864
    %7381 = vmatprep.subr.bf16.mxu0 %v4869
    %7382 = vmatpush1.bf16.msra.mxu0 %v4868
    %7383 = vmatprep.subr.bf16.mxu0 %v4873
    %7384 = vmatpush1.bf16.msra.mxu0 %v4872
    %7385 = vmatprep.mubr.bf16.mxu0 %v227
    %7386 = vmatmul.mubr.bf16.gmra.mrb[0].mxu0 %v226
    %v7387 = vpop.f32.mrb[0].mxu0
    %v7388 = vadd.f32 %v7347, %v7387
    %v7389 = vpop.f32.mrb[0].mxu0
    %v7390 = vadd.f32 %v7349, %v7389
    %v7391 = vpop.f32.mrb[0].mxu0
    %v7392 = vpop.f32.mrb[0].mxu0
    %7393 = vdwg.mxu0
    %7394 = vmatprep.subr.bf16.mxu0 %v4877
    %7395 = vmatpush1.bf16.msra.mxu0 %v4876
    %7396 = vmatprep.subr.bf16.mxu0 %v4881
    %7397 = vmatpush1.bf16.msra.mxu0 %v4880
    %7398 = vmatprep.subr.bf16.mxu0 %v4885
    %7399 = vmatpush1.bf16.msra.mxu0 %v4884
    %7400 = vmatprep.subr.bf16.mxu0 %v4889
    %7401 = vmatpush1.bf16.msra.mxu0 %v4888
    %7402 = vmatprep.subr.bf16.mxu0 %v4893
    %7403 = vmatpush1.bf16.msra.mxu0 %v4892
    %7404 = vmatprep.subr.bf16.mxu0 %v4897
    %7405 = vmatpush1.bf16.msra.mxu0 %v4896
    %7406 = vmatprep.subr.bf16.mxu0 %v4901
    %7407 = vmatpush1.bf16.msra.mxu0 %v4900
    %7408 = vmatprep.subr.bf16.mxu0 %v4905
    %7409 = vmatpush1.bf16.msra.mxu0 %v4904
    %7410 = vmatprep.subr.bf16.mxu0 %v4909
    %7411 = vmatpush1.bf16.msra.mxu0 %v4908
    %7412 = vmatprep.subr.bf16.mxu0 %v4913
    %7413 = vmatpush1.bf16.msra.mxu0 %v4912
    %7414 = vmatprep.subr.bf16.mxu0 %v4917
    %7415 = vmatpush1.bf16.msra.mxu0 %v4916
    %7416 = vmatprep.subr.bf16.mxu0 %v4921
    %7417 = vmatpush1.bf16.msra.mxu0 %v4920
    %7418 = vmatprep.subr.bf16.mxu0 %v4925
    %7419 = vmatpush1.bf16.msra.mxu0 %v4924
    %7420 = vmatprep.subr.bf16.mxu0 %v4929
    %7421 = vmatpush1.bf16.msra.mxu0 %v4928
    %7422 = vmatprep.subr.bf16.mxu0 %v4933
    %7423 = vmatpush1.bf16.msra.mxu0 %v4932
    %7424 = vmatprep.subr.bf16.mxu0 %v4937
    %7425 = vmatpush1.bf16.msra.mxu0 %v4936
    %7426 = vmatprep.mubr.bf16.mxu0 %v229
    %7427 = vmatmul.mubr.bf16.gmra.mrb[0].mxu0 %v228
    %v7428 = vpop.f32.mrb[0].mxu0
    %v7429 = vadd.f32 %v7388, %v7428
    %v7430 = vpop.f32.mrb[0].mxu0
    %v7431 = vadd.f32 %v7390, %v7430
    %v7432 = vpop.f32.mrb[0].mxu0
    %v7433 = vpop.f32.mrb[0].mxu0
    %7434 = vdwg.mxu0
    %7435 = vmatprep.subr.bf16.mxu0 %v4941
    %7436 = vmatpush1.bf16.msra.mxu0 %v4940
    %7437 = vmatprep.subr.bf16.mxu0 %v4945
    %7438 = vmatpush1.bf16.msra.mxu0 %v4944
    %7439 = vmatprep.subr.bf16.mxu0 %v4949
    %7440 = vmatpush1.bf16.msra.mxu0 %v4948
    %7441 = vmatprep.subr.bf16.mxu0 %v4953
    %7442 = vmatpush1.bf16.msra.mxu0 %v4952
    %7443 = vmatprep.subr.bf16.mxu0 %v4957
    %7444 = vmatpush1.bf16.msra.mxu0 %v4956
    %7445 = vmatprep.subr.bf16.mxu0 %v4961
    %7446 = vmatpush1.bf16.msra.mxu0 %v4960
    %7447 = vmatprep.subr.bf16.mxu0 %v4965
    %7448 = vmatpush1.bf16.msra.mxu0 %v4964
    %7449 = vmatprep.subr.bf16.mxu0 %v4969
    %7450 = vmatpush1.bf16.msra.mxu0 %v4968
    %7451 = vmatprep.subr.bf16.mxu0 %v4973
    %7452 = vmatpush1.bf16.msra.mxu0 %v4972
    %7453 = vmatprep.subr.bf16.mxu0 %v4977
    %7454 = vmatpush1.bf16.msra.mxu0 %v4976
    %7455 = vmatprep.subr.bf16.mxu0 %v4981
    %7456 = vmatpush1.bf16.msra.mxu0 %v4980
    %7457 = vmatprep.subr.bf16.mxu0 %v4985
    %7458 = vmatpush1.bf16.msra.mxu0 %v4984
    %7459 = vmatprep.subr.bf16.mxu0 %v4989
    %7460 = vmatpush1.bf16.msra.mxu0 %v4988
    %7461 = vmatprep.subr.bf16.mxu0 %v4993
    %7462 = vmatpush1.bf16.msra.mxu0 %v4992
    %7463 = vmatprep.subr.bf16.mxu0 %v4997
    %7464 = vmatpush1.bf16.msra.mxu0 %v4996
    %7465 = vmatprep.subr.bf16.mxu0 %v5001
    %7466 = vmatpush1.bf16.msra.mxu0 %v5000
    %7467 = vmatprep.mubr.bf16.mxu0 %v231
    %7468 = vmatmul.mubr.bf16.gmra.mrb[0].mxu0 %v230
    %v7469 = vpop.f32.mrb[0].mxu0
    %v7470 = vadd.f32 %v7429, %v7469
    %v7471 = vpop.f32.mrb[0].mxu0
    %v7472 = vadd.f32 %v7431, %v7471
    %v7473 = vpop.f32.mrb[0].mxu0
    %v7474 = vpop.f32.mrb[0].mxu0
    %7475 = vdwg.mxu0
    %7476 = vmatprep.subr.bf16.mxu0 %v5005
    %7477 = vmatpush1.bf16.msra.mxu0 %v5004
    %7478 = vmatprep.subr.bf16.mxu0 %v5009
    %7479 = vmatpush1.bf16.msra.mxu0 %v5008
    %7480 = vmatprep.subr.bf16.mxu0 %v5013
    %7481 = vmatpush1.bf16.msra.mxu0 %v5012
    %7482 = vmatprep.subr.bf16.mxu0 %v5017
    %7483 = vmatpush1.bf16.msra.mxu0 %v5016
    %7484 = vmatprep.subr.bf16.mxu0 %v5021
    %7485 = vmatpush1.bf16.msra.mxu0 %v5020
    %7486 = vmatprep.subr.bf16.mxu0 %v5025
    %7487 = vmatpush1.bf16.msra.mxu0 %v5024
    %7488 = vmatprep.subr.bf16.mxu0 %v5029
    %7489 = vmatpush1.bf16.msra.mxu0 %v5028
    %7490 = vmatprep.subr.bf16.mxu0 %v5033
    %7491 = vmatpush1.bf16.msra.mxu0 %v5032
    %7492 = vmatprep.subr.bf16.mxu0 %v5037
    %7493 = vmatpush1.bf16.msra.mxu0 %v5036
    %7494 = vmatprep.subr.bf16.mxu0 %v5041
    %7495 = vmatpush1.bf16.msra.mxu0 %v5040
    %7496 = vmatprep.subr.bf16.mxu0 %v5045
    %7497 = vmatpush1.bf16.msra.mxu0 %v5044
    %7498 = vmatprep.subr.bf16.mxu0 %v5049
    %7499 = vmatpush1.bf16.msra.mxu0 %v5048
    %7500 = vmatprep.subr.bf16.mxu0 %v5053
    %7501 = vmatpush1.bf16.msra.mxu0 %v5052
    %7502 = vmatprep.subr.bf16.mxu0 %v5057
    %7503 = vmatpush1.bf16.msra.mxu0 %v5056
    %7504 = vmatprep.subr.bf16.mxu0 %v5061
    %7505 = vmatpush1.bf16.msra.mxu0 %v5060
    %7506 = vmatprep.subr.bf16.mxu0 %v5065
    %7507 = vmatpush1.bf16.msra.mxu0 %v5064
    %7508 = vmatprep.mubr.bf16.mxu0 %v233
    %7509 = vmatmul.mubr.bf16.gmra.mrb[0].mxu0 %v232
    %v7510 = vpop.f32.mrb[0].mxu0
    %v7511 = vadd.f32 %v7470, %v7510
    %v7512 = vpop.f32.mrb[0].mxu0
    %v7513 = vadd.f32 %v7472, %v7512
    %v7514 = vpop.f32.mrb[0].mxu0
    %v7515 = vpop.f32.mrb[0].mxu0
    %7516 = vdwg.mxu0
    %7517 = vmatprep.subr.bf16.mxu0 %v5069
    %7518 = vmatpush1.bf16.msra.mxu0 %v5068
    %7519 = vmatprep.subr.bf16.mxu0 %v5073
    %7520 = vmatpush1.bf16.msra.mxu0 %v5072
    %7521 = vmatprep.subr.bf16.mxu0 %v5077
    %7522 = vmatpush1.bf16.msra.mxu0 %v5076
    %7523 = vmatprep.subr.bf16.mxu0 %v5081
    %7524 = vmatpush1.bf16.msra.mxu0 %v5080
    %7525 = vmatprep.subr.bf16.mxu0 %v5085
    %7526 = vmatpush1.bf16.msra.mxu0 %v5084
    %7527 = vmatprep.subr.bf16.mxu0 %v5089
    %7528 = vmatpush1.bf16.msra.mxu0 %v5088
    %7529 = vmatprep.subr.bf16.mxu0 %v5093
    %7530 = vmatpush1.bf16.msra.mxu0 %v5092
    %7531 = vmatprep.subr.bf16.mxu0 %v5097
    %7532 = vmatpush1.bf16.msra.mxu0 %v5096
    %7533 = vmatprep.subr.bf16.mxu0 %v5101
    %7534 = vmatpush1.bf16.msra.mxu0 %v5100
    %7535 = vmatprep.subr.bf16.mxu0 %v5105
    %7536 = vmatpush1.bf16.msra.mxu0 %v5104
    %7537 = vmatprep.subr.bf16.mxu0 %v5109
    %7538 = vmatpush1.bf16.msra.mxu0 %v5108
    %7539 = vmatprep.subr.bf16.mxu0 %v5113
    %7540 = vmatpush1.bf16.msra.mxu0 %v5112
    %7541 = vmatprep.subr.bf16.mxu0 %v5117
    %7542 = vmatpush1.bf16.msra.mxu0 %v5116
    %7543 = vmatprep.subr.bf16.mxu0 %v5121
    %7544 = vmatpush1.bf16.msra.mxu0 %v5120
    %7545 = vmatprep.subr.bf16.mxu0 %v5125
    %7546 = vmatpush1.bf16.msra.mxu0 %v5124
    %7547 = vmatprep.subr.bf16.mxu0 %v5129
    %7548 = vmatpush1.bf16.msra.mxu0 %v5128
    %7549 = vmatprep.mubr.bf16.mxu0 %v235
    %7550 = vmatmul.mubr.bf16.gmra.mrb[0].mxu0 %v234
    %v7551 = vpop.f32.mrb[0].mxu0
    %v7552 = vadd.f32 %v7511, %v7551
    %v7553 = vpop.f32.mrb[0].mxu0
    %v7554 = vadd.f32 %v7513, %v7553
    %v7555 = vpop.f32.mrb[0].mxu0
    %v7556 = vpop.f32.mrb[0].mxu0
    %7557 = vdwg.mxu0
    %7558 = vmatprep.subr.bf16.mxu0 %v5133
    %7559 = vmatpush1.bf16.msra.mxu0 %v5132
    %7560 = vmatprep.subr.bf16.mxu0 %v5137
    %7561 = vmatpush1.bf16.msra.mxu0 %v5136
    %7562 = vmatprep.subr.bf16.mxu0 %v5141
    %7563 = vmatpush1.bf16.msra.mxu0 %v5140
    %7564 = vmatprep.subr.bf16.mxu0 %v5145
    %7565 = vmatpush1.bf16.msra.mxu0 %v5144
    %7566 = vmatprep.subr.bf16.mxu0 %v5149
    %7567 = vmatpush1.bf16.msra.mxu0 %v5148
    %7568 = vmatprep.subr.bf16.mxu0 %v5153
    %7569 = vmatpush1.bf16.msra.mxu0 %v5152
    %7570 = vmatprep.subr.bf16.mxu0 %v5157
    %7571 = vmatpush1.bf16.msra.mxu0 %v5156
    %7572 = vmatprep.subr.bf16.mxu0 %v5161
    %7573 = vmatpush1.bf16.msra.mxu0 %v5160
    %7574 = vmatprep.subr.bf16.mxu0 %v5165
    %7575 = vmatpush1.bf16.msra.mxu0 %v5164
    %7576 = vmatprep.subr.bf16.mxu0 %v5169
    %7577 = vmatpush1.bf16.msra.mxu0 %v5168
    %7578 = vmatprep.subr.bf16.mxu0 %v5173
    %7579 = vmatpush1.bf16.msra.mxu0 %v5172
    %7580 = vmatprep.subr.bf16.mxu0 %v5177
    %7581 = vmatpush1.bf16.msra.mxu0 %v5176
    %7582 = vmatprep.subr.bf16.mxu0 %v5181
    %7583 = vmatpush1.bf16.msra.mxu0 %v5180
    %7584 = vmatprep.subr.bf16.mxu0 %v5185
    %7585 = vmatpush1.bf16.msra.mxu0 %v5184
    %7586 = vmatprep.subr.bf16.mxu0 %v5189
    %7587 = vmatpush1.bf16.msra.mxu0 %v5188
    %7588 = vmatprep.subr.bf16.mxu0 %v5193
    %7589 = vmatpush1.bf16.msra.mxu0 %v5192
    %7590 = vmatprep.mubr.bf16.mxu0 %v237
    %7591 = vmatmul.mubr.bf16.gmra.mrb[0].mxu0 %v236
    %v7592 = vpop.f32.mrb[0].mxu0
    %v7593 = vadd.f32 %v7552, %v7592
    %v7594 = vpop.f32.mrb[0].mxu0
    %v7595 = vadd.f32 %v7554, %v7594
    %v7596 = vpop.f32.mrb[0].mxu0
    %v7597 = vpop.f32.mrb[0].mxu0
    %7598 = vdwg.mxu0
    %7599 = vmatprep.subr.bf16.mxu0 %v5197
    %7600 = vmatpush1.bf16.msra.mxu0 %v5196
    %7601 = vmatprep.subr.bf16.mxu0 %v5201
    %7602 = vmatpush1.bf16.msra.mxu0 %v5200
    %7603 = vmatprep.subr.bf16.mxu0 %v5205
    %7604 = vmatpush1.bf16.msra.mxu0 %v5204
    %7605 = vmatprep.subr.bf16.mxu0 %v5209
    %7606 = vmatpush1.bf16.msra.mxu0 %v5208
    %7607 = vmatprep.subr.bf16.mxu0 %v5213
    %7608 = vmatpush1.bf16.msra.mxu0 %v5212
    %7609 = vmatprep.subr.bf16.mxu0 %v5217
    %7610 = vmatpush1.bf16.msra.mxu0 %v5216
    %7611 = vmatprep.subr.bf16.mxu0 %v5221
    %7612 = vmatpush1.bf16.msra.mxu0 %v5220
    %7613 = vmatprep.subr.bf16.mxu0 %v5225
    %7614 = vmatpush1.bf16.msra.mxu0 %v5224
    %7615 = vmatprep.subr.bf16.mxu0 %v5229
    %7616 = vmatpush1.bf16.msra.mxu0 %v5228
    %7617 = vmatprep.subr.bf16.mxu0 %v5233
    %7618 = vmatpush1.bf16.msra.mxu0 %v5232
    %7619 = vmatprep.subr.bf16.mxu0 %v5237
    %7620 = vmatpush1.bf16.msra.mxu0 %v5236
    %7621 = vmatprep.subr.bf16.mxu0 %v5241
    %7622 = vmatpush1.bf16.msra.mxu0 %v5240
    %7623 = vmatprep.subr.bf16.mxu0 %v5245
    %7624 = vmatpush1.bf16.msra.mxu0 %v5244
    %7625 = vmatprep.subr.bf16.mxu0 %v5249
    %7626 = vmatpush1.bf16.msra.mxu0 %v5248
    %7627 = vmatprep.subr.bf16.mxu0 %v5253
    %7628 = vmatpush1.bf16.msra.mxu0 %v5252
    %7629 = vmatprep.subr.bf16.mxu0 %v5257
    %7630 = vmatpush1.bf16.msra.mxu0 %v5256
    %7631 = vmatprep.mubr.bf16.mxu0 %v239
    %7632 = vmatmul.mubr.bf16.gmra.mrb[0].mxu0 %v238
    %v7633 = vpop.f32.mrb[0].mxu0
    %v7634 = vadd.f32 %v7593, %v7633
    %v7635 = vpop.f32.mrb[0].mxu0
    %v7636 = vadd.f32 %v7595, %v7635
    %v7637 = vpop.f32.mrb[0].mxu0
    %v7638 = vpop.f32.mrb[0].mxu0
    %7639 = vdwg.mxu0
    %7640 = vmatprep.subr.bf16.mxu0 %v5261
    %7641 = vmatpush1.bf16.msra.mxu0 %v5260
    %7642 = vmatprep.subr.bf16.mxu0 %v5265
    %7643 = vmatpush1.bf16.msra.mxu0 %v5264
    %7644 = vmatprep.subr.bf16.mxu0 %v5269
    %7645 = vmatpush1.bf16.msra.mxu0 %v5268
    %7646 = vmatprep.subr.bf16.mxu0 %v5273
    %7647 = vmatpush1.bf16.msra.mxu0 %v5272
    %7648 = vmatprep.subr.bf16.mxu0 %v5277
    %7649 = vmatpush1.bf16.msra.mxu0 %v5276
    %7650 = vmatprep.subr.bf16.mxu0 %v5281
    %7651 = vmatpush1.bf16.msra.mxu0 %v5280
    %7652 = vmatprep.subr.bf16.mxu0 %v5285
    %7653 = vmatpush1.bf16.msra.mxu0 %v5284
    %7654 = vmatprep.subr.bf16.mxu0 %v5289
    %7655 = vmatpush1.bf16.msra.mxu0 %v5288
    %7656 = vmatprep.subr.bf16.mxu0 %v5293
    %7657 = vmatpush1.bf16.msra.mxu0 %v5292
    %7658 = vmatprep.subr.bf16.mxu0 %v5297
    %7659 = vmatpush1.bf16.msra.mxu0 %v5296
    %7660 = vmatprep.subr.bf16.mxu0 %v5301
    %7661 = vmatpush1.bf16.msra.mxu0 %v5300
    %7662 = vmatprep.subr.bf16.mxu0 %v5305
    %7663 = vmatpush1.bf16.msra.mxu0 %v5304
    %7664 = vmatprep.subr.bf16.mxu0 %v5309
    %7665 = vmatpush1.bf16.msra.mxu0 %v5308
    %7666 = vmatprep.subr.bf16.mxu0 %v5313
    %7667 = vmatpush1.bf16.msra.mxu0 %v5312
    %7668 = vmatprep.subr.bf16.mxu0 %v5317
    %7669 = vmatpush1.bf16.msra.mxu0 %v5316
    %7670 = vmatprep.subr.bf16.mxu0 %v5321
    %7671 = vmatpush1.bf16.msra.mxu0 %v5320
    %7672 = vmatprep.mubr.bf16.mxu0 %v241
    %7673 = vmatmul.mubr.bf16.gmra.mrb[0].mxu0 %v240
    %v7674 = vpop.f32.mrb[0].mxu0
    %v7675 = vadd.f32 %v7634, %v7674
    %v7676 = vpop.f32.mrb[0].mxu0
    %v7677 = vadd.f32 %v7636, %v7676
    %v7678 = vpop.f32.mrb[0].mxu0
    %v7679 = vpop.f32.mrb[0].mxu0
    %7680 = vdwg.mxu0
    %7681 = vmatprep.subr.bf16.mxu0 %v5325
    %7682 = vmatpush1.bf16.msra.mxu0 %v5324
    %7683 = vmatprep.subr.bf16.mxu0 %v5329
    %7684 = vmatpush1.bf16.msra.mxu0 %v5328
    %7685 = vmatprep.subr.bf16.mxu0 %v5333
    %7686 = vmatpush1.bf16.msra.mxu0 %v5332
    %7687 = vmatprep.subr.bf16.mxu0 %v5337
    %7688 = vmatpush1.bf16.msra.mxu0 %v5336
    %7689 = vmatprep.subr.bf16.mxu0 %v5341
    %7690 = vmatpush1.bf16.msra.mxu0 %v5340
    %7691 = vmatprep.subr.bf16.mxu0 %v5345
    %7692 = vmatpush1.bf16.msra.mxu0 %v5344
    %7693 = vmatprep.subr.bf16.mxu0 %v5349
    %7694 = vmatpush1.bf16.msra.mxu0 %v5348
    %7695 = vmatprep.subr.bf16.mxu0 %v5353
    %7696 = vmatpush1.bf16.msra.mxu0 %v5352
    %7697 = vmatprep.subr.bf16.mxu0 %v5357
    %7698 = vmatpush1.bf16.msra.mxu0 %v5356
    %7699 = vmatprep.subr.bf16.mxu0 %v5361
    %7700 = vmatpush1.bf16.msra.mxu0 %v5360
    %7701 = vmatprep.subr.bf16.mxu0 %v5365
    %7702 = vmatpush1.bf16.msra.mxu0 %v5364
    %7703 = vmatprep.subr.bf16.mxu0 %v5369
    %7704 = vmatpush1.bf16.msra.mxu0 %v5368
    %7705 = vmatprep.subr.bf16.mxu0 %v5373
    %7706 = vmatpush1.bf16.msra.mxu0 %v5372
    %7707 = vmatprep.subr.bf16.mxu0 %v5377
    %7708 = vmatpush1.bf16.msra.mxu0 %v5376
    %7709 = vmatprep.subr.bf16.mxu0 %v5381
    %7710 = vmatpush1.bf16.msra.mxu0 %v5380
    %7711 = vmatprep.subr.bf16.mxu0 %v5385
    %7712 = vmatpush1.bf16.msra.mxu0 %v5384
    %7713 = vmatprep.mubr.bf16.mxu0 %v243
    %7714 = vmatmul.mubr.bf16.gmra.mrb[0].mxu0 %v242
    %v7715 = vpop.f32.mrb[0].mxu0
    %v7716 = vadd.f32 %v7675, %v7715
    %v7717 = vpop.f32.mrb[0].mxu0
    %v7718 = vadd.f32 %v7677, %v7717
    %v7719 = vpop.f32.mrb[0].mxu0
    %v7720 = vpop.f32.mrb[0].mxu0
    %7721 = vdwg.mxu0
    %v7722 = vmax.f32 %v7060, 0.0
    %v7723 = vmax.f32 %v7062, 0.0
    %v7724 = vmax.f32 %v7716, 0.0
    %v7725 = vmax.f32 %v7718, 0.0
    %v7726 = vpack.c.bf16 %v7722, %v7722
    %v7727 = vpack.c.bf16 %v7723, %v7723
    %v7728 = vpack.c.bf16 %v7724, %v7724
    %v7729 = vpack.c.bf16 %v7725, %v7725
    %v7730 = vld [vmem:[%s3] sm:$0xf]
    %v7731 = vld [vmem:[%s3 + $0x4] sm:$0xf]
    %v7732 = vld [vmem:[%s3 + $0x8] sm:$0xf]
    %v7733 = vld [vmem:[%s3 + $0xc] sm:$0xf]
    %v7734 = vld [vmem:[%s3 + $0x10] sm:$0xf]
    %v7735 = vld [vmem:[%s3 + $0x14] sm:$0xf]
    %v7736 = vld [vmem:[%s3 + $0x18] sm:$0xf]
    %v7737 = vld [vmem:[%s3 + $0x1c] sm:$0xf]
    %v7738 = vld [vmem:[%s3 + $0x20] sm:$0xf]
    %v7739 = vld [vmem:[%s3 + $0x24] sm:$0xf]
    %v7740 = vld [vmem:[%s3 + $0x28] sm:$0xf]
    %v7741 = vld [vmem:[%s3 + $0x2c] sm:$0xf]
    %v7742 = vld [vmem:[%s3 + $0x30] sm:$0xf]
    %v7743 = vld [vmem:[%s3 + $0x34] sm:$0xf]
    %v7744 = vld [vmem:[%s3 + $0x38] sm:$0xf]
    %v7745 = vld [vmem:[%s3 + $0x3c] sm:$0xf]
    %v7746 = vld [vmem:[%s3 + $0x40] sm:$0xf]
    %v7747 = vld [vmem:[%s3 + $0x44] sm:$0xf]
    %v7748 = vld [vmem:[%s3 + $0x48] sm:$0xf]
    %v7749 = vld [vmem:[%s3 + $0x4c] sm:$0xf]
    %v7750 = vld [vmem:[%s3 + $0x50] sm:$0xf]
    %v7751 = vld [vmem:[%s3 + $0x54] sm:$0xf]
    %v7752 = vld [vmem:[%s3 + $0x58] sm:$0xf]
    %v7753 = vld [vmem:[%s3 + $0x5c] sm:$0xf]
    %v7754 = vld [vmem:[%s3 + $0x60] sm:$0xf]
    %v7755 = vld [vmem:[%s3 + $0x64] sm:$0xf]
    %v7756 = vld [vmem:[%s3 + $0x68] sm:$0xf]
    %v7757 = vld [vmem:[%s3 + $0x6c] sm:$0xf]
    %v7758 = vld [vmem:[%s3 + $0x70] sm:$0xf]
    %v7759 = vld [vmem:[%s3 + $0x74] sm:$0xf]
    %v7760 = vld [vmem:[%s3 + $0x78] sm:$0xf]
    %v7761 = vld [vmem:[%s3 + $0x7c] sm:$0xf]
    %v7762 = vld [vmem:[%s3 + $0x80] sm:$0xf]
    %v7763 = vld [vmem:[%s3 + $0x84] sm:$0xf]
    %v7764 = vld [vmem:[%s3 + $0x88] sm:$0xf]
    %v7765 = vld [vmem:[%s3 + $0x8c] sm:$0xf]
    %v7766 = vld [vmem:[%s3 + $0x90] sm:$0xf]
    %v7767 = vld [vmem:[%s3 + $0x94] sm:$0xf]
    %v7768 = vld [vmem:[%s3 + $0x98] sm:$0xf]
    %v7769 = vld [vmem:[%s3 + $0x9c] sm:$0xf]
    %v7770 = vld [vmem:[%s3 + $0xa0] sm:$0xf]
    %v7771 = vld [vmem:[%s3 + $0xa4] sm:$0xf]
    %v7772 = vld [vmem:[%s3 + $0xa8] sm:$0xf]
    %v7773 = vld [vmem:[%s3 + $0xac] sm:$0xf]
    %v7774 = vld [vmem:[%s3 + $0xb0] sm:$0xf]
    %v7775 = vld [vmem:[%s3 + $0xb4] sm:$0xf]
    %v7776 = vld [vmem:[%s3 + $0xb8] sm:$0xf]
    %v7777 = vld [vmem:[%s3 + $0xbc] sm:$0xf]
    %v7778 = vld [vmem:[%s3 + $0xc0] sm:$0xf]
    %v7779 = vld [vmem:[%s3 + $0xc4] sm:$0xf]
    %v7780 = vld [vmem:[%s3 + $0xc8] sm:$0xf]
    %v7781 = vld [vmem:[%s3 + $0xcc] sm:$0xf]
    %v7782 = vld [vmem:[%s3 + $0xd0] sm:$0xf]
    %v7783 = vld [vmem:[%s3 + $0xd4] sm:$0xf]
    %v7784 = vld [vmem:[%s3 + $0xd8] sm:$0xf]
    %v7785 = vld [vmem:[%s3 + $0xdc] sm:$0xf]
    %v7786 = vld [vmem:[%s3 + $0xe0] sm:$0xf]
    %v7787 = vld [vmem:[%s3 + $0xe4] sm:$0xf]
    %v7788 = vld [vmem:[%s3 + $0xe8] sm:$0xf]
    %v7789 = vld [vmem:[%s3 + $0xec] sm:$0xf]
    %v7790 = vld [vmem:[%s3 + $0xf0] sm:$0xf]
    %v7791 = vld [vmem:[%s3 + $0xf4] sm:$0xf]
    %v7792 = vld [vmem:[%s3 + $0xf8] sm:$0xf]
    %v7793 = vld [vmem:[%s3 + $0xfc] sm:$0xf]
    %v7794 = vld [vmem:[%s4] sm:$0x1]
    %v7796 = vlaneseq
    %v7797 = vshrl.u32 %v7796, 7
    %v7798 = vsub.s32 0, %v7797
    %v7799 = vrot.slane %v7794, %v7798
    %v7865 = vunpack.c.l.b16 %v7730
    %v7866 = vunpack.c.l.b16 %v7731
    %v7867 = vunpack.c.l.b16 %v7732
    %v7868 = vunpack.c.l.b16 %v7733
    %v7869 = vunpack.c.l.b16 %v7734
    %v7870 = vunpack.c.l.b16 %v7735
    %v7871 = vunpack.c.l.b16 %v7736
    %v7872 = vunpack.c.l.b16 %v7737
    %v7873 = vunpack.c.l.b16 %v7738
    %v7874 = vunpack.c.l.b16 %v7739
    %v7875 = vunpack.c.l.b16 %v7740
    %v7876 = vunpack.c.l.b16 %v7741
    %v7877 = vunpack.c.l.b16 %v7742
    %v7878 = vunpack.c.l.b16 %v7743
    %v7879 = vunpack.c.l.b16 %v7744
    %v7880 = vunpack.c.l.b16 %v7745
    %v7881 = vunpack.c.l.b16 %v7746
    %v7882 = vunpack.c.l.b16 %v7747
    %v7883 = vunpack.c.l.b16 %v7748
    %v7884 = vunpack.c.l.b16 %v7749
    %v7885 = vunpack.c.l.b16 %v7750
    %v7886 = vunpack.c.l.b16 %v7751
    %v7887 = vunpack.c.l.b16 %v7752
    %v7888 = vunpack.c.l.b16 %v7753
    %v7889 = vunpack.c.l.b16 %v7754
    %v7890 = vunpack.c.l.b16 %v7755
    %v7891 = vunpack.c.l.b16 %v7756
    %v7892 = vunpack.c.l.b16 %v7757
    %v7893 = vunpack.c.l.b16 %v7758
    %v7894 = vunpack.c.l.b16 %v7759
    %v7895 = vunpack.c.l.b16 %v7760
    %v7896 = vunpack.c.l.b16 %v7761
    %v7897 = vunpack.c.l.b16 %v7762
    %v7898 = vunpack.c.l.b16 %v7763
    %v7899 = vunpack.c.l.b16 %v7764
    %v7900 = vunpack.c.l.b16 %v7765
    %v7901 = vunpack.c.l.b16 %v7766
    %v7902 = vunpack.c.l.b16 %v7767
    %v7903 = vunpack.c.l.b16 %v7768
    %v7904 = vunpack.c.l.b16 %v7769
    %v7905 = vunpack.c.l.b16 %v7770
    %v7906 = vunpack.c.l.b16 %v7771
    %v7907 = vunpack.c.l.b16 %v7772
    %v7908 = vunpack.c.l.b16 %v7773
    %v7909 = vunpack.c.l.b16 %v7774
    %v7910 = vunpack.c.l.b16 %v7775
    %v7911 = vunpack.c.l.b16 %v7776
    %v7912 = vunpack.c.l.b16 %v7777
    %v7913 = vunpack.c.l.b16 %v7778
    %v7914 = vunpack.c.l.b16 %v7779
    %v7915 = vunpack.c.l.b16 %v7780
    %v7916 = vunpack.c.l.b16 %v7781
    %v7917 = vunpack.c.l.b16 %v7782
    %v7918 = vunpack.c.l.b16 %v7783
    %v7919 = vunpack.c.l.b16 %v7784
    %v7920 = vunpack.c.l.b16 %v7785
    %v7921 = vunpack.c.l.b16 %v7786
    %v7922 = vunpack.c.l.b16 %v7787
    %v7923 = vunpack.c.l.b16 %v7788
    %v7924 = vunpack.c.l.b16 %v7789
    %v7925 = vunpack.c.l.b16 %v7790
    %v7926 = vunpack.c.l.b16 %v7791
    %v7927 = vunpack.c.l.b16 %v7792
    %v7928 = vunpack.c.l.b16 %v7793
    %v7929 = vpack.c.b16 %v7866, %v7865
    %v7930 = vpack.c.b16 %v7868, %v7867
    %v7931 = vpack.c.b16 %v7870, %v7869
    %v7932 = vpack.c.b16 %v7872, %v7871
    %v7933 = vpack.c.b16 %v7874, %v7873
    %v7934 = vpack.c.b16 %v7876, %v7875
    %v7935 = vpack.c.b16 %v7878, %v7877
    %v7936 = vpack.c.b16 %v7880, %v7879
    %v7937 = vpack.c.b16 %v7882, %v7881
    %v7938 = vpack.c.b16 %v7884, %v7883
    %v7939 = vpack.c.b16 %v7886, %v7885
    %v7940 = vpack.c.b16 %v7888, %v7887
    %v7941 = vpack.c.b16 %v7890, %v7889
    %v7942 = vpack.c.b16 %v7892, %v7891
    %v7943 = vpack.c.b16 %v7894, %v7893
    %v7944 = vpack.c.b16 %v7896, %v7895
    %v7945 = vpack.c.b16 %v7898, %v7897
    %v7946 = vpack.c.b16 %v7900, %v7899
    %v7947 = vpack.c.b16 %v7902, %v7901
    %v7948 = vpack.c.b16 %v7904, %v7903
    %v7949 = vpack.c.b16 %v7906, %v7905
    %v7950 = vpack.c.b16 %v7908, %v7907
    %v7951 = vpack.c.b16 %v7910, %v7909
    %v7952 = vpack.c.b16 %v7912, %v7911
    %v7953 = vpack.c.b16 %v7914, %v7913
    %v7954 = vpack.c.b16 %v7916, %v7915
    %v7955 = vpack.c.b16 %v7918, %v7917
    %v7956 = vpack.c.b16 %v7920, %v7919
    %v7957 = vpack.c.b16 %v7922, %v7921
    %v7958 = vpack.c.b16 %v7924, %v7923
    %v7959 = vpack.c.b16 %v7926, %v7925
    %v7960 = vpack.c.b16 %v7928, %v7927
    %7993 = vmatprep.subr.bf16.mxu0 0
    %7994 = vmatpush1.bf16.msra.mxu0 %v7929
    %7995 = vmatprep.subr.bf16.mxu0 0
    %7996 = vmatpush1.bf16.msra.mxu0 %v7930
    %7997 = vmatprep.subr.bf16.mxu0 0
    %7998 = vmatpush1.bf16.msra.mxu0 %v7931
    %7999 = vmatprep.subr.bf16.mxu0 0
    %8000 = vmatpush1.bf16.msra.mxu0 %v7932
    %8001 = vmatprep.subr.bf16.mxu0 0
    %8002 = vmatpush1.bf16.msra.mxu0 %v7933
    %8003 = vmatprep.subr.bf16.mxu0 0
    %8004 = vmatpush1.bf16.msra.mxu0 %v7934
    %8005 = vmatprep.subr.bf16.mxu0 0
    %8006 = vmatpush1.bf16.msra.mxu0 %v7935
    %8007 = vmatprep.subr.bf16.mxu0 0
    %8008 = vmatpush1.bf16.msra.mxu0 %v7936
    %8009 = vmatprep.subr.bf16.mxu0 0
    %8010 = vmatpush1.bf16.msra.mxu0 %v7937
    %8011 = vmatprep.subr.bf16.mxu0 0
    %8012 = vmatpush1.bf16.msra.mxu0 %v7938
    %8013 = vmatprep.subr.bf16.mxu0 0
    %8014 = vmatpush1.bf16.msra.mxu0 %v7939
    %8015 = vmatprep.subr.bf16.mxu0 0
    %8016 = vmatpush1.bf16.msra.mxu0 %v7940
    %8017 = vmatprep.subr.bf16.mxu0 0
    %8018 = vmatpush1.bf16.msra.mxu0 %v7941
    %8019 = vmatprep.subr.bf16.mxu0 0
    %8020 = vmatpush1.bf16.msra.mxu0 %v7942
    %8021 = vmatprep.subr.bf16.mxu0 0
    %8022 = vmatpush1.bf16.msra.mxu0 %v7943
    %8023 = vmatprep.subr.bf16.mxu0 0
    %8024 = vmatpush1.bf16.msra.mxu0 %v7944
    %8025 = vmatprep.mubr.bf16.mxu0 %v7727
    %8026 = vmatmul.mubr.bf16.gmra.mrb[0].mxu0 %v7726
    %v8027 = vpop.f32.mrb[0].mxu0
    %v8028 = vadd.f32 %v7799, %v8027
    %v8029 = vpop.f32.mrb[0].mxu0
    %v8030 = vpop.f32.mrb[0].mxu0
    %v8031 = vpop.f32.mrb[0].mxu0
    %8032 = vdwg.mxu0
    %8033 = vmatprep.subr.bf16.mxu0 0
    %8034 = vmatpush1.bf16.msra.mxu0 %v7945
    %8035 = vmatprep.subr.bf16.mxu0 0
    %8036 = vmatpush1.bf16.msra.mxu0 %v7946
    %8037 = vmatprep.subr.bf16.mxu0 0
    %8038 = vmatpush1.bf16.msra.mxu0 %v7947
    %8039 = vmatprep.subr.bf16.mxu0 0
    %8040 = vmatpush1.bf16.msra.mxu0 %v7948
    %8041 = vmatprep.subr.bf16.mxu0 0
    %8042 = vmatpush1.bf16.msra.mxu0 %v7949
    %8043 = vmatprep.subr.bf16.mxu0 0
    %8044 = vmatpush1.bf16.msra.mxu0 %v7950
    %8045 = vmatprep.subr.bf16.mxu0 0
    %8046 = vmatpush1.bf16.msra.mxu0 %v7951
    %8047 = vmatprep.subr.bf16.mxu0 0
    %8048 = vmatpush1.bf16.msra.mxu0 %v7952
    %8049 = vmatprep.subr.bf16.mxu0 0
    %8050 = vmatpush1.bf16.msra.mxu0 %v7953
    %8051 = vmatprep.subr.bf16.mxu0 0
    %8052 = vmatpush1.bf16.msra.mxu0 %v7954
    %8053 = vmatprep.subr.bf16.mxu0 0
    %8054 = vmatpush1.bf16.msra.mxu0 %v7955
    %8055 = vmatprep.subr.bf16.mxu0 0
    %8056 = vmatpush1.bf16.msra.mxu0 %v7956
    %8057 = vmatprep.subr.bf16.mxu0 0
    %8058 = vmatpush1.bf16.msra.mxu0 %v7957
    %8059 = vmatprep.subr.bf16.mxu0 0
    %8060 = vmatpush1.bf16.msra.mxu0 %v7958
    %8061 = vmatprep.subr.bf16.mxu0 0
    %8062 = vmatpush1.bf16.msra.mxu0 %v7959
    %8063 = vmatprep.subr.bf16.mxu0 0
    %8064 = vmatpush1.bf16.msra.mxu0 %v7960
    %8065 = vmatprep.mubr.bf16.mxu0 %v7729
    %8066 = vmatmul.mubr.bf16.gmra.mrb[0].mxu0 %v7728
    %v8067 = vpop.f32.mrb[0].mxu0
    %v8068 = vadd.f32 %v8028, %v8067
    %v8069 = vpop.f32.mrb[0].mxu0
    %v8070 = vpop.f32.mrb[0].mxu0
    %v8071 = vpop.f32.mrb[0].mxu0
    %8072 = vdwg.mxu0
    %v8073 = vmax.f32 %v8068, 0.0
    %v8074 = vpack.c.bf16 %v8073, %v8073
    %v8075 = vld [vmem:[%s5] sm:$0xf]
    %v8076 = vld [vmem:[%s5 + $0x4] sm:$0xf]
    %v8077 = vld [vmem:[%s5 + $0x8] sm:$0xf]
    %v8078 = vld [vmem:[%s5 + $0xc] sm:$0xf]
    %v8079 = vld [vmem:[%s5 + $0x10] sm:$0xf]
    %v8080 = vld [vmem:[%s5 + $0x14] sm:$0xf]
    %v8081 = vld [vmem:[%s5 + $0x18] sm:$0xf]
    %v8082 = vld [vmem:[%s5 + $0x1c] sm:$0xf]
    %v8083 = vld [vmem:[%s5 + $0x20] sm:$0xf]
    %v8084 = vld [vmem:[%s5 + $0x24] sm:$0xf]
    %v8085 = vld [vmem:[%s5 + $0x28] sm:$0xf]
    %v8086 = vld [vmem:[%s5 + $0x2c] sm:$0xf]
    %v8087 = vld [vmem:[%s5 + $0x30] sm:$0xf]
    %v8088 = vld [vmem:[%s5 + $0x34] sm:$0xf]
    %v8089 = vld [vmem:[%s5 + $0x38] sm:$0xf]
    %v8090 = vld [vmem:[%s5 + $0x3c] sm:$0xf]
    %v8091 = vld [vmem:[%s6] sm:$0x1]
    %v8093 = vlaneseq
    %v8094 = vshrl.u32 %v8093, 7
    %v8095 = vsub.s32 0, %v8094
    %v8096 = vrot.slane %v8091, %v8095
    %v8114 = vunpack.c.l.b16 %v8075
    %v8115 = vunpack.c.l.b16 %v8076
    %v8116 = vunpack.c.l.b16 %v8077
    %v8117 = vunpack.c.l.b16 %v8078
    %v8118 = vunpack.c.l.b16 %v8079
    %v8119 = vunpack.c.l.b16 %v8080
    %v8120 = vunpack.c.l.b16 %v8081
    %v8121 = vunpack.c.l.b16 %v8082
    %v8122 = vunpack.c.l.b16 %v8083
    %v8123 = vunpack.c.l.b16 %v8084
    %v8124 = vunpack.c.l.b16 %v8085
    %v8125 = vunpack.c.l.b16 %v8086
    %v8126 = vunpack.c.l.b16 %v8087
    %v8127 = vunpack.c.l.b16 %v8088
    %v8128 = vunpack.c.l.b16 %v8089
    %v8129 = vunpack.c.l.b16 %v8090
    %v8130 = vpack.c.b16 %v8115, %v8114
    %v8131 = vpack.c.b16 %v8117, %v8116
    %v8132 = vpack.c.b16 %v8119, %v8118
    %v8133 = vpack.c.b16 %v8121, %v8120
    %v8134 = vpack.c.b16 %v8123, %v8122
    %v8135 = vpack.c.b16 %v8125, %v8124
    %v8136 = vpack.c.b16 %v8127, %v8126
    %v8137 = vpack.c.b16 %v8129, %v8128
    %8146 = vmatprep.subr.bf16.mxu0 0
    %8147 = vmatpush1.bf16.msra.mxu0 %v8130
    %8148 = vmatprep.subr.bf16.mxu0 0
    %8149 = vmatpush1.bf16.msra.mxu0 %v8131
    %8150 = vmatprep.subr.bf16.mxu0 0
    %8151 = vmatpush1.bf16.msra.mxu0 %v8132
    %8152 = vmatprep.subr.bf16.mxu0 0
    %8153 = vmatpush1.bf16.msra.mxu0 %v8133
    %8154 = vmatprep.subr.bf16.mxu0 0
    %8155 = vmatpush1.bf16.msra.mxu0 %v8134
    %8156 = vmatprep.subr.bf16.mxu0 0
    %8157 = vmatpush1.bf16.msra.mxu0 %v8135
    %8158 = vmatprep.subr.bf16.mxu0 0
    %8159 = vmatpush1.bf16.msra.mxu0 %v8136
    %8160 = vmatprep.subr.bf16.mxu0 0
    %8161 = vmatpush1.bf16.msra.mxu0 %v8137
    %8162 = vmatprep.subr.bf16.mxu0 0
    %8163 = vmatpush1.bf16.msra.mxu0 0
    %8164 = vmatprep.subr.bf16.mxu0 0
    %8165 = vmatpush1.bf16.msra.mxu0 0
    %8166 = vmatprep.subr.bf16.mxu0 0
    %8167 = vmatpush1.bf16.msra.mxu0 0
    %8168 = vmatprep.subr.bf16.mxu0 0
    %8169 = vmatpush1.bf16.msra.mxu0 0
    %8170 = vmatprep.subr.bf16.mxu0 0
    %8171 = vmatpush1.bf16.msra.mxu0 0
    %8172 = vmatprep.subr.bf16.mxu0 0
    %8173 = vmatpush1.bf16.msra.mxu0 0
    %8174 = vmatprep.subr.bf16.mxu0 0
    %8175 = vmatpush1.bf16.msra.mxu0 0
    %8176 = vmatprep.subr.bf16.mxu0 0
    %8177 = vmatpush1.bf16.msra.mxu0 0
    %8178 = vmatprep.mubr.bf16.mxu0 0
    %8179 = vmatmul.mubr.bf16.gmra.mrb[0].mxu0 %v8074
    %v8180 = vpop.f32.mrb[0].mxu0
    %v8181 = vadd.f32 %v8096, %v8180
    %v8182 = vpop.f32.mrb[0].mxu0
    %v8183 = vpop.f32.mrb[0].mxu0
    %v8184 = vpop.f32.mrb[0].mxu0
    %8185 = vdwg.mxu0
    %8186 = vst [vmem:[#allocation2] sm:$0x3] %v8181
    // Predicated region
    $region30: #{cnn_cifar1_forward.5} parent=1 // pred_check
      _
    $region31: #{cnn_cifar1_forward.5} parent=1 // pred_check_branch
      %8188 = sbr.rel (0) target = $region33
    $region32: #{cnn_cifar1_forward.5} parent=1 // pred_region
      %s8190 = ssub.s32 32, 32
      %8191 = vsyncadd [#allocation3], %s8190
      %s8193 = sshll.u32 [#allocation2], 4
      %s8194 = int_to_ptr.vmem [resolvable:$true] %s8193
      %8196 = dma.vmem_to_hbm [thread:$0]  %s8194, 32, %s7, [#allocation3]
    $region33: #{cnn_cifar1_forward.5} parent=1 // pred_fallthru
      _
    // Predicated region
    $region34: #{cnn_cifar1_forward.5} parent=1 // pred_check
      _
    $region35: #{cnn_cifar1_forward.5} parent=1 // pred_check_branch
      %8198 = sbr.rel (0) target = $region37
    $region36: #{cnn_cifar1_forward.5} parent=1 // pred_region
      %8199 = dma.done [#allocation3], 32
    $region37: #{cnn_cifar1_forward.5} parent=1 // pred_fallthru
      _
    %8200 = vsyncpa [#allocation3], 1

</llo_original>
